<compile_context>
chip_gen: v5e
topology: v5e:2x2
jax: 0.10.0
libtpu: 0.0.40
codegen_flags: <defaults>
</compile_context>

<pallas_src>
import jax
import jax.numpy as jnp
from jax import lax
from jax.experimental import pallas as pl
from jax.experimental.pallas import tpu as pltpu

ACTION_SCALE = 1.0
ACTION_BIAS = 0.0

_VMEM = pl.BlockSpec(memory_space=pltpu.MemorySpace.VMEM)


# ---------------------------------------------------------------------------
# Fused Pallas kernel
# ---------------------------------------------------------------------------
def _policy_kernel(xph_ref, ps_ref, m1_ref, m2_ref, m3_ref,
                   cb1_ref, cb2_ref, cb3_ref,
                   w1a_ref, w1b_ref, b1_ref, w2_ref, b2_ref, wm_ref, bm_ref,
                   o_ref, y1_ref, y2_ref):
    f32, bf16 = jnp.float32, jnp.bfloat16
    B = ps_ref.shape[0]
    KH = m1_ref.shape[0]             # 5
    H1H = y1_ref.shape[2]            # conv1 output rows per parity phase (7)
    H2 = y2_ref.shape[1]             # conv2 output height (5)

    # ---- conv1 (5x5, s2): width im2col folded into m1; height handled by
    # reading contiguous slices of the mod-4 row phases of the bf16 input. ----
    for b in range(B):
        for par in range(2):                         # even / odd output rows
            acc = cb1_ref[:, :]                      # (1, W1*16) f32 broadcast
            for kh in range(KH):
                t = 2 * par + kh                     # input row = 4*m + t
                lhs = xph_ref[t % 4, b, pl.ds(t // 4, H1H), :]     # bf16
                acc = acc + jnp.dot(lhs, m1_ref[kh, :, :],
                                    preferred_element_type=f32)
            y1_ref[par, b, :, :] = jnp.maximum(acc, 0.0).astype(bf16)

    # ---- conv2: contiguous slices of the parity-split bf16 conv1 output. ----
    for b in range(B):
        acc = cb2_ref[:, :]                          # (1, W2*64)
        for kh in range(KH):
            lhs = y1_ref[kh % 2, b, pl.ds(kh // 2, H2), :]         # bf16
            acc = acc + jnp.dot(lhs, m2_ref[kh, :, :],
                                preferred_element_type=f32)
        y2_ref[b, :, :] = jnp.maximum(acc, 0.0).astype(bf16)

    # ---- conv3 (1x1 spatial output), batched over B: 5 (B,320)x(320,256)
    # dots instead of 10 M=1 dots.  AdaptiveAvgPool2d((1,1)) over a 1x1 map is
    # the identity, so the result is directly the flattened feature x1. ----
    acc3 = cb3_ref[:, :]                             # (1, 256)
    for kh in range(KH):
        lhs = y2_ref[:, kh, :]                       # (B, 320) bf16
        acc3 = acc3 + jnp.dot(lhs, m3_ref[kh, :, :],
                              preferred_element_type=f32)
    x1 = jnp.maximum(acc3, 0.0)                      # (B, 256) f32

    # ---- head: fc1 on concat([x1, fc_embed(pstate)]) with fc_embed folded
    # into w1b_eff / b1_eff, then fc2, mean, tanh, scale/bias.  Weights are
    # bf16 (MXU), accumulation and biases f32. ----
    h = (jnp.dot(x1.astype(bf16), w1a_ref[:, :], preferred_element_type=f32)
         + jnp.dot(ps_ref[:, :], w1b_ref[:, :], preferred_element_type=f32)
         + b1_ref[:, :])
    h = jnp.maximum(h, 0.0)                                           # (B, 128)
    h = jnp.maximum(jnp.dot(h.astype(bf16), w2_ref[:, :],
                            preferred_element_type=f32)
                    + b2_ref[:, :], 0.0)                              # (B, 32)
    m = jnp.tanh(jnp.dot(h.astype(bf16), wm_ref[:, :],
                         preferred_element_type=f32) + bm_ref[:, :])
    o_ref[:, :] = m * ACTION_SCALE + ACTION_BIAS                      # (B, A)


# ---------------------------------------------------------------------------
# One-time weight preprocessing (banded conv weights, bf16 cast, fc_embed fold)
# ---------------------------------------------------------------------------
def _banded_conv_weight(w, win, wout, stride=2):
    """Fold width-direction im2col of a (KH,KW,Cin,Cout) conv weight into a
    (KH, win*Cin, wout*Cout) per-kernel-row matmul weight."""
    kh, kw, cin, cout = w.shape
    m = jnp.zeros((kh, win * cin, wout * cout), jnp.float32)
    for wo in range(wout):
        for k in range(kw):
            col = stride * wo + k
            m = m.at[:, col * cin:(col + 1) * cin,
                     wo * cout:(wo + 1) * cout].set(w[:, k])
    return m


def prepare_params(p, width):
    bf16, f32 = jnp.bfloat16, jnp.float32
    w1 = (width - 5) // 2 + 1
    w2 = (w1 - 5) // 2 + 1
    w3 = (w2 - 5) // 2 + 1
    assert w3 == 1, "conv3 must produce a 1x1 spatial map for this kernel"
    c1 = p["cw1"].shape[-1]
    c2 = p["cw2"].shape[-1]
    c3 = p["cw3"].shape[-1]
    return {
        # conv weights: banded (width im2col folded in), shipped bf16.
        "m1": _banded_conv_weight(p["cw1"], width, w1).astype(bf16),
        "m2": _banded_conv_weight(p["cw2"], w1, w2).astype(bf16),
        "m3": _banded_conv_weight(p["cw3"], w2, w3).astype(bf16),
        "cb1": jnp.tile(p["cb1"], w1).reshape(1, w1 * c1).astype(f32),
        "cb2": jnp.tile(p["cb2"], w2).reshape(1, w2 * c2).astype(f32),
        "cb3": p["cb3"].reshape(1, c3).astype(f32),
        # head weights bf16 (MXU-native on every generation), biases f32.
        "w1a": p["w1a"].astype(bf16),
        "w1b_eff": (p["we"] @ p["w1b"]).astype(bf16),
        "b1_eff": (p["be"] @ p["w1b"] + p["b1"]).reshape(1, -1).astype(f32),
        "w2": p["w2"].astype(bf16),
        "b2": p["b2"].reshape(1, -1).astype(f32),
        "wm": p["wm"].astype(bf16),
        "bm": p["bm"].reshape(1, -1).astype(f32),
    }


# ---------------------------------------------------------------------------
# Forward
# ---------------------------------------------------------------------------
@jax.jit
def deterministic_policy_forward(istate_nchw, pstate, prep):
    B, C, H, W = istate_nchw.shape
    H1 = (H - 5) // 2 + 1
    H2 = (H1 - 5) // 2 + 1
    H3 = (H2 - 5) // 2 + 1
    assert H % 4 == 0 and H1 % 2 == 0 and H3 == 1, "unsupported spatial size"

    n1 = prep["m1"].shape[2]          # W1 * 16
    n2 = prep["m2"].shape[2]          # W2 * 64
    n3 = prep["m3"].shape[2]          # 256
    A = prep["wm"].shape[1]
    P = pstate.shape[1]

    # Single fused relayout on the tiny input: NCHW -> (phase, B, H/4, W*C),
    # pre-cast to bf16 so the kernel never re-casts the LHS rows.
    # TODO(synk): store observations upstream in this layout (and prefetch the
    # weights cross-call) to remove the remaining per-call glue / weight DMA.
    xph = jnp.transpose(istate_nchw.reshape(B, C, H // 4, 4, W),
                        (3, 0, 2, 4, 1)).reshape(4, B, H // 4, W * C)
    xph = xph.astype(jnp.bfloat16)
    ps = pstate.astype(jnp.bfloat16)

    flops = 2 * B * (2 * 5 * (H1 // 2) * (W * C) * n1
                     + 5 * H2 * n1 * n2
                     + 5 * n2 * n3
                     + n3 * 128 + P * 128 + 128 * 32 + 32 * A)
    bytes_accessed = (sum(int(v.size) * v.dtype.itemsize for v in prep.values())
                      + xph.size * xph.dtype.itemsize
                      + ps.size * ps.dtype.itemsize + B * A * 4)

    args = (xph, ps,
            prep["m1"], prep["m2"], prep["m3"],
            prep["cb1"], prep["cb2"], prep["cb3"],
            prep["w1a"], prep["w1b_eff"], prep["b1_eff"],
            prep["w2"], prep["b2"], prep["wm"], prep["bm"])

    return pl.pallas_call(
        _policy_kernel,
        out_shape=jax.ShapeDtypeStruct((B, A), jnp.float32),
        in_specs=[_VMEM] * len(args),
        out_specs=_VMEM,
        scratch_shapes=[
            pltpu.VMEM((2, B, H1 // 2, n1), jnp.bfloat16),  # conv1 out (parity)
            pltpu.VMEM((B, H2, n2), jnp.bfloat16),          # conv2 out
        ],
        cost_estimate=pl.CostEstimate(flops=flops, transcendentals=B * A,
                                      bytes_accessed=int(bytes_accessed)),
        compiler_params=pltpu.CompilerParams(vmem_limit_bytes=8 * 1024 * 1024),
    )(*args)


# ---------------------------------------------------------------------------
# Parameters (deterministic synthetic init) and pure-JAX reference
# ---------------------------------------------------------------------------
def init_params(key, channel, nb_pstate, nb_actions):
    ks = jax.random.split(key, 16)

    def dense(k, fan_in, fan_out):
        lim = (6.0 / (fan_in + fan_out)) ** 0.5
        return jax.random.uniform(k, (fan_in, fan_out), jnp.float32, -lim, lim)

    def conv_w(k, kh, kw, cin, cout):
        lim = 1.0 / (kh * kw * cin) ** 0.5
        return jax.random.uniform(k, (kh, kw, cin, cout), jnp.float32, -lim, lim)

    return {
        "cw1": conv_w(ks[0], 5, 5, channel, 16),
        "cb1": jax.random.uniform(ks[1], (16,), jnp.float32, -0.05, 0.05),
        "cw2": conv_w(ks[2], 5, 5, 16, 64),
        "cb2": jax.random.uniform(ks[3], (64,), jnp.float32, -0.05, 0.05),
        "cw3": conv_w(ks[4], 5, 5, 64, 256),
        "cb3": jax.random.uniform(ks[5], (256,), jnp.float32, -0.05, 0.05),
        "we": dense(ks[6], nb_pstate, 32),
        "be": jnp.zeros((32,), jnp.float32),
        "w1a": dense(ks[7], 256, 128),   # fc1 rows for the conv features
        "w1b": dense(ks[8], 32, 128),    # fc1 rows for the pstate embed
        "b1": jnp.zeros((128,), jnp.float32),
        "w2": dense(ks[9], 128, 32),
        "b2": jnp.zeros((32,), jnp.float32),
        "wm": dense(ks[10], 32, nb_actions),
        "bm": jnp.zeros((nb_actions,), jnp.float32),
    }


def reference_forward(istate_nchw, pstate, params):
    x = jnp.transpose(istate_nchw, (0, 2, 3, 1)).astype(jnp.float32)
    dn = ("NHWC", "HWIO", "NHWC")
    for wk, bk in (("cw1", "cb1"), ("cw2", "cb2"), ("cw3", "cb3")):
        x = lax.conv_general_dilated(x, params[wk], (2, 2), "VALID",
                                     dimension_numbers=dn) + params[bk]
        x = jnp.maximum(x, 0.0)
    x1 = jnp.mean(x, axis=(1, 2))
    x2 = pstate.astype(jnp.float32) @ params["we"] + params["be"]
    h = jnp.maximum(x1 @ params["w1a"] + x2 @ params["w1b"] + params["b1"], 0.0)
    h = jnp.maximum(h @ params["w2"] + params["b2"], 0.0)
    return jnp.tanh(h @ params["wm"] + params["bm"]) * ACTION_SCALE + ACTION_BIAS


if __name__ == "__main__":
    B, C, H, W = 2, 4, 32, 32          # 32 -> 14 -> 5 -> 1 through the three convs
    NB_PSTATE, NB_ACTIONS = 8, 6

    key = jax.random.PRNGKey(0)
    k_img, k_ps, k_par = jax.random.split(key, 3)
    istate = jax.random.normal(k_img, (B, C, H, W), jnp.float32)   # NCHW like PyTorch
    pstate = jax.random.normal(k_ps, (B, NB_PSTATE), jnp.float32)
    params = init_params(k_par, C, NB_PSTATE, NB_ACTIONS)
    prep = prepare_params(params, W)   # one-time weight preprocessing

    out = deterministic_policy_forward(istate, pstate, prep)
    out = jax.block_until_ready(out)

    ref = reference_forward(istate, pstate, params)
    assert out.shape == (B, NB_ACTIONS)
    assert jnp.allclose(out, ref, rtol=5e-2, atol=5e-2), (out, ref)

    print("KERNEL_OK")
</pallas_src>

<mosaic_0001>
module attributes {stable_mosaic.version = 11 : i64} {
  func.func @_policy_kernel(%arg0: memref<4x2x8x128xbf16, #tpu.memory_space<vmem>>, %arg1: memref<2x8xbf16, #tpu.memory_space<vmem>>, %arg2: memref<5x128x224xbf16, #tpu.memory_space<vmem>>, %arg3: memref<5x224x320xbf16, #tpu.memory_space<vmem>>, %arg4: memref<5x320x256xbf16, #tpu.memory_space<vmem>>, %arg5: memref<1x224xf32, #tpu.memory_space<vmem>>, %arg6: memref<1x320xf32, #tpu.memory_space<vmem>>, %arg7: memref<1x256xf32, #tpu.memory_space<vmem>>, %arg8: memref<256x128xbf16, #tpu.memory_space<vmem>>, %arg9: memref<8x128xbf16, #tpu.memory_space<vmem>>, %arg10: memref<1x128xf32, #tpu.memory_space<vmem>>, %arg11: memref<128x32xbf16, #tpu.memory_space<vmem>>, %arg12: memref<1x32xf32, #tpu.memory_space<vmem>>, %arg13: memref<32x6xbf16, #tpu.memory_space<vmem>>, %arg14: memref<1x6xf32, #tpu.memory_space<vmem>>, %arg15: memref<2x6xf32, #tpu.memory_space<vmem>>, %arg16: memref<2x2x7x224xbf16, #tpu.memory_space<vmem>>, %arg17: memref<2x5x320xbf16, #tpu.memory_space<vmem>>) attributes {dimension_semantics = [], scalar_prefetch = 0 : i64, scratch_operands = 2 : i64, tpu.core_type = #tpu.core_type<tc>} {
    %c0 = arith.constant 0 : index
    %c0_0 = arith.constant 0 : index
    %0 = vector.load %arg5[%c0, %c0_0] : memref<1x224xf32, #tpu.memory_space<vmem>>, vector<1x224xf32>
    %c0_1 = arith.constant 0 : index
    %c0_2 = arith.constant 0 : index
    %c0_3 = arith.constant 0 : index
    %c0_4 = arith.constant 0 : index
    %1 = vector.load %arg0[%c0_1, %c0_2, %c0_3, %c0_4] : memref<4x2x8x128xbf16, #tpu.memory_space<vmem>>, vector<1x1x7x128xbf16>
    %2 = vector.shape_cast %1 : vector<1x1x7x128xbf16> to vector<7x128xbf16>
    %c0_5 = arith.constant 0 : index
    %c0_6 = arith.constant 0 : index
    %c0_7 = arith.constant 0 : index
    %3 = vector.load %arg2[%c0_5, %c0_6, %c0_7] : memref<5x128x224xbf16, #tpu.memory_space<vmem>>, vector<1x128x224xbf16>
    %4 = vector.shape_cast %3 : vector<1x128x224xbf16> to vector<128x224xbf16>
    %cst = arith.constant dense<0.000000e+00> : vector<7x224xf32>
    %5 = tpu.matmul %2, %4, %cst {dimension_numbers = #tpu.dot_dimension_numbers<[1], [0], [0], [1], [0, 0, 1, 1], [], []>} : vector<7x128xbf16>, vector<128x224xbf16>, vector<7x224xf32> -> vector<7x224xf32>
    %6 = vector.broadcast %0 : vector<1x224xf32> to vector<7x224xf32>
    %7 = arith.addf %6, %5 : vector<7x224xf32>
    %c1 = arith.constant 1 : index
    %c0_8 = arith.constant 0 : index
    %c0_9 = arith.constant 0 : index
    %c0_10 = arith.constant 0 : index
    %8 = vector.load %arg0[%c1, %c0_8, %c0_9, %c0_10] : memref<4x2x8x128xbf16, #tpu.memory_space<vmem>>, vector<1x1x7x128xbf16>
    %9 = vector.shape_cast %8 : vector<1x1x7x128xbf16> to vector<7x128xbf16>
    %c1_11 = arith.constant 1 : index
    %c0_12 = arith.constant 0 : index
    %c0_13 = arith.constant 0 : index
    %10 = vector.load %arg2[%c1_11, %c0_12, %c0_13] : memref<5x128x224xbf16, #tpu.memory_space<vmem>>, vector<1x128x224xbf16>
    %11 = vector.shape_cast %10 : vector<1x128x224xbf16> to vector<128x224xbf16>
    %cst_14 = arith.constant dense<0.000000e+00> : vector<7x224xf32>
    %12 = tpu.matmul %9, %11, %cst_14 {dimension_numbers = #tpu.dot_dimension_numbers<[1], [0], [0], [1], [0, 0, 1, 1], [], []>} : vector<7x128xbf16>, vector<128x224xbf16>, vector<7x224xf32> -> vector<7x224xf32>
    %13 = arith.addf %7, %12 : vector<7x224xf32>
    %c2 = arith.constant 2 : index
    %c0_15 = arith.constant 0 : index
    %c0_16 = arith.constant 0 : index
    %c0_17 = arith.constant 0 : index
    %14 = vector.load %arg0[%c2, %c0_15, %c0_16, %c0_17] : memref<4x2x8x128xbf16, #tpu.memory_space<vmem>>, vector<1x1x7x128xbf16>
    %15 = vector.shape_cast %14 : vector<1x1x7x128xbf16> to vector<7x128xbf16>
    %c2_18 = arith.constant 2 : index
    %c0_19 = arith.constant 0 : index
    %c0_20 = arith.constant 0 : index
    %16 = vector.load %arg2[%c2_18, %c0_19, %c0_20] : memref<5x128x224xbf16, #tpu.memory_space<vmem>>, vector<1x128x224xbf16>
    %17 = vector.shape_cast %16 : vector<1x128x224xbf16> to vector<128x224xbf16>
    %cst_21 = arith.constant dense<0.000000e+00> : vector<7x224xf32>
    %18 = tpu.matmul %15, %17, %cst_21 {dimension_numbers = #tpu.dot_dimension_numbers<[1], [0], [0], [1], [0, 0, 1, 1], [], []>} : vector<7x128xbf16>, vector<128x224xbf16>, vector<7x224xf32> -> vector<7x224xf32>
    %19 = arith.addf %13, %18 : vector<7x224xf32>
    %c3 = arith.constant 3 : index
    %c0_22 = arith.constant 0 : index
    %c0_23 = arith.constant 0 : index
    %c0_24 = arith.constant 0 : index
    %20 = vector.load %arg0[%c3, %c0_22, %c0_23, %c0_24] : memref<4x2x8x128xbf16, #tpu.memory_space<vmem>>, vector<1x1x7x128xbf16>
    %21 = vector.shape_cast %20 : vector<1x1x7x128xbf16> to vector<7x128xbf16>
    %c3_25 = arith.constant 3 : index
    %c0_26 = arith.constant 0 : index
    %c0_27 = arith.constant 0 : index
    %22 = vector.load %arg2[%c3_25, %c0_26, %c0_27] : memref<5x128x224xbf16, #tpu.memory_space<vmem>>, vector<1x128x224xbf16>
    %23 = vector.shape_cast %22 : vector<1x128x224xbf16> to vector<128x224xbf16>
    %cst_28 = arith.constant dense<0.000000e+00> : vector<7x224xf32>
    %24 = tpu.matmul %21, %23, %cst_28 {dimension_numbers = #tpu.dot_dimension_numbers<[1], [0], [0], [1], [0, 0, 1, 1], [], []>} : vector<7x128xbf16>, vector<128x224xbf16>, vector<7x224xf32> -> vector<7x224xf32>
    %25 = arith.addf %19, %24 : vector<7x224xf32>
    %c0_29 = arith.constant 0 : index
    %c0_30 = arith.constant 0 : index
    %c1_31 = arith.constant 1 : index
    %c0_32 = arith.constant 0 : index
    %26 = vector.load %arg0[%c0_29, %c0_30, %c1_31, %c0_32] : memref<4x2x8x128xbf16, #tpu.memory_space<vmem>>, vector<1x1x7x128xbf16>
    %27 = vector.shape_cast %26 : vector<1x1x7x128xbf16> to vector<7x128xbf16>
    %c4 = arith.constant 4 : index
    %c0_33 = arith.constant 0 : index
    %c0_34 = arith.constant 0 : index
    %28 = vector.load %arg2[%c4, %c0_33, %c0_34] : memref<5x128x224xbf16, #tpu.memory_space<vmem>>, vector<1x128x224xbf16>
    %29 = vector.shape_cast %28 : vector<1x128x224xbf16> to vector<128x224xbf16>
    %cst_35 = arith.constant dense<0.000000e+00> : vector<7x224xf32>
    %30 = tpu.matmul %27, %29, %cst_35 {dimension_numbers = #tpu.dot_dimension_numbers<[1], [0], [0], [1], [0, 0, 1, 1], [], []>} : vector<7x128xbf16>, vector<128x224xbf16>, vector<7x224xf32> -> vector<7x224xf32>
    %31 = arith.addf %25, %30 : vector<7x224xf32>
    %cst_36 = arith.constant 0.000000e+00 : f32
    %32 = vector.broadcast %cst_36 : f32 to vector<7x224xf32>
    %33 = arith.maximumf %31, %32 : vector<7x224xf32>
    %34 = arith.truncf %33 : vector<7x224xf32> to vector<7x224xbf16>
    %c0_37 = arith.constant 0 : index
    %c0_38 = arith.constant 0 : index
    %c0_39 = arith.constant 0 : index
    %c0_40 = arith.constant 0 : index
    %35 = vector.load %arg16[%c0_37, %c0_38, %c0_39, %c0_40] : memref<2x2x7x224xbf16, #tpu.memory_space<vmem>>, vector<1x1x7x224xbf16>
    %36 = vector.shape_cast %35 : vector<1x1x7x224xbf16> to vector<7x224xbf16>
    %37 = vector.shape_cast %34 : vector<7x224xbf16> to vector<1x1x7x224xbf16>
    tpu.vector_store %arg16[%c0_37, %c0_38, %c0_39, %c0_40], %37 {strides = array<i32>} : memref<2x2x7x224xbf16, #tpu.memory_space<vmem>>, vector<1x1x7x224xbf16>,
    %c0_41 = arith.constant 0 : index
    %c0_42 = arith.constant 0 : index
    %38 = vector.load %arg5[%c0_41, %c0_42] : memref<1x224xf32, #tpu.memory_space<vmem>>, vector<1x224xf32>
    %c2_43 = arith.constant 2 : index
    %c0_44 = arith.constant 0 : index
    %c0_45 = arith.constant 0 : index
    %c0_46 = arith.constant 0 : index
    %39 = vector.load %arg0[%c2_43, %c0_44, %c0_45, %c0_46] : memref<4x2x8x128xbf16, #tpu.memory_space<vmem>>, vector<1x1x7x128xbf16>
    %40 = vector.shape_cast %39 : vector<1x1x7x128xbf16> to vector<7x128xbf16>
    %c0_47 = arith.constant 0 : index
    %c0_48 = arith.constant 0 : index
    %c0_49 = arith.constant 0 : index
    %41 = vector.load %arg2[%c0_47, %c0_48, %c0_49] : memref<5x128x224xbf16, #tpu.memory_space<vmem>>, vector<1x128x224xbf16>
    %42 = vector.shape_cast %41 : vector<1x128x224xbf16> to vector<128x224xbf16>
    %cst_50 = arith.constant dense<0.000000e+00> : vector<7x224xf32>
    %43 = tpu.matmul %40, %42, %cst_50 {dimension_numbers = #tpu.dot_dimension_numbers<[1], [0], [0], [1], [0, 0, 1, 1], [], []>} : vector<7x128xbf16>, vector<128x224xbf16>, vector<7x224xf32> -> vector<7x224xf32>
    %44 = vector.broadcast %38 : vector<1x224xf32> to vector<7x224xf32>
    %45 = arith.addf %44, %43 : vector<7x224xf32>
    %c3_51 = arith.constant 3 : index
    %c0_52 = arith.constant 0 : index
    %c0_53 = arith.constant 0 : index
    %c0_54 = arith.constant 0 : index
    %46 = vector.load %arg0[%c3_51, %c0_52, %c0_53, %c0_54] : memref<4x2x8x128xbf16, #tpu.memory_space<vmem>>, vector<1x1x7x128xbf16>
    %47 = vector.shape_cast %46 : vector<1x1x7x128xbf16> to vector<7x128xbf16>
    %c1_55 = arith.constant 1 : index
    %c0_56 = arith.constant 0 : index
    %c0_57 = arith.constant 0 : index
    %48 = vector.load %arg2[%c1_55, %c0_56, %c0_57] : memref<5x128x224xbf16, #tpu.memory_space<vmem>>, vector<1x128x224xbf16>
    %49 = vector.shape_cast %48 : vector<1x128x224xbf16> to vector<128x224xbf16>
    %cst_58 = arith.constant dense<0.000000e+00> : vector<7x224xf32>
    %50 = tpu.matmul %47, %49, %cst_58 {dimension_numbers = #tpu.dot_dimension_numbers<[1], [0], [0], [1], [0, 0, 1, 1], [], []>} : vector<7x128xbf16>, vector<128x224xbf16>, vector<7x224xf32> -> vector<7x224xf32>
    %51 = arith.addf %45, %50 : vector<7x224xf32>
    %c0_59 = arith.constant 0 : index
    %c0_60 = arith.constant 0 : index
    %c1_61 = arith.constant 1 : index
    %c0_62 = arith.constant 0 : index
    %52 = vector.load %arg0[%c0_59, %c0_60, %c1_61, %c0_62] : memref<4x2x8x128xbf16, #tpu.memory_space<vmem>>, vector<1x1x7x128xbf16>
    %53 = vector.shape_cast %52 : vector<1x1x7x128xbf16> to vector<7x128xbf16>
    %c2_63 = arith.constant 2 : index
    %c0_64 = arith.constant 0 : index
    %c0_65 = arith.constant 0 : index
    %54 = vector.load %arg2[%c2_63, %c0_64, %c0_65] : memref<5x128x224xbf16, #tpu.memory_space<vmem>>, vector<1x128x224xbf16>
    %55 = vector.shape_cast %54 : vector<1x128x224xbf16> to vector<128x224xbf16>
    %cst_66 = arith.constant dense<0.000000e+00> : vector<7x224xf32>
    %56 = tpu.matmul %53, %55, %cst_66 {dimension_numbers = #tpu.dot_dimension_numbers<[1], [0], [0], [1], [0, 0, 1, 1], [], []>} : vector<7x128xbf16>, vector<128x224xbf16>, vector<7x224xf32> -> vector<7x224xf32>
    %57 = arith.addf %51, %56 : vector<7x224xf32>
    %c1_67 = arith.constant 1 : index
    %c0_68 = arith.constant 0 : index
    %c1_69 = arith.constant 1 : index
    %c0_70 = arith.constant 0 : index
    %58 = vector.load %arg0[%c1_67, %c0_68, %c1_69, %c0_70] : memref<4x2x8x128xbf16, #tpu.memory_space<vmem>>, vector<1x1x7x128xbf16>
    %59 = vector.shape_cast %58 : vector<1x1x7x128xbf16> to vector<7x128xbf16>
    %c3_71 = arith.constant 3 : index
    %c0_72 = arith.constant 0 : index
    %c0_73 = arith.constant 0 : index
    %60 = vector.load %arg2[%c3_71, %c0_72, %c0_73] : memref<5x128x224xbf16, #tpu.memory_space<vmem>>, vector<1x128x224xbf16>
    %61 = vector.shape_cast %60 : vector<1x128x224xbf16> to vector<128x224xbf16>
    %cst_74 = arith.constant dense<0.000000e+00> : vector<7x224xf32>
    %62 = tpu.matmul %59, %61, %cst_74 {dimension_numbers = #tpu.dot_dimension_numbers<[1], [0], [0], [1], [0, 0, 1, 1], [], []>} : vector<7x128xbf16>, vector<128x224xbf16>, vector<7x224xf32> -> vector<7x224xf32>
    %63 = arith.addf %57, %62 : vector<7x224xf32>
    %c2_75 = arith.constant 2 : index
    %c0_76 = arith.constant 0 : index
    %c1_77 = arith.constant 1 : index
    %c0_78 = arith.constant 0 : index
    %64 = vector.load %arg0[%c2_75, %c0_76, %c1_77, %c0_78] : memref<4x2x8x128xbf16, #tpu.memory_space<vmem>>, vector<1x1x7x128xbf16>
    %65 = vector.shape_cast %64 : vector<1x1x7x128xbf16> to vector<7x128xbf16>
    %c4_79 = arith.constant 4 : index
    %c0_80 = arith.constant 0 : index
    %c0_81 = arith.constant 0 : index
    %66 = vector.load %arg2[%c4_79, %c0_80, %c0_81] : memref<5x128x224xbf16, #tpu.memory_space<vmem>>, vector<1x128x224xbf16>
    %67 = vector.shape_cast %66 : vector<1x128x224xbf16> to vector<128x224xbf16>
    %cst_82 = arith.constant dense<0.000000e+00> : vector<7x224xf32>
    %68 = tpu.matmul %65, %67, %cst_82 {dimension_numbers = #tpu.dot_dimension_numbers<[1], [0], [0], [1], [0, 0, 1, 1], [], []>} : vector<7x128xbf16>, vector<128x224xbf16>, vector<7x224xf32> -> vector<7x224xf32>
    %69 = arith.addf %63, %68 : vector<7x224xf32>
    %cst_83 = arith.constant 0.000000e+00 : f32
    %70 = vector.broadcast %cst_83 : f32 to vector<7x224xf32>
    %71 = arith.maximumf %69, %70 : vector<7x224xf32>
    %72 = arith.truncf %71 : vector<7x224xf32> to vector<7x224xbf16>
    %c1_84 = arith.constant 1 : index
    %c0_85 = arith.constant 0 : index
    %c0_86 = arith.constant 0 : index
    %c0_87 = arith.constant 0 : index
    %73 = vector.load %arg16[%c1_84, %c0_85, %c0_86, %c0_87] : memref<2x2x7x224xbf16, #tpu.memory_space<vmem>>, vector<1x1x7x224xbf16>
    %74 = vector.shape_cast %73 : vector<1x1x7x224xbf16> to vector<7x224xbf16>
    %75 = vector.shape_cast %72 : vector<7x224xbf16> to vector<1x1x7x224xbf16>
    tpu.vector_store %arg16[%c1_84, %c0_85, %c0_86, %c0_87], %75 {strides = array<i32>} : memref<2x2x7x224xbf16, #tpu.memory_space<vmem>>, vector<1x1x7x224xbf16>,
    %c0_88 = arith.constant 0 : index
    %c0_89 = arith.constant 0 : index
    %76 = vector.load %arg5[%c0_88, %c0_89] : memref<1x224xf32, #tpu.memory_space<vmem>>, vector<1x224xf32>
    %c0_90 = arith.constant 0 : index
    %c1_91 = arith.constant 1 : index
    %c0_92 = arith.constant 0 : index
    %c0_93 = arith.constant 0 : index
    %77 = vector.load %arg0[%c0_90, %c1_91, %c0_92, %c0_93] : memref<4x2x8x128xbf16, #tpu.memory_space<vmem>>, vector<1x1x7x128xbf16>
    %78 = vector.shape_cast %77 : vector<1x1x7x128xbf16> to vector<7x128xbf16>
    %c0_94 = arith.constant 0 : index
    %c0_95 = arith.constant 0 : index
    %c0_96 = arith.constant 0 : index
    %79 = vector.load %arg2[%c0_94, %c0_95, %c0_96] : memref<5x128x224xbf16, #tpu.memory_space<vmem>>, vector<1x128x224xbf16>
    %80 = vector.shape_cast %79 : vector<1x128x224xbf16> to vector<128x224xbf16>
    %cst_97 = arith.constant dense<0.000000e+00> : vector<7x224xf32>
    %81 = tpu.matmul %78, %80, %cst_97 {dimension_numbers = #tpu.dot_dimension_numbers<[1], [0], [0], [1], [0, 0, 1, 1], [], []>} : vector<7x128xbf16>, vector<128x224xbf16>, vector<7x224xf32> -> vector<7x224xf32>
    %82 = vector.broadcast %76 : vector<1x224xf32> to vector<7x224xf32>
    %83 = arith.addf %82, %81 : vector<7x224xf32>
    %c1_98 = arith.constant 1 : index
    %c1_99 = arith.constant 1 : index
    %c0_100 = arith.constant 0 : index
    %c0_101 = arith.constant 0 : index
    %84 = vector.load %arg0[%c1_98, %c1_99, %c0_100, %c0_101] : memref<4x2x8x128xbf16, #tpu.memory_space<vmem>>, vector<1x1x7x128xbf16>
    %85 = vector.shape_cast %84 : vector<1x1x7x128xbf16> to vector<7x128xbf16>
    %c1_102 = arith.constant 1 : index
    %c0_103 = arith.constant 0 : index
    %c0_104 = arith.constant 0 : index
    %86 = vector.load %arg2[%c1_102, %c0_103, %c0_104] : memref<5x128x224xbf16, #tpu.memory_space<vmem>>, vector<1x128x224xbf16>
    %87 = vector.shape_cast %86 : vector<1x128x224xbf16> to vector<128x224xbf16>
    %cst_105 = arith.constant dense<0.000000e+00> : vector<7x224xf32>
    %88 = tpu.matmul %85, %87, %cst_105 {dimension_numbers = #tpu.dot_dimension_numbers<[1], [0], [0], [1], [0, 0, 1, 1], [], []>} : vector<7x128xbf16>, vector<128x224xbf16>, vector<7x224xf32> -> vector<7x224xf32>
    %89 = arith.addf %83, %88 : vector<7x224xf32>
    %c2_106 = arith.constant 2 : index
    %c1_107 = arith.constant 1 : index
    %c0_108 = arith.constant 0 : index
    %c0_109 = arith.constant 0 : index
    %90 = vector.load %arg0[%c2_106, %c1_107, %c0_108, %c0_109] : memref<4x2x8x128xbf16, #tpu.memory_space<vmem>>, vector<1x1x7x128xbf16>
    %91 = vector.shape_cast %90 : vector<1x1x7x128xbf16> to vector<7x128xbf16>
    %c2_110 = arith.constant 2 : index
    %c0_111 = arith.constant 0 : index
    %c0_112 = arith.constant 0 : index
    %92 = vector.load %arg2[%c2_110, %c0_111, %c0_112] : memref<5x128x224xbf16, #tpu.memory_space<vmem>>, vector<1x128x224xbf16>
    %93 = vector.shape_cast %92 : vector<1x128x224xbf16> to vector<128x224xbf16>
    %cst_113 = arith.constant dense<0.000000e+00> : vector<7x224xf32>
    %94 = tpu.matmul %91, %93, %cst_113 {dimension_numbers = #tpu.dot_dimension_numbers<[1], [0], [0], [1], [0, 0, 1, 1], [], []>} : vector<7x128xbf16>, vector<128x224xbf16>, vector<7x224xf32> -> vector<7x224xf32>
    %95 = arith.addf %89, %94 : vector<7x224xf32>
    %c3_114 = arith.constant 3 : index
    %c1_115 = arith.constant 1 : index
    %c0_116 = arith.constant 0 : index
    %c0_117 = arith.constant 0 : index
    %96 = vector.load %arg0[%c3_114, %c1_115, %c0_116, %c0_117] : memref<4x2x8x128xbf16, #tpu.memory_space<vmem>>, vector<1x1x7x128xbf16>
    %97 = vector.shape_cast %96 : vector<1x1x7x128xbf16> to vector<7x128xbf16>
    %c3_118 = arith.constant 3 : index
    %c0_119 = arith.constant 0 : index
    %c0_120 = arith.constant 0 : index
    %98 = vector.load %arg2[%c3_118, %c0_119, %c0_120] : memref<5x128x224xbf16, #tpu.memory_space<vmem>>, vector<1x128x224xbf16>
    %99 = vector.shape_cast %98 : vector<1x128x224xbf16> to vector<128x224xbf16>
    %cst_121 = arith.constant dense<0.000000e+00> : vector<7x224xf32>
    %100 = tpu.matmul %97, %99, %cst_121 {dimension_numbers = #tpu.dot_dimension_numbers<[1], [0], [0], [1], [0, 0, 1, 1], [], []>} : vector<7x128xbf16>, vector<128x224xbf16>, vector<7x224xf32> -> vector<7x224xf32>
    %101 = arith.addf %95, %100 : vector<7x224xf32>
    %c0_122 = arith.constant 0 : index
    %c1_123 = arith.constant 1 : index
    %c1_124 = arith.constant 1 : index
    %c0_125 = arith.constant 0 : index
    %102 = vector.load %arg0[%c0_122, %c1_123, %c1_124, %c0_125] : memref<4x2x8x128xbf16, #tpu.memory_space<vmem>>, vector<1x1x7x128xbf16>
    %103 = vector.shape_cast %102 : vector<1x1x7x128xbf16> to vector<7x128xbf16>
    %c4_126 = arith.constant 4 : index
    %c0_127 = arith.constant 0 : index
    %c0_128 = arith.constant 0 : index
    %104 = vector.load %arg2[%c4_126, %c0_127, %c0_128] : memref<5x128x224xbf16, #tpu.memory_space<vmem>>, vector<1x128x224xbf16>
    %105 = vector.shape_cast %104 : vector<1x128x224xbf16> to vector<128x224xbf16>
    %cst_129 = arith.constant dense<0.000000e+00> : vector<7x224xf32>
    %106 = tpu.matmul %103, %105, %cst_129 {dimension_numbers = #tpu.dot_dimension_numbers<[1], [0], [0], [1], [0, 0, 1, 1], [], []>} : vector<7x128xbf16>, vector<128x224xbf16>, vector<7x224xf32> -> vector<7x224xf32>
    %107 = arith.addf %101, %106 : vector<7x224xf32>
    %cst_130 = arith.constant 0.000000e+00 : f32
    %108 = vector.broadcast %cst_130 : f32 to vector<7x224xf32>
    %109 = arith.maximumf %107, %108 : vector<7x224xf32>
    %110 = arith.truncf %109 : vector<7x224xf32> to vector<7x224xbf16>
    %c0_131 = arith.constant 0 : index
    %c1_132 = arith.constant 1 : index
    %c0_133 = arith.constant 0 : index
    %c0_134 = arith.constant 0 : index
    %111 = vector.load %arg16[%c0_131, %c1_132, %c0_133, %c0_134] : memref<2x2x7x224xbf16, #tpu.memory_space<vmem>>, vector<1x1x7x224xbf16>
    %112 = vector.shape_cast %111 : vector<1x1x7x224xbf16> to vector<7x224xbf16>
    %113 = vector.shape_cast %110 : vector<7x224xbf16> to vector<1x1x7x224xbf16>
    tpu.vector_store %arg16[%c0_131, %c1_132, %c0_133, %c0_134], %113 {strides = array<i32>} : memref<2x2x7x224xbf16, #tpu.memory_space<vmem>>, vector<1x1x7x224xbf16>,
    %c0_135 = arith.constant 0 : index
    %c0_136 = arith.constant 0 : index
    %114 = vector.load %arg5[%c0_135, %c0_136] : memref<1x224xf32, #tpu.memory_space<vmem>>, vector<1x224xf32>
    %c2_137 = arith.constant 2 : index
    %c1_138 = arith.constant 1 : index
    %c0_139 = arith.constant 0 : index
    %c0_140 = arith.constant 0 : index
    %115 = vector.load %arg0[%c2_137, %c1_138, %c0_139, %c0_140] : memref<4x2x8x128xbf16, #tpu.memory_space<vmem>>, vector<1x1x7x128xbf16>
    %116 = vector.shape_cast %115 : vector<1x1x7x128xbf16> to vector<7x128xbf16>
    %c0_141 = arith.constant 0 : index
    %c0_142 = arith.constant 0 : index
    %c0_143 = arith.constant 0 : index
    %117 = vector.load %arg2[%c0_141, %c0_142, %c0_143] : memref<5x128x224xbf16, #tpu.memory_space<vmem>>, vector<1x128x224xbf16>
    %118 = vector.shape_cast %117 : vector<1x128x224xbf16> to vector<128x224xbf16>
    %cst_144 = arith.constant dense<0.000000e+00> : vector<7x224xf32>
    %119 = tpu.matmul %116, %118, %cst_144 {dimension_numbers = #tpu.dot_dimension_numbers<[1], [0], [0], [1], [0, 0, 1, 1], [], []>} : vector<7x128xbf16>, vector<128x224xbf16>, vector<7x224xf32> -> vector<7x224xf32>
    %120 = vector.broadcast %114 : vector<1x224xf32> to vector<7x224xf32>
    %121 = arith.addf %120, %119 : vector<7x224xf32>
    %c3_145 = arith.constant 3 : index
    %c1_146 = arith.constant 1 : index
    %c0_147 = arith.constant 0 : index
    %c0_148 = arith.constant 0 : index
    %122 = vector.load %arg0[%c3_145, %c1_146, %c0_147, %c0_148] : memref<4x2x8x128xbf16, #tpu.memory_space<vmem>>, vector<1x1x7x128xbf16>
    %123 = vector.shape_cast %122 : vector<1x1x7x128xbf16> to vector<7x128xbf16>
    %c1_149 = arith.constant 1 : index
    %c0_150 = arith.constant 0 : index
    %c0_151 = arith.constant 0 : index
    %124 = vector.load %arg2[%c1_149, %c0_150, %c0_151] : memref<5x128x224xbf16, #tpu.memory_space<vmem>>, vector<1x128x224xbf16>
    %125 = vector.shape_cast %124 : vector<1x128x224xbf16> to vector<128x224xbf16>
    %cst_152 = arith.constant dense<0.000000e+00> : vector<7x224xf32>
    %126 = tpu.matmul %123, %125, %cst_152 {dimension_numbers = #tpu.dot_dimension_numbers<[1], [0], [0], [1], [0, 0, 1, 1], [], []>} : vector<7x128xbf16>, vector<128x224xbf16>, vector<7x224xf32> -> vector<7x224xf32>
    %127 = arith.addf %121, %126 : vector<7x224xf32>
    %c0_153 = arith.constant 0 : index
    %c1_154 = arith.constant 1 : index
    %c1_155 = arith.constant 1 : index
    %c0_156 = arith.constant 0 : index
    %128 = vector.load %arg0[%c0_153, %c1_154, %c1_155, %c0_156] : memref<4x2x8x128xbf16, #tpu.memory_space<vmem>>, vector<1x1x7x128xbf16>
    %129 = vector.shape_cast %128 : vector<1x1x7x128xbf16> to vector<7x128xbf16>
    %c2_157 = arith.constant 2 : index
    %c0_158 = arith.constant 0 : index
    %c0_159 = arith.constant 0 : index
    %130 = vector.load %arg2[%c2_157, %c0_158, %c0_159] : memref<5x128x224xbf16, #tpu.memory_space<vmem>>, vector<1x128x224xbf16>
    %131 = vector.shape_cast %130 : vector<1x128x224xbf16> to vector<128x224xbf16>
    %cst_160 = arith.constant dense<0.000000e+00> : vector<7x224xf32>
    %132 = tpu.matmul %129, %131, %cst_160 {dimension_numbers = #tpu.dot_dimension_numbers<[1], [0], [0], [1], [0, 0, 1, 1], [], []>} : vector<7x128xbf16>, vector<128x224xbf16>, vector<7x224xf32> -> vector<7x224xf32>
    %133 = arith.addf %127, %132 : vector<7x224xf32>
    %c1_161 = arith.constant 1 : index
    %c1_162 = arith.constant 1 : index
    %c1_163 = arith.constant 1 : index
    %c0_164 = arith.constant 0 : index
    %134 = vector.load %arg0[%c1_161, %c1_162, %c1_163, %c0_164] : memref<4x2x8x128xbf16, #tpu.memory_space<vmem>>, vector<1x1x7x128xbf16>
    %135 = vector.shape_cast %134 : vector<1x1x7x128xbf16> to vector<7x128xbf16>
    %c3_165 = arith.constant 3 : index
    %c0_166 = arith.constant 0 : index
    %c0_167 = arith.constant 0 : index
    %136 = vector.load %arg2[%c3_165, %c0_166, %c0_167] : memref<5x128x224xbf16, #tpu.memory_space<vmem>>, vector<1x128x224xbf16>
    %137 = vector.shape_cast %136 : vector<1x128x224xbf16> to vector<128x224xbf16>
    %cst_168 = arith.constant dense<0.000000e+00> : vector<7x224xf32>
    %138 = tpu.matmul %135, %137, %cst_168 {dimension_numbers = #tpu.dot_dimension_numbers<[1], [0], [0], [1], [0, 0, 1, 1], [], []>} : vector<7x128xbf16>, vector<128x224xbf16>, vector<7x224xf32> -> vector<7x224xf32>
    %139 = arith.addf %133, %138 : vector<7x224xf32>
    %c2_169 = arith.constant 2 : index
    %c1_170 = arith.constant 1 : index
    %c1_171 = arith.constant 1 : index
    %c0_172 = arith.constant 0 : index
    %140 = vector.load %arg0[%c2_169, %c1_170, %c1_171, %c0_172] : memref<4x2x8x128xbf16, #tpu.memory_space<vmem>>, vector<1x1x7x128xbf16>
    %141 = vector.shape_cast %140 : vector<1x1x7x128xbf16> to vector<7x128xbf16>
    %c4_173 = arith.constant 4 : index
    %c0_174 = arith.constant 0 : index
    %c0_175 = arith.constant 0 : index
    %142 = vector.load %arg2[%c4_173, %c0_174, %c0_175] : memref<5x128x224xbf16, #tpu.memory_space<vmem>>, vector<1x128x224xbf16>
    %143 = vector.shape_cast %142 : vector<1x128x224xbf16> to vector<128x224xbf16>
    %cst_176 = arith.constant dense<0.000000e+00> : vector<7x224xf32>
    %144 = tpu.matmul %141, %143, %cst_176 {dimension_numbers = #tpu.dot_dimension_numbers<[1], [0], [0], [1], [0, 0, 1, 1], [], []>} : vector<7x128xbf16>, vector<128x224xbf16>, vector<7x224xf32> -> vector<7x224xf32>
    %145 = arith.addf %139, %144 : vector<7x224xf32>
    %cst_177 = arith.constant 0.000000e+00 : f32
    %146 = vector.broadcast %cst_177 : f32 to vector<7x224xf32>
    %147 = arith.maximumf %145, %146 : vector<7x224xf32>
    %148 = arith.truncf %147 : vector<7x224xf32> to vector<7x224xbf16>
    %c1_178 = arith.constant 1 : index
    %c1_179 = arith.constant 1 : index
    %c0_180 = arith.constant 0 : index
    %c0_181 = arith.constant 0 : index
    %149 = vector.load %arg16[%c1_178, %c1_179, %c0_180, %c0_181] : memref<2x2x7x224xbf16, #tpu.memory_space<vmem>>, vector<1x1x7x224xbf16>
    %150 = vector.shape_cast %149 : vector<1x1x7x224xbf16> to vector<7x224xbf16>
    %151 = vector.shape_cast %148 : vector<7x224xbf16> to vector<1x1x7x224xbf16>
    tpu.vector_store %arg16[%c1_178, %c1_179, %c0_180, %c0_181], %151 {strides = array<i32>} : memref<2x2x7x224xbf16, #tpu.memory_space<vmem>>, vector<1x1x7x224xbf16>,
    %c0_182 = arith.constant 0 : index
    %c0_183 = arith.constant 0 : index
    %152 = vector.load %arg6[%c0_182, %c0_183] : memref<1x320xf32, #tpu.memory_space<vmem>>, vector<1x320xf32>
    %c0_184 = arith.constant 0 : index
    %c0_185 = arith.constant 0 : index
    %c0_186 = arith.constant 0 : index
    %c0_187 = arith.constant 0 : index
    %153 = vector.load %arg16[%c0_184, %c0_185, %c0_186, %c0_187] : memref<2x2x7x224xbf16, #tpu.memory_space<vmem>>, vector<1x1x5x224xbf16>
    %154 = vector.shape_cast %153 : vector<1x1x5x224xbf16> to vector<5x224xbf16>
    %c0_188 = arith.constant 0 : index
    %c0_189 = arith.constant 0 : index
    %c0_190 = arith.constant 0 : index
    %155 = vector.load %arg3[%c0_188, %c0_189, %c0_190] : memref<5x224x320xbf16, #tpu.memory_space<vmem>>, vector<1x224x320xbf16>
    %156 = vector.shape_cast %155 : vector<1x224x320xbf16> to vector<224x320xbf16>
    %cst_191 = arith.constant dense<0.000000e+00> : vector<5x320xf32>
    %157 = tpu.matmul %154, %156, %cst_191 {dimension_numbers = #tpu.dot_dimension_numbers<[1], [0], [0], [1], [0, 0, 1, 1], [], []>} : vector<5x224xbf16>, vector<224x320xbf16>, vector<5x320xf32> -> vector<5x320xf32>
    %158 = vector.broadcast %152 : vector<1x320xf32> to vector<5x320xf32>
    %159 = arith.addf %158, %157 : vector<5x320xf32>
    %c1_192 = arith.constant 1 : index
    %c0_193 = arith.constant 0 : index
    %c0_194 = arith.constant 0 : index
    %c0_195 = arith.constant 0 : index
    %160 = vector.load %arg16[%c1_192, %c0_193, %c0_194, %c0_195] : memref<2x2x7x224xbf16, #tpu.memory_space<vmem>>, vector<1x1x5x224xbf16>
    %161 = vector.shape_cast %160 : vector<1x1x5x224xbf16> to vector<5x224xbf16>
    %c1_196 = arith.constant 1 : index
    %c0_197 = arith.constant 0 : index
    %c0_198 = arith.constant 0 : index
    %162 = vector.load %arg3[%c1_196, %c0_197, %c0_198] : memref<5x224x320xbf16, #tpu.memory_space<vmem>>, vector<1x224x320xbf16>
    %163 = vector.shape_cast %162 : vector<1x224x320xbf16> to vector<224x320xbf16>
    %cst_199 = arith.constant dense<0.000000e+00> : vector<5x320xf32>
    %164 = tpu.matmul %161, %163, %cst_199 {dimension_numbers = #tpu.dot_dimension_numbers<[1], [0], [0], [1], [0, 0, 1, 1], [], []>} : vector<5x224xbf16>, vector<224x320xbf16>, vector<5x320xf32> -> vector<5x320xf32>
    %165 = arith.addf %159, %164 : vector<5x320xf32>
    %c0_200 = arith.constant 0 : index
    %c0_201 = arith.constant 0 : index
    %c1_202 = arith.constant 1 : index
    %c0_203 = arith.constant 0 : index
    %166 = vector.load %arg16[%c0_200, %c0_201, %c1_202, %c0_203] : memref<2x2x7x224xbf16, #tpu.memory_space<vmem>>, vector<1x1x5x224xbf16>
    %167 = vector.shape_cast %166 : vector<1x1x5x224xbf16> to vector<5x224xbf16>
    %c2_204 = arith.constant 2 : index
    %c0_205 = arith.constant 0 : index
    %c0_206 = arith.constant 0 : index
    %168 = vector.load %arg3[%c2_204, %c0_205, %c0_206] : memref<5x224x320xbf16, #tpu.memory_space<vmem>>, vector<1x224x320xbf16>
    %169 = vector.shape_cast %168 : vector<1x224x320xbf16> to vector<224x320xbf16>
    %cst_207 = arith.constant dense<0.000000e+00> : vector<5x320xf32>
    %170 = tpu.matmul %167, %169, %cst_207 {dimension_numbers = #tpu.dot_dimension_numbers<[1], [0], [0], [1], [0, 0, 1, 1], [], []>} : vector<5x224xbf16>, vector<224x320xbf16>, vector<5x320xf32> -> vector<5x320xf32>
    %171 = arith.addf %165, %170 : vector<5x320xf32>
    %c1_208 = arith.constant 1 : index
    %c0_209 = arith.constant 0 : index
    %c1_210 = arith.constant 1 : index
    %c0_211 = arith.constant 0 : index
    %172 = vector.load %arg16[%c1_208, %c0_209, %c1_210, %c0_211] : memref<2x2x7x224xbf16, #tpu.memory_space<vmem>>, vector<1x1x5x224xbf16>
    %173 = vector.shape_cast %172 : vector<1x1x5x224xbf16> to vector<5x224xbf16>
    %c3_212 = arith.constant 3 : index
    %c0_213 = arith.constant 0 : index
    %c0_214 = arith.constant 0 : index
    %174 = vector.load %arg3[%c3_212, %c0_213, %c0_214] : memref<5x224x320xbf16, #tpu.memory_space<vmem>>, vector<1x224x320xbf16>
    %175 = vector.shape_cast %174 : vector<1x224x320xbf16> to vector<224x320xbf16>
    %cst_215 = arith.constant dense<0.000000e+00> : vector<5x320xf32>
    %176 = tpu.matmul %173, %175, %cst_215 {dimension_numbers = #tpu.dot_dimension_numbers<[1], [0], [0], [1], [0, 0, 1, 1], [], []>} : vector<5x224xbf16>, vector<224x320xbf16>, vector<5x320xf32> -> vector<5x320xf32>
    %177 = arith.addf %171, %176 : vector<5x320xf32>
    %c0_216 = arith.constant 0 : index
    %c0_217 = arith.constant 0 : index
    %c2_218 = arith.constant 2 : index
    %c0_219 = arith.constant 0 : index
    %178 = vector.load %arg16[%c0_216, %c0_217, %c2_218, %c0_219] : memref<2x2x7x224xbf16, #tpu.memory_space<vmem>>, vector<1x1x5x224xbf16>
    %179 = vector.shape_cast %178 : vector<1x1x5x224xbf16> to vector<5x224xbf16>
    %c4_220 = arith.constant 4 : index
    %c0_221 = arith.constant 0 : index
    %c0_222 = arith.constant 0 : index
    %180 = vector.load %arg3[%c4_220, %c0_221, %c0_222] : memref<5x224x320xbf16, #tpu.memory_space<vmem>>, vector<1x224x320xbf16>
    %181 = vector.shape_cast %180 : vector<1x224x320xbf16> to vector<224x320xbf16>
    %cst_223 = arith.constant dense<0.000000e+00> : vector<5x320xf32>
    %182 = tpu.matmul %179, %181, %cst_223 {dimension_numbers = #tpu.dot_dimension_numbers<[1], [0], [0], [1], [0, 0, 1, 1], [], []>} : vector<5x224xbf16>, vector<224x320xbf16>, vector<5x320xf32> -> vector<5x320xf32>
    %183 = arith.addf %177, %182 : vector<5x320xf32>
    %cst_224 = arith.constant 0.000000e+00 : f32
    %184 = vector.broadcast %cst_224 : f32 to vector<5x320xf32>
    %185 = arith.maximumf %183, %184 : vector<5x320xf32>
    %186 = arith.truncf %185 : vector<5x320xf32> to vector<5x320xbf16>
    %c0_225 = arith.constant 0 : index
    %c0_226 = arith.constant 0 : index
    %c0_227 = arith.constant 0 : index
    %187 = vector.load %arg17[%c0_225, %c0_226, %c0_227] : memref<2x5x320xbf16, #tpu.memory_space<vmem>>, vector<1x5x320xbf16>
    %188 = vector.shape_cast %187 : vector<1x5x320xbf16> to vector<5x320xbf16>
    %189 = vector.shape_cast %186 : vector<5x320xbf16> to vector<1x5x320xbf16>
    tpu.vector_store %arg17[%c0_225, %c0_226, %c0_227], %189 {strides = array<i32>} : memref<2x5x320xbf16, #tpu.memory_space<vmem>>, vector<1x5x320xbf16>,
    %c0_228 = arith.constant 0 : index
    %c0_229 = arith.constant 0 : index
    %190 = vector.load %arg6[%c0_228, %c0_229] : memref<1x320xf32, #tpu.memory_space<vmem>>, vector<1x320xf32>
    %c0_230 = arith.constant 0 : index
    %c1_231 = arith.constant 1 : index
    %c0_232 = arith.constant 0 : index
    %c0_233 = arith.constant 0 : index
    %191 = vector.load %arg16[%c0_230, %c1_231, %c0_232, %c0_233] : memref<2x2x7x224xbf16, #tpu.memory_space<vmem>>, vector<1x1x5x224xbf16>
    %192 = vector.shape_cast %191 : vector<1x1x5x224xbf16> to vector<5x224xbf16>
    %c0_234 = arith.constant 0 : index
    %c0_235 = arith.constant 0 : index
    %c0_236 = arith.constant 0 : index
    %193 = vector.load %arg3[%c0_234, %c0_235, %c0_236] : memref<5x224x320xbf16, #tpu.memory_space<vmem>>, vector<1x224x320xbf16>
    %194 = vector.shape_cast %193 : vector<1x224x320xbf16> to vector<224x320xbf16>
    %cst_237 = arith.constant dense<0.000000e+00> : vector<5x320xf32>
    %195 = tpu.matmul %192, %194, %cst_237 {dimension_numbers = #tpu.dot_dimension_numbers<[1], [0], [0], [1], [0, 0, 1, 1], [], []>} : vector<5x224xbf16>, vector<224x320xbf16>, vector<5x320xf32> -> vector<5x320xf32>
    %196 = vector.broadcast %190 : vector<1x320xf32> to vector<5x320xf32>
    %197 = arith.addf %196, %195 : vector<5x320xf32>
    %c1_238 = arith.constant 1 : index
    %c1_239 = arith.constant 1 : index
    %c0_240 = arith.constant 0 : index
    %c0_241 = arith.constant 0 : index
    %198 = vector.load %arg16[%c1_238, %c1_239, %c0_240, %c0_241] : memref<2x2x7x224xbf16, #tpu.memory_space<vmem>>, vector<1x1x5x224xbf16>
    %199 = vector.shape_cast %198 : vector<1x1x5x224xbf16> to vector<5x224xbf16>
    %c1_242 = arith.constant 1 : index
    %c0_243 = arith.constant 0 : index
    %c0_244 = arith.constant 0 : index
    %200 = vector.load %arg3[%c1_242, %c0_243, %c0_244] : memref<5x224x320xbf16, #tpu.memory_space<vmem>>, vector<1x224x320xbf16>
    %201 = vector.shape_cast %200 : vector<1x224x320xbf16> to vector<224x320xbf16>
    %cst_245 = arith.constant dense<0.000000e+00> : vector<5x320xf32>
    %202 = tpu.matmul %199, %201, %cst_245 {dimension_numbers = #tpu.dot_dimension_numbers<[1], [0], [0], [1], [0, 0, 1, 1], [], []>} : vector<5x224xbf16>, vector<224x320xbf16>, vector<5x320xf32> -> vector<5x320xf32>
    %203 = arith.addf %197, %202 : vector<5x320xf32>
    %c0_246 = arith.constant 0 : index
    %c1_247 = arith.constant 1 : index
    %c1_248 = arith.constant 1 : index
    %c0_249 = arith.constant 0 : index
    %204 = vector.load %arg16[%c0_246, %c1_247, %c1_248, %c0_249] : memref<2x2x7x224xbf16, #tpu.memory_space<vmem>>, vector<1x1x5x224xbf16>
    %205 = vector.shape_cast %204 : vector<1x1x5x224xbf16> to vector<5x224xbf16>
    %c2_250 = arith.constant 2 : index
    %c0_251 = arith.constant 0 : index
    %c0_252 = arith.constant 0 : index
    %206 = vector.load %arg3[%c2_250, %c0_251, %c0_252] : memref<5x224x320xbf16, #tpu.memory_space<vmem>>, vector<1x224x320xbf16>
    %207 = vector.shape_cast %206 : vector<1x224x320xbf16> to vector<224x320xbf16>
    %cst_253 = arith.constant dense<0.000000e+00> : vector<5x320xf32>
    %208 = tpu.matmul %205, %207, %cst_253 {dimension_numbers = #tpu.dot_dimension_numbers<[1], [0], [0], [1], [0, 0, 1, 1], [], []>} : vector<5x224xbf16>, vector<224x320xbf16>, vector<5x320xf32> -> vector<5x320xf32>
    %209 = arith.addf %203, %208 : vector<5x320xf32>
    %c1_254 = arith.constant 1 : index
    %c1_255 = arith.constant 1 : index
    %c1_256 = arith.constant 1 : index
    %c0_257 = arith.constant 0 : index
    %210 = vector.load %arg16[%c1_254, %c1_255, %c1_256, %c0_257] : memref<2x2x7x224xbf16, #tpu.memory_space<vmem>>, vector<1x1x5x224xbf16>
    %211 = vector.shape_cast %210 : vector<1x1x5x224xbf16> to vector<5x224xbf16>
    %c3_258 = arith.constant 3 : index
    %c0_259 = arith.constant 0 : index
    %c0_260 = arith.constant 0 : index
    %212 = vector.load %arg3[%c3_258, %c0_259, %c0_260] : memref<5x224x320xbf16, #tpu.memory_space<vmem>>, vector<1x224x320xbf16>
    %213 = vector.shape_cast %212 : vector<1x224x320xbf16> to vector<224x320xbf16>
    %cst_261 = arith.constant dense<0.000000e+00> : vector<5x320xf32>
    %214 = tpu.matmul %211, %213, %cst_261 {dimension_numbers = #tpu.dot_dimension_numbers<[1], [0], [0], [1], [0, 0, 1, 1], [], []>} : vector<5x224xbf16>, vector<224x320xbf16>, vector<5x320xf32> -> vector<5x320xf32>
    %215 = arith.addf %209, %214 : vector<5x320xf32>
    %c0_262 = arith.constant 0 : index
    %c1_263 = arith.constant 1 : index
    %c2_264 = arith.constant 2 : index
    %c0_265 = arith.constant 0 : index
    %216 = vector.load %arg16[%c0_262, %c1_263, %c2_264, %c0_265] : memref<2x2x7x224xbf16, #tpu.memory_space<vmem>>, vector<1x1x5x224xbf16>
    %217 = vector.shape_cast %216 : vector<1x1x5x224xbf16> to vector<5x224xbf16>
    %c4_266 = arith.constant 4 : index
    %c0_267 = arith.constant 0 : index
    %c0_268 = arith.constant 0 : index
    %218 = vector.load %arg3[%c4_266, %c0_267, %c0_268] : memref<5x224x320xbf16, #tpu.memory_space<vmem>>, vector<1x224x320xbf16>
    %219 = vector.shape_cast %218 : vector<1x224x320xbf16> to vector<224x320xbf16>
    %cst_269 = arith.constant dense<0.000000e+00> : vector<5x320xf32>
    %220 = tpu.matmul %217, %219, %cst_269 {dimension_numbers = #tpu.dot_dimension_numbers<[1], [0], [0], [1], [0, 0, 1, 1], [], []>} : vector<5x224xbf16>, vector<224x320xbf16>, vector<5x320xf32> -> vector<5x320xf32>
    %221 = arith.addf %215, %220 : vector<5x320xf32>
    %cst_270 = arith.constant 0.000000e+00 : f32
    %222 = vector.broadcast %cst_270 : f32 to vector<5x320xf32>
    %223 = arith.maximumf %221, %222 : vector<5x320xf32>
    %224 = arith.truncf %223 : vector<5x320xf32> to vector<5x320xbf16>
    %c1_271 = arith.constant 1 : index
    %c0_272 = arith.constant 0 : index
    %c0_273 = arith.constant 0 : index
    %225 = vector.load %arg17[%c1_271, %c0_272, %c0_273] : memref<2x5x320xbf16, #tpu.memory_space<vmem>>, vector<1x5x320xbf16>
    %226 = vector.shape_cast %225 : vector<1x5x320xbf16> to vector<5x320xbf16>
    %227 = vector.shape_cast %224 : vector<5x320xbf16> to vector<1x5x320xbf16>
    tpu.vector_store %arg17[%c1_271, %c0_272, %c0_273], %227 {strides = array<i32>} : memref<2x5x320xbf16, #tpu.memory_space<vmem>>, vector<1x5x320xbf16>,
    %c0_274 = arith.constant 0 : index
    %c0_275 = arith.constant 0 : index
    %228 = vector.load %arg7[%c0_274, %c0_275] : memref<1x256xf32, #tpu.memory_space<vmem>>, vector<1x256xf32>
    %c0_276 = arith.constant 0 : index
    %c0_277 = arith.constant 0 : index
    %c0_278 = arith.constant 0 : index
    %229 = vector.load %arg17[%c0_276, %c0_277, %c0_278] : memref<2x5x320xbf16, #tpu.memory_space<vmem>>, vector<2x1x320xbf16>
    %230 = vector.shape_cast %229 : vector<2x1x320xbf16> to vector<2x320xbf16>
    %c0_279 = arith.constant 0 : index
    %c0_280 = arith.constant 0 : index
    %c0_281 = arith.constant 0 : index
    %231 = vector.load %arg4[%c0_279, %c0_280, %c0_281] : memref<5x320x256xbf16, #tpu.memory_space<vmem>>, vector<1x320x256xbf16>
    %232 = vector.shape_cast %231 : vector<1x320x256xbf16> to vector<320x256xbf16>
    %cst_282 = arith.constant dense<0.000000e+00> : vector<2x256xf32>
    %233 = tpu.matmul %230, %232, %cst_282 {dimension_numbers = #tpu.dot_dimension_numbers<[1], [0], [0], [1], [0, 0, 1, 1], [], []>} : vector<2x320xbf16>, vector<320x256xbf16>, vector<2x256xf32> -> vector<2x256xf32>
    %234 = vector.broadcast %228 : vector<1x256xf32> to vector<2x256xf32>
    %235 = arith.addf %234, %233 : vector<2x256xf32>
    %c0_283 = arith.constant 0 : index
    %c1_284 = arith.constant 1 : index
    %c0_285 = arith.constant 0 : index
    %236 = vector.load %arg17[%c0_283, %c1_284, %c0_285] : memref<2x5x320xbf16, #tpu.memory_space<vmem>>, vector<2x1x320xbf16>
    %237 = vector.shape_cast %236 : vector<2x1x320xbf16> to vector<2x320xbf16>
    %c1_286 = arith.constant 1 : index
    %c0_287 = arith.constant 0 : index
    %c0_288 = arith.constant 0 : index
    %238 = vector.load %arg4[%c1_286, %c0_287, %c0_288] : memref<5x320x256xbf16, #tpu.memory_space<vmem>>, vector<1x320x256xbf16>
    %239 = vector.shape_cast %238 : vector<1x320x256xbf16> to vector<320x256xbf16>
    %cst_289 = arith.constant dense<0.000000e+00> : vector<2x256xf32>
    %240 = tpu.matmul %237, %239, %cst_289 {dimension_numbers = #tpu.dot_dimension_numbers<[1], [0], [0], [1], [0, 0, 1, 1], [], []>} : vector<2x320xbf16>, vector<320x256xbf16>, vector<2x256xf32> -> vector<2x256xf32>
    %241 = arith.addf %235, %240 : vector<2x256xf32>
    %c0_290 = arith.constant 0 : index
    %c2_291 = arith.constant 2 : index
    %c0_292 = arith.constant 0 : index
    %242 = vector.load %arg17[%c0_290, %c2_291, %c0_292] : memref<2x5x320xbf16, #tpu.memory_space<vmem>>, vector<2x1x320xbf16>
    %243 = vector.shape_cast %242 : vector<2x1x320xbf16> to vector<2x320xbf16>
    %c2_293 = arith.constant 2 : index
    %c0_294 = arith.constant 0 : index
    %c0_295 = arith.constant 0 : index
    %244 = vector.load %arg4[%c2_293, %c0_294, %c0_295] : memref<5x320x256xbf16, #tpu.memory_space<vmem>>, vector<1x320x256xbf16>
    %245 = vector.shape_cast %244 : vector<1x320x256xbf16> to vector<320x256xbf16>
    %cst_296 = arith.constant dense<0.000000e+00> : vector<2x256xf32>
    %246 = tpu.matmul %243, %245, %cst_296 {dimension_numbers = #tpu.dot_dimension_numbers<[1], [0], [0], [1], [0, 0, 1, 1], [], []>} : vector<2x320xbf16>, vector<320x256xbf16>, vector<2x256xf32> -> vector<2x256xf32>
    %247 = arith.addf %241, %246 : vector<2x256xf32>
    %c0_297 = arith.constant 0 : index
    %c3_298 = arith.constant 3 : index
    %c0_299 = arith.constant 0 : index
    %248 = vector.load %arg17[%c0_297, %c3_298, %c0_299] : memref<2x5x320xbf16, #tpu.memory_space<vmem>>, vector<2x1x320xbf16>
    %249 = vector.shape_cast %248 : vector<2x1x320xbf16> to vector<2x320xbf16>
    %c3_300 = arith.constant 3 : index
    %c0_301 = arith.constant 0 : index
    %c0_302 = arith.constant 0 : index
    %250 = vector.load %arg4[%c3_300, %c0_301, %c0_302] : memref<5x320x256xbf16, #tpu.memory_space<vmem>>, vector<1x320x256xbf16>
    %251 = vector.shape_cast %250 : vector<1x320x256xbf16> to vector<320x256xbf16>
    %cst_303 = arith.constant dense<0.000000e+00> : vector<2x256xf32>
    %252 = tpu.matmul %249, %251, %cst_303 {dimension_numbers = #tpu.dot_dimension_numbers<[1], [0], [0], [1], [0, 0, 1, 1], [], []>} : vector<2x320xbf16>, vector<320x256xbf16>, vector<2x256xf32> -> vector<2x256xf32>
    %253 = arith.addf %247, %252 : vector<2x256xf32>
    %c0_304 = arith.constant 0 : index
    %c4_305 = arith.constant 4 : index
    %c0_306 = arith.constant 0 : index
    %254 = vector.load %arg17[%c0_304, %c4_305, %c0_306] : memref<2x5x320xbf16, #tpu.memory_space<vmem>>, vector<2x1x320xbf16>
    %255 = vector.shape_cast %254 : vector<2x1x320xbf16> to vector<2x320xbf16>
    %c4_307 = arith.constant 4 : index
    %c0_308 = arith.constant 0 : index
    %c0_309 = arith.constant 0 : index
    %256 = vector.load %arg4[%c4_307, %c0_308, %c0_309] : memref<5x320x256xbf16, #tpu.memory_space<vmem>>, vector<1x320x256xbf16>
    %257 = vector.shape_cast %256 : vector<1x320x256xbf16> to vector<320x256xbf16>
    %cst_310 = arith.constant dense<0.000000e+00> : vector<2x256xf32>
    %258 = tpu.matmul %255, %257, %cst_310 {dimension_numbers = #tpu.dot_dimension_numbers<[1], [0], [0], [1], [0, 0, 1, 1], [], []>} : vector<2x320xbf16>, vector<320x256xbf16>, vector<2x256xf32> -> vector<2x256xf32>
    %259 = arith.addf %253, %258 : vector<2x256xf32>
    %cst_311 = arith.constant 0.000000e+00 : f32
    %260 = vector.broadcast %cst_311 : f32 to vector<2x256xf32>
    %261 = arith.maximumf %259, %260 : vector<2x256xf32>
    %262 = arith.truncf %261 : vector<2x256xf32> to vector<2x256xbf16>
    %c0_312 = arith.constant 0 : index
    %c0_313 = arith.constant 0 : index
    %263 = vector.load %arg8[%c0_312, %c0_313] : memref<256x128xbf16, #tpu.memory_space<vmem>>, vector<256x128xbf16>
    %cst_314 = arith.constant dense<0.000000e+00> : vector<2x128xf32>
    %264 = tpu.matmul %262, %263, %cst_314 {dimension_numbers = #tpu.dot_dimension_numbers<[1], [0], [0], [1], [0, 0, 1, 1], [], []>} : vector<2x256xbf16>, vector<256x128xbf16>, vector<2x128xf32> -> vector<2x128xf32>
    %c0_315 = arith.constant 0 : index
    %c0_316 = arith.constant 0 : index
    %265 = vector.load %arg1[%c0_315, %c0_316] : memref<2x8xbf16, #tpu.memory_space<vmem>>, vector<2x8xbf16>
    %c0_317 = arith.constant 0 : index
    %c0_318 = arith.constant 0 : index
    %266 = vector.load %arg9[%c0_317, %c0_318] : memref<8x128xbf16, #tpu.memory_space<vmem>>, vector<8x128xbf16>
    %cst_319 = arith.constant dense<0.000000e+00> : vector<2x128xf32>
    %267 = tpu.matmul %265, %266, %cst_319 {dimension_numbers = #tpu.dot_dimension_numbers<[1], [0], [0], [1], [0, 0, 1, 1], [], []>} : vector<2x8xbf16>, vector<8x128xbf16>, vector<2x128xf32> -> vector<2x128xf32>
    %268 = arith.addf %264, %267 : vector<2x128xf32>
    %c0_320 = arith.constant 0 : index
    %c0_321 = arith.constant 0 : index
    %269 = vector.load %arg10[%c0_320, %c0_321] : memref<1x128xf32, #tpu.memory_space<vmem>>, vector<1x128xf32>
    %270 = vector.broadcast %269 : vector<1x128xf32> to vector<2x128xf32>
    %271 = arith.addf %268, %270 : vector<2x128xf32>
    %cst_322 = arith.constant 0.000000e+00 : f32
    %272 = vector.broadcast %cst_322 : f32 to vector<2x128xf32>
    %273 = arith.maximumf %271, %272 : vector<2x128xf32>
    %274 = arith.truncf %273 : vector<2x128xf32> to vector<2x128xbf16>
    %c0_323 = arith.constant 0 : index
    %c0_324 = arith.constant 0 : index
    %275 = vector.load %arg11[%c0_323, %c0_324] : memref<128x32xbf16, #tpu.memory_space<vmem>>, vector<128x32xbf16>
    %cst_325 = arith.constant dense<0.000000e+00> : vector<2x32xf32>
    %276 = tpu.matmul %274, %275, %cst_325 {dimension_numbers = #tpu.dot_dimension_numbers<[1], [0], [0], [1], [0, 0, 1, 1], [], []>} : vector<2x128xbf16>, vector<128x32xbf16>, vector<2x32xf32> -> vector<2x32xf32>
    %c0_326 = arith.constant 0 : index
    %c0_327 = arith.constant 0 : index
    %277 = vector.load %arg12[%c0_326, %c0_327] : memref<1x32xf32, #tpu.memory_space<vmem>>, vector<1x32xf32>
    %278 = vector.broadcast %277 : vector<1x32xf32> to vector<2x32xf32>
    %279 = arith.addf %276, %278 : vector<2x32xf32>
    %cst_328 = arith.constant 0.000000e+00 : f32
    %280 = vector.broadcast %cst_328 : f32 to vector<2x32xf32>
    %281 = arith.maximumf %279, %280 : vector<2x32xf32>
    %282 = arith.truncf %281 : vector<2x32xf32> to vector<2x32xbf16>
    %c0_329 = arith.constant 0 : index
    %c0_330 = arith.constant 0 : index
    %283 = vector.load %arg13[%c0_329, %c0_330] : memref<32x6xbf16, #tpu.memory_space<vmem>>, vector<32x6xbf16>
    %cst_331 = arith.constant dense<0.000000e+00> : vector<2x6xf32>
    %284 = tpu.matmul %282, %283, %cst_331 {dimension_numbers = #tpu.dot_dimension_numbers<[1], [0], [0], [1], [0, 0, 1, 1], [], []>} : vector<2x32xbf16>, vector<32x6xbf16>, vector<2x6xf32> -> vector<2x6xf32>
    %c0_332 = arith.constant 0 : index
    %c0_333 = arith.constant 0 : index
    %285 = vector.load %arg14[%c0_332, %c0_333] : memref<1x6xf32, #tpu.memory_space<vmem>>, vector<1x6xf32>
    %286 = vector.broadcast %285 : vector<1x6xf32> to vector<2x6xf32>
    %287 = arith.addf %284, %286 : vector<2x6xf32>
    %288 = math.tanh %287 : vector<2x6xf32>
    %cst_334 = arith.constant 1.000000e+00 : f32
    %289 = vector.broadcast %cst_334 : f32 to vector<2x6xf32>
    %290 = arith.mulf %288, %289 : vector<2x6xf32>
    %cst_335 = arith.constant 0.000000e+00 : f32
    %291 = vector.broadcast %cst_335 : f32 to vector<2x6xf32>
    %292 = arith.addf %290, %291 : vector<2x6xf32>
    %c0_336 = arith.constant 0 : index
    %c0_337 = arith.constant 0 : index
    %293 = vector.load %arg15[%c0_336, %c0_337] : memref<2x6xf32, #tpu.memory_space<vmem>>, vector<2x6xf32>
    tpu.vector_store %arg15[%c0_336, %c0_337], %292 {strides = array<i32>} : memref<2x6xf32, #tpu.memory_space<vmem>>, vector<2x6xf32>,
    return
  }
}

</mosaic_0001>

<llo_original>
// kernel: deterministic_policy_forward.1
$region0: #{deterministic_policy_forward.1}
  #allocation0 [shape = 'u32[]', space=smem, size = 0x4, offset = 0x4, fixed_abs, tag = 'smem constant byte address 0x4 - core index']
  #allocation1 [shape = 'u32[72,128]{1,0:T(1,128)}', space=vmem, size = 0x9000, scoped, tag = 'internal scratch']
  #allocation2 [shape = 'bf16[2,2,7,224]{3,2,1,0:T(8,128)(2,1)}', space=vmem, size = 0x4000, scoped, tag = 'scratch operand']
  #allocation3 [shape = 'bf16[2,5,320]{2,1,0:T(8,128)(2,1)}', space=vmem, size = 0x3000, scoped, tag = 'scratch operand']
  %s0 = inlined_call_operand.vmem [shape: bf16[4,2,8,128], index: 0, kind: input, shape index: {}]
  %s1 = inlined_call_operand.vmem [shape: bf16[2,8], index: 1, kind: input, shape index: {}]
  %s2 = inlined_call_operand.vmem [shape: bf16[5,128,224], index: 2, kind: input, shape index: {}]
  %s3 = inlined_call_operand.vmem [shape: bf16[5,224,320], index: 3, kind: input, shape index: {}]
  %s4 = inlined_call_operand.vmem [shape: bf16[5,320,256], index: 4, kind: input, shape index: {}]
  %s5 = inlined_call_operand.vmem [shape: f32[1,224], index: 5, kind: input, shape index: {}]
  %s6 = inlined_call_operand.vmem [shape: f32[1,320], index: 6, kind: input, shape index: {}]
  %s7 = inlined_call_operand.vmem [shape: f32[1,256], index: 7, kind: input, shape index: {}]
  %s8 = inlined_call_operand.vmem [shape: bf16[256,128], index: 8, kind: input, shape index: {}]
  %s9 = inlined_call_operand.vmem [shape: bf16[8,128], index: 9, kind: input, shape index: {}]
  %s10 = inlined_call_operand.vmem [shape: f32[1,128], index: 10, kind: input, shape index: {}]
  %s11 = inlined_call_operand.vmem [shape: bf16[128,32], index: 11, kind: input, shape index: {}]
  %s12 = inlined_call_operand.vmem [shape: f32[1,32], index: 12, kind: input, shape index: {}]
  %s13 = inlined_call_operand.vmem [shape: bf16[32,6], index: 13, kind: input, shape index: {}]
  %s14 = inlined_call_operand.vmem [shape: f32[1,6], index: 14, kind: input, shape index: {}]
  %s15 = inlined_call_operand.hbm [shape: f32[2,6], index: 15, kind: output, shape index: {}]
  %s16 = sld [smem:[#allocation0]]
  $region70: #{deterministic_policy_forward.1} parent=0
    _
  %s18 = ssub.s32 1, %s16
  %s19 = scalar_select 0, %s18, %s16
  $region1: #{deterministic_policy_forward.1} parent=0
    #allocation4 [shape = 'u8[1024]{0}', space=vmem, size = 0x400, scoped, tag = 'output window, operand 0, single buffered']
    #allocation5 [shape = 's32[1]{0}', space=sflag, size = 0x4, scoped, tag = 'scoped memory for deterministic_policy_forward.1']
    %20 = vsyncpa [#allocation5], 0
    // Predicated region
    $region2: #{deterministic_policy_forward.1} parent=1 // pred_check
      _
    $region3: #{deterministic_policy_forward.1} parent=1 // pred_check_branch
      %22 = sbr.rel (0) target = $region5
    $region4: #{deterministic_policy_forward.1} parent=1 // pred_region
      _
    $region5: #{deterministic_policy_forward.1} parent=1 // pred_fallthru
      _
    // Predicated region
    $region6: #{deterministic_policy_forward.1} parent=1 // pred_check
      _
    $region7: #{deterministic_policy_forward.1} parent=1 // pred_check_branch
      %24 = sbr.rel (0) target = $region9
    $region8: #{deterministic_policy_forward.1} parent=1 // pred_region
      _
    $region9: #{deterministic_policy_forward.1} parent=1 // pred_fallthru
      _
    // Predicated region
    $region10: #{deterministic_policy_forward.1} parent=1 // pred_check
      _
    $region11: #{deterministic_policy_forward.1} parent=1 // pred_check_branch
      %26 = sbr.rel (0) target = $region13
    $region12: #{deterministic_policy_forward.1} parent=1 // pred_region
      _
    $region13: #{deterministic_policy_forward.1} parent=1 // pred_fallthru
      _
    // Predicated region
    $region14: #{deterministic_policy_forward.1} parent=1 // pred_check
      _
    $region15: #{deterministic_policy_forward.1} parent=1 // pred_check_branch
      %28 = sbr.rel (0) target = $region17
    $region16: #{deterministic_policy_forward.1} parent=1 // pred_region
      _
    $region17: #{deterministic_policy_forward.1} parent=1 // pred_fallthru
      _
    // Predicated region
    $region18: #{deterministic_policy_forward.1} parent=1 // pred_check
      _
    $region19: #{deterministic_policy_forward.1} parent=1 // pred_check_branch
      %30 = sbr.rel (0) target = $region21
    $region20: #{deterministic_policy_forward.1} parent=1 // pred_region
      _
    $region21: #{deterministic_policy_forward.1} parent=1 // pred_fallthru
      _
    // Predicated region
    $region22: #{deterministic_policy_forward.1} parent=1 // pred_check
      _
    $region23: #{deterministic_policy_forward.1} parent=1 // pred_check_branch
      %32 = sbr.rel (0) target = $region25
    $region24: #{deterministic_policy_forward.1} parent=1 // pred_region
      _
    $region25: #{deterministic_policy_forward.1} parent=1 // pred_fallthru
      _
    // Predicated region
    $region26: #{deterministic_policy_forward.1} parent=1 // pred_check
      _
    $region27: #{deterministic_policy_forward.1} parent=1 // pred_check_branch
      %34 = sbr.rel (0) target = $region29
    $region28: #{deterministic_policy_forward.1} parent=1 // pred_region
      _
    $region29: #{deterministic_policy_forward.1} parent=1 // pred_fallthru
      _
    // Predicated region
    $region30: #{deterministic_policy_forward.1} parent=1 // pred_check
      _
    $region31: #{deterministic_policy_forward.1} parent=1 // pred_check_branch
      %36 = sbr.rel (0) target = $region33
    $region32: #{deterministic_policy_forward.1} parent=1 // pred_region
      _
    $region33: #{deterministic_policy_forward.1} parent=1 // pred_fallthru
      _
    // Predicated region
    $region34: #{deterministic_policy_forward.1} parent=1 // pred_check
      _
    $region35: #{deterministic_policy_forward.1} parent=1 // pred_check_branch
      %38 = sbr.rel (0) target = $region37
    $region36: #{deterministic_policy_forward.1} parent=1 // pred_region
      _
    $region37: #{deterministic_policy_forward.1} parent=1 // pred_fallthru
      _
    // Predicated region
    $region38: #{deterministic_policy_forward.1} parent=1 // pred_check
      _
    $region39: #{deterministic_policy_forward.1} parent=1 // pred_check_branch
      %40 = sbr.rel (0) target = $region41
    $region40: #{deterministic_policy_forward.1} parent=1 // pred_region
      _
    $region41: #{deterministic_policy_forward.1} parent=1 // pred_fallthru
      _
    // Predicated region
    $region42: #{deterministic_policy_forward.1} parent=1 // pred_check
      _
    $region43: #{deterministic_policy_forward.1} parent=1 // pred_check_branch
      %42 = sbr.rel (0) target = $region45
    $region44: #{deterministic_policy_forward.1} parent=1 // pred_region
      _
    $region45: #{deterministic_policy_forward.1} parent=1 // pred_fallthru
      _
    // Predicated region
    $region46: #{deterministic_policy_forward.1} parent=1 // pred_check
      _
    $region47: #{deterministic_policy_forward.1} parent=1 // pred_check_branch
      %44 = sbr.rel (0) target = $region49
    $region48: #{deterministic_policy_forward.1} parent=1 // pred_region
      _
    $region49: #{deterministic_policy_forward.1} parent=1 // pred_fallthru
      _
    // Predicated region
    $region50: #{deterministic_policy_forward.1} parent=1 // pred_check
      _
    $region51: #{deterministic_policy_forward.1} parent=1 // pred_check_branch
      %46 = sbr.rel (0) target = $region53
    $region52: #{deterministic_policy_forward.1} parent=1 // pred_region
      _
    $region53: #{deterministic_policy_forward.1} parent=1 // pred_fallthru
      _
    // Predicated region
    $region54: #{deterministic_policy_forward.1} parent=1 // pred_check
      _
    $region55: #{deterministic_policy_forward.1} parent=1 // pred_check_branch
      %48 = sbr.rel (0) target = $region57
    $region56: #{deterministic_policy_forward.1} parent=1 // pred_region
      _
    $region57: #{deterministic_policy_forward.1} parent=1 // pred_fallthru
      _
    // Predicated region
    $region58: #{deterministic_policy_forward.1} parent=1 // pred_check
      _
    $region59: #{deterministic_policy_forward.1} parent=1 // pred_check_branch
      %50 = sbr.rel (0) target = $region61
    $region60: #{deterministic_policy_forward.1} parent=1 // pred_region
      _
    $region61: #{deterministic_policy_forward.1} parent=1 // pred_fallthru
      _
    %v52 = vld [vmem:[%s5] sm:$0x3]
    %v53 = vld [vmem:[%s0] sm:$0xf]
    %v54 = vld [vmem:[%s2] sm:$0xff]
    %v55 = vld [vmem:[%s2 + $0x8] sm:$0xff]
    %v56 = vld [vmem:[%s2 + $0x10] sm:$0xff]
    %v57 = vld [vmem:[%s2 + $0x18] sm:$0xff]
    %v58 = vld [vmem:[%s2 + $0x20] sm:$0xff]
    %v59 = vld [vmem:[%s2 + $0x28] sm:$0xff]
    %v60 = vld [vmem:[%s2 + $0x30] sm:$0xff]
    %v61 = vld [vmem:[%s2 + $0x38] sm:$0xff]
    %v62 = vld [vmem:[%s2 + $0x40] sm:$0xff]
    %v63 = vld [vmem:[%s2 + $0x48] sm:$0xff]
    %v64 = vld [vmem:[%s2 + $0x50] sm:$0xff]
    %v65 = vld [vmem:[%s2 + $0x58] sm:$0xff]
    %v66 = vld [vmem:[%s2 + $0x60] sm:$0xff]
    %v67 = vld [vmem:[%s2 + $0x68] sm:$0xff]
    %v68 = vld [vmem:[%s2 + $0x70] sm:$0xff]
    %v69 = vld [vmem:[%s2 + $0x78] sm:$0xff]
    %v86 = vunpack.c.l.b16 %v54
    %v87 = vunpack.c.h.b16 %v54
    %v88 = vunpack.c.l.b16 %v55
    %v89 = vunpack.c.h.b16 %v55
    %v90 = vunpack.c.l.b16 %v56
    %v91 = vunpack.c.h.b16 %v56
    %v92 = vunpack.c.l.b16 %v57
    %v93 = vunpack.c.h.b16 %v57
    %v94 = vunpack.c.l.b16 %v58
    %v95 = vunpack.c.h.b16 %v58
    %v96 = vunpack.c.l.b16 %v59
    %v97 = vunpack.c.h.b16 %v59
    %v98 = vunpack.c.l.b16 %v60
    %v99 = vunpack.c.h.b16 %v60
    %v100 = vunpack.c.l.b16 %v61
    %v101 = vunpack.c.h.b16 %v61
    %v102 = vunpack.c.l.b16 %v62
    %v103 = vunpack.c.h.b16 %v62
    %v104 = vunpack.c.l.b16 %v63
    %v105 = vunpack.c.h.b16 %v63
    %v106 = vunpack.c.l.b16 %v64
    %v107 = vunpack.c.h.b16 %v64
    %v108 = vunpack.c.l.b16 %v65
    %v109 = vunpack.c.h.b16 %v65
    %v110 = vunpack.c.l.b16 %v66
    %v111 = vunpack.c.h.b16 %v66
    %v112 = vunpack.c.l.b16 %v67
    %v113 = vunpack.c.h.b16 %v67
    %v114 = vunpack.c.l.b16 %v68
    %v115 = vunpack.c.h.b16 %v68
    %v116 = vunpack.c.l.b16 %v69
    %v117 = vunpack.c.h.b16 %v69
    %v118 = vpack.c.b16 %v88, %v86
    %v119 = vpack.c.b16 %v89, %v87
    %v120 = vpack.c.b16 %v92, %v90
    %v121 = vpack.c.b16 %v93, %v91
    %v122 = vpack.c.b16 %v96, %v94
    %v123 = vpack.c.b16 %v97, %v95
    %v124 = vpack.c.b16 %v100, %v98
    %v125 = vpack.c.b16 %v101, %v99
    %v126 = vpack.c.b16 %v104, %v102
    %v127 = vpack.c.b16 %v105, %v103
    %v128 = vpack.c.b16 %v108, %v106
    %v129 = vpack.c.b16 %v109, %v107
    %v130 = vpack.c.b16 %v112, %v110
    %v131 = vpack.c.b16 %v113, %v111
    %v132 = vpack.c.b16 %v116, %v114
    %v133 = vpack.c.b16 %v117, %v115
    %150 = vmatpush.bf16.msra.mxu0 %v132
    %151 = vmatpush.bf16.msra.mxu0 %v130
    %152 = vmatpush.bf16.msra.mxu0 %v128
    %153 = vmatpush.bf16.msra.mxu0 %v126
    %154 = vmatpush.bf16.msra.mxu0 %v124
    %155 = vmatpush.bf16.msra.mxu0 %v122
    %156 = vmatpush.bf16.msra.mxu0 %v120
    %157 = vmatpush.bf16.msra.mxu0 %v118
    %158 = vmatmul.bf16.gmra.mxu0 %v53
    %v159 = vpop.f32.mrf.mxu0
    %v160 = vadd.f32 0.0, %v159
    %v161 = vpop.f32.mrf.mxu0
    %162 = vdwg.mxu0
    %163 = vmatpush.bf16.msra.mxu0 %v133
    %164 = vmatpush.bf16.msra.mxu0 %v131
    %165 = vmatpush.bf16.msra.mxu0 %v129
    %166 = vmatpush.bf16.msra.mxu0 %v127
    %167 = vmatpush.bf16.msra.mxu0 %v125
    %168 = vmatpush.bf16.msra.mxu0 %v123
    %169 = vmatpush.bf16.msra.mxu0 %v121
    %170 = vmatpush.bf16.msra.mxu0 %v119
    %171 = vmatmul.bf16.gmra.mxu0 %v53
    %v172 = vpop.f32.mrf.mxu0
    %v173 = vadd.f32 0.0, %v172
    %v174 = vpop.f32.mrf.mxu0
    %175 = vdwg.mxu0
    %v177 = vperm.slane %v52, 0
    %v178 = vperm.slane %v52, 1
    %v181 = vadd.f32 %v177, %v160
    %v182 = vadd.f32 %v178, %v173
    %s183 = scalar_lea.vmem %s0, 8
    %v184 = vld [vmem:[%s183] sm:$0xf]
    %s185 = scalar_lea.vmem %s2, 128
    %v186 = vld [vmem:[%s185] sm:$0xff]
    %v187 = vld [vmem:[%s185 + $0x8] sm:$0xff]
    %v188 = vld [vmem:[%s185 + $0x10] sm:$0xff]
    %v189 = vld [vmem:[%s185 + $0x18] sm:$0xff]
    %v190 = vld [vmem:[%s185 + $0x20] sm:$0xff]
    %v191 = vld [vmem:[%s185 + $0x28] sm:$0xff]
    %v192 = vld [vmem:[%s185 + $0x30] sm:$0xff]
    %v193 = vld [vmem:[%s185 + $0x38] sm:$0xff]
    %v194 = vld [vmem:[%s185 + $0x40] sm:$0xff]
    %v195 = vld [vmem:[%s185 + $0x48] sm:$0xff]
    %v196 = vld [vmem:[%s185 + $0x50] sm:$0xff]
    %v197 = vld [vmem:[%s185 + $0x58] sm:$0xff]
    %v198 = vld [vmem:[%s185 + $0x60] sm:$0xff]
    %v199 = vld [vmem:[%s185 + $0x68] sm:$0xff]
    %v200 = vld [vmem:[%s185 + $0x70] sm:$0xff]
    %v201 = vld [vmem:[%s185 + $0x78] sm:$0xff]
    %v218 = vunpack.c.l.b16 %v186
    %v219 = vunpack.c.h.b16 %v186
    %v220 = vunpack.c.l.b16 %v187
    %v221 = vunpack.c.h.b16 %v187
    %v222 = vunpack.c.l.b16 %v188
    %v223 = vunpack.c.h.b16 %v188
    %v224 = vunpack.c.l.b16 %v189
    %v225 = vunpack.c.h.b16 %v189
    %v226 = vunpack.c.l.b16 %v190
    %v227 = vunpack.c.h.b16 %v190
    %v228 = vunpack.c.l.b16 %v191
    %v229 = vunpack.c.h.b16 %v191
    %v230 = vunpack.c.l.b16 %v192
    %v231 = vunpack.c.h.b16 %v192
    %v232 = vunpack.c.l.b16 %v193
    %v233 = vunpack.c.h.b16 %v193
    %v234 = vunpack.c.l.b16 %v194
    %v235 = vunpack.c.h.b16 %v194
    %v236 = vunpack.c.l.b16 %v195
    %v237 = vunpack.c.h.b16 %v195
    %v238 = vunpack.c.l.b16 %v196
    %v239 = vunpack.c.h.b16 %v196
    %v240 = vunpack.c.l.b16 %v197
    %v241 = vunpack.c.h.b16 %v197
    %v242 = vunpack.c.l.b16 %v198
    %v243 = vunpack.c.h.b16 %v198
    %v244 = vunpack.c.l.b16 %v199
    %v245 = vunpack.c.h.b16 %v199
    %v246 = vunpack.c.l.b16 %v200
    %v247 = vunpack.c.h.b16 %v200
    %v248 = vunpack.c.l.b16 %v201
    %v249 = vunpack.c.h.b16 %v201
    %v250 = vpack.c.b16 %v220, %v218
    %v251 = vpack.c.b16 %v221, %v219
    %v252 = vpack.c.b16 %v224, %v222
    %v253 = vpack.c.b16 %v225, %v223
    %v254 = vpack.c.b16 %v228, %v226
    %v255 = vpack.c.b16 %v229, %v227
    %v256 = vpack.c.b16 %v232, %v230
    %v257 = vpack.c.b16 %v233, %v231
    %v258 = vpack.c.b16 %v236, %v234
    %v259 = vpack.c.b16 %v237, %v235
    %v260 = vpack.c.b16 %v240, %v238
    %v261 = vpack.c.b16 %v241, %v239
    %v262 = vpack.c.b16 %v244, %v242
    %v263 = vpack.c.b16 %v245, %v243
    %v264 = vpack.c.b16 %v248, %v246
    %v265 = vpack.c.b16 %v249, %v247
    %282 = vmatpush.bf16.msra.mxu0 %v264
    %283 = vmatpush.bf16.msra.mxu0 %v262
    %284 = vmatpush.bf16.msra.mxu0 %v260
    %285 = vmatpush.bf16.msra.mxu0 %v258
    %286 = vmatpush.bf16.msra.mxu0 %v256
    %287 = vmatpush.bf16.msra.mxu0 %v254
    %288 = vmatpush.bf16.msra.mxu0 %v252
    %289 = vmatpush.bf16.msra.mxu0 %v250
    %290 = vmatmul.bf16.gmra.mxu0 %v184
    %v291 = vpop.f32.mrf.mxu0
    %v292 = vadd.f32 0.0, %v291
    %v293 = vpop.f32.mrf.mxu0
    %294 = vdwg.mxu0
    %295 = vmatpush.bf16.msra.mxu0 %v265
    %296 = vmatpush.bf16.msra.mxu0 %v263
    %297 = vmatpush.bf16.msra.mxu0 %v261
    %298 = vmatpush.bf16.msra.mxu0 %v259
    %299 = vmatpush.bf16.msra.mxu0 %v257
    %300 = vmatpush.bf16.msra.mxu0 %v255
    %301 = vmatpush.bf16.msra.mxu0 %v253
    %302 = vmatpush.bf16.msra.mxu0 %v251
    %303 = vmatmul.bf16.gmra.mxu0 %v184
    %v304 = vpop.f32.mrf.mxu0
    %v305 = vadd.f32 0.0, %v304
    %v306 = vpop.f32.mrf.mxu0
    %307 = vdwg.mxu0
    %v308 = vadd.f32 %v181, %v292
    %v309 = vadd.f32 %v182, %v305
    %s310 = scalar_lea.vmem %s0, 16
    %v311 = vld [vmem:[%s310] sm:$0xf]
    %s312 = scalar_lea.vmem %s2, 256
    %v313 = vld [vmem:[%s312] sm:$0xff]
    %v314 = vld [vmem:[%s312 + $0x8] sm:$0xff]
    %v315 = vld [vmem:[%s312 + $0x10] sm:$0xff]
    %v316 = vld [vmem:[%s312 + $0x18] sm:$0xff]
    %v317 = vld [vmem:[%s312 + $0x20] sm:$0xff]
    %v318 = vld [vmem:[%s312 + $0x28] sm:$0xff]
    %v319 = vld [vmem:[%s312 + $0x30] sm:$0xff]
    %v320 = vld [vmem:[%s312 + $0x38] sm:$0xff]
    %v321 = vld [vmem:[%s312 + $0x40] sm:$0xff]
    %v322 = vld [vmem:[%s312 + $0x48] sm:$0xff]
    %v323 = vld [vmem:[%s312 + $0x50] sm:$0xff]
    %v324 = vld [vmem:[%s312 + $0x58] sm:$0xff]
    %v325 = vld [vmem:[%s312 + $0x60] sm:$0xff]
    %v326 = vld [vmem:[%s312 + $0x68] sm:$0xff]
    %v327 = vld [vmem:[%s312 + $0x70] sm:$0xff]
    %v328 = vld [vmem:[%s312 + $0x78] sm:$0xff]
    %v345 = vunpack.c.l.b16 %v313
    %v346 = vunpack.c.h.b16 %v313
    %v347 = vunpack.c.l.b16 %v314
    %v348 = vunpack.c.h.b16 %v314
    %v349 = vunpack.c.l.b16 %v315
    %v350 = vunpack.c.h.b16 %v315
    %v351 = vunpack.c.l.b16 %v316
    %v352 = vunpack.c.h.b16 %v316
    %v353 = vunpack.c.l.b16 %v317
    %v354 = vunpack.c.h.b16 %v317
    %v355 = vunpack.c.l.b16 %v318
    %v356 = vunpack.c.h.b16 %v318
    %v357 = vunpack.c.l.b16 %v319
    %v358 = vunpack.c.h.b16 %v319
    %v359 = vunpack.c.l.b16 %v320
    %v360 = vunpack.c.h.b16 %v320
    %v361 = vunpack.c.l.b16 %v321
    %v362 = vunpack.c.h.b16 %v321
    %v363 = vunpack.c.l.b16 %v322
    %v364 = vunpack.c.h.b16 %v322
    %v365 = vunpack.c.l.b16 %v323
    %v366 = vunpack.c.h.b16 %v323
    %v367 = vunpack.c.l.b16 %v324
    %v368 = vunpack.c.h.b16 %v324
    %v369 = vunpack.c.l.b16 %v325
    %v370 = vunpack.c.h.b16 %v325
    %v371 = vunpack.c.l.b16 %v326
    %v372 = vunpack.c.h.b16 %v326
    %v373 = vunpack.c.l.b16 %v327
    %v374 = vunpack.c.h.b16 %v327
    %v375 = vunpack.c.l.b16 %v328
    %v376 = vunpack.c.h.b16 %v328
    %v377 = vpack.c.b16 %v347, %v345
    %v378 = vpack.c.b16 %v348, %v346
    %v379 = vpack.c.b16 %v351, %v349
    %v380 = vpack.c.b16 %v352, %v350
    %v381 = vpack.c.b16 %v355, %v353
    %v382 = vpack.c.b16 %v356, %v354
    %v383 = vpack.c.b16 %v359, %v357
    %v384 = vpack.c.b16 %v360, %v358
    %v385 = vpack.c.b16 %v363, %v361
    %v386 = vpack.c.b16 %v364, %v362
    %v387 = vpack.c.b16 %v367, %v365
    %v388 = vpack.c.b16 %v368, %v366
    %v389 = vpack.c.b16 %v371, %v369
    %v390 = vpack.c.b16 %v372, %v370
    %v391 = vpack.c.b16 %v375, %v373
    %v392 = vpack.c.b16 %v376, %v374
    %409 = vmatpush.bf16.msra.mxu0 %v391
    %410 = vmatpush.bf16.msra.mxu0 %v389
    %411 = vmatpush.bf16.msra.mxu0 %v387
    %412 = vmatpush.bf16.msra.mxu0 %v385
    %413 = vmatpush.bf16.msra.mxu0 %v383
    %414 = vmatpush.bf16.msra.mxu0 %v381
    %415 = vmatpush.bf16.msra.mxu0 %v379
    %416 = vmatpush.bf16.msra.mxu0 %v377
    %417 = vmatmul.bf16.gmra.mxu0 %v311
    %v418 = vpop.f32.mrf.mxu0
    %v419 = vadd.f32 0.0, %v418
    %v420 = vpop.f32.mrf.mxu0
    %421 = vdwg.mxu0
    %422 = vmatpush.bf16.msra.mxu0 %v392
    %423 = vmatpush.bf16.msra.mxu0 %v390
    %424 = vmatpush.bf16.msra.mxu0 %v388
    %425 = vmatpush.bf16.msra.mxu0 %v386
    %426 = vmatpush.bf16.msra.mxu0 %v384
    %427 = vmatpush.bf16.msra.mxu0 %v382
    %428 = vmatpush.bf16.msra.mxu0 %v380
    %429 = vmatpush.bf16.msra.mxu0 %v378
    %430 = vmatmul.bf16.gmra.mxu0 %v311
    %v431 = vpop.f32.mrf.mxu0
    %v432 = vadd.f32 0.0, %v431
    %v433 = vpop.f32.mrf.mxu0
    %434 = vdwg.mxu0
    %v435 = vadd.f32 %v308, %v419
    %v436 = vadd.f32 %v309, %v432
    %s437 = scalar_lea.vmem %s0, 24
    %v438 = vld [vmem:[%s437] sm:$0xf]
    %s439 = scalar_lea.vmem %s2, 384
    %v440 = vld [vmem:[%s439] sm:$0xff]
    %v441 = vld [vmem:[%s439 + $0x8] sm:$0xff]
    %v442 = vld [vmem:[%s439 + $0x10] sm:$0xff]
    %v443 = vld [vmem:[%s439 + $0x18] sm:$0xff]
    %v444 = vld [vmem:[%s439 + $0x20] sm:$0xff]
    %v445 = vld [vmem:[%s439 + $0x28] sm:$0xff]
    %v446 = vld [vmem:[%s439 + $0x30] sm:$0xff]
    %v447 = vld [vmem:[%s439 + $0x38] sm:$0xff]
    %v448 = vld [vmem:[%s439 + $0x40] sm:$0xff]
    %v449 = vld [vmem:[%s439 + $0x48] sm:$0xff]
    %v450 = vld [vmem:[%s439 + $0x50] sm:$0xff]
    %v451 = vld [vmem:[%s439 + $0x58] sm:$0xff]
    %v452 = vld [vmem:[%s439 + $0x60] sm:$0xff]
    %v453 = vld [vmem:[%s439 + $0x68] sm:$0xff]
    %v454 = vld [vmem:[%s439 + $0x70] sm:$0xff]
    %v455 = vld [vmem:[%s439 + $0x78] sm:$0xff]
    %v472 = vunpack.c.l.b16 %v440
    %v473 = vunpack.c.h.b16 %v440
    %v474 = vunpack.c.l.b16 %v441
    %v475 = vunpack.c.h.b16 %v441
    %v476 = vunpack.c.l.b16 %v442
    %v477 = vunpack.c.h.b16 %v442
    %v478 = vunpack.c.l.b16 %v443
    %v479 = vunpack.c.h.b16 %v443
    %v480 = vunpack.c.l.b16 %v444
    %v481 = vunpack.c.h.b16 %v444
    %v482 = vunpack.c.l.b16 %v445
    %v483 = vunpack.c.h.b16 %v445
    %v484 = vunpack.c.l.b16 %v446
    %v485 = vunpack.c.h.b16 %v446
    %v486 = vunpack.c.l.b16 %v447
    %v487 = vunpack.c.h.b16 %v447
    %v488 = vunpack.c.l.b16 %v448
    %v489 = vunpack.c.h.b16 %v448
    %v490 = vunpack.c.l.b16 %v449
    %v491 = vunpack.c.h.b16 %v449
    %v492 = vunpack.c.l.b16 %v450
    %v493 = vunpack.c.h.b16 %v450
    %v494 = vunpack.c.l.b16 %v451
    %v495 = vunpack.c.h.b16 %v451
    %v496 = vunpack.c.l.b16 %v452
    %v497 = vunpack.c.h.b16 %v452
    %v498 = vunpack.c.l.b16 %v453
    %v499 = vunpack.c.h.b16 %v453
    %v500 = vunpack.c.l.b16 %v454
    %v501 = vunpack.c.h.b16 %v454
    %v502 = vunpack.c.l.b16 %v455
    %v503 = vunpack.c.h.b16 %v455
    %v504 = vpack.c.b16 %v474, %v472
    %v505 = vpack.c.b16 %v475, %v473
    %v506 = vpack.c.b16 %v478, %v476
    %v507 = vpack.c.b16 %v479, %v477
    %v508 = vpack.c.b16 %v482, %v480
    %v509 = vpack.c.b16 %v483, %v481
    %v510 = vpack.c.b16 %v486, %v484
    %v511 = vpack.c.b16 %v487, %v485
    %v512 = vpack.c.b16 %v490, %v488
    %v513 = vpack.c.b16 %v491, %v489
    %v514 = vpack.c.b16 %v494, %v492
    %v515 = vpack.c.b16 %v495, %v493
    %v516 = vpack.c.b16 %v498, %v496
    %v517 = vpack.c.b16 %v499, %v497
    %v518 = vpack.c.b16 %v502, %v500
    %v519 = vpack.c.b16 %v503, %v501
    %536 = vmatpush.bf16.msra.mxu0 %v518
    %537 = vmatpush.bf16.msra.mxu0 %v516
    %538 = vmatpush.bf16.msra.mxu0 %v514
    %539 = vmatpush.bf16.msra.mxu0 %v512
    %540 = vmatpush.bf16.msra.mxu0 %v510
    %541 = vmatpush.bf16.msra.mxu0 %v508
    %542 = vmatpush.bf16.msra.mxu0 %v506
    %543 = vmatpush.bf16.msra.mxu0 %v504
    %544 = vmatmul.bf16.gmra.mxu0 %v438
    %v545 = vpop.f32.mrf.mxu0
    %v546 = vadd.f32 0.0, %v545
    %v547 = vpop.f32.mrf.mxu0
    %548 = vdwg.mxu0
    %549 = vmatpush.bf16.msra.mxu0 %v519
    %550 = vmatpush.bf16.msra.mxu0 %v517
    %551 = vmatpush.bf16.msra.mxu0 %v515
    %552 = vmatpush.bf16.msra.mxu0 %v513
    %553 = vmatpush.bf16.msra.mxu0 %v511
    %554 = vmatpush.bf16.msra.mxu0 %v509
    %555 = vmatpush.bf16.msra.mxu0 %v507
    %556 = vmatpush.bf16.msra.mxu0 %v505
    %557 = vmatmul.bf16.gmra.mxu0 %v438
    %v558 = vpop.f32.mrf.mxu0
    %v559 = vadd.f32 0.0, %v558
    %v560 = vpop.f32.mrf.mxu0
    %561 = vdwg.mxu0
    %v562 = vadd.f32 %v435, %v546
    %v563 = vadd.f32 %v436, %v559
    %s564 = scalar_lea.vmem %s2, 512
    %v565 = vld [vmem:[%s564] sm:$0xff]
    %v566 = vld [vmem:[%s564 + $0x8] sm:$0xff]
    %v567 = vld [vmem:[%s564 + $0x10] sm:$0xff]
    %v568 = vld [vmem:[%s564 + $0x18] sm:$0xff]
    %v569 = vld [vmem:[%s564 + $0x20] sm:$0xff]
    %v570 = vld [vmem:[%s564 + $0x28] sm:$0xff]
    %v571 = vld [vmem:[%s564 + $0x30] sm:$0xff]
    %v572 = vld [vmem:[%s564 + $0x38] sm:$0xff]
    %v573 = vld [vmem:[%s564 + $0x40] sm:$0xff]
    %v574 = vld [vmem:[%s564 + $0x48] sm:$0xff]
    %v575 = vld [vmem:[%s564 + $0x50] sm:$0xff]
    %v576 = vld [vmem:[%s564 + $0x58] sm:$0xff]
    %v577 = vld [vmem:[%s564 + $0x60] sm:$0xff]
    %v578 = vld [vmem:[%s564 + $0x68] sm:$0xff]
    %v579 = vld [vmem:[%s564 + $0x70] sm:$0xff]
    %v580 = vld [vmem:[%s564 + $0x78] sm:$0xff]
    %v582 = vunpack.c.l.b16 %v53
    %v583 = vpack.c.b16 %v582, %v582
    %v585 = vshrl.u32 %v583, 16
    %v587 = vshll.u32 %v583, 16
    %v589 = vrot.slane %v587, 1
    %v590 = vor.u32 %v585, %v589
    %v608 = vunpack.c.l.b16 %v565
    %v609 = vunpack.c.h.b16 %v565
    %v610 = vunpack.c.l.b16 %v566
    %v611 = vunpack.c.h.b16 %v566
    %v612 = vunpack.c.l.b16 %v567
    %v613 = vunpack.c.h.b16 %v567
    %v614 = vunpack.c.l.b16 %v568
    %v615 = vunpack.c.h.b16 %v568
    %v616 = vunpack.c.l.b16 %v569
    %v617 = vunpack.c.h.b16 %v569
    %v618 = vunpack.c.l.b16 %v570
    %v619 = vunpack.c.h.b16 %v570
    %v620 = vunpack.c.l.b16 %v571
    %v621 = vunpack.c.h.b16 %v571
    %v622 = vunpack.c.l.b16 %v572
    %v623 = vunpack.c.h.b16 %v572
    %v624 = vunpack.c.l.b16 %v573
    %v625 = vunpack.c.h.b16 %v573
    %v626 = vunpack.c.l.b16 %v574
    %v627 = vunpack.c.h.b16 %v574
    %v628 = vunpack.c.l.b16 %v575
    %v629 = vunpack.c.h.b16 %v575
    %v630 = vunpack.c.l.b16 %v576
    %v631 = vunpack.c.h.b16 %v576
    %v632 = vunpack.c.l.b16 %v577
    %v633 = vunpack.c.h.b16 %v577
    %v634 = vunpack.c.l.b16 %v578
    %v635 = vunpack.c.h.b16 %v578
    %v636 = vunpack.c.l.b16 %v579
    %v637 = vunpack.c.h.b16 %v579
    %v638 = vunpack.c.l.b16 %v580
    %v639 = vunpack.c.h.b16 %v580
    %v640 = vpack.c.b16 %v610, %v608
    %v641 = vpack.c.b16 %v611, %v609
    %v642 = vpack.c.b16 %v614, %v612
    %v643 = vpack.c.b16 %v615, %v613
    %v644 = vpack.c.b16 %v618, %v616
    %v645 = vpack.c.b16 %v619, %v617
    %v646 = vpack.c.b16 %v622, %v620
    %v647 = vpack.c.b16 %v623, %v621
    %v648 = vpack.c.b16 %v626, %v624
    %v649 = vpack.c.b16 %v627, %v625
    %v650 = vpack.c.b16 %v630, %v628
    %v651 = vpack.c.b16 %v631, %v629
    %v652 = vpack.c.b16 %v634, %v632
    %v653 = vpack.c.b16 %v635, %v633
    %v654 = vpack.c.b16 %v638, %v636
    %v655 = vpack.c.b16 %v639, %v637
    %672 = vmatpush.bf16.msra.mxu0 %v654
    %673 = vmatpush.bf16.msra.mxu0 %v652
    %674 = vmatpush.bf16.msra.mxu0 %v650
    %675 = vmatpush.bf16.msra.mxu0 %v648
    %676 = vmatpush.bf16.msra.mxu0 %v646
    %677 = vmatpush.bf16.msra.mxu0 %v644
    %678 = vmatpush.bf16.msra.mxu0 %v642
    %679 = vmatpush.bf16.msra.mxu0 %v640
    %680 = vmatmul.bf16.gmra.mxu0 %v590
    %v681 = vpop.f32.mrf.mxu0
    %v682 = vadd.f32 0.0, %v681
    %v683 = vpop.f32.mrf.mxu0
    %684 = vdwg.mxu0
    %685 = vmatpush.bf16.msra.mxu0 %v655
    %686 = vmatpush.bf16.msra.mxu0 %v653
    %687 = vmatpush.bf16.msra.mxu0 %v651
    %688 = vmatpush.bf16.msra.mxu0 %v649
    %689 = vmatpush.bf16.msra.mxu0 %v647
    %690 = vmatpush.bf16.msra.mxu0 %v645
    %691 = vmatpush.bf16.msra.mxu0 %v643
    %692 = vmatpush.bf16.msra.mxu0 %v641
    %693 = vmatmul.bf16.gmra.mxu0 %v590
    %v694 = vpop.f32.mrf.mxu0
    %v695 = vadd.f32 0.0, %v694
    %v696 = vpop.f32.mrf.mxu0
    %697 = vdwg.mxu0
    %v698 = vadd.f32 %v562, %v682
    %v699 = vadd.f32 %v563, %v695
    %v700 = vmax.f32 %v698, 0.0
    %v701 = vmax.f32 %v699, 0.0
    %v702 = vpack.c.bf16 %v701, %v700
    %vm703 = vcmask 1043456
    %vm704 = vsmask.f32 3328
    %vm705 = vmand %vm703, %vm704
    %vm706 = vcmask 785412
    %vm707 = vsmask.f32 7424
    %vm708 = vmand %vm706, %vm707
    %vm709 = vmor %vm708, %vm705
    %v710 = vld [vmem:[#allocation2] sm:$0xff]
    %v711 = vsel %vm709, %v702, %v710
    %712 = vst [vmem:[#allocation2] sm:$0xff] %v711
    %v713 = vld [vmem:[%s5] sm:$0x3]
    %v714 = vld [vmem:[%s310] sm:$0xf]
    %v715 = vld [vmem:[%s2] sm:$0xff]
    %v716 = vld [vmem:[%s2 + $0x8] sm:$0xff]
    %v717 = vld [vmem:[%s2 + $0x10] sm:$0xff]
    %v718 = vld [vmem:[%s2 + $0x18] sm:$0xff]
    %v719 = vld [vmem:[%s2 + $0x20] sm:$0xff]
    %v720 = vld [vmem:[%s2 + $0x28] sm:$0xff]
    %v721 = vld [vmem:[%s2 + $0x30] sm:$0xff]
    %v722 = vld [vmem:[%s2 + $0x38] sm:$0xff]
    %v723 = vld [vmem:[%s2 + $0x40] sm:$0xff]
    %v724 = vld [vmem:[%s2 + $0x48] sm:$0xff]
    %v725 = vld [vmem:[%s2 + $0x50] sm:$0xff]
    %v726 = vld [vmem:[%s2 + $0x58] sm:$0xff]
    %v727 = vld [vmem:[%s2 + $0x60] sm:$0xff]
    %v728 = vld [vmem:[%s2 + $0x68] sm:$0xff]
    %v729 = vld [vmem:[%s2 + $0x70] sm:$0xff]
    %v730 = vld [vmem:[%s2 + $0x78] sm:$0xff]
    %v747 = vunpack.c.l.b16 %v715
    %v748 = vunpack.c.h.b16 %v715
    %v749 = vunpack.c.l.b16 %v716
    %v750 = vunpack.c.h.b16 %v716
    %v751 = vunpack.c.l.b16 %v717
    %v752 = vunpack.c.h.b16 %v717
    %v753 = vunpack.c.l.b16 %v718
    %v754 = vunpack.c.h.b16 %v718
    %v755 = vunpack.c.l.b16 %v719
    %v756 = vunpack.c.h.b16 %v719
    %v757 = vunpack.c.l.b16 %v720
    %v758 = vunpack.c.h.b16 %v720
    %v759 = vunpack.c.l.b16 %v721
    %v760 = vunpack.c.h.b16 %v721
    %v761 = vunpack.c.l.b16 %v722
    %v762 = vunpack.c.h.b16 %v722
    %v763 = vunpack.c.l.b16 %v723
    %v764 = vunpack.c.h.b16 %v723
    %v765 = vunpack.c.l.b16 %v724
    %v766 = vunpack.c.h.b16 %v724
    %v767 = vunpack.c.l.b16 %v725
    %v768 = vunpack.c.h.b16 %v725
    %v769 = vunpack.c.l.b16 %v726
    %v770 = vunpack.c.h.b16 %v726
    %v771 = vunpack.c.l.b16 %v727
    %v772 = vunpack.c.h.b16 %v727
    %v773 = vunpack.c.l.b16 %v728
    %v774 = vunpack.c.h.b16 %v728
    %v775 = vunpack.c.l.b16 %v729
    %v776 = vunpack.c.h.b16 %v729
    %v777 = vunpack.c.l.b16 %v730
    %v778 = vunpack.c.h.b16 %v730
    %v779 = vpack.c.b16 %v749, %v747
    %v780 = vpack.c.b16 %v750, %v748
    %v781 = vpack.c.b16 %v753, %v751
    %v782 = vpack.c.b16 %v754, %v752
    %v783 = vpack.c.b16 %v757, %v755
    %v784 = vpack.c.b16 %v758, %v756
    %v785 = vpack.c.b16 %v761, %v759
    %v786 = vpack.c.b16 %v762, %v760
    %v787 = vpack.c.b16 %v765, %v763
    %v788 = vpack.c.b16 %v766, %v764
    %v789 = vpack.c.b16 %v769, %v767
    %v790 = vpack.c.b16 %v770, %v768
    %v791 = vpack.c.b16 %v773, %v771
    %v792 = vpack.c.b16 %v774, %v772
    %v793 = vpack.c.b16 %v777, %v775
    %v794 = vpack.c.b16 %v778, %v776
    %811 = vmatpush.bf16.msra.mxu0 %v793
    %812 = vmatpush.bf16.msra.mxu0 %v791
    %813 = vmatpush.bf16.msra.mxu0 %v789
    %814 = vmatpush.bf16.msra.mxu0 %v787
    %815 = vmatpush.bf16.msra.mxu0 %v785
    %816 = vmatpush.bf16.msra.mxu0 %v783
    %817 = vmatpush.bf16.msra.mxu0 %v781
    %818 = vmatpush.bf16.msra.mxu0 %v779
    %819 = vmatmul.bf16.gmra.mxu0 %v714
    %v820 = vpop.f32.mrf.mxu0
    %v821 = vadd.f32 0.0, %v820
    %v822 = vpop.f32.mrf.mxu0
    %823 = vdwg.mxu0
    %824 = vmatpush.bf16.msra.mxu0 %v794
    %825 = vmatpush.bf16.msra.mxu0 %v792
    %826 = vmatpush.bf16.msra.mxu0 %v790
    %827 = vmatpush.bf16.msra.mxu0 %v788
    %828 = vmatpush.bf16.msra.mxu0 %v786
    %829 = vmatpush.bf16.msra.mxu0 %v784
    %830 = vmatpush.bf16.msra.mxu0 %v782
    %831 = vmatpush.bf16.msra.mxu0 %v780
    %832 = vmatmul.bf16.gmra.mxu0 %v714
    %v833 = vpop.f32.mrf.mxu0
    %v834 = vadd.f32 0.0, %v833
    %v835 = vpop.f32.mrf.mxu0
    %836 = vdwg.mxu0
    %v838 = vperm.slane %v713, 0
    %v839 = vperm.slane %v713, 1
    %v842 = vadd.f32 %v838, %v821
    %v843 = vadd.f32 %v839, %v834
    %v844 = vld [vmem:[%s437] sm:$0xf]
    %v845 = vld [vmem:[%s185] sm:$0xff]
    %v846 = vld [vmem:[%s185 + $0x8] sm:$0xff]
    %v847 = vld [vmem:[%s185 + $0x10] sm:$0xff]
    %v848 = vld [vmem:[%s185 + $0x18] sm:$0xff]
    %v849 = vld [vmem:[%s185 + $0x20] sm:$0xff]
    %v850 = vld [vmem:[%s185 + $0x28] sm:$0xff]
    %v851 = vld [vmem:[%s185 + $0x30] sm:$0xff]
    %v852 = vld [vmem:[%s185 + $0x38] sm:$0xff]
    %v853 = vld [vmem:[%s185 + $0x40] sm:$0xff]
    %v854 = vld [vmem:[%s185 + $0x48] sm:$0xff]
    %v855 = vld [vmem:[%s185 + $0x50] sm:$0xff]
    %v856 = vld [vmem:[%s185 + $0x58] sm:$0xff]
    %v857 = vld [vmem:[%s185 + $0x60] sm:$0xff]
    %v858 = vld [vmem:[%s185 + $0x68] sm:$0xff]
    %v859 = vld [vmem:[%s185 + $0x70] sm:$0xff]
    %v860 = vld [vmem:[%s185 + $0x78] sm:$0xff]
    %v877 = vunpack.c.l.b16 %v845
    %v878 = vunpack.c.h.b16 %v845
    %v879 = vunpack.c.l.b16 %v846
    %v880 = vunpack.c.h.b16 %v846
    %v881 = vunpack.c.l.b16 %v847
    %v882 = vunpack.c.h.b16 %v847
    %v883 = vunpack.c.l.b16 %v848
    %v884 = vunpack.c.h.b16 %v848
    %v885 = vunpack.c.l.b16 %v849
    %v886 = vunpack.c.h.b16 %v849
    %v887 = vunpack.c.l.b16 %v850
    %v888 = vunpack.c.h.b16 %v850
    %v889 = vunpack.c.l.b16 %v851
    %v890 = vunpack.c.h.b16 %v851
    %v891 = vunpack.c.l.b16 %v852
    %v892 = vunpack.c.h.b16 %v852
    %v893 = vunpack.c.l.b16 %v853
    %v894 = vunpack.c.h.b16 %v853
    %v895 = vunpack.c.l.b16 %v854
    %v896 = vunpack.c.h.b16 %v854
    %v897 = vunpack.c.l.b16 %v855
    %v898 = vunpack.c.h.b16 %v855
    %v899 = vunpack.c.l.b16 %v856
    %v900 = vunpack.c.h.b16 %v856
    %v901 = vunpack.c.l.b16 %v857
    %v902 = vunpack.c.h.b16 %v857
    %v903 = vunpack.c.l.b16 %v858
    %v904 = vunpack.c.h.b16 %v858
    %v905 = vunpack.c.l.b16 %v859
    %v906 = vunpack.c.h.b16 %v859
    %v907 = vunpack.c.l.b16 %v860
    %v908 = vunpack.c.h.b16 %v860
    %v909 = vpack.c.b16 %v879, %v877
    %v910 = vpack.c.b16 %v880, %v878
    %v911 = vpack.c.b16 %v883, %v881
    %v912 = vpack.c.b16 %v884, %v882
    %v913 = vpack.c.b16 %v887, %v885
    %v914 = vpack.c.b16 %v888, %v886
    %v915 = vpack.c.b16 %v891, %v889
    %v916 = vpack.c.b16 %v892, %v890
    %v917 = vpack.c.b16 %v895, %v893
    %v918 = vpack.c.b16 %v896, %v894
    %v919 = vpack.c.b16 %v899, %v897
    %v920 = vpack.c.b16 %v900, %v898
    %v921 = vpack.c.b16 %v903, %v901
    %v922 = vpack.c.b16 %v904, %v902
    %v923 = vpack.c.b16 %v907, %v905
    %v924 = vpack.c.b16 %v908, %v906
    %941 = vmatpush.bf16.msra.mxu0 %v923
    %942 = vmatpush.bf16.msra.mxu0 %v921
    %943 = vmatpush.bf16.msra.mxu0 %v919
    %944 = vmatpush.bf16.msra.mxu0 %v917
    %945 = vmatpush.bf16.msra.mxu0 %v915
    %946 = vmatpush.bf16.msra.mxu0 %v913
    %947 = vmatpush.bf16.msra.mxu0 %v911
    %948 = vmatpush.bf16.msra.mxu0 %v909
    %949 = vmatmul.bf16.gmra.mxu0 %v844
    %v950 = vpop.f32.mrf.mxu0
    %v951 = vadd.f32 0.0, %v950
    %v952 = vpop.f32.mrf.mxu0
    %953 = vdwg.mxu0
    %954 = vmatpush.bf16.msra.mxu0 %v924
    %955 = vmatpush.bf16.msra.mxu0 %v922
    %956 = vmatpush.bf16.msra.mxu0 %v920
    %957 = vmatpush.bf16.msra.mxu0 %v918
    %958 = vmatpush.bf16.msra.mxu0 %v916
    %959 = vmatpush.bf16.msra.mxu0 %v914
    %960 = vmatpush.bf16.msra.mxu0 %v912
    %961 = vmatpush.bf16.msra.mxu0 %v910
    %962 = vmatmul.bf16.gmra.mxu0 %v844
    %v963 = vpop.f32.mrf.mxu0
    %v964 = vadd.f32 0.0, %v963
    %v965 = vpop.f32.mrf.mxu0
    %966 = vdwg.mxu0
    %v967 = vadd.f32 %v842, %v951
    %v968 = vadd.f32 %v843, %v964
    %v969 = vld [vmem:[%s0] sm:$0xf]
    %v970 = vld [vmem:[%s312] sm:$0xff]
    %v971 = vld [vmem:[%s312 + $0x8] sm:$0xff]
    %v972 = vld [vmem:[%s312 + $0x10] sm:$0xff]
    %v973 = vld [vmem:[%s312 + $0x18] sm:$0xff]
    %v974 = vld [vmem:[%s312 + $0x20] sm:$0xff]
    %v975 = vld [vmem:[%s312 + $0x28] sm:$0xff]
    %v976 = vld [vmem:[%s312 + $0x30] sm:$0xff]
    %v977 = vld [vmem:[%s312 + $0x38] sm:$0xff]
    %v978 = vld [vmem:[%s312 + $0x40] sm:$0xff]
    %v979 = vld [vmem:[%s312 + $0x48] sm:$0xff]
    %v980 = vld [vmem:[%s312 + $0x50] sm:$0xff]
    %v981 = vld [vmem:[%s312 + $0x58] sm:$0xff]
    %v982 = vld [vmem:[%s312 + $0x60] sm:$0xff]
    %v983 = vld [vmem:[%s312 + $0x68] sm:$0xff]
    %v984 = vld [vmem:[%s312 + $0x70] sm:$0xff]
    %v985 = vld [vmem:[%s312 + $0x78] sm:$0xff]
    %v987 = vunpack.c.l.b16 %v969
    %v988 = vpack.c.b16 %v987, %v987
    %v990 = vshrl.u32 %v988, 16
    %v992 = vshll.u32 %v988, 16
    %v994 = vrot.slane %v992, 1
    %v995 = vor.u32 %v990, %v994
    %v1013 = vunpack.c.l.b16 %v970
    %v1014 = vunpack.c.h.b16 %v970
    %v1015 = vunpack.c.l.b16 %v971
    %v1016 = vunpack.c.h.b16 %v971
    %v1017 = vunpack.c.l.b16 %v972
    %v1018 = vunpack.c.h.b16 %v972
    %v1019 = vunpack.c.l.b16 %v973
    %v1020 = vunpack.c.h.b16 %v973
    %v1021 = vunpack.c.l.b16 %v974
    %v1022 = vunpack.c.h.b16 %v974
    %v1023 = vunpack.c.l.b16 %v975
    %v1024 = vunpack.c.h.b16 %v975
    %v1025 = vunpack.c.l.b16 %v976
    %v1026 = vunpack.c.h.b16 %v976
    %v1027 = vunpack.c.l.b16 %v977
    %v1028 = vunpack.c.h.b16 %v977
    %v1029 = vunpack.c.l.b16 %v978
    %v1030 = vunpack.c.h.b16 %v978
    %v1031 = vunpack.c.l.b16 %v979
    %v1032 = vunpack.c.h.b16 %v979
    %v1033 = vunpack.c.l.b16 %v980
    %v1034 = vunpack.c.h.b16 %v980
    %v1035 = vunpack.c.l.b16 %v981
    %v1036 = vunpack.c.h.b16 %v981
    %v1037 = vunpack.c.l.b16 %v982
    %v1038 = vunpack.c.h.b16 %v982
    %v1039 = vunpack.c.l.b16 %v983
    %v1040 = vunpack.c.h.b16 %v983
    %v1041 = vunpack.c.l.b16 %v984
    %v1042 = vunpack.c.h.b16 %v984
    %v1043 = vunpack.c.l.b16 %v985
    %v1044 = vunpack.c.h.b16 %v985
    %v1045 = vpack.c.b16 %v1015, %v1013
    %v1046 = vpack.c.b16 %v1016, %v1014
    %v1047 = vpack.c.b16 %v1019, %v1017
    %v1048 = vpack.c.b16 %v1020, %v1018
    %v1049 = vpack.c.b16 %v1023, %v1021
    %v1050 = vpack.c.b16 %v1024, %v1022
    %v1051 = vpack.c.b16 %v1027, %v1025
    %v1052 = vpack.c.b16 %v1028, %v1026
    %v1053 = vpack.c.b16 %v1031, %v1029
    %v1054 = vpack.c.b16 %v1032, %v1030
    %v1055 = vpack.c.b16 %v1035, %v1033
    %v1056 = vpack.c.b16 %v1036, %v1034
    %v1057 = vpack.c.b16 %v1039, %v1037
    %v1058 = vpack.c.b16 %v1040, %v1038
    %v1059 = vpack.c.b16 %v1043, %v1041
    %v1060 = vpack.c.b16 %v1044, %v1042
    %1077 = vmatpush.bf16.msra.mxu0 %v1059
    %1078 = vmatpush.bf16.msra.mxu0 %v1057
    %1079 = vmatpush.bf16.msra.mxu0 %v1055
    %1080 = vmatpush.bf16.msra.mxu0 %v1053
    %1081 = vmatpush.bf16.msra.mxu0 %v1051
    %1082 = vmatpush.bf16.msra.mxu0 %v1049
    %1083 = vmatpush.bf16.msra.mxu0 %v1047
    %1084 = vmatpush.bf16.msra.mxu0 %v1045
    %1085 = vmatmul.bf16.gmra.mxu0 %v995
    %v1086 = vpop.f32.mrf.mxu0
    %v1087 = vadd.f32 0.0, %v1086
    %v1088 = vpop.f32.mrf.mxu0
    %1089 = vdwg.mxu0
    %1090 = vmatpush.bf16.msra.mxu0 %v1060
    %1091 = vmatpush.bf16.msra.mxu0 %v1058
    %1092 = vmatpush.bf16.msra.mxu0 %v1056
    %1093 = vmatpush.bf16.msra.mxu0 %v1054
    %1094 = vmatpush.bf16.msra.mxu0 %v1052
    %1095 = vmatpush.bf16.msra.mxu0 %v1050
    %1096 = vmatpush.bf16.msra.mxu0 %v1048
    %1097 = vmatpush.bf16.msra.mxu0 %v1046
    %1098 = vmatmul.bf16.gmra.mxu0 %v995
    %v1099 = vpop.f32.mrf.mxu0
    %v1100 = vadd.f32 0.0, %v1099
    %v1101 = vpop.f32.mrf.mxu0
    %1102 = vdwg.mxu0
    %v1103 = vadd.f32 %v967, %v1087
    %v1104 = vadd.f32 %v968, %v1100
    %v1105 = vld [vmem:[%s183] sm:$0xf]
    %v1106 = vld [vmem:[%s439] sm:$0xff]
    %v1107 = vld [vmem:[%s439 + $0x8] sm:$0xff]
    %v1108 = vld [vmem:[%s439 + $0x10] sm:$0xff]
    %v1109 = vld [vmem:[%s439 + $0x18] sm:$0xff]
    %v1110 = vld [vmem:[%s439 + $0x20] sm:$0xff]
    %v1111 = vld [vmem:[%s439 + $0x28] sm:$0xff]
    %v1112 = vld [vmem:[%s439 + $0x30] sm:$0xff]
    %v1113 = vld [vmem:[%s439 + $0x38] sm:$0xff]
    %v1114 = vld [vmem:[%s439 + $0x40] sm:$0xff]
    %v1115 = vld [vmem:[%s439 + $0x48] sm:$0xff]
    %v1116 = vld [vmem:[%s439 + $0x50] sm:$0xff]
    %v1117 = vld [vmem:[%s439 + $0x58] sm:$0xff]
    %v1118 = vld [vmem:[%s439 + $0x60] sm:$0xff]
    %v1119 = vld [vmem:[%s439 + $0x68] sm:$0xff]
    %v1120 = vld [vmem:[%s439 + $0x70] sm:$0xff]
    %v1121 = vld [vmem:[%s439 + $0x78] sm:$0xff]
    %v1123 = vunpack.c.l.b16 %v1105
    %v1124 = vpack.c.b16 %v1123, %v1123
    %v1126 = vshrl.u32 %v1124, 16
    %v1128 = vshll.u32 %v1124, 16
    %v1130 = vrot.slane %v1128, 1
    %v1131 = vor.u32 %v1126, %v1130
    %v1149 = vunpack.c.l.b16 %v1106
    %v1150 = vunpack.c.h.b16 %v1106
    %v1151 = vunpack.c.l.b16 %v1107
    %v1152 = vunpack.c.h.b16 %v1107
    %v1153 = vunpack.c.l.b16 %v1108
    %v1154 = vunpack.c.h.b16 %v1108
    %v1155 = vunpack.c.l.b16 %v1109
    %v1156 = vunpack.c.h.b16 %v1109
    %v1157 = vunpack.c.l.b16 %v1110
    %v1158 = vunpack.c.h.b16 %v1110
    %v1159 = vunpack.c.l.b16 %v1111
    %v1160 = vunpack.c.h.b16 %v1111
    %v1161 = vunpack.c.l.b16 %v1112
    %v1162 = vunpack.c.h.b16 %v1112
    %v1163 = vunpack.c.l.b16 %v1113
    %v1164 = vunpack.c.h.b16 %v1113
    %v1165 = vunpack.c.l.b16 %v1114
    %v1166 = vunpack.c.h.b16 %v1114
    %v1167 = vunpack.c.l.b16 %v1115
    %v1168 = vunpack.c.h.b16 %v1115
    %v1169 = vunpack.c.l.b16 %v1116
    %v1170 = vunpack.c.h.b16 %v1116
    %v1171 = vunpack.c.l.b16 %v1117
    %v1172 = vunpack.c.h.b16 %v1117
    %v1173 = vunpack.c.l.b16 %v1118
    %v1174 = vunpack.c.h.b16 %v1118
    %v1175 = vunpack.c.l.b16 %v1119
    %v1176 = vunpack.c.h.b16 %v1119
    %v1177 = vunpack.c.l.b16 %v1120
    %v1178 = vunpack.c.h.b16 %v1120
    %v1179 = vunpack.c.l.b16 %v1121
    %v1180 = vunpack.c.h.b16 %v1121
    %v1181 = vpack.c.b16 %v1151, %v1149
    %v1182 = vpack.c.b16 %v1152, %v1150
    %v1183 = vpack.c.b16 %v1155, %v1153
    %v1184 = vpack.c.b16 %v1156, %v1154
    %v1185 = vpack.c.b16 %v1159, %v1157
    %v1186 = vpack.c.b16 %v1160, %v1158
    %v1187 = vpack.c.b16 %v1163, %v1161
    %v1188 = vpack.c.b16 %v1164, %v1162
    %v1189 = vpack.c.b16 %v1167, %v1165
    %v1190 = vpack.c.b16 %v1168, %v1166
    %v1191 = vpack.c.b16 %v1171, %v1169
    %v1192 = vpack.c.b16 %v1172, %v1170
    %v1193 = vpack.c.b16 %v1175, %v1173
    %v1194 = vpack.c.b16 %v1176, %v1174
    %v1195 = vpack.c.b16 %v1179, %v1177
    %v1196 = vpack.c.b16 %v1180, %v1178
    %1213 = vmatpush.bf16.msra.mxu0 %v1195
    %1214 = vmatpush.bf16.msra.mxu0 %v1193
    %1215 = vmatpush.bf16.msra.mxu0 %v1191
    %1216 = vmatpush.bf16.msra.mxu0 %v1189
    %1217 = vmatpush.bf16.msra.mxu0 %v1187
    %1218 = vmatpush.bf16.msra.mxu0 %v1185
    %1219 = vmatpush.bf16.msra.mxu0 %v1183
    %1220 = vmatpush.bf16.msra.mxu0 %v1181
    %1221 = vmatmul.bf16.gmra.mxu0 %v1131
    %v1222 = vpop.f32.mrf.mxu0
    %v1223 = vadd.f32 0.0, %v1222
    %v1224 = vpop.f32.mrf.mxu0
    %1225 = vdwg.mxu0
    %1226 = vmatpush.bf16.msra.mxu0 %v1196
    %1227 = vmatpush.bf16.msra.mxu0 %v1194
    %1228 = vmatpush.bf16.msra.mxu0 %v1192
    %1229 = vmatpush.bf16.msra.mxu0 %v1190
    %1230 = vmatpush.bf16.msra.mxu0 %v1188
    %1231 = vmatpush.bf16.msra.mxu0 %v1186
    %1232 = vmatpush.bf16.msra.mxu0 %v1184
    %1233 = vmatpush.bf16.msra.mxu0 %v1182
    %1234 = vmatmul.bf16.gmra.mxu0 %v1131
    %v1235 = vpop.f32.mrf.mxu0
    %v1236 = vadd.f32 0.0, %v1235
    %v1237 = vpop.f32.mrf.mxu0
    %1238 = vdwg.mxu0
    %v1239 = vadd.f32 %v1103, %v1223
    %v1240 = vadd.f32 %v1104, %v1236
    %v1241 = vld [vmem:[%s564] sm:$0xff]
    %v1242 = vld [vmem:[%s564 + $0x8] sm:$0xff]
    %v1243 = vld [vmem:[%s564 + $0x10] sm:$0xff]
    %v1244 = vld [vmem:[%s564 + $0x18] sm:$0xff]
    %v1245 = vld [vmem:[%s564 + $0x20] sm:$0xff]
    %v1246 = vld [vmem:[%s564 + $0x28] sm:$0xff]
    %v1247 = vld [vmem:[%s564 + $0x30] sm:$0xff]
    %v1248 = vld [vmem:[%s564 + $0x38] sm:$0xff]
    %v1249 = vld [vmem:[%s564 + $0x40] sm:$0xff]
    %v1250 = vld [vmem:[%s564 + $0x48] sm:$0xff]
    %v1251 = vld [vmem:[%s564 + $0x50] sm:$0xff]
    %v1252 = vld [vmem:[%s564 + $0x58] sm:$0xff]
    %v1253 = vld [vmem:[%s564 + $0x60] sm:$0xff]
    %v1254 = vld [vmem:[%s564 + $0x68] sm:$0xff]
    %v1255 = vld [vmem:[%s564 + $0x70] sm:$0xff]
    %v1256 = vld [vmem:[%s564 + $0x78] sm:$0xff]
    %v1258 = vunpack.c.l.b16 %v714
    %v1259 = vpack.c.b16 %v1258, %v1258
    %v1261 = vshrl.u32 %v1259, 16
    %v1263 = vshll.u32 %v1259, 16
    %v1265 = vrot.slane %v1263, 1
    %v1266 = vor.u32 %v1261, %v1265
    %v1284 = vunpack.c.l.b16 %v1241
    %v1285 = vunpack.c.h.b16 %v1241
    %v1286 = vunpack.c.l.b16 %v1242
    %v1287 = vunpack.c.h.b16 %v1242
    %v1288 = vunpack.c.l.b16 %v1243
    %v1289 = vunpack.c.h.b16 %v1243
    %v1290 = vunpack.c.l.b16 %v1244
    %v1291 = vunpack.c.h.b16 %v1244
    %v1292 = vunpack.c.l.b16 %v1245
    %v1293 = vunpack.c.h.b16 %v1245
    %v1294 = vunpack.c.l.b16 %v1246
    %v1295 = vunpack.c.h.b16 %v1246
    %v1296 = vunpack.c.l.b16 %v1247
    %v1297 = vunpack.c.h.b16 %v1247
    %v1298 = vunpack.c.l.b16 %v1248
    %v1299 = vunpack.c.h.b16 %v1248
    %v1300 = vunpack.c.l.b16 %v1249
    %v1301 = vunpack.c.h.b16 %v1249
    %v1302 = vunpack.c.l.b16 %v1250
    %v1303 = vunpack.c.h.b16 %v1250
    %v1304 = vunpack.c.l.b16 %v1251
    %v1305 = vunpack.c.h.b16 %v1251
    %v1306 = vunpack.c.l.b16 %v1252
    %v1307 = vunpack.c.h.b16 %v1252
    %v1308 = vunpack.c.l.b16 %v1253
    %v1309 = vunpack.c.h.b16 %v1253
    %v1310 = vunpack.c.l.b16 %v1254
    %v1311 = vunpack.c.h.b16 %v1254
    %v1312 = vunpack.c.l.b16 %v1255
    %v1313 = vunpack.c.h.b16 %v1255
    %v1314 = vunpack.c.l.b16 %v1256
    %v1315 = vunpack.c.h.b16 %v1256
    %v1316 = vpack.c.b16 %v1286, %v1284
    %v1317 = vpack.c.b16 %v1287, %v1285
    %v1318 = vpack.c.b16 %v1290, %v1288
    %v1319 = vpack.c.b16 %v1291, %v1289
    %v1320 = vpack.c.b16 %v1294, %v1292
    %v1321 = vpack.c.b16 %v1295, %v1293
    %v1322 = vpack.c.b16 %v1298, %v1296
    %v1323 = vpack.c.b16 %v1299, %v1297
    %v1324 = vpack.c.b16 %v1302, %v1300
    %v1325 = vpack.c.b16 %v1303, %v1301
    %v1326 = vpack.c.b16 %v1306, %v1304
    %v1327 = vpack.c.b16 %v1307, %v1305
    %v1328 = vpack.c.b16 %v1310, %v1308
    %v1329 = vpack.c.b16 %v1311, %v1309
    %v1330 = vpack.c.b16 %v1314, %v1312
    %v1331 = vpack.c.b16 %v1315, %v1313
    %1348 = vmatpush.bf16.msra.mxu0 %v1330
    %1349 = vmatpush.bf16.msra.mxu0 %v1328
    %1350 = vmatpush.bf16.msra.mxu0 %v1326
    %1351 = vmatpush.bf16.msra.mxu0 %v1324
    %1352 = vmatpush.bf16.msra.mxu0 %v1322
    %1353 = vmatpush.bf16.msra.mxu0 %v1320
    %1354 = vmatpush.bf16.msra.mxu0 %v1318
    %1355 = vmatpush.bf16.msra.mxu0 %v1316
    %1356 = vmatmul.bf16.gmra.mxu0 %v1266
    %v1357 = vpop.f32.mrf.mxu0
    %v1358 = vadd.f32 0.0, %v1357
    %v1359 = vpop.f32.mrf.mxu0
    %1360 = vdwg.mxu0
    %1361 = vmatpush.bf16.msra.mxu0 %v1331
    %1362 = vmatpush.bf16.msra.mxu0 %v1329
    %1363 = vmatpush.bf16.msra.mxu0 %v1327
    %1364 = vmatpush.bf16.msra.mxu0 %v1325
    %1365 = vmatpush.bf16.msra.mxu0 %v1323
    %1366 = vmatpush.bf16.msra.mxu0 %v1321
    %1367 = vmatpush.bf16.msra.mxu0 %v1319
    %1368 = vmatpush.bf16.msra.mxu0 %v1317
    %1369 = vmatmul.bf16.gmra.mxu0 %v1266
    %v1370 = vpop.f32.mrf.mxu0
    %v1371 = vadd.f32 0.0, %v1370
    %v1372 = vpop.f32.mrf.mxu0
    %1373 = vdwg.mxu0
    %v1374 = vadd.f32 %v1239, %v1358
    %v1375 = vadd.f32 %v1240, %v1371
    %v1376 = vmax.f32 %v1374, 0.0
    %v1377 = vmax.f32 %v1375, 0.0
    %v1378 = vpack.c.bf16 %v1377, %v1376
    %s1379 = scalar_lea.vmem [#allocation2], 16
    %v1380 = vld [vmem:[%s1379] sm:$0xff]
    %v1381 = vsel %vm709, %v1378, %v1380
    %1382 = vst [vmem:[%s1379] sm:$0xff] %v1381
    %v1383 = vld [vmem:[%s5] sm:$0x3]
    %s1384 = scalar_lea.vmem %s0, 4
    %v1385 = vld [vmem:[%s1384] sm:$0xf]
    %v1386 = vld [vmem:[%s2] sm:$0xff]
    %v1387 = vld [vmem:[%s2 + $0x8] sm:$0xff]
    %v1388 = vld [vmem:[%s2 + $0x10] sm:$0xff]
    %v1389 = vld [vmem:[%s2 + $0x18] sm:$0xff]
    %v1390 = vld [vmem:[%s2 + $0x20] sm:$0xff]
    %v1391 = vld [vmem:[%s2 + $0x28] sm:$0xff]
    %v1392 = vld [vmem:[%s2 + $0x30] sm:$0xff]
    %v1393 = vld [vmem:[%s2 + $0x38] sm:$0xff]
    %v1394 = vld [vmem:[%s2 + $0x40] sm:$0xff]
    %v1395 = vld [vmem:[%s2 + $0x48] sm:$0xff]
    %v1396 = vld [vmem:[%s2 + $0x50] sm:$0xff]
    %v1397 = vld [vmem:[%s2 + $0x58] sm:$0xff]
    %v1398 = vld [vmem:[%s2 + $0x60] sm:$0xff]
    %v1399 = vld [vmem:[%s2 + $0x68] sm:$0xff]
    %v1400 = vld [vmem:[%s2 + $0x70] sm:$0xff]
    %v1401 = vld [vmem:[%s2 + $0x78] sm:$0xff]
    %v1418 = vunpack.c.l.b16 %v1386
    %v1419 = vunpack.c.h.b16 %v1386
    %v1420 = vunpack.c.l.b16 %v1387
    %v1421 = vunpack.c.h.b16 %v1387
    %v1422 = vunpack.c.l.b16 %v1388
    %v1423 = vunpack.c.h.b16 %v1388
    %v1424 = vunpack.c.l.b16 %v1389
    %v1425 = vunpack.c.h.b16 %v1389
    %v1426 = vunpack.c.l.b16 %v1390
    %v1427 = vunpack.c.h.b16 %v1390
    %v1428 = vunpack.c.l.b16 %v1391
    %v1429 = vunpack.c.h.b16 %v1391
    %v1430 = vunpack.c.l.b16 %v1392
    %v1431 = vunpack.c.h.b16 %v1392
    %v1432 = vunpack.c.l.b16 %v1393
    %v1433 = vunpack.c.h.b16 %v1393
    %v1434 = vunpack.c.l.b16 %v1394
    %v1435 = vunpack.c.h.b16 %v1394
    %v1436 = vunpack.c.l.b16 %v1395
    %v1437 = vunpack.c.h.b16 %v1395
    %v1438 = vunpack.c.l.b16 %v1396
    %v1439 = vunpack.c.h.b16 %v1396
    %v1440 = vunpack.c.l.b16 %v1397
    %v1441 = vunpack.c.h.b16 %v1397
    %v1442 = vunpack.c.l.b16 %v1398
    %v1443 = vunpack.c.h.b16 %v1398
    %v1444 = vunpack.c.l.b16 %v1399
    %v1445 = vunpack.c.h.b16 %v1399
    %v1446 = vunpack.c.l.b16 %v1400
    %v1447 = vunpack.c.h.b16 %v1400
    %v1448 = vunpack.c.l.b16 %v1401
    %v1449 = vunpack.c.h.b16 %v1401
    %v1450 = vpack.c.b16 %v1420, %v1418
    %v1451 = vpack.c.b16 %v1421, %v1419
    %v1452 = vpack.c.b16 %v1424, %v1422
    %v1453 = vpack.c.b16 %v1425, %v1423
    %v1454 = vpack.c.b16 %v1428, %v1426
    %v1455 = vpack.c.b16 %v1429, %v1427
    %v1456 = vpack.c.b16 %v1432, %v1430
    %v1457 = vpack.c.b16 %v1433, %v1431
    %v1458 = vpack.c.b16 %v1436, %v1434
    %v1459 = vpack.c.b16 %v1437, %v1435
    %v1460 = vpack.c.b16 %v1440, %v1438
    %v1461 = vpack.c.b16 %v1441, %v1439
    %v1462 = vpack.c.b16 %v1444, %v1442
    %v1463 = vpack.c.b16 %v1445, %v1443
    %v1464 = vpack.c.b16 %v1448, %v1446
    %v1465 = vpack.c.b16 %v1449, %v1447
    %1482 = vmatpush.bf16.msra.mxu0 %v1464
    %1483 = vmatpush.bf16.msra.mxu0 %v1462
    %1484 = vmatpush.bf16.msra.mxu0 %v1460
    %1485 = vmatpush.bf16.msra.mxu0 %v1458
    %1486 = vmatpush.bf16.msra.mxu0 %v1456
    %1487 = vmatpush.bf16.msra.mxu0 %v1454
    %1488 = vmatpush.bf16.msra.mxu0 %v1452
    %1489 = vmatpush.bf16.msra.mxu0 %v1450
    %1490 = vmatmul.bf16.gmra.mxu0 %v1385
    %v1491 = vpop.f32.mrf.mxu0
    %v1492 = vadd.f32 0.0, %v1491
    %v1493 = vpop.f32.mrf.mxu0
    %1494 = vdwg.mxu0
    %1495 = vmatpush.bf16.msra.mxu0 %v1465
    %1496 = vmatpush.bf16.msra.mxu0 %v1463
    %1497 = vmatpush.bf16.msra.mxu0 %v1461
    %1498 = vmatpush.bf16.msra.mxu0 %v1459
    %1499 = vmatpush.bf16.msra.mxu0 %v1457
    %1500 = vmatpush.bf16.msra.mxu0 %v1455
    %1501 = vmatpush.bf16.msra.mxu0 %v1453
    %1502 = vmatpush.bf16.msra.mxu0 %v1451
    %1503 = vmatmul.bf16.gmra.mxu0 %v1385
    %v1504 = vpop.f32.mrf.mxu0
    %v1505 = vadd.f32 0.0, %v1504
    %v1506 = vpop.f32.mrf.mxu0
    %1507 = vdwg.mxu0
    %v1509 = vperm.slane %v1383, 0
    %v1510 = vperm.slane %v1383, 1
    %v1513 = vadd.f32 %v1509, %v1492
    %v1514 = vadd.f32 %v1510, %v1505
    %s1515 = scalar_lea.vmem %s0, 12
    %v1516 = vld [vmem:[%s1515] sm:$0xf]
    %v1517 = vld [vmem:[%s185] sm:$0xff]
    %v1518 = vld [vmem:[%s185 + $0x8] sm:$0xff]
    %v1519 = vld [vmem:[%s185 + $0x10] sm:$0xff]
    %v1520 = vld [vmem:[%s185 + $0x18] sm:$0xff]
    %v1521 = vld [vmem:[%s185 + $0x20] sm:$0xff]
    %v1522 = vld [vmem:[%s185 + $0x28] sm:$0xff]
    %v1523 = vld [vmem:[%s185 + $0x30] sm:$0xff]
    %v1524 = vld [vmem:[%s185 + $0x38] sm:$0xff]
    %v1525 = vld [vmem:[%s185 + $0x40] sm:$0xff]
    %v1526 = vld [vmem:[%s185 + $0x48] sm:$0xff]
    %v1527 = vld [vmem:[%s185 + $0x50] sm:$0xff]
    %v1528 = vld [vmem:[%s185 + $0x58] sm:$0xff]
    %v1529 = vld [vmem:[%s185 + $0x60] sm:$0xff]
    %v1530 = vld [vmem:[%s185 + $0x68] sm:$0xff]
    %v1531 = vld [vmem:[%s185 + $0x70] sm:$0xff]
    %v1532 = vld [vmem:[%s185 + $0x78] sm:$0xff]
    %v1549 = vunpack.c.l.b16 %v1517
    %v1550 = vunpack.c.h.b16 %v1517
    %v1551 = vunpack.c.l.b16 %v1518
    %v1552 = vunpack.c.h.b16 %v1518
    %v1553 = vunpack.c.l.b16 %v1519
    %v1554 = vunpack.c.h.b16 %v1519
    %v1555 = vunpack.c.l.b16 %v1520
    %v1556 = vunpack.c.h.b16 %v1520
    %v1557 = vunpack.c.l.b16 %v1521
    %v1558 = vunpack.c.h.b16 %v1521
    %v1559 = vunpack.c.l.b16 %v1522
    %v1560 = vunpack.c.h.b16 %v1522
    %v1561 = vunpack.c.l.b16 %v1523
    %v1562 = vunpack.c.h.b16 %v1523
    %v1563 = vunpack.c.l.b16 %v1524
    %v1564 = vunpack.c.h.b16 %v1524
    %v1565 = vunpack.c.l.b16 %v1525
    %v1566 = vunpack.c.h.b16 %v1525
    %v1567 = vunpack.c.l.b16 %v1526
    %v1568 = vunpack.c.h.b16 %v1526
    %v1569 = vunpack.c.l.b16 %v1527
    %v1570 = vunpack.c.h.b16 %v1527
    %v1571 = vunpack.c.l.b16 %v1528
    %v1572 = vunpack.c.h.b16 %v1528
    %v1573 = vunpack.c.l.b16 %v1529
    %v1574 = vunpack.c.h.b16 %v1529
    %v1575 = vunpack.c.l.b16 %v1530
    %v1576 = vunpack.c.h.b16 %v1530
    %v1577 = vunpack.c.l.b16 %v1531
    %v1578 = vunpack.c.h.b16 %v1531
    %v1579 = vunpack.c.l.b16 %v1532
    %v1580 = vunpack.c.h.b16 %v1532
    %v1581 = vpack.c.b16 %v1551, %v1549
    %v1582 = vpack.c.b16 %v1552, %v1550
    %v1583 = vpack.c.b16 %v1555, %v1553
    %v1584 = vpack.c.b16 %v1556, %v1554
    %v1585 = vpack.c.b16 %v1559, %v1557
    %v1586 = vpack.c.b16 %v1560, %v1558
    %v1587 = vpack.c.b16 %v1563, %v1561
    %v1588 = vpack.c.b16 %v1564, %v1562
    %v1589 = vpack.c.b16 %v1567, %v1565
    %v1590 = vpack.c.b16 %v1568, %v1566
    %v1591 = vpack.c.b16 %v1571, %v1569
    %v1592 = vpack.c.b16 %v1572, %v1570
    %v1593 = vpack.c.b16 %v1575, %v1573
    %v1594 = vpack.c.b16 %v1576, %v1574
    %v1595 = vpack.c.b16 %v1579, %v1577
    %v1596 = vpack.c.b16 %v1580, %v1578
    %1613 = vmatpush.bf16.msra.mxu0 %v1595
    %1614 = vmatpush.bf16.msra.mxu0 %v1593
    %1615 = vmatpush.bf16.msra.mxu0 %v1591
    %1616 = vmatpush.bf16.msra.mxu0 %v1589
    %1617 = vmatpush.bf16.msra.mxu0 %v1587
    %1618 = vmatpush.bf16.msra.mxu0 %v1585
    %1619 = vmatpush.bf16.msra.mxu0 %v1583
    %1620 = vmatpush.bf16.msra.mxu0 %v1581
    %1621 = vmatmul.bf16.gmra.mxu0 %v1516
    %v1622 = vpop.f32.mrf.mxu0
    %v1623 = vadd.f32 0.0, %v1622
    %v1624 = vpop.f32.mrf.mxu0
    %1625 = vdwg.mxu0
    %1626 = vmatpush.bf16.msra.mxu0 %v1596
    %1627 = vmatpush.bf16.msra.mxu0 %v1594
    %1628 = vmatpush.bf16.msra.mxu0 %v1592
    %1629 = vmatpush.bf16.msra.mxu0 %v1590
    %1630 = vmatpush.bf16.msra.mxu0 %v1588
    %1631 = vmatpush.bf16.msra.mxu0 %v1586
    %1632 = vmatpush.bf16.msra.mxu0 %v1584
    %1633 = vmatpush.bf16.msra.mxu0 %v1582
    %1634 = vmatmul.bf16.gmra.mxu0 %v1516
    %v1635 = vpop.f32.mrf.mxu0
    %v1636 = vadd.f32 0.0, %v1635
    %v1637 = vpop.f32.mrf.mxu0
    %1638 = vdwg.mxu0
    %v1639 = vadd.f32 %v1513, %v1623
    %v1640 = vadd.f32 %v1514, %v1636
    %s1641 = scalar_lea.vmem %s0, 20
    %v1642 = vld [vmem:[%s1641] sm:$0xf]
    %v1643 = vld [vmem:[%s312] sm:$0xff]
    %v1644 = vld [vmem:[%s312 + $0x8] sm:$0xff]
    %v1645 = vld [vmem:[%s312 + $0x10] sm:$0xff]
    %v1646 = vld [vmem:[%s312 + $0x18] sm:$0xff]
    %v1647 = vld [vmem:[%s312 + $0x20] sm:$0xff]
    %v1648 = vld [vmem:[%s312 + $0x28] sm:$0xff]
    %v1649 = vld [vmem:[%s312 + $0x30] sm:$0xff]
    %v1650 = vld [vmem:[%s312 + $0x38] sm:$0xff]
    %v1651 = vld [vmem:[%s312 + $0x40] sm:$0xff]
    %v1652 = vld [vmem:[%s312 + $0x48] sm:$0xff]
    %v1653 = vld [vmem:[%s312 + $0x50] sm:$0xff]
    %v1654 = vld [vmem:[%s312 + $0x58] sm:$0xff]
    %v1655 = vld [vmem:[%s312 + $0x60] sm:$0xff]
    %v1656 = vld [vmem:[%s312 + $0x68] sm:$0xff]
    %v1657 = vld [vmem:[%s312 + $0x70] sm:$0xff]
    %v1658 = vld [vmem:[%s312 + $0x78] sm:$0xff]
    %v1675 = vunpack.c.l.b16 %v1643
    %v1676 = vunpack.c.h.b16 %v1643
    %v1677 = vunpack.c.l.b16 %v1644
    %v1678 = vunpack.c.h.b16 %v1644
    %v1679 = vunpack.c.l.b16 %v1645
    %v1680 = vunpack.c.h.b16 %v1645
    %v1681 = vunpack.c.l.b16 %v1646
    %v1682 = vunpack.c.h.b16 %v1646
    %v1683 = vunpack.c.l.b16 %v1647
    %v1684 = vunpack.c.h.b16 %v1647
    %v1685 = vunpack.c.l.b16 %v1648
    %v1686 = vunpack.c.h.b16 %v1648
    %v1687 = vunpack.c.l.b16 %v1649
    %v1688 = vunpack.c.h.b16 %v1649
    %v1689 = vunpack.c.l.b16 %v1650
    %v1690 = vunpack.c.h.b16 %v1650
    %v1691 = vunpack.c.l.b16 %v1651
    %v1692 = vunpack.c.h.b16 %v1651
    %v1693 = vunpack.c.l.b16 %v1652
    %v1694 = vunpack.c.h.b16 %v1652
    %v1695 = vunpack.c.l.b16 %v1653
    %v1696 = vunpack.c.h.b16 %v1653
    %v1697 = vunpack.c.l.b16 %v1654
    %v1698 = vunpack.c.h.b16 %v1654
    %v1699 = vunpack.c.l.b16 %v1655
    %v1700 = vunpack.c.h.b16 %v1655
    %v1701 = vunpack.c.l.b16 %v1656
    %v1702 = vunpack.c.h.b16 %v1656
    %v1703 = vunpack.c.l.b16 %v1657
    %v1704 = vunpack.c.h.b16 %v1657
    %v1705 = vunpack.c.l.b16 %v1658
    %v1706 = vunpack.c.h.b16 %v1658
    %v1707 = vpack.c.b16 %v1677, %v1675
    %v1708 = vpack.c.b16 %v1678, %v1676
    %v1709 = vpack.c.b16 %v1681, %v1679
    %v1710 = vpack.c.b16 %v1682, %v1680
    %v1711 = vpack.c.b16 %v1685, %v1683
    %v1712 = vpack.c.b16 %v1686, %v1684
    %v1713 = vpack.c.b16 %v1689, %v1687
    %v1714 = vpack.c.b16 %v1690, %v1688
    %v1715 = vpack.c.b16 %v1693, %v1691
    %v1716 = vpack.c.b16 %v1694, %v1692
    %v1717 = vpack.c.b16 %v1697, %v1695
    %v1718 = vpack.c.b16 %v1698, %v1696
    %v1719 = vpack.c.b16 %v1701, %v1699
    %v1720 = vpack.c.b16 %v1702, %v1700
    %v1721 = vpack.c.b16 %v1705, %v1703
    %v1722 = vpack.c.b16 %v1706, %v1704
    %1739 = vmatpush.bf16.msra.mxu0 %v1721
    %1740 = vmatpush.bf16.msra.mxu0 %v1719
    %1741 = vmatpush.bf16.msra.mxu0 %v1717
    %1742 = vmatpush.bf16.msra.mxu0 %v1715
    %1743 = vmatpush.bf16.msra.mxu0 %v1713
    %1744 = vmatpush.bf16.msra.mxu0 %v1711
    %1745 = vmatpush.bf16.msra.mxu0 %v1709
    %1746 = vmatpush.bf16.msra.mxu0 %v1707
    %1747 = vmatmul.bf16.gmra.mxu0 %v1642
    %v1748 = vpop.f32.mrf.mxu0
    %v1749 = vadd.f32 0.0, %v1748
    %v1750 = vpop.f32.mrf.mxu0
    %1751 = vdwg.mxu0
    %1752 = vmatpush.bf16.msra.mxu0 %v1722
    %1753 = vmatpush.bf16.msra.mxu0 %v1720
    %1754 = vmatpush.bf16.msra.mxu0 %v1718
    %1755 = vmatpush.bf16.msra.mxu0 %v1716
    %1756 = vmatpush.bf16.msra.mxu0 %v1714
    %1757 = vmatpush.bf16.msra.mxu0 %v1712
    %1758 = vmatpush.bf16.msra.mxu0 %v1710
    %1759 = vmatpush.bf16.msra.mxu0 %v1708
    %1760 = vmatmul.bf16.gmra.mxu0 %v1642
    %v1761 = vpop.f32.mrf.mxu0
    %v1762 = vadd.f32 0.0, %v1761
    %v1763 = vpop.f32.mrf.mxu0
    %1764 = vdwg.mxu0
    %v1765 = vadd.f32 %v1639, %v1749
    %v1766 = vadd.f32 %v1640, %v1762
    %s1767 = scalar_lea.vmem %s0, 28
    %v1768 = vld [vmem:[%s1767] sm:$0xf]
    %v1769 = vld [vmem:[%s439] sm:$0xff]
    %v1770 = vld [vmem:[%s439 + $0x8] sm:$0xff]
    %v1771 = vld [vmem:[%s439 + $0x10] sm:$0xff]
    %v1772 = vld [vmem:[%s439 + $0x18] sm:$0xff]
    %v1773 = vld [vmem:[%s439 + $0x20] sm:$0xff]
    %v1774 = vld [vmem:[%s439 + $0x28] sm:$0xff]
    %v1775 = vld [vmem:[%s439 + $0x30] sm:$0xff]
    %v1776 = vld [vmem:[%s439 + $0x38] sm:$0xff]
    %v1777 = vld [vmem:[%s439 + $0x40] sm:$0xff]
    %v1778 = vld [vmem:[%s439 + $0x48] sm:$0xff]
    %v1779 = vld [vmem:[%s439 + $0x50] sm:$0xff]
    %v1780 = vld [vmem:[%s439 + $0x58] sm:$0xff]
    %v1781 = vld [vmem:[%s439 + $0x60] sm:$0xff]
    %v1782 = vld [vmem:[%s439 + $0x68] sm:$0xff]
    %v1783 = vld [vmem:[%s439 + $0x70] sm:$0xff]
    %v1784 = vld [vmem:[%s439 + $0x78] sm:$0xff]
    %v1801 = vunpack.c.l.b16 %v1769
    %v1802 = vunpack.c.h.b16 %v1769
    %v1803 = vunpack.c.l.b16 %v1770
    %v1804 = vunpack.c.h.b16 %v1770
    %v1805 = vunpack.c.l.b16 %v1771
    %v1806 = vunpack.c.h.b16 %v1771
    %v1807 = vunpack.c.l.b16 %v1772
    %v1808 = vunpack.c.h.b16 %v1772
    %v1809 = vunpack.c.l.b16 %v1773
    %v1810 = vunpack.c.h.b16 %v1773
    %v1811 = vunpack.c.l.b16 %v1774
    %v1812 = vunpack.c.h.b16 %v1774
    %v1813 = vunpack.c.l.b16 %v1775
    %v1814 = vunpack.c.h.b16 %v1775
    %v1815 = vunpack.c.l.b16 %v1776
    %v1816 = vunpack.c.h.b16 %v1776
    %v1817 = vunpack.c.l.b16 %v1777
    %v1818 = vunpack.c.h.b16 %v1777
    %v1819 = vunpack.c.l.b16 %v1778
    %v1820 = vunpack.c.h.b16 %v1778
    %v1821 = vunpack.c.l.b16 %v1779
    %v1822 = vunpack.c.h.b16 %v1779
    %v1823 = vunpack.c.l.b16 %v1780
    %v1824 = vunpack.c.h.b16 %v1780
    %v1825 = vunpack.c.l.b16 %v1781
    %v1826 = vunpack.c.h.b16 %v1781
    %v1827 = vunpack.c.l.b16 %v1782
    %v1828 = vunpack.c.h.b16 %v1782
    %v1829 = vunpack.c.l.b16 %v1783
    %v1830 = vunpack.c.h.b16 %v1783
    %v1831 = vunpack.c.l.b16 %v1784
    %v1832 = vunpack.c.h.b16 %v1784
    %v1833 = vpack.c.b16 %v1803, %v1801
    %v1834 = vpack.c.b16 %v1804, %v1802
    %v1835 = vpack.c.b16 %v1807, %v1805
    %v1836 = vpack.c.b16 %v1808, %v1806
    %v1837 = vpack.c.b16 %v1811, %v1809
    %v1838 = vpack.c.b16 %v1812, %v1810
    %v1839 = vpack.c.b16 %v1815, %v1813
    %v1840 = vpack.c.b16 %v1816, %v1814
    %v1841 = vpack.c.b16 %v1819, %v1817
    %v1842 = vpack.c.b16 %v1820, %v1818
    %v1843 = vpack.c.b16 %v1823, %v1821
    %v1844 = vpack.c.b16 %v1824, %v1822
    %v1845 = vpack.c.b16 %v1827, %v1825
    %v1846 = vpack.c.b16 %v1828, %v1826
    %v1847 = vpack.c.b16 %v1831, %v1829
    %v1848 = vpack.c.b16 %v1832, %v1830
    %1865 = vmatpush.bf16.msra.mxu0 %v1847
    %1866 = vmatpush.bf16.msra.mxu0 %v1845
    %1867 = vmatpush.bf16.msra.mxu0 %v1843
    %1868 = vmatpush.bf16.msra.mxu0 %v1841
    %1869 = vmatpush.bf16.msra.mxu0 %v1839
    %1870 = vmatpush.bf16.msra.mxu0 %v1837
    %1871 = vmatpush.bf16.msra.mxu0 %v1835
    %1872 = vmatpush.bf16.msra.mxu0 %v1833
    %1873 = vmatmul.bf16.gmra.mxu0 %v1768
    %v1874 = vpop.f32.mrf.mxu0
    %v1875 = vadd.f32 0.0, %v1874
    %v1876 = vpop.f32.mrf.mxu0
    %1877 = vdwg.mxu0
    %1878 = vmatpush.bf16.msra.mxu0 %v1848
    %1879 = vmatpush.bf16.msra.mxu0 %v1846
    %1880 = vmatpush.bf16.msra.mxu0 %v1844
    %1881 = vmatpush.bf16.msra.mxu0 %v1842
    %1882 = vmatpush.bf16.msra.mxu0 %v1840
    %1883 = vmatpush.bf16.msra.mxu0 %v1838
    %1884 = vmatpush.bf16.msra.mxu0 %v1836
    %1885 = vmatpush.bf16.msra.mxu0 %v1834
    %1886 = vmatmul.bf16.gmra.mxu0 %v1768
    %v1887 = vpop.f32.mrf.mxu0
    %v1888 = vadd.f32 0.0, %v1887
    %v1889 = vpop.f32.mrf.mxu0
    %1890 = vdwg.mxu0
    %v1891 = vadd.f32 %v1765, %v1875
    %v1892 = vadd.f32 %v1766, %v1888
    %v1893 = vld [vmem:[%s564] sm:$0xff]
    %v1894 = vld [vmem:[%s564 + $0x8] sm:$0xff]
    %v1895 = vld [vmem:[%s564 + $0x10] sm:$0xff]
    %v1896 = vld [vmem:[%s564 + $0x18] sm:$0xff]
    %v1897 = vld [vmem:[%s564 + $0x20] sm:$0xff]
    %v1898 = vld [vmem:[%s564 + $0x28] sm:$0xff]
    %v1899 = vld [vmem:[%s564 + $0x30] sm:$0xff]
    %v1900 = vld [vmem:[%s564 + $0x38] sm:$0xff]
    %v1901 = vld [vmem:[%s564 + $0x40] sm:$0xff]
    %v1902 = vld [vmem:[%s564 + $0x48] sm:$0xff]
    %v1903 = vld [vmem:[%s564 + $0x50] sm:$0xff]
    %v1904 = vld [vmem:[%s564 + $0x58] sm:$0xff]
    %v1905 = vld [vmem:[%s564 + $0x60] sm:$0xff]
    %v1906 = vld [vmem:[%s564 + $0x68] sm:$0xff]
    %v1907 = vld [vmem:[%s564 + $0x70] sm:$0xff]
    %v1908 = vld [vmem:[%s564 + $0x78] sm:$0xff]
    %v1910 = vunpack.c.l.b16 %v1385
    %v1911 = vpack.c.b16 %v1910, %v1910
    %v1913 = vshrl.u32 %v1911, 16
    %v1915 = vshll.u32 %v1911, 16
    %v1917 = vrot.slane %v1915, 1
    %v1918 = vor.u32 %v1913, %v1917
    %v1936 = vunpack.c.l.b16 %v1893
    %v1937 = vunpack.c.h.b16 %v1893
    %v1938 = vunpack.c.l.b16 %v1894
    %v1939 = vunpack.c.h.b16 %v1894
    %v1940 = vunpack.c.l.b16 %v1895
    %v1941 = vunpack.c.h.b16 %v1895
    %v1942 = vunpack.c.l.b16 %v1896
    %v1943 = vunpack.c.h.b16 %v1896
    %v1944 = vunpack.c.l.b16 %v1897
    %v1945 = vunpack.c.h.b16 %v1897
    %v1946 = vunpack.c.l.b16 %v1898
    %v1947 = vunpack.c.h.b16 %v1898
    %v1948 = vunpack.c.l.b16 %v1899
    %v1949 = vunpack.c.h.b16 %v1899
    %v1950 = vunpack.c.l.b16 %v1900
    %v1951 = vunpack.c.h.b16 %v1900
    %v1952 = vunpack.c.l.b16 %v1901
    %v1953 = vunpack.c.h.b16 %v1901
    %v1954 = vunpack.c.l.b16 %v1902
    %v1955 = vunpack.c.h.b16 %v1902
    %v1956 = vunpack.c.l.b16 %v1903
    %v1957 = vunpack.c.h.b16 %v1903
    %v1958 = vunpack.c.l.b16 %v1904
    %v1959 = vunpack.c.h.b16 %v1904
    %v1960 = vunpack.c.l.b16 %v1905
    %v1961 = vunpack.c.h.b16 %v1905
    %v1962 = vunpack.c.l.b16 %v1906
    %v1963 = vunpack.c.h.b16 %v1906
    %v1964 = vunpack.c.l.b16 %v1907
    %v1965 = vunpack.c.h.b16 %v1907
    %v1966 = vunpack.c.l.b16 %v1908
    %v1967 = vunpack.c.h.b16 %v1908
    %v1968 = vpack.c.b16 %v1938, %v1936
    %v1969 = vpack.c.b16 %v1939, %v1937
    %v1970 = vpack.c.b16 %v1942, %v1940
    %v1971 = vpack.c.b16 %v1943, %v1941
    %v1972 = vpack.c.b16 %v1946, %v1944
    %v1973 = vpack.c.b16 %v1947, %v1945
    %v1974 = vpack.c.b16 %v1950, %v1948
    %v1975 = vpack.c.b16 %v1951, %v1949
    %v1976 = vpack.c.b16 %v1954, %v1952
    %v1977 = vpack.c.b16 %v1955, %v1953
    %v1978 = vpack.c.b16 %v1958, %v1956
    %v1979 = vpack.c.b16 %v1959, %v1957
    %v1980 = vpack.c.b16 %v1962, %v1960
    %v1981 = vpack.c.b16 %v1963, %v1961
    %v1982 = vpack.c.b16 %v1966, %v1964
    %v1983 = vpack.c.b16 %v1967, %v1965
    %2000 = vmatpush.bf16.msra.mxu0 %v1982
    %2001 = vmatpush.bf16.msra.mxu0 %v1980
    %2002 = vmatpush.bf16.msra.mxu0 %v1978
    %2003 = vmatpush.bf16.msra.mxu0 %v1976
    %2004 = vmatpush.bf16.msra.mxu0 %v1974
    %2005 = vmatpush.bf16.msra.mxu0 %v1972
    %2006 = vmatpush.bf16.msra.mxu0 %v1970
    %2007 = vmatpush.bf16.msra.mxu0 %v1968
    %2008 = vmatmul.bf16.gmra.mxu0 %v1918
    %v2009 = vpop.f32.mrf.mxu0
    %v2010 = vadd.f32 0.0, %v2009
    %v2011 = vpop.f32.mrf.mxu0
    %2012 = vdwg.mxu0
    %2013 = vmatpush.bf16.msra.mxu0 %v1983
    %2014 = vmatpush.bf16.msra.mxu0 %v1981
    %2015 = vmatpush.bf16.msra.mxu0 %v1979
    %2016 = vmatpush.bf16.msra.mxu0 %v1977
    %2017 = vmatpush.bf16.msra.mxu0 %v1975
    %2018 = vmatpush.bf16.msra.mxu0 %v1973
    %2019 = vmatpush.bf16.msra.mxu0 %v1971
    %2020 = vmatpush.bf16.msra.mxu0 %v1969
    %2021 = vmatmul.bf16.gmra.mxu0 %v1918
    %v2022 = vpop.f32.mrf.mxu0
    %v2023 = vadd.f32 0.0, %v2022
    %v2024 = vpop.f32.mrf.mxu0
    %2025 = vdwg.mxu0
    %v2026 = vadd.f32 %v1891, %v2010
    %v2027 = vadd.f32 %v1892, %v2023
    %v2028 = vmax.f32 %v2026, 0.0
    %v2029 = vmax.f32 %v2027, 0.0
    %v2030 = vpack.c.bf16 %v2029, %v2028
    %s2031 = scalar_lea.vmem [#allocation2], 8
    %v2032 = vld [vmem:[%s2031] sm:$0xff]
    %v2033 = vsel %vm709, %v2030, %v2032
    %2034 = vst [vmem:[%s2031] sm:$0xff] %v2033
    %v2035 = vld [vmem:[%s5] sm:$0x3]
    %v2036 = vld [vmem:[%s1641] sm:$0xf]
    %v2037 = vld [vmem:[%s2] sm:$0xff]
    %v2038 = vld [vmem:[%s2 + $0x8] sm:$0xff]
    %v2039 = vld [vmem:[%s2 + $0x10] sm:$0xff]
    %v2040 = vld [vmem:[%s2 + $0x18] sm:$0xff]
    %v2041 = vld [vmem:[%s2 + $0x20] sm:$0xff]
    %v2042 = vld [vmem:[%s2 + $0x28] sm:$0xff]
    %v2043 = vld [vmem:[%s2 + $0x30] sm:$0xff]
    %v2044 = vld [vmem:[%s2 + $0x38] sm:$0xff]
    %v2045 = vld [vmem:[%s2 + $0x40] sm:$0xff]
    %v2046 = vld [vmem:[%s2 + $0x48] sm:$0xff]
    %v2047 = vld [vmem:[%s2 + $0x50] sm:$0xff]
    %v2048 = vld [vmem:[%s2 + $0x58] sm:$0xff]
    %v2049 = vld [vmem:[%s2 + $0x60] sm:$0xff]
    %v2050 = vld [vmem:[%s2 + $0x68] sm:$0xff]
    %v2051 = vld [vmem:[%s2 + $0x70] sm:$0xff]
    %v2052 = vld [vmem:[%s2 + $0x78] sm:$0xff]
    %v2069 = vunpack.c.l.b16 %v2037
    %v2070 = vunpack.c.h.b16 %v2037
    %v2071 = vunpack.c.l.b16 %v2038
    %v2072 = vunpack.c.h.b16 %v2038
    %v2073 = vunpack.c.l.b16 %v2039
    %v2074 = vunpack.c.h.b16 %v2039
    %v2075 = vunpack.c.l.b16 %v2040
    %v2076 = vunpack.c.h.b16 %v2040
    %v2077 = vunpack.c.l.b16 %v2041
    %v2078 = vunpack.c.h.b16 %v2041
    %v2079 = vunpack.c.l.b16 %v2042
    %v2080 = vunpack.c.h.b16 %v2042
    %v2081 = vunpack.c.l.b16 %v2043
    %v2082 = vunpack.c.h.b16 %v2043
    %v2083 = vunpack.c.l.b16 %v2044
    %v2084 = vunpack.c.h.b16 %v2044
    %v2085 = vunpack.c.l.b16 %v2045
    %v2086 = vunpack.c.h.b16 %v2045
    %v2087 = vunpack.c.l.b16 %v2046
    %v2088 = vunpack.c.h.b16 %v2046
    %v2089 = vunpack.c.l.b16 %v2047
    %v2090 = vunpack.c.h.b16 %v2047
    %v2091 = vunpack.c.l.b16 %v2048
    %v2092 = vunpack.c.h.b16 %v2048
    %v2093 = vunpack.c.l.b16 %v2049
    %v2094 = vunpack.c.h.b16 %v2049
    %v2095 = vunpack.c.l.b16 %v2050
    %v2096 = vunpack.c.h.b16 %v2050
    %v2097 = vunpack.c.l.b16 %v2051
    %v2098 = vunpack.c.h.b16 %v2051
    %v2099 = vunpack.c.l.b16 %v2052
    %v2100 = vunpack.c.h.b16 %v2052
    %v2101 = vpack.c.b16 %v2071, %v2069
    %v2102 = vpack.c.b16 %v2072, %v2070
    %v2103 = vpack.c.b16 %v2075, %v2073
    %v2104 = vpack.c.b16 %v2076, %v2074
    %v2105 = vpack.c.b16 %v2079, %v2077
    %v2106 = vpack.c.b16 %v2080, %v2078
    %v2107 = vpack.c.b16 %v2083, %v2081
    %v2108 = vpack.c.b16 %v2084, %v2082
    %v2109 = vpack.c.b16 %v2087, %v2085
    %v2110 = vpack.c.b16 %v2088, %v2086
    %v2111 = vpack.c.b16 %v2091, %v2089
    %v2112 = vpack.c.b16 %v2092, %v2090
    %v2113 = vpack.c.b16 %v2095, %v2093
    %v2114 = vpack.c.b16 %v2096, %v2094
    %v2115 = vpack.c.b16 %v2099, %v2097
    %v2116 = vpack.c.b16 %v2100, %v2098
    %2133 = vmatpush.bf16.msra.mxu0 %v2115
    %2134 = vmatpush.bf16.msra.mxu0 %v2113
    %2135 = vmatpush.bf16.msra.mxu0 %v2111
    %2136 = vmatpush.bf16.msra.mxu0 %v2109
    %2137 = vmatpush.bf16.msra.mxu0 %v2107
    %2138 = vmatpush.bf16.msra.mxu0 %v2105
    %2139 = vmatpush.bf16.msra.mxu0 %v2103
    %2140 = vmatpush.bf16.msra.mxu0 %v2101
    %2141 = vmatmul.bf16.gmra.mxu0 %v2036
    %v2142 = vpop.f32.mrf.mxu0
    %v2143 = vadd.f32 0.0, %v2142
    %v2144 = vpop.f32.mrf.mxu0
    %2145 = vdwg.mxu0
    %2146 = vmatpush.bf16.msra.mxu0 %v2116
    %2147 = vmatpush.bf16.msra.mxu0 %v2114
    %2148 = vmatpush.bf16.msra.mxu0 %v2112
    %2149 = vmatpush.bf16.msra.mxu0 %v2110
    %2150 = vmatpush.bf16.msra.mxu0 %v2108
    %2151 = vmatpush.bf16.msra.mxu0 %v2106
    %2152 = vmatpush.bf16.msra.mxu0 %v2104
    %2153 = vmatpush.bf16.msra.mxu0 %v2102
    %2154 = vmatmul.bf16.gmra.mxu0 %v2036
    %v2155 = vpop.f32.mrf.mxu0
    %v2156 = vadd.f32 0.0, %v2155
    %v2157 = vpop.f32.mrf.mxu0
    %2158 = vdwg.mxu0
    %v2160 = vperm.slane %v2035, 0
    %v2161 = vperm.slane %v2035, 1
    %v2164 = vadd.f32 %v2160, %v2143
    %v2165 = vadd.f32 %v2161, %v2156
    %v2166 = vld [vmem:[%s1767] sm:$0xf]
    %v2167 = vld [vmem:[%s185] sm:$0xff]
    %v2168 = vld [vmem:[%s185 + $0x8] sm:$0xff]
    %v2169 = vld [vmem:[%s185 + $0x10] sm:$0xff]
    %v2170 = vld [vmem:[%s185 + $0x18] sm:$0xff]
    %v2171 = vld [vmem:[%s185 + $0x20] sm:$0xff]
    %v2172 = vld [vmem:[%s185 + $0x28] sm:$0xff]
    %v2173 = vld [vmem:[%s185 + $0x30] sm:$0xff]
    %v2174 = vld [vmem:[%s185 + $0x38] sm:$0xff]
    %v2175 = vld [vmem:[%s185 + $0x40] sm:$0xff]
    %v2176 = vld [vmem:[%s185 + $0x48] sm:$0xff]
    %v2177 = vld [vmem:[%s185 + $0x50] sm:$0xff]
    %v2178 = vld [vmem:[%s185 + $0x58] sm:$0xff]
    %v2179 = vld [vmem:[%s185 + $0x60] sm:$0xff]
    %v2180 = vld [vmem:[%s185 + $0x68] sm:$0xff]
    %v2181 = vld [vmem:[%s185 + $0x70] sm:$0xff]
    %v2182 = vld [vmem:[%s185 + $0x78] sm:$0xff]
    %v2199 = vunpack.c.l.b16 %v2167
    %v2200 = vunpack.c.h.b16 %v2167
    %v2201 = vunpack.c.l.b16 %v2168
    %v2202 = vunpack.c.h.b16 %v2168
    %v2203 = vunpack.c.l.b16 %v2169
    %v2204 = vunpack.c.h.b16 %v2169
    %v2205 = vunpack.c.l.b16 %v2170
    %v2206 = vunpack.c.h.b16 %v2170
    %v2207 = vunpack.c.l.b16 %v2171
    %v2208 = vunpack.c.h.b16 %v2171
    %v2209 = vunpack.c.l.b16 %v2172
    %v2210 = vunpack.c.h.b16 %v2172
    %v2211 = vunpack.c.l.b16 %v2173
    %v2212 = vunpack.c.h.b16 %v2173
    %v2213 = vunpack.c.l.b16 %v2174
    %v2214 = vunpack.c.h.b16 %v2174
    %v2215 = vunpack.c.l.b16 %v2175
    %v2216 = vunpack.c.h.b16 %v2175
    %v2217 = vunpack.c.l.b16 %v2176
    %v2218 = vunpack.c.h.b16 %v2176
    %v2219 = vunpack.c.l.b16 %v2177
    %v2220 = vunpack.c.h.b16 %v2177
    %v2221 = vunpack.c.l.b16 %v2178
    %v2222 = vunpack.c.h.b16 %v2178
    %v2223 = vunpack.c.l.b16 %v2179
    %v2224 = vunpack.c.h.b16 %v2179
    %v2225 = vunpack.c.l.b16 %v2180
    %v2226 = vunpack.c.h.b16 %v2180
    %v2227 = vunpack.c.l.b16 %v2181
    %v2228 = vunpack.c.h.b16 %v2181
    %v2229 = vunpack.c.l.b16 %v2182
    %v2230 = vunpack.c.h.b16 %v2182
    %v2231 = vpack.c.b16 %v2201, %v2199
    %v2232 = vpack.c.b16 %v2202, %v2200
    %v2233 = vpack.c.b16 %v2205, %v2203
    %v2234 = vpack.c.b16 %v2206, %v2204
    %v2235 = vpack.c.b16 %v2209, %v2207
    %v2236 = vpack.c.b16 %v2210, %v2208
    %v2237 = vpack.c.b16 %v2213, %v2211
    %v2238 = vpack.c.b16 %v2214, %v2212
    %v2239 = vpack.c.b16 %v2217, %v2215
    %v2240 = vpack.c.b16 %v2218, %v2216
    %v2241 = vpack.c.b16 %v2221, %v2219
    %v2242 = vpack.c.b16 %v2222, %v2220
    %v2243 = vpack.c.b16 %v2225, %v2223
    %v2244 = vpack.c.b16 %v2226, %v2224
    %v2245 = vpack.c.b16 %v2229, %v2227
    %v2246 = vpack.c.b16 %v2230, %v2228
    %2263 = vmatpush.bf16.msra.mxu0 %v2245
    %2264 = vmatpush.bf16.msra.mxu0 %v2243
    %2265 = vmatpush.bf16.msra.mxu0 %v2241
    %2266 = vmatpush.bf16.msra.mxu0 %v2239
    %2267 = vmatpush.bf16.msra.mxu0 %v2237
    %2268 = vmatpush.bf16.msra.mxu0 %v2235
    %2269 = vmatpush.bf16.msra.mxu0 %v2233
    %2270 = vmatpush.bf16.msra.mxu0 %v2231
    %2271 = vmatmul.bf16.gmra.mxu0 %v2166
    %v2272 = vpop.f32.mrf.mxu0
    %v2273 = vadd.f32 0.0, %v2272
    %v2274 = vpop.f32.mrf.mxu0
    %2275 = vdwg.mxu0
    %2276 = vmatpush.bf16.msra.mxu0 %v2246
    %2277 = vmatpush.bf16.msra.mxu0 %v2244
    %2278 = vmatpush.bf16.msra.mxu0 %v2242
    %2279 = vmatpush.bf16.msra.mxu0 %v2240
    %2280 = vmatpush.bf16.msra.mxu0 %v2238
    %2281 = vmatpush.bf16.msra.mxu0 %v2236
    %2282 = vmatpush.bf16.msra.mxu0 %v2234
    %2283 = vmatpush.bf16.msra.mxu0 %v2232
    %2284 = vmatmul.bf16.gmra.mxu0 %v2166
    %v2285 = vpop.f32.mrf.mxu0
    %v2286 = vadd.f32 0.0, %v2285
    %v2287 = vpop.f32.mrf.mxu0
    %2288 = vdwg.mxu0
    %v2289 = vadd.f32 %v2164, %v2273
    %v2290 = vadd.f32 %v2165, %v2286
    %v2291 = vld [vmem:[%s1384] sm:$0xf]
    %v2292 = vld [vmem:[%s312] sm:$0xff]
    %v2293 = vld [vmem:[%s312 + $0x8] sm:$0xff]
    %v2294 = vld [vmem:[%s312 + $0x10] sm:$0xff]
    %v2295 = vld [vmem:[%s312 + $0x18] sm:$0xff]
    %v2296 = vld [vmem:[%s312 + $0x20] sm:$0xff]
    %v2297 = vld [vmem:[%s312 + $0x28] sm:$0xff]
    %v2298 = vld [vmem:[%s312 + $0x30] sm:$0xff]
    %v2299 = vld [vmem:[%s312 + $0x38] sm:$0xff]
    %v2300 = vld [vmem:[%s312 + $0x40] sm:$0xff]
    %v2301 = vld [vmem:[%s312 + $0x48] sm:$0xff]
    %v2302 = vld [vmem:[%s312 + $0x50] sm:$0xff]
    %v2303 = vld [vmem:[%s312 + $0x58] sm:$0xff]
    %v2304 = vld [vmem:[%s312 + $0x60] sm:$0xff]
    %v2305 = vld [vmem:[%s312 + $0x68] sm:$0xff]
    %v2306 = vld [vmem:[%s312 + $0x70] sm:$0xff]
    %v2307 = vld [vmem:[%s312 + $0x78] sm:$0xff]
    %v2309 = vunpack.c.l.b16 %v2291
    %v2310 = vpack.c.b16 %v2309, %v2309
    %v2312 = vshrl.u32 %v2310, 16
    %v2314 = vshll.u32 %v2310, 16
    %v2316 = vrot.slane %v2314, 1
    %v2317 = vor.u32 %v2312, %v2316
    %v2335 = vunpack.c.l.b16 %v2292
    %v2336 = vunpack.c.h.b16 %v2292
    %v2337 = vunpack.c.l.b16 %v2293
    %v2338 = vunpack.c.h.b16 %v2293
    %v2339 = vunpack.c.l.b16 %v2294
    %v2340 = vunpack.c.h.b16 %v2294
    %v2341 = vunpack.c.l.b16 %v2295
    %v2342 = vunpack.c.h.b16 %v2295
    %v2343 = vunpack.c.l.b16 %v2296
    %v2344 = vunpack.c.h.b16 %v2296
    %v2345 = vunpack.c.l.b16 %v2297
    %v2346 = vunpack.c.h.b16 %v2297
    %v2347 = vunpack.c.l.b16 %v2298
    %v2348 = vunpack.c.h.b16 %v2298
    %v2349 = vunpack.c.l.b16 %v2299
    %v2350 = vunpack.c.h.b16 %v2299
    %v2351 = vunpack.c.l.b16 %v2300
    %v2352 = vunpack.c.h.b16 %v2300
    %v2353 = vunpack.c.l.b16 %v2301
    %v2354 = vunpack.c.h.b16 %v2301
    %v2355 = vunpack.c.l.b16 %v2302
    %v2356 = vunpack.c.h.b16 %v2302
    %v2357 = vunpack.c.l.b16 %v2303
    %v2358 = vunpack.c.h.b16 %v2303
    %v2359 = vunpack.c.l.b16 %v2304
    %v2360 = vunpack.c.h.b16 %v2304
    %v2361 = vunpack.c.l.b16 %v2305
    %v2362 = vunpack.c.h.b16 %v2305
    %v2363 = vunpack.c.l.b16 %v2306
    %v2364 = vunpack.c.h.b16 %v2306
    %v2365 = vunpack.c.l.b16 %v2307
    %v2366 = vunpack.c.h.b16 %v2307
    %v2367 = vpack.c.b16 %v2337, %v2335
    %v2368 = vpack.c.b16 %v2338, %v2336
    %v2369 = vpack.c.b16 %v2341, %v2339
    %v2370 = vpack.c.b16 %v2342, %v2340
    %v2371 = vpack.c.b16 %v2345, %v2343
    %v2372 = vpack.c.b16 %v2346, %v2344
    %v2373 = vpack.c.b16 %v2349, %v2347
    %v2374 = vpack.c.b16 %v2350, %v2348
    %v2375 = vpack.c.b16 %v2353, %v2351
    %v2376 = vpack.c.b16 %v2354, %v2352
    %v2377 = vpack.c.b16 %v2357, %v2355
    %v2378 = vpack.c.b16 %v2358, %v2356
    %v2379 = vpack.c.b16 %v2361, %v2359
    %v2380 = vpack.c.b16 %v2362, %v2360
    %v2381 = vpack.c.b16 %v2365, %v2363
    %v2382 = vpack.c.b16 %v2366, %v2364
    %2399 = vmatpush.bf16.msra.mxu0 %v2381
    %2400 = vmatpush.bf16.msra.mxu0 %v2379
    %2401 = vmatpush.bf16.msra.mxu0 %v2377
    %2402 = vmatpush.bf16.msra.mxu0 %v2375
    %2403 = vmatpush.bf16.msra.mxu0 %v2373
    %2404 = vmatpush.bf16.msra.mxu0 %v2371
    %2405 = vmatpush.bf16.msra.mxu0 %v2369
    %2406 = vmatpush.bf16.msra.mxu0 %v2367
    %2407 = vmatmul.bf16.gmra.mxu0 %v2317
    %v2408 = vpop.f32.mrf.mxu0
    %v2409 = vadd.f32 0.0, %v2408
    %v2410 = vpop.f32.mrf.mxu0
    %2411 = vdwg.mxu0
    %2412 = vmatpush.bf16.msra.mxu0 %v2382
    %2413 = vmatpush.bf16.msra.mxu0 %v2380
    %2414 = vmatpush.bf16.msra.mxu0 %v2378
    %2415 = vmatpush.bf16.msra.mxu0 %v2376
    %2416 = vmatpush.bf16.msra.mxu0 %v2374
    %2417 = vmatpush.bf16.msra.mxu0 %v2372
    %2418 = vmatpush.bf16.msra.mxu0 %v2370
    %2419 = vmatpush.bf16.msra.mxu0 %v2368
    %2420 = vmatmul.bf16.gmra.mxu0 %v2317
    %v2421 = vpop.f32.mrf.mxu0
    %v2422 = vadd.f32 0.0, %v2421
    %v2423 = vpop.f32.mrf.mxu0
    %2424 = vdwg.mxu0
    %v2425 = vadd.f32 %v2289, %v2409
    %v2426 = vadd.f32 %v2290, %v2422
    %v2427 = vld [vmem:[%s1515] sm:$0xf]
    %v2428 = vld [vmem:[%s439] sm:$0xff]
    %v2429 = vld [vmem:[%s439 + $0x8] sm:$0xff]
    %v2430 = vld [vmem:[%s439 + $0x10] sm:$0xff]
    %v2431 = vld [vmem:[%s439 + $0x18] sm:$0xff]
    %v2432 = vld [vmem:[%s439 + $0x20] sm:$0xff]
    %v2433 = vld [vmem:[%s439 + $0x28] sm:$0xff]
    %v2434 = vld [vmem:[%s439 + $0x30] sm:$0xff]
    %v2435 = vld [vmem:[%s439 + $0x38] sm:$0xff]
    %v2436 = vld [vmem:[%s439 + $0x40] sm:$0xff]
    %v2437 = vld [vmem:[%s439 + $0x48] sm:$0xff]
    %v2438 = vld [vmem:[%s439 + $0x50] sm:$0xff]
    %v2439 = vld [vmem:[%s439 + $0x58] sm:$0xff]
    %v2440 = vld [vmem:[%s439 + $0x60] sm:$0xff]
    %v2441 = vld [vmem:[%s439 + $0x68] sm:$0xff]
    %v2442 = vld [vmem:[%s439 + $0x70] sm:$0xff]
    %v2443 = vld [vmem:[%s439 + $0x78] sm:$0xff]
    %v2445 = vunpack.c.l.b16 %v2427
    %v2446 = vpack.c.b16 %v2445, %v2445
    %v2448 = vshrl.u32 %v2446, 16
    %v2450 = vshll.u32 %v2446, 16
    %v2452 = vrot.slane %v2450, 1
    %v2453 = vor.u32 %v2448, %v2452
    %v2471 = vunpack.c.l.b16 %v2428
    %v2472 = vunpack.c.h.b16 %v2428
    %v2473 = vunpack.c.l.b16 %v2429
    %v2474 = vunpack.c.h.b16 %v2429
    %v2475 = vunpack.c.l.b16 %v2430
    %v2476 = vunpack.c.h.b16 %v2430
    %v2477 = vunpack.c.l.b16 %v2431
    %v2478 = vunpack.c.h.b16 %v2431
    %v2479 = vunpack.c.l.b16 %v2432
    %v2480 = vunpack.c.h.b16 %v2432
    %v2481 = vunpack.c.l.b16 %v2433
    %v2482 = vunpack.c.h.b16 %v2433
    %v2483 = vunpack.c.l.b16 %v2434
    %v2484 = vunpack.c.h.b16 %v2434
    %v2485 = vunpack.c.l.b16 %v2435
    %v2486 = vunpack.c.h.b16 %v2435
    %v2487 = vunpack.c.l.b16 %v2436
    %v2488 = vunpack.c.h.b16 %v2436
    %v2489 = vunpack.c.l.b16 %v2437
    %v2490 = vunpack.c.h.b16 %v2437
    %v2491 = vunpack.c.l.b16 %v2438
    %v2492 = vunpack.c.h.b16 %v2438
    %v2493 = vunpack.c.l.b16 %v2439
    %v2494 = vunpack.c.h.b16 %v2439
    %v2495 = vunpack.c.l.b16 %v2440
    %v2496 = vunpack.c.h.b16 %v2440
    %v2497 = vunpack.c.l.b16 %v2441
    %v2498 = vunpack.c.h.b16 %v2441
    %v2499 = vunpack.c.l.b16 %v2442
    %v2500 = vunpack.c.h.b16 %v2442
    %v2501 = vunpack.c.l.b16 %v2443
    %v2502 = vunpack.c.h.b16 %v2443
    %v2503 = vpack.c.b16 %v2473, %v2471
    %v2504 = vpack.c.b16 %v2474, %v2472
    %v2505 = vpack.c.b16 %v2477, %v2475
    %v2506 = vpack.c.b16 %v2478, %v2476
    %v2507 = vpack.c.b16 %v2481, %v2479
    %v2508 = vpack.c.b16 %v2482, %v2480
    %v2509 = vpack.c.b16 %v2485, %v2483
    %v2510 = vpack.c.b16 %v2486, %v2484
    %v2511 = vpack.c.b16 %v2489, %v2487
    %v2512 = vpack.c.b16 %v2490, %v2488
    %v2513 = vpack.c.b16 %v2493, %v2491
    %v2514 = vpack.c.b16 %v2494, %v2492
    %v2515 = vpack.c.b16 %v2497, %v2495
    %v2516 = vpack.c.b16 %v2498, %v2496
    %v2517 = vpack.c.b16 %v2501, %v2499
    %v2518 = vpack.c.b16 %v2502, %v2500
    %2535 = vmatpush.bf16.msra.mxu0 %v2517
    %2536 = vmatpush.bf16.msra.mxu0 %v2515
    %2537 = vmatpush.bf16.msra.mxu0 %v2513
    %2538 = vmatpush.bf16.msra.mxu0 %v2511
    %2539 = vmatpush.bf16.msra.mxu0 %v2509
    %2540 = vmatpush.bf16.msra.mxu0 %v2507
    %2541 = vmatpush.bf16.msra.mxu0 %v2505
    %2542 = vmatpush.bf16.msra.mxu0 %v2503
    %2543 = vmatmul.bf16.gmra.mxu0 %v2453
    %v2544 = vpop.f32.mrf.mxu0
    %v2545 = vadd.f32 0.0, %v2544
    %v2546 = vpop.f32.mrf.mxu0
    %2547 = vdwg.mxu0
    %2548 = vmatpush.bf16.msra.mxu0 %v2518
    %2549 = vmatpush.bf16.msra.mxu0 %v2516
    %2550 = vmatpush.bf16.msra.mxu0 %v2514
    %2551 = vmatpush.bf16.msra.mxu0 %v2512
    %2552 = vmatpush.bf16.msra.mxu0 %v2510
    %2553 = vmatpush.bf16.msra.mxu0 %v2508
    %2554 = vmatpush.bf16.msra.mxu0 %v2506
    %2555 = vmatpush.bf16.msra.mxu0 %v2504
    %2556 = vmatmul.bf16.gmra.mxu0 %v2453
    %v2557 = vpop.f32.mrf.mxu0
    %v2558 = vadd.f32 0.0, %v2557
    %v2559 = vpop.f32.mrf.mxu0
    %2560 = vdwg.mxu0
    %v2561 = vadd.f32 %v2425, %v2545
    %v2562 = vadd.f32 %v2426, %v2558
    %v2563 = vld [vmem:[%s564] sm:$0xff]
    %v2564 = vld [vmem:[%s564 + $0x8] sm:$0xff]
    %v2565 = vld [vmem:[%s564 + $0x10] sm:$0xff]
    %v2566 = vld [vmem:[%s564 + $0x18] sm:$0xff]
    %v2567 = vld [vmem:[%s564 + $0x20] sm:$0xff]
    %v2568 = vld [vmem:[%s564 + $0x28] sm:$0xff]
    %v2569 = vld [vmem:[%s564 + $0x30] sm:$0xff]
    %v2570 = vld [vmem:[%s564 + $0x38] sm:$0xff]
    %v2571 = vld [vmem:[%s564 + $0x40] sm:$0xff]
    %v2572 = vld [vmem:[%s564 + $0x48] sm:$0xff]
    %v2573 = vld [vmem:[%s564 + $0x50] sm:$0xff]
    %v2574 = vld [vmem:[%s564 + $0x58] sm:$0xff]
    %v2575 = vld [vmem:[%s564 + $0x60] sm:$0xff]
    %v2576 = vld [vmem:[%s564 + $0x68] sm:$0xff]
    %v2577 = vld [vmem:[%s564 + $0x70] sm:$0xff]
    %v2578 = vld [vmem:[%s564 + $0x78] sm:$0xff]
    %v2580 = vunpack.c.l.b16 %v2036
    %v2581 = vpack.c.b16 %v2580, %v2580
    %v2583 = vshrl.u32 %v2581, 16
    %v2585 = vshll.u32 %v2581, 16
    %v2587 = vrot.slane %v2585, 1
    %v2588 = vor.u32 %v2583, %v2587
    %v2606 = vunpack.c.l.b16 %v2563
    %v2607 = vunpack.c.h.b16 %v2563
    %v2608 = vunpack.c.l.b16 %v2564
    %v2609 = vunpack.c.h.b16 %v2564
    %v2610 = vunpack.c.l.b16 %v2565
    %v2611 = vunpack.c.h.b16 %v2565
    %v2612 = vunpack.c.l.b16 %v2566
    %v2613 = vunpack.c.h.b16 %v2566
    %v2614 = vunpack.c.l.b16 %v2567
    %v2615 = vunpack.c.h.b16 %v2567
    %v2616 = vunpack.c.l.b16 %v2568
    %v2617 = vunpack.c.h.b16 %v2568
    %v2618 = vunpack.c.l.b16 %v2569
    %v2619 = vunpack.c.h.b16 %v2569
    %v2620 = vunpack.c.l.b16 %v2570
    %v2621 = vunpack.c.h.b16 %v2570
    %v2622 = vunpack.c.l.b16 %v2571
    %v2623 = vunpack.c.h.b16 %v2571
    %v2624 = vunpack.c.l.b16 %v2572
    %v2625 = vunpack.c.h.b16 %v2572
    %v2626 = vunpack.c.l.b16 %v2573
    %v2627 = vunpack.c.h.b16 %v2573
    %v2628 = vunpack.c.l.b16 %v2574
    %v2629 = vunpack.c.h.b16 %v2574
    %v2630 = vunpack.c.l.b16 %v2575
    %v2631 = vunpack.c.h.b16 %v2575
    %v2632 = vunpack.c.l.b16 %v2576
    %v2633 = vunpack.c.h.b16 %v2576
    %v2634 = vunpack.c.l.b16 %v2577
    %v2635 = vunpack.c.h.b16 %v2577
    %v2636 = vunpack.c.l.b16 %v2578
    %v2637 = vunpack.c.h.b16 %v2578
    %v2638 = vpack.c.b16 %v2608, %v2606
    %v2639 = vpack.c.b16 %v2609, %v2607
    %v2640 = vpack.c.b16 %v2612, %v2610
    %v2641 = vpack.c.b16 %v2613, %v2611
    %v2642 = vpack.c.b16 %v2616, %v2614
    %v2643 = vpack.c.b16 %v2617, %v2615
    %v2644 = vpack.c.b16 %v2620, %v2618
    %v2645 = vpack.c.b16 %v2621, %v2619
    %v2646 = vpack.c.b16 %v2624, %v2622
    %v2647 = vpack.c.b16 %v2625, %v2623
    %v2648 = vpack.c.b16 %v2628, %v2626
    %v2649 = vpack.c.b16 %v2629, %v2627
    %v2650 = vpack.c.b16 %v2632, %v2630
    %v2651 = vpack.c.b16 %v2633, %v2631
    %v2652 = vpack.c.b16 %v2636, %v2634
    %v2653 = vpack.c.b16 %v2637, %v2635
    %2670 = vmatpush.bf16.msra.mxu0 %v2652
    %2671 = vmatpush.bf16.msra.mxu0 %v2650
    %2672 = vmatpush.bf16.msra.mxu0 %v2648
    %2673 = vmatpush.bf16.msra.mxu0 %v2646
    %2674 = vmatpush.bf16.msra.mxu0 %v2644
    %2675 = vmatpush.bf16.msra.mxu0 %v2642
    %2676 = vmatpush.bf16.msra.mxu0 %v2640
    %2677 = vmatpush.bf16.msra.mxu0 %v2638
    %2678 = vmatmul.bf16.gmra.mxu0 %v2588
    %v2679 = vpop.f32.mrf.mxu0
    %v2680 = vadd.f32 0.0, %v2679
    %v2681 = vpop.f32.mrf.mxu0
    %2682 = vdwg.mxu0
    %2683 = vmatpush.bf16.msra.mxu0 %v2653
    %2684 = vmatpush.bf16.msra.mxu0 %v2651
    %2685 = vmatpush.bf16.msra.mxu0 %v2649
    %2686 = vmatpush.bf16.msra.mxu0 %v2647
    %2687 = vmatpush.bf16.msra.mxu0 %v2645
    %2688 = vmatpush.bf16.msra.mxu0 %v2643
    %2689 = vmatpush.bf16.msra.mxu0 %v2641
    %2690 = vmatpush.bf16.msra.mxu0 %v2639
    %2691 = vmatmul.bf16.gmra.mxu0 %v2588
    %v2692 = vpop.f32.mrf.mxu0
    %v2693 = vadd.f32 0.0, %v2692
    %v2694 = vpop.f32.mrf.mxu0
    %2695 = vdwg.mxu0
    %v2696 = vadd.f32 %v2561, %v2680
    %v2697 = vadd.f32 %v2562, %v2693
    %v2698 = vmax.f32 %v2696, 0.0
    %v2699 = vmax.f32 %v2697, 0.0
    %v2700 = vpack.c.bf16 %v2699, %v2698
    %s2701 = scalar_lea.vmem [#allocation2], 24
    %v2702 = vld [vmem:[%s2701] sm:$0xff]
    %v2703 = vsel %vm709, %v2700, %v2702
    %2704 = vst [vmem:[%s2701] sm:$0xff] %v2703
    %v2705 = vld [vmem:[%s6] sm:$0x7]
    %v2706 = vld [vmem:[#allocation2] sm:$0x77]
    %v2707 = vld [vmem:[%s3] sm:$0xff]
    %v2708 = vld [vmem:[%s3 + $0x8] sm:$0xf]
    %v2709 = vld [vmem:[%s3 + $0xc] sm:$0xff]
    %v2710 = vld [vmem:[%s3 + $0x14] sm:$0xf]
    %v2711 = vld [vmem:[%s3 + $0x18] sm:$0xff]
    %v2712 = vld [vmem:[%s3 + $0x20] sm:$0xf]
    %v2713 = vld [vmem:[%s3 + $0x24] sm:$0xff]
    %v2714 = vld [vmem:[%s3 + $0x2c] sm:$0xf]
    %v2715 = vld [vmem:[%s3 + $0x30] sm:$0xff]
    %v2716 = vld [vmem:[%s3 + $0x38] sm:$0xf]
    %v2717 = vld [vmem:[%s3 + $0x3c] sm:$0xff]
    %v2718 = vld [vmem:[%s3 + $0x44] sm:$0xf]
    %v2719 = vld [vmem:[%s3 + $0x48] sm:$0xff]
    %v2720 = vld [vmem:[%s3 + $0x50] sm:$0xf]
    %v2721 = vld [vmem:[%s3 + $0x54] sm:$0xff]
    %v2722 = vld [vmem:[%s3 + $0x5c] sm:$0xf]
    %v2723 = vld [vmem:[%s3 + $0x60] sm:$0xff]
    %v2724 = vld [vmem:[%s3 + $0x68] sm:$0xf]
    %v2725 = vld [vmem:[%s3 + $0x6c] sm:$0xff]
    %v2726 = vld [vmem:[%s3 + $0x74] sm:$0xf]
    %v2727 = vld [vmem:[%s3 + $0x78] sm:$0xff]
    %v2728 = vld [vmem:[%s3 + $0x80] sm:$0xf]
    %v2729 = vld [vmem:[%s3 + $0x84] sm:$0xff]
    %v2730 = vld [vmem:[%s3 + $0x8c] sm:$0xf]
    %v2731 = vld [vmem:[%s3 + $0x90] sm:$0xff]
    %v2732 = vld [vmem:[%s3 + $0x98] sm:$0xf]
    %v2733 = vld [vmem:[%s3 + $0x9c] sm:$0xff]
    %v2734 = vld [vmem:[%s3 + $0xa4] sm:$0xf]
    %v2735 = vld [vmem:[%s3 + $0xa8] sm:$0xff]
    %v2736 = vld [vmem:[%s3 + $0xb0] sm:$0xf]
    %v2737 = vld [vmem:[%s3 + $0xb4] sm:$0xff]
    %v2738 = vld [vmem:[%s3 + $0xbc] sm:$0xf]
    %v2739 = vld [vmem:[%s3 + $0xc0] sm:$0xff]
    %v2740 = vld [vmem:[%s3 + $0xc8] sm:$0xf]
    %v2741 = vld [vmem:[%s3 + $0xcc] sm:$0xff]
    %v2742 = vld [vmem:[%s3 + $0xd4] sm:$0xf]
    %v2743 = vld [vmem:[%s3 + $0xd8] sm:$0xff]
    %v2744 = vld [vmem:[%s3 + $0xe0] sm:$0xf]
    %v2745 = vld [vmem:[%s3 + $0xe4] sm:$0xff]
    %v2746 = vld [vmem:[%s3 + $0xec] sm:$0xf]
    %v2747 = vld [vmem:[%s3 + $0xf0] sm:$0xff]
    %v2748 = vld [vmem:[%s3 + $0xf8] sm:$0xf]
    %v2749 = vld [vmem:[%s3 + $0xfc] sm:$0xff]
    %v2750 = vld [vmem:[%s3 + $0x104] sm:$0xf]
    %v2751 = vld [vmem:[%s3 + $0x108] sm:$0xff]
    %v2752 = vld [vmem:[%s3 + $0x110] sm:$0xf]
    %v2753 = vld [vmem:[%s3 + $0x114] sm:$0xff]
    %v2754 = vld [vmem:[%s3 + $0x11c] sm:$0xf]
    %v2755 = vld [vmem:[%s3 + $0x120] sm:$0xff]
    %v2756 = vld [vmem:[%s3 + $0x128] sm:$0xf]
    %v2757 = vld [vmem:[%s3 + $0x12c] sm:$0xff]
    %v2758 = vld [vmem:[%s3 + $0x134] sm:$0xf]
    %v2759 = vld [vmem:[%s3 + $0x138] sm:$0xff]
    %v2760 = vld [vmem:[%s3 + $0x140] sm:$0xf]
    %v2761 = vld [vmem:[%s3 + $0x144] sm:$0xff]
    %v2762 = vld [vmem:[%s3 + $0x14c] sm:$0xf]
    %v2764 = vunpack.c.l.b16 %v2706
    %v2765 = vunpack.c.h.b16 %v2706
    %v2766 = vpack.c.b16 %v2764, %v2764
    %v2767 = vpack.c.b16 %v2765, %v2765
    %v2825 = vunpack.c.l.b16 %v2707
    %v2826 = vunpack.c.h.b16 %v2707
    %v2827 = vunpack.c.l.b16 %v2708
    %v2828 = vunpack.c.l.b16 %v2709
    %v2829 = vunpack.c.h.b16 %v2709
    %v2830 = vunpack.c.l.b16 %v2710
    %v2831 = vunpack.c.l.b16 %v2711
    %v2832 = vunpack.c.h.b16 %v2711
    %v2833 = vunpack.c.l.b16 %v2712
    %v2834 = vunpack.c.l.b16 %v2713
    %v2835 = vunpack.c.h.b16 %v2713
    %v2836 = vunpack.c.l.b16 %v2714
    %v2837 = vunpack.c.l.b16 %v2715
    %v2838 = vunpack.c.h.b16 %v2715
    %v2839 = vunpack.c.l.b16 %v2716
    %v2840 = vunpack.c.l.b16 %v2717
    %v2841 = vunpack.c.h.b16 %v2717
    %v2842 = vunpack.c.l.b16 %v2718
    %v2843 = vunpack.c.l.b16 %v2719
    %v2844 = vunpack.c.h.b16 %v2719
    %v2845 = vunpack.c.l.b16 %v2720
    %v2846 = vunpack.c.l.b16 %v2721
    %v2847 = vunpack.c.h.b16 %v2721
    %v2848 = vunpack.c.l.b16 %v2722
    %v2849 = vunpack.c.l.b16 %v2723
    %v2850 = vunpack.c.h.b16 %v2723
    %v2851 = vunpack.c.l.b16 %v2724
    %v2852 = vunpack.c.l.b16 %v2725
    %v2853 = vunpack.c.h.b16 %v2725
    %v2854 = vunpack.c.l.b16 %v2726
    %v2855 = vunpack.c.l.b16 %v2727
    %v2856 = vunpack.c.h.b16 %v2727
    %v2857 = vunpack.c.l.b16 %v2728
    %v2858 = vunpack.c.l.b16 %v2729
    %v2859 = vunpack.c.h.b16 %v2729
    %v2860 = vunpack.c.l.b16 %v2730
    %v2861 = vunpack.c.l.b16 %v2731
    %v2862 = vunpack.c.h.b16 %v2731
    %v2863 = vunpack.c.l.b16 %v2732
    %v2864 = vunpack.c.l.b16 %v2733
    %v2865 = vunpack.c.h.b16 %v2733
    %v2866 = vunpack.c.l.b16 %v2734
    %v2867 = vunpack.c.l.b16 %v2735
    %v2868 = vunpack.c.h.b16 %v2735
    %v2869 = vunpack.c.l.b16 %v2736
    %v2870 = vunpack.c.l.b16 %v2737
    %v2871 = vunpack.c.h.b16 %v2737
    %v2872 = vunpack.c.l.b16 %v2738
    %v2873 = vunpack.c.l.b16 %v2739
    %v2874 = vunpack.c.h.b16 %v2739
    %v2875 = vunpack.c.l.b16 %v2740
    %v2876 = vunpack.c.l.b16 %v2741
    %v2877 = vunpack.c.h.b16 %v2741
    %v2878 = vunpack.c.l.b16 %v2742
    %v2879 = vunpack.c.l.b16 %v2743
    %v2880 = vunpack.c.h.b16 %v2743
    %v2881 = vunpack.c.l.b16 %v2744
    %v2882 = vunpack.c.l.b16 %v2745
    %v2883 = vunpack.c.h.b16 %v2745
    %v2884 = vunpack.c.l.b16 %v2746
    %v2885 = vunpack.c.l.b16 %v2747
    %v2886 = vunpack.c.h.b16 %v2747
    %v2887 = vunpack.c.l.b16 %v2748
    %v2888 = vunpack.c.l.b16 %v2749
    %v2889 = vunpack.c.h.b16 %v2749
    %v2890 = vunpack.c.l.b16 %v2750
    %v2891 = vunpack.c.l.b16 %v2751
    %v2892 = vunpack.c.h.b16 %v2751
    %v2893 = vunpack.c.l.b16 %v2752
    %v2894 = vunpack.c.l.b16 %v2753
    %v2895 = vunpack.c.h.b16 %v2753
    %v2896 = vunpack.c.l.b16 %v2754
    %v2897 = vunpack.c.l.b16 %v2755
    %v2898 = vunpack.c.h.b16 %v2755
    %v2899 = vunpack.c.l.b16 %v2756
    %v2900 = vunpack.c.l.b16 %v2757
    %v2901 = vunpack.c.h.b16 %v2757
    %v2902 = vunpack.c.l.b16 %v2758
    %v2903 = vunpack.c.l.b16 %v2759
    %v2904 = vunpack.c.h.b16 %v2759
    %v2905 = vunpack.c.l.b16 %v2760
    %v2906 = vunpack.c.l.b16 %v2761
    %v2907 = vunpack.c.h.b16 %v2761
    %v2908 = vunpack.c.l.b16 %v2762
    %v2909 = vpack.c.b16 %v2828, %v2825
    %v2910 = vpack.c.b16 %v2829, %v2826
    %v2911 = vpack.c.b16 %v2830, %v2827
    %v2912 = vpack.c.b16 %v2834, %v2831
    %v2913 = vpack.c.b16 %v2835, %v2832
    %v2914 = vpack.c.b16 %v2836, %v2833
    %v2915 = vpack.c.b16 %v2840, %v2837
    %v2916 = vpack.c.b16 %v2841, %v2838
    %v2917 = vpack.c.b16 %v2842, %v2839
    %v2918 = vpack.c.b16 %v2846, %v2843
    %v2919 = vpack.c.b16 %v2847, %v2844
    %v2920 = vpack.c.b16 %v2848, %v2845
    %v2921 = vpack.c.b16 %v2852, %v2849
    %v2922 = vpack.c.b16 %v2853, %v2850
    %v2923 = vpack.c.b16 %v2854, %v2851
    %v2924 = vpack.c.b16 %v2858, %v2855
    %v2925 = vpack.c.b16 %v2859, %v2856
    %v2926 = vpack.c.b16 %v2860, %v2857
    %v2927 = vpack.c.b16 %v2864, %v2861
    %v2928 = vpack.c.b16 %v2865, %v2862
    %v2929 = vpack.c.b16 %v2866, %v2863
    %v2930 = vpack.c.b16 %v2870, %v2867
    %v2931 = vpack.c.b16 %v2871, %v2868
    %v2932 = vpack.c.b16 %v2872, %v2869
    %v2933 = vpack.c.b16 %v2876, %v2873
    %v2934 = vpack.c.b16 %v2877, %v2874
    %v2935 = vpack.c.b16 %v2878, %v2875
    %v2936 = vpack.c.b16 %v2882, %v2879
    %v2937 = vpack.c.b16 %v2883, %v2880
    %v2938 = vpack.c.b16 %v2884, %v2881
    %v2939 = vpack.c.b16 %v2888, %v2885
    %v2940 = vpack.c.b16 %v2889, %v2886
    %v2941 = vpack.c.b16 %v2890, %v2887
    %v2942 = vpack.c.b16 %v2894, %v2891
    %v2943 = vpack.c.b16 %v2895, %v2892
    %v2944 = vpack.c.b16 %v2896, %v2893
    %v2945 = vpack.c.b16 %v2900, %v2897
    %v2946 = vpack.c.b16 %v2901, %v2898
    %v2947 = vpack.c.b16 %v2902, %v2899
    %v2948 = vpack.c.b16 %v2906, %v2903
    %v2949 = vpack.c.b16 %v2907, %v2904
    %v2950 = vpack.c.b16 %v2908, %v2905
    %vm2993 = vcmask 785408
    %v2995 = vsel %vm2993, %v2767, 0
    %2997 = vmatpush.bf16.msra.mxu0 %v2930
    %2998 = vmatpush.bf16.msra.mxu0 %v2927
    %2999 = vmatpush.bf16.msra.mxu0 %v2924
    %3000 = vmatpush.bf16.msra.mxu0 %v2921
    %3001 = vmatpush.bf16.msra.mxu0 %v2918
    %3002 = vmatpush.bf16.msra.mxu0 %v2915
    %3003 = vmatpush.bf16.msra.mxu0 %v2912
    %3004 = vmatpush.bf16.msra.mxu0 %v2909
    %3005 = vmatmul.bf16.gmra.mxu0 %v2766
    %v3006 = vpop.f32.mrf.mxu0
    %v3007 = vadd.f32 0.0, %v3006
    %v3008 = vpop.f32.mrf.mxu0
    %3009 = vdwg.mxu0
    %3010 = vmatpush.bf16.msra.mxu0 0
    %3011 = vmatpush.bf16.msra.mxu0 0
    %3012 = vmatpush.bf16.msra.mxu0 %v2948
    %3013 = vmatpush.bf16.msra.mxu0 %v2945
    %3014 = vmatpush.bf16.msra.mxu0 %v2942
    %3015 = vmatpush.bf16.msra.mxu0 %v2939
    %3016 = vmatpush.bf16.msra.mxu0 %v2936
    %3017 = vmatpush.bf16.msra.mxu0 %v2933
    %3018 = vmatmul.bf16.gmra.mxu0 %v2995
    %v3019 = vpop.f32.mrf.mxu0
    %v3020 = vadd.f32 %v3007, %v3019
    %v3021 = vpop.f32.mrf.mxu0
    %3022 = vdwg.mxu0
    %3023 = vmatpush.bf16.msra.mxu0 %v2931
    %3024 = vmatpush.bf16.msra.mxu0 %v2928
    %3025 = vmatpush.bf16.msra.mxu0 %v2925
    %3026 = vmatpush.bf16.msra.mxu0 %v2922
    %3027 = vmatpush.bf16.msra.mxu0 %v2919
    %3028 = vmatpush.bf16.msra.mxu0 %v2916
    %3029 = vmatpush.bf16.msra.mxu0 %v2913
    %3030 = vmatpush.bf16.msra.mxu0 %v2910
    %3031 = vmatmul.bf16.gmra.mxu0 %v2766
    %v3032 = vpop.f32.mrf.mxu0
    %v3033 = vadd.f32 0.0, %v3032
    %v3034 = vpop.f32.mrf.mxu0
    %3035 = vdwg.mxu0
    %3036 = vmatpush.bf16.msra.mxu0 0
    %3037 = vmatpush.bf16.msra.mxu0 0
    %3038 = vmatpush.bf16.msra.mxu0 %v2949
    %3039 = vmatpush.bf16.msra.mxu0 %v2946
    %3040 = vmatpush.bf16.msra.mxu0 %v2943
    %3041 = vmatpush.bf16.msra.mxu0 %v2940
    %3042 = vmatpush.bf16.msra.mxu0 %v2937
    %3043 = vmatpush.bf16.msra.mxu0 %v2934
    %3044 = vmatmul.bf16.gmra.mxu0 %v2995
    %v3045 = vpop.f32.mrf.mxu0
    %v3046 = vadd.f32 %v3033, %v3045
    %v3047 = vpop.f32.mrf.mxu0
    %3048 = vdwg.mxu0
    %3049 = vmatpush.bf16.msra.mxu0 %v2932
    %3050 = vmatpush.bf16.msra.mxu0 %v2929
    %3051 = vmatpush.bf16.msra.mxu0 %v2926
    %3052 = vmatpush.bf16.msra.mxu0 %v2923
    %3053 = vmatpush.bf16.msra.mxu0 %v2920
    %3054 = vmatpush.bf16.msra.mxu0 %v2917
    %3055 = vmatpush.bf16.msra.mxu0 %v2914
    %3056 = vmatpush.bf16.msra.mxu0 %v2911
    %3057 = vmatmul.bf16.gmra.mxu0 %v2766
    %v3058 = vpop.f32.mrf.mxu0
    %v3059 = vadd.f32 0.0, %v3058
    %v3060 = vpop.f32.mrf.mxu0
    %3061 = vdwg.mxu0
    %3062 = vmatpush.bf16.msra.mxu0 0
    %3063 = vmatpush.bf16.msra.mxu0 0
    %3064 = vmatpush.bf16.msra.mxu0 %v2950
    %3065 = vmatpush.bf16.msra.mxu0 %v2947
    %3066 = vmatpush.bf16.msra.mxu0 %v2944
    %3067 = vmatpush.bf16.msra.mxu0 %v2941
    %3068 = vmatpush.bf16.msra.mxu0 %v2938
    %3069 = vmatpush.bf16.msra.mxu0 %v2935
    %3070 = vmatmul.bf16.gmra.mxu0 %v2995
    %v3071 = vpop.f32.mrf.mxu0
    %v3072 = vadd.f32 %v3059, %v3071
    %v3073 = vpop.f32.mrf.mxu0
    %3074 = vdwg.mxu0
    %v3076 = vperm.slane %v2705, 0
    %v3077 = vperm.slane %v2705, 1
    %v3078 = vperm.slane %v2705, 2
    %v3082 = vadd.f32 %v3076, %v3020
    %v3083 = vadd.f32 %v3077, %v3046
    %v3084 = vadd.f32 %v3078, %v3072
    %v3085 = vld [vmem:[%s1379] sm:$0x77]
    %s3086 = scalar_lea.vmem %s3, 336
    %v3087 = vld [vmem:[%s3086] sm:$0xff]
    %v3088 = vld [vmem:[%s3086 + $0x8] sm:$0xf]
    %v3089 = vld [vmem:[%s3086 + $0xc] sm:$0xff]
    %v3090 = vld [vmem:[%s3086 + $0x14] sm:$0xf]
    %v3091 = vld [vmem:[%s3086 + $0x18] sm:$0xff]
    %v3092 = vld [vmem:[%s3086 + $0x20] sm:$0xf]
    %v3093 = vld [vmem:[%s3086 + $0x24] sm:$0xff]
    %v3094 = vld [vmem:[%s3086 + $0x2c] sm:$0xf]
    %v3095 = vld [vmem:[%s3086 + $0x30] sm:$0xff]
    %v3096 = vld [vmem:[%s3086 + $0x38] sm:$0xf]
    %v3097 = vld [vmem:[%s3086 + $0x3c] sm:$0xff]
    %v3098 = vld [vmem:[%s3086 + $0x44] sm:$0xf]
    %v3099 = vld [vmem:[%s3086 + $0x48] sm:$0xff]
    %v3100 = vld [vmem:[%s3086 + $0x50] sm:$0xf]
    %v3101 = vld [vmem:[%s3086 + $0x54] sm:$0xff]
    %v3102 = vld [vmem:[%s3086 + $0x5c] sm:$0xf]
    %v3103 = vld [vmem:[%s3086 + $0x60] sm:$0xff]
    %v3104 = vld [vmem:[%s3086 + $0x68] sm:$0xf]
    %v3105 = vld [vmem:[%s3086 + $0x6c] sm:$0xff]
    %v3106 = vld [vmem:[%s3086 + $0x74] sm:$0xf]
    %v3107 = vld [vmem:[%s3086 + $0x78] sm:$0xff]
    %v3108 = vld [vmem:[%s3086 + $0x80] sm:$0xf]
    %v3109 = vld [vmem:[%s3086 + $0x84] sm:$0xff]
    %v3110 = vld [vmem:[%s3086 + $0x8c] sm:$0xf]
    %v3111 = vld [vmem:[%s3086 + $0x90] sm:$0xff]
    %v3112 = vld [vmem:[%s3086 + $0x98] sm:$0xf]
    %v3113 = vld [vmem:[%s3086 + $0x9c] sm:$0xff]
    %v3114 = vld [vmem:[%s3086 + $0xa4] sm:$0xf]
    %v3115 = vld [vmem:[%s3086 + $0xa8] sm:$0xff]
    %v3116 = vld [vmem:[%s3086 + $0xb0] sm:$0xf]
    %v3117 = vld [vmem:[%s3086 + $0xb4] sm:$0xff]
    %v3118 = vld [vmem:[%s3086 + $0xbc] sm:$0xf]
    %v3119 = vld [vmem:[%s3086 + $0xc0] sm:$0xff]
    %v3120 = vld [vmem:[%s3086 + $0xc8] sm:$0xf]
    %v3121 = vld [vmem:[%s3086 + $0xcc] sm:$0xff]
    %v3122 = vld [vmem:[%s3086 + $0xd4] sm:$0xf]
    %v3123 = vld [vmem:[%s3086 + $0xd8] sm:$0xff]
    %v3124 = vld [vmem:[%s3086 + $0xe0] sm:$0xf]
    %v3125 = vld [vmem:[%s3086 + $0xe4] sm:$0xff]
    %v3126 = vld [vmem:[%s3086 + $0xec] sm:$0xf]
    %v3127 = vld [vmem:[%s3086 + $0xf0] sm:$0xff]
    %v3128 = vld [vmem:[%s3086 + $0xf8] sm:$0xf]
    %v3129 = vld [vmem:[%s3086 + $0xfc] sm:$0xff]
    %v3130 = vld [vmem:[%s3086 + $0x104] sm:$0xf]
    %v3131 = vld [vmem:[%s3086 + $0x108] sm:$0xff]
    %v3132 = vld [vmem:[%s3086 + $0x110] sm:$0xf]
    %v3133 = vld [vmem:[%s3086 + $0x114] sm:$0xff]
    %v3134 = vld [vmem:[%s3086 + $0x11c] sm:$0xf]
    %v3135 = vld [vmem:[%s3086 + $0x120] sm:$0xff]
    %v3136 = vld [vmem:[%s3086 + $0x128] sm:$0xf]
    %v3137 = vld [vmem:[%s3086 + $0x12c] sm:$0xff]
    %v3138 = vld [vmem:[%s3086 + $0x134] sm:$0xf]
    %v3139 = vld [vmem:[%s3086 + $0x138] sm:$0xff]
    %v3140 = vld [vmem:[%s3086 + $0x140] sm:$0xf]
    %v3141 = vld [vmem:[%s3086 + $0x144] sm:$0xff]
    %v3142 = vld [vmem:[%s3086 + $0x14c] sm:$0xf]
    %v3144 = vunpack.c.l.b16 %v3085
    %v3145 = vunpack.c.h.b16 %v3085
    %v3146 = vpack.c.b16 %v3144, %v3144
    %v3147 = vpack.c.b16 %v3145, %v3145
    %v3205 = vunpack.c.l.b16 %v3087
    %v3206 = vunpack.c.h.b16 %v3087
    %v3207 = vunpack.c.l.b16 %v3088
    %v3208 = vunpack.c.l.b16 %v3089
    %v3209 = vunpack.c.h.b16 %v3089
    %v3210 = vunpack.c.l.b16 %v3090
    %v3211 = vunpack.c.l.b16 %v3091
    %v3212 = vunpack.c.h.b16 %v3091
    %v3213 = vunpack.c.l.b16 %v3092
    %v3214 = vunpack.c.l.b16 %v3093
    %v3215 = vunpack.c.h.b16 %v3093
    %v3216 = vunpack.c.l.b16 %v3094
    %v3217 = vunpack.c.l.b16 %v3095
    %v3218 = vunpack.c.h.b16 %v3095
    %v3219 = vunpack.c.l.b16 %v3096
    %v3220 = vunpack.c.l.b16 %v3097
    %v3221 = vunpack.c.h.b16 %v3097
    %v3222 = vunpack.c.l.b16 %v3098
    %v3223 = vunpack.c.l.b16 %v3099
    %v3224 = vunpack.c.h.b16 %v3099
    %v3225 = vunpack.c.l.b16 %v3100
    %v3226 = vunpack.c.l.b16 %v3101
    %v3227 = vunpack.c.h.b16 %v3101
    %v3228 = vunpack.c.l.b16 %v3102
    %v3229 = vunpack.c.l.b16 %v3103
    %v3230 = vunpack.c.h.b16 %v3103
    %v3231 = vunpack.c.l.b16 %v3104
    %v3232 = vunpack.c.l.b16 %v3105
    %v3233 = vunpack.c.h.b16 %v3105
    %v3234 = vunpack.c.l.b16 %v3106
    %v3235 = vunpack.c.l.b16 %v3107
    %v3236 = vunpack.c.h.b16 %v3107
    %v3237 = vunpack.c.l.b16 %v3108
    %v3238 = vunpack.c.l.b16 %v3109
    %v3239 = vunpack.c.h.b16 %v3109
    %v3240 = vunpack.c.l.b16 %v3110
    %v3241 = vunpack.c.l.b16 %v3111
    %v3242 = vunpack.c.h.b16 %v3111
    %v3243 = vunpack.c.l.b16 %v3112
    %v3244 = vunpack.c.l.b16 %v3113
    %v3245 = vunpack.c.h.b16 %v3113
    %v3246 = vunpack.c.l.b16 %v3114
    %v3247 = vunpack.c.l.b16 %v3115
    %v3248 = vunpack.c.h.b16 %v3115
    %v3249 = vunpack.c.l.b16 %v3116
    %v3250 = vunpack.c.l.b16 %v3117
    %v3251 = vunpack.c.h.b16 %v3117
    %v3252 = vunpack.c.l.b16 %v3118
    %v3253 = vunpack.c.l.b16 %v3119
    %v3254 = vunpack.c.h.b16 %v3119
    %v3255 = vunpack.c.l.b16 %v3120
    %v3256 = vunpack.c.l.b16 %v3121
    %v3257 = vunpack.c.h.b16 %v3121
    %v3258 = vunpack.c.l.b16 %v3122
    %v3259 = vunpack.c.l.b16 %v3123
    %v3260 = vunpack.c.h.b16 %v3123
    %v3261 = vunpack.c.l.b16 %v3124
    %v3262 = vunpack.c.l.b16 %v3125
    %v3263 = vunpack.c.h.b16 %v3125
    %v3264 = vunpack.c.l.b16 %v3126
    %v3265 = vunpack.c.l.b16 %v3127
    %v3266 = vunpack.c.h.b16 %v3127
    %v3267 = vunpack.c.l.b16 %v3128
    %v3268 = vunpack.c.l.b16 %v3129
    %v3269 = vunpack.c.h.b16 %v3129
    %v3270 = vunpack.c.l.b16 %v3130
    %v3271 = vunpack.c.l.b16 %v3131
    %v3272 = vunpack.c.h.b16 %v3131
    %v3273 = vunpack.c.l.b16 %v3132
    %v3274 = vunpack.c.l.b16 %v3133
    %v3275 = vunpack.c.h.b16 %v3133
    %v3276 = vunpack.c.l.b16 %v3134
    %v3277 = vunpack.c.l.b16 %v3135
    %v3278 = vunpack.c.h.b16 %v3135
    %v3279 = vunpack.c.l.b16 %v3136
    %v3280 = vunpack.c.l.b16 %v3137
    %v3281 = vunpack.c.h.b16 %v3137
    %v3282 = vunpack.c.l.b16 %v3138
    %v3283 = vunpack.c.l.b16 %v3139
    %v3284 = vunpack.c.h.b16 %v3139
    %v3285 = vunpack.c.l.b16 %v3140
    %v3286 = vunpack.c.l.b16 %v3141
    %v3287 = vunpack.c.h.b16 %v3141
    %v3288 = vunpack.c.l.b16 %v3142
    %v3289 = vpack.c.b16 %v3208, %v3205
    %v3290 = vpack.c.b16 %v3209, %v3206
    %v3291 = vpack.c.b16 %v3210, %v3207
    %v3292 = vpack.c.b16 %v3214, %v3211
    %v3293 = vpack.c.b16 %v3215, %v3212
    %v3294 = vpack.c.b16 %v3216, %v3213
    %v3295 = vpack.c.b16 %v3220, %v3217
    %v3296 = vpack.c.b16 %v3221, %v3218
    %v3297 = vpack.c.b16 %v3222, %v3219
    %v3298 = vpack.c.b16 %v3226, %v3223
    %v3299 = vpack.c.b16 %v3227, %v3224
    %v3300 = vpack.c.b16 %v3228, %v3225
    %v3301 = vpack.c.b16 %v3232, %v3229
    %v3302 = vpack.c.b16 %v3233, %v3230
    %v3303 = vpack.c.b16 %v3234, %v3231
    %v3304 = vpack.c.b16 %v3238, %v3235
    %v3305 = vpack.c.b16 %v3239, %v3236
    %v3306 = vpack.c.b16 %v3240, %v3237
    %v3307 = vpack.c.b16 %v3244, %v3241
    %v3308 = vpack.c.b16 %v3245, %v3242
    %v3309 = vpack.c.b16 %v3246, %v3243
    %v3310 = vpack.c.b16 %v3250, %v3247
    %v3311 = vpack.c.b16 %v3251, %v3248
    %v3312 = vpack.c.b16 %v3252, %v3249
    %v3313 = vpack.c.b16 %v3256, %v3253
    %v3314 = vpack.c.b16 %v3257, %v3254
    %v3315 = vpack.c.b16 %v3258, %v3255
    %v3316 = vpack.c.b16 %v3262, %v3259
    %v3317 = vpack.c.b16 %v3263, %v3260
    %v3318 = vpack.c.b16 %v3264, %v3261
    %v3319 = vpack.c.b16 %v3268, %v3265
    %v3320 = vpack.c.b16 %v3269, %v3266
    %v3321 = vpack.c.b16 %v3270, %v3267
    %v3322 = vpack.c.b16 %v3274, %v3271
    %v3323 = vpack.c.b16 %v3275, %v3272
    %v3324 = vpack.c.b16 %v3276, %v3273
    %v3325 = vpack.c.b16 %v3280, %v3277
    %v3326 = vpack.c.b16 %v3281, %v3278
    %v3327 = vpack.c.b16 %v3282, %v3279
    %v3328 = vpack.c.b16 %v3286, %v3283
    %v3329 = vpack.c.b16 %v3287, %v3284
    %v3330 = vpack.c.b16 %v3288, %v3285
    %v3374 = vsel %vm2993, %v3147, 0
    %3376 = vmatpush.bf16.msra.mxu0 %v3310
    %3377 = vmatpush.bf16.msra.mxu0 %v3307
    %3378 = vmatpush.bf16.msra.mxu0 %v3304
    %3379 = vmatpush.bf16.msra.mxu0 %v3301
    %3380 = vmatpush.bf16.msra.mxu0 %v3298
    %3381 = vmatpush.bf16.msra.mxu0 %v3295
    %3382 = vmatpush.bf16.msra.mxu0 %v3292
    %3383 = vmatpush.bf16.msra.mxu0 %v3289
    %3384 = vmatmul.bf16.gmra.mxu0 %v3146
    %v3385 = vpop.f32.mrf.mxu0
    %v3386 = vadd.f32 0.0, %v3385
    %v3387 = vpop.f32.mrf.mxu0
    %3388 = vdwg.mxu0
    %3389 = vmatpush.bf16.msra.mxu0 0
    %3390 = vmatpush.bf16.msra.mxu0 0
    %3391 = vmatpush.bf16.msra.mxu0 %v3328
    %3392 = vmatpush.bf16.msra.mxu0 %v3325
    %3393 = vmatpush.bf16.msra.mxu0 %v3322
    %3394 = vmatpush.bf16.msra.mxu0 %v3319
    %3395 = vmatpush.bf16.msra.mxu0 %v3316
    %3396 = vmatpush.bf16.msra.mxu0 %v3313
    %3397 = vmatmul.bf16.gmra.mxu0 %v3374
    %v3398 = vpop.f32.mrf.mxu0
    %v3399 = vadd.f32 %v3386, %v3398
    %v3400 = vpop.f32.mrf.mxu0
    %3401 = vdwg.mxu0
    %3402 = vmatpush.bf16.msra.mxu0 %v3311
    %3403 = vmatpush.bf16.msra.mxu0 %v3308
    %3404 = vmatpush.bf16.msra.mxu0 %v3305
    %3405 = vmatpush.bf16.msra.mxu0 %v3302
    %3406 = vmatpush.bf16.msra.mxu0 %v3299
    %3407 = vmatpush.bf16.msra.mxu0 %v3296
    %3408 = vmatpush.bf16.msra.mxu0 %v3293
    %3409 = vmatpush.bf16.msra.mxu0 %v3290
    %3410 = vmatmul.bf16.gmra.mxu0 %v3146
    %v3411 = vpop.f32.mrf.mxu0
    %v3412 = vadd.f32 0.0, %v3411
    %v3413 = vpop.f32.mrf.mxu0
    %3414 = vdwg.mxu0
    %3415 = vmatpush.bf16.msra.mxu0 0
    %3416 = vmatpush.bf16.msra.mxu0 0
    %3417 = vmatpush.bf16.msra.mxu0 %v3329
    %3418 = vmatpush.bf16.msra.mxu0 %v3326
    %3419 = vmatpush.bf16.msra.mxu0 %v3323
    %3420 = vmatpush.bf16.msra.mxu0 %v3320
    %3421 = vmatpush.bf16.msra.mxu0 %v3317
    %3422 = vmatpush.bf16.msra.mxu0 %v3314
    %3423 = vmatmul.bf16.gmra.mxu0 %v3374
    %v3424 = vpop.f32.mrf.mxu0
    %v3425 = vadd.f32 %v3412, %v3424
    %v3426 = vpop.f32.mrf.mxu0
    %3427 = vdwg.mxu0
    %3428 = vmatpush.bf16.msra.mxu0 %v3312
    %3429 = vmatpush.bf16.msra.mxu0 %v3309
    %3430 = vmatpush.bf16.msra.mxu0 %v3306
    %3431 = vmatpush.bf16.msra.mxu0 %v3303
    %3432 = vmatpush.bf16.msra.mxu0 %v3300
    %3433 = vmatpush.bf16.msra.mxu0 %v3297
    %3434 = vmatpush.bf16.msra.mxu0 %v3294
    %3435 = vmatpush.bf16.msra.mxu0 %v3291
    %3436 = vmatmul.bf16.gmra.mxu0 %v3146
    %v3437 = vpop.f32.mrf.mxu0
    %v3438 = vadd.f32 0.0, %v3437
    %v3439 = vpop.f32.mrf.mxu0
    %3440 = vdwg.mxu0
    %3441 = vmatpush.bf16.msra.mxu0 0
    %3442 = vmatpush.bf16.msra.mxu0 0
    %3443 = vmatpush.bf16.msra.mxu0 %v3330
    %3444 = vmatpush.bf16.msra.mxu0 %v3327
    %3445 = vmatpush.bf16.msra.mxu0 %v3324
    %3446 = vmatpush.bf16.msra.mxu0 %v3321
    %3447 = vmatpush.bf16.msra.mxu0 %v3318
    %3448 = vmatpush.bf16.msra.mxu0 %v3315
    %3449 = vmatmul.bf16.gmra.mxu0 %v3374
    %v3450 = vpop.f32.mrf.mxu0
    %v3451 = vadd.f32 %v3438, %v3450
    %v3452 = vpop.f32.mrf.mxu0
    %3453 = vdwg.mxu0
    %v3454 = vadd.f32 %v3082, %v3399
    %v3455 = vadd.f32 %v3083, %v3425
    %v3456 = vadd.f32 %v3084, %v3451
    %s3457 = scalar_lea.vmem %s3, 672
    %v3458 = vld [vmem:[%s3457] sm:$0xff]
    %v3459 = vld [vmem:[%s3457 + $0x8] sm:$0xf]
    %v3460 = vld [vmem:[%s3457 + $0xc] sm:$0xff]
    %v3461 = vld [vmem:[%s3457 + $0x14] sm:$0xf]
    %v3462 = vld [vmem:[%s3457 + $0x18] sm:$0xff]
    %v3463 = vld [vmem:[%s3457 + $0x20] sm:$0xf]
    %v3464 = vld [vmem:[%s3457 + $0x24] sm:$0xff]
    %v3465 = vld [vmem:[%s3457 + $0x2c] sm:$0xf]
    %v3466 = vld [vmem:[%s3457 + $0x30] sm:$0xff]
    %v3467 = vld [vmem:[%s3457 + $0x38] sm:$0xf]
    %v3468 = vld [vmem:[%s3457 + $0x3c] sm:$0xff]
    %v3469 = vld [vmem:[%s3457 + $0x44] sm:$0xf]
    %v3470 = vld [vmem:[%s3457 + $0x48] sm:$0xff]
    %v3471 = vld [vmem:[%s3457 + $0x50] sm:$0xf]
    %v3472 = vld [vmem:[%s3457 + $0x54] sm:$0xff]
    %v3473 = vld [vmem:[%s3457 + $0x5c] sm:$0xf]
    %v3474 = vld [vmem:[%s3457 + $0x60] sm:$0xff]
    %v3475 = vld [vmem:[%s3457 + $0x68] sm:$0xf]
    %v3476 = vld [vmem:[%s3457 + $0x6c] sm:$0xff]
    %v3477 = vld [vmem:[%s3457 + $0x74] sm:$0xf]
    %v3478 = vld [vmem:[%s3457 + $0x78] sm:$0xff]
    %v3479 = vld [vmem:[%s3457 + $0x80] sm:$0xf]
    %v3480 = vld [vmem:[%s3457 + $0x84] sm:$0xff]
    %v3481 = vld [vmem:[%s3457 + $0x8c] sm:$0xf]
    %v3482 = vld [vmem:[%s3457 + $0x90] sm:$0xff]
    %v3483 = vld [vmem:[%s3457 + $0x98] sm:$0xf]
    %v3484 = vld [vmem:[%s3457 + $0x9c] sm:$0xff]
    %v3485 = vld [vmem:[%s3457 + $0xa4] sm:$0xf]
    %v3486 = vld [vmem:[%s3457 + $0xa8] sm:$0xff]
    %v3487 = vld [vmem:[%s3457 + $0xb0] sm:$0xf]
    %v3488 = vld [vmem:[%s3457 + $0xb4] sm:$0xff]
    %v3489 = vld [vmem:[%s3457 + $0xbc] sm:$0xf]
    %v3490 = vld [vmem:[%s3457 + $0xc0] sm:$0xff]
    %v3491 = vld [vmem:[%s3457 + $0xc8] sm:$0xf]
    %v3492 = vld [vmem:[%s3457 + $0xcc] sm:$0xff]
    %v3493 = vld [vmem:[%s3457 + $0xd4] sm:$0xf]
    %v3494 = vld [vmem:[%s3457 + $0xd8] sm:$0xff]
    %v3495 = vld [vmem:[%s3457 + $0xe0] sm:$0xf]
    %v3496 = vld [vmem:[%s3457 + $0xe4] sm:$0xff]
    %v3497 = vld [vmem:[%s3457 + $0xec] sm:$0xf]
    %v3498 = vld [vmem:[%s3457 + $0xf0] sm:$0xff]
    %v3499 = vld [vmem:[%s3457 + $0xf8] sm:$0xf]
    %v3500 = vld [vmem:[%s3457 + $0xfc] sm:$0xff]
    %v3501 = vld [vmem:[%s3457 + $0x104] sm:$0xf]
    %v3502 = vld [vmem:[%s3457 + $0x108] sm:$0xff]
    %v3503 = vld [vmem:[%s3457 + $0x110] sm:$0xf]
    %v3504 = vld [vmem:[%s3457 + $0x114] sm:$0xff]
    %v3505 = vld [vmem:[%s3457 + $0x11c] sm:$0xf]
    %v3506 = vld [vmem:[%s3457 + $0x120] sm:$0xff]
    %v3507 = vld [vmem:[%s3457 + $0x128] sm:$0xf]
    %v3508 = vld [vmem:[%s3457 + $0x12c] sm:$0xff]
    %v3509 = vld [vmem:[%s3457 + $0x134] sm:$0xf]
    %v3510 = vld [vmem:[%s3457 + $0x138] sm:$0xff]
    %v3511 = vld [vmem:[%s3457 + $0x140] sm:$0xf]
    %v3512 = vld [vmem:[%s3457 + $0x144] sm:$0xff]
    %v3513 = vld [vmem:[%s3457 + $0x14c] sm:$0xf]
    %v3515 = vshrl.u32 %v2766, 16
    %v3517 = vshll.u32 %v2766, 16
    %v3519 = vrot.slane %v3517, 1
    %v3520 = vor.u32 %v3515, %v3519
    %v3521 = vshrl.u32 %v2767, 16
    %v3523 = vshll.u32 %v2767, 16
    %v3525 = vrot.slane %v3523, 1
    %v3526 = vor.u32 %v3521, %v3525
    %v3584 = vunpack.c.l.b16 %v3458
    %v3585 = vunpack.c.h.b16 %v3458
    %v3586 = vunpack.c.l.b16 %v3459
    %v3587 = vunpack.c.l.b16 %v3460
    %v3588 = vunpack.c.h.b16 %v3460
    %v3589 = vunpack.c.l.b16 %v3461
    %v3590 = vunpack.c.l.b16 %v3462
    %v3591 = vunpack.c.h.b16 %v3462
    %v3592 = vunpack.c.l.b16 %v3463
    %v3593 = vunpack.c.l.b16 %v3464
    %v3594 = vunpack.c.h.b16 %v3464
    %v3595 = vunpack.c.l.b16 %v3465
    %v3596 = vunpack.c.l.b16 %v3466
    %v3597 = vunpack.c.h.b16 %v3466
    %v3598 = vunpack.c.l.b16 %v3467
    %v3599 = vunpack.c.l.b16 %v3468
    %v3600 = vunpack.c.h.b16 %v3468
    %v3601 = vunpack.c.l.b16 %v3469
    %v3602 = vunpack.c.l.b16 %v3470
    %v3603 = vunpack.c.h.b16 %v3470
    %v3604 = vunpack.c.l.b16 %v3471
    %v3605 = vunpack.c.l.b16 %v3472
    %v3606 = vunpack.c.h.b16 %v3472
    %v3607 = vunpack.c.l.b16 %v3473
    %v3608 = vunpack.c.l.b16 %v3474
    %v3609 = vunpack.c.h.b16 %v3474
    %v3610 = vunpack.c.l.b16 %v3475
    %v3611 = vunpack.c.l.b16 %v3476
    %v3612 = vunpack.c.h.b16 %v3476
    %v3613 = vunpack.c.l.b16 %v3477
    %v3614 = vunpack.c.l.b16 %v3478
    %v3615 = vunpack.c.h.b16 %v3478
    %v3616 = vunpack.c.l.b16 %v3479
    %v3617 = vunpack.c.l.b16 %v3480
    %v3618 = vunpack.c.h.b16 %v3480
    %v3619 = vunpack.c.l.b16 %v3481
    %v3620 = vunpack.c.l.b16 %v3482
    %v3621 = vunpack.c.h.b16 %v3482
    %v3622 = vunpack.c.l.b16 %v3483
    %v3623 = vunpack.c.l.b16 %v3484
    %v3624 = vunpack.c.h.b16 %v3484
    %v3625 = vunpack.c.l.b16 %v3485
    %v3626 = vunpack.c.l.b16 %v3486
    %v3627 = vunpack.c.h.b16 %v3486
    %v3628 = vunpack.c.l.b16 %v3487
    %v3629 = vunpack.c.l.b16 %v3488
    %v3630 = vunpack.c.h.b16 %v3488
    %v3631 = vunpack.c.l.b16 %v3489
    %v3632 = vunpack.c.l.b16 %v3490
    %v3633 = vunpack.c.h.b16 %v3490
    %v3634 = vunpack.c.l.b16 %v3491
    %v3635 = vunpack.c.l.b16 %v3492
    %v3636 = vunpack.c.h.b16 %v3492
    %v3637 = vunpack.c.l.b16 %v3493
    %v3638 = vunpack.c.l.b16 %v3494
    %v3639 = vunpack.c.h.b16 %v3494
    %v3640 = vunpack.c.l.b16 %v3495
    %v3641 = vunpack.c.l.b16 %v3496
    %v3642 = vunpack.c.h.b16 %v3496
    %v3643 = vunpack.c.l.b16 %v3497
    %v3644 = vunpack.c.l.b16 %v3498
    %v3645 = vunpack.c.h.b16 %v3498
    %v3646 = vunpack.c.l.b16 %v3499
    %v3647 = vunpack.c.l.b16 %v3500
    %v3648 = vunpack.c.h.b16 %v3500
    %v3649 = vunpack.c.l.b16 %v3501
    %v3650 = vunpack.c.l.b16 %v3502
    %v3651 = vunpack.c.h.b16 %v3502
    %v3652 = vunpack.c.l.b16 %v3503
    %v3653 = vunpack.c.l.b16 %v3504
    %v3654 = vunpack.c.h.b16 %v3504
    %v3655 = vunpack.c.l.b16 %v3505
    %v3656 = vunpack.c.l.b16 %v3506
    %v3657 = vunpack.c.h.b16 %v3506
    %v3658 = vunpack.c.l.b16 %v3507
    %v3659 = vunpack.c.l.b16 %v3508
    %v3660 = vunpack.c.h.b16 %v3508
    %v3661 = vunpack.c.l.b16 %v3509
    %v3662 = vunpack.c.l.b16 %v3510
    %v3663 = vunpack.c.h.b16 %v3510
    %v3664 = vunpack.c.l.b16 %v3511
    %v3665 = vunpack.c.l.b16 %v3512
    %v3666 = vunpack.c.h.b16 %v3512
    %v3667 = vunpack.c.l.b16 %v3513
    %v3668 = vpack.c.b16 %v3587, %v3584
    %v3669 = vpack.c.b16 %v3588, %v3585
    %v3670 = vpack.c.b16 %v3589, %v3586
    %v3671 = vpack.c.b16 %v3593, %v3590
    %v3672 = vpack.c.b16 %v3594, %v3591
    %v3673 = vpack.c.b16 %v3595, %v3592
    %v3674 = vpack.c.b16 %v3599, %v3596
    %v3675 = vpack.c.b16 %v3600, %v3597
    %v3676 = vpack.c.b16 %v3601, %v3598
    %v3677 = vpack.c.b16 %v3605, %v3602
    %v3678 = vpack.c.b16 %v3606, %v3603
    %v3679 = vpack.c.b16 %v3607, %v3604
    %v3680 = vpack.c.b16 %v3611, %v3608
    %v3681 = vpack.c.b16 %v3612, %v3609
    %v3682 = vpack.c.b16 %v3613, %v3610
    %v3683 = vpack.c.b16 %v3617, %v3614
    %v3684 = vpack.c.b16 %v3618, %v3615
    %v3685 = vpack.c.b16 %v3619, %v3616
    %v3686 = vpack.c.b16 %v3623, %v3620
    %v3687 = vpack.c.b16 %v3624, %v3621
    %v3688 = vpack.c.b16 %v3625, %v3622
    %v3689 = vpack.c.b16 %v3629, %v3626
    %v3690 = vpack.c.b16 %v3630, %v3627
    %v3691 = vpack.c.b16 %v3631, %v3628
    %v3692 = vpack.c.b16 %v3635, %v3632
    %v3693 = vpack.c.b16 %v3636, %v3633
    %v3694 = vpack.c.b16 %v3637, %v3634
    %v3695 = vpack.c.b16 %v3641, %v3638
    %v3696 = vpack.c.b16 %v3642, %v3639
    %v3697 = vpack.c.b16 %v3643, %v3640
    %v3698 = vpack.c.b16 %v3647, %v3644
    %v3699 = vpack.c.b16 %v3648, %v3645
    %v3700 = vpack.c.b16 %v3649, %v3646
    %v3701 = vpack.c.b16 %v3653, %v3650
    %v3702 = vpack.c.b16 %v3654, %v3651
    %v3703 = vpack.c.b16 %v3655, %v3652
    %v3704 = vpack.c.b16 %v3659, %v3656
    %v3705 = vpack.c.b16 %v3660, %v3657
    %v3706 = vpack.c.b16 %v3661, %v3658
    %v3707 = vpack.c.b16 %v3665, %v3662
    %v3708 = vpack.c.b16 %v3666, %v3663
    %v3709 = vpack.c.b16 %v3667, %v3664
    %v3753 = vsel %vm2993, %v3526, 0
    %3755 = vmatpush.bf16.msra.mxu0 %v3689
    %3756 = vmatpush.bf16.msra.mxu0 %v3686
    %3757 = vmatpush.bf16.msra.mxu0 %v3683
    %3758 = vmatpush.bf16.msra.mxu0 %v3680
    %3759 = vmatpush.bf16.msra.mxu0 %v3677
    %3760 = vmatpush.bf16.msra.mxu0 %v3674
    %3761 = vmatpush.bf16.msra.mxu0 %v3671
    %3762 = vmatpush.bf16.msra.mxu0 %v3668
    %3763 = vmatmul.bf16.gmra.mxu0 %v3520
    %v3764 = vpop.f32.mrf.mxu0
    %v3765 = vadd.f32 0.0, %v3764
    %v3766 = vpop.f32.mrf.mxu0
    %3767 = vdwg.mxu0
    %3768 = vmatpush.bf16.msra.mxu0 0
    %3769 = vmatpush.bf16.msra.mxu0 0
    %3770 = vmatpush.bf16.msra.mxu0 %v3707
    %3771 = vmatpush.bf16.msra.mxu0 %v3704
    %3772 = vmatpush.bf16.msra.mxu0 %v3701
    %3773 = vmatpush.bf16.msra.mxu0 %v3698
    %3774 = vmatpush.bf16.msra.mxu0 %v3695
    %3775 = vmatpush.bf16.msra.mxu0 %v3692
    %3776 = vmatmul.bf16.gmra.mxu0 %v3753
    %v3777 = vpop.f32.mrf.mxu0
    %v3778 = vadd.f32 %v3765, %v3777
    %v3779 = vpop.f32.mrf.mxu0
    %3780 = vdwg.mxu0
    %3781 = vmatpush.bf16.msra.mxu0 %v3690
    %3782 = vmatpush.bf16.msra.mxu0 %v3687
    %3783 = vmatpush.bf16.msra.mxu0 %v3684
    %3784 = vmatpush.bf16.msra.mxu0 %v3681
    %3785 = vmatpush.bf16.msra.mxu0 %v3678
    %3786 = vmatpush.bf16.msra.mxu0 %v3675
    %3787 = vmatpush.bf16.msra.mxu0 %v3672
    %3788 = vmatpush.bf16.msra.mxu0 %v3669
    %3789 = vmatmul.bf16.gmra.mxu0 %v3520
    %v3790 = vpop.f32.mrf.mxu0
    %v3791 = vadd.f32 0.0, %v3790
    %v3792 = vpop.f32.mrf.mxu0
    %3793 = vdwg.mxu0
    %3794 = vmatpush.bf16.msra.mxu0 0
    %3795 = vmatpush.bf16.msra.mxu0 0
    %3796 = vmatpush.bf16.msra.mxu0 %v3708
    %3797 = vmatpush.bf16.msra.mxu0 %v3705
    %3798 = vmatpush.bf16.msra.mxu0 %v3702
    %3799 = vmatpush.bf16.msra.mxu0 %v3699
    %3800 = vmatpush.bf16.msra.mxu0 %v3696
    %3801 = vmatpush.bf16.msra.mxu0 %v3693
    %3802 = vmatmul.bf16.gmra.mxu0 %v3753
    %v3803 = vpop.f32.mrf.mxu0
    %v3804 = vadd.f32 %v3791, %v3803
    %v3805 = vpop.f32.mrf.mxu0
    %3806 = vdwg.mxu0
    %3807 = vmatpush.bf16.msra.mxu0 %v3691
    %3808 = vmatpush.bf16.msra.mxu0 %v3688
    %3809 = vmatpush.bf16.msra.mxu0 %v3685
    %3810 = vmatpush.bf16.msra.mxu0 %v3682
    %3811 = vmatpush.bf16.msra.mxu0 %v3679
    %3812 = vmatpush.bf16.msra.mxu0 %v3676
    %3813 = vmatpush.bf16.msra.mxu0 %v3673
    %3814 = vmatpush.bf16.msra.mxu0 %v3670
    %3815 = vmatmul.bf16.gmra.mxu0 %v3520
    %v3816 = vpop.f32.mrf.mxu0
    %v3817 = vadd.f32 0.0, %v3816
    %v3818 = vpop.f32.mrf.mxu0
    %3819 = vdwg.mxu0
    %3820 = vmatpush.bf16.msra.mxu0 0
    %3821 = vmatpush.bf16.msra.mxu0 0
    %3822 = vmatpush.bf16.msra.mxu0 %v3709
    %3823 = vmatpush.bf16.msra.mxu0 %v3706
    %3824 = vmatpush.bf16.msra.mxu0 %v3703
    %3825 = vmatpush.bf16.msra.mxu0 %v3700
    %3826 = vmatpush.bf16.msra.mxu0 %v3697
    %3827 = vmatpush.bf16.msra.mxu0 %v3694
    %3828 = vmatmul.bf16.gmra.mxu0 %v3753
    %v3829 = vpop.f32.mrf.mxu0
    %v3830 = vadd.f32 %v3817, %v3829
    %v3831 = vpop.f32.mrf.mxu0
    %3832 = vdwg.mxu0
    %v3833 = vadd.f32 %v3454, %v3778
    %v3834 = vadd.f32 %v3455, %v3804
    %v3835 = vadd.f32 %v3456, %v3830
    %s3836 = scalar_lea.vmem %s3, 1008
    %v3837 = vld [vmem:[%s3836] sm:$0xff]
    %v3838 = vld [vmem:[%s3836 + $0x8] sm:$0xf]
    %v3839 = vld [vmem:[%s3836 + $0xc] sm:$0xff]
    %v3840 = vld [vmem:[%s3836 + $0x14] sm:$0xf]
    %v3841 = vld [vmem:[%s3836 + $0x18] sm:$0xff]
    %v3842 = vld [vmem:[%s3836 + $0x20] sm:$0xf]
    %v3843 = vld [vmem:[%s3836 + $0x24] sm:$0xff]
    %v3844 = vld [vmem:[%s3836 + $0x2c] sm:$0xf]
    %v3845 = vld [vmem:[%s3836 + $0x30] sm:$0xff]
    %v3846 = vld [vmem:[%s3836 + $0x38] sm:$0xf]
    %v3847 = vld [vmem:[%s3836 + $0x3c] sm:$0xff]
    %v3848 = vld [vmem:[%s3836 + $0x44] sm:$0xf]
    %v3849 = vld [vmem:[%s3836 + $0x48] sm:$0xff]
    %v3850 = vld [vmem:[%s3836 + $0x50] sm:$0xf]
    %v3851 = vld [vmem:[%s3836 + $0x54] sm:$0xff]
    %v3852 = vld [vmem:[%s3836 + $0x5c] sm:$0xf]
    %v3853 = vld [vmem:[%s3836 + $0x60] sm:$0xff]
    %v3854 = vld [vmem:[%s3836 + $0x68] sm:$0xf]
    %v3855 = vld [vmem:[%s3836 + $0x6c] sm:$0xff]
    %v3856 = vld [vmem:[%s3836 + $0x74] sm:$0xf]
    %v3857 = vld [vmem:[%s3836 + $0x78] sm:$0xff]
    %v3858 = vld [vmem:[%s3836 + $0x80] sm:$0xf]
    %v3859 = vld [vmem:[%s3836 + $0x84] sm:$0xff]
    %v3860 = vld [vmem:[%s3836 + $0x8c] sm:$0xf]
    %v3861 = vld [vmem:[%s3836 + $0x90] sm:$0xff]
    %v3862 = vld [vmem:[%s3836 + $0x98] sm:$0xf]
    %v3863 = vld [vmem:[%s3836 + $0x9c] sm:$0xff]
    %v3864 = vld [vmem:[%s3836 + $0xa4] sm:$0xf]
    %v3865 = vld [vmem:[%s3836 + $0xa8] sm:$0xff]
    %v3866 = vld [vmem:[%s3836 + $0xb0] sm:$0xf]
    %v3867 = vld [vmem:[%s3836 + $0xb4] sm:$0xff]
    %v3868 = vld [vmem:[%s3836 + $0xbc] sm:$0xf]
    %v3869 = vld [vmem:[%s3836 + $0xc0] sm:$0xff]
    %v3870 = vld [vmem:[%s3836 + $0xc8] sm:$0xf]
    %v3871 = vld [vmem:[%s3836 + $0xcc] sm:$0xff]
    %v3872 = vld [vmem:[%s3836 + $0xd4] sm:$0xf]
    %v3873 = vld [vmem:[%s3836 + $0xd8] sm:$0xff]
    %v3874 = vld [vmem:[%s3836 + $0xe0] sm:$0xf]
    %v3875 = vld [vmem:[%s3836 + $0xe4] sm:$0xff]
    %v3876 = vld [vmem:[%s3836 + $0xec] sm:$0xf]
    %v3877 = vld [vmem:[%s3836 + $0xf0] sm:$0xff]
    %v3878 = vld [vmem:[%s3836 + $0xf8] sm:$0xf]
    %v3879 = vld [vmem:[%s3836 + $0xfc] sm:$0xff]
    %v3880 = vld [vmem:[%s3836 + $0x104] sm:$0xf]
    %v3881 = vld [vmem:[%s3836 + $0x108] sm:$0xff]
    %v3882 = vld [vmem:[%s3836 + $0x110] sm:$0xf]
    %v3883 = vld [vmem:[%s3836 + $0x114] sm:$0xff]
    %v3884 = vld [vmem:[%s3836 + $0x11c] sm:$0xf]
    %v3885 = vld [vmem:[%s3836 + $0x120] sm:$0xff]
    %v3886 = vld [vmem:[%s3836 + $0x128] sm:$0xf]
    %v3887 = vld [vmem:[%s3836 + $0x12c] sm:$0xff]
    %v3888 = vld [vmem:[%s3836 + $0x134] sm:$0xf]
    %v3889 = vld [vmem:[%s3836 + $0x138] sm:$0xff]
    %v3890 = vld [vmem:[%s3836 + $0x140] sm:$0xf]
    %v3891 = vld [vmem:[%s3836 + $0x144] sm:$0xff]
    %v3892 = vld [vmem:[%s3836 + $0x14c] sm:$0xf]
    %v3894 = vshrl.u32 %v3146, 16
    %v3896 = vshll.u32 %v3146, 16
    %v3898 = vrot.slane %v3896, 1
    %v3899 = vor.u32 %v3894, %v3898
    %v3900 = vshrl.u32 %v3147, 16
    %v3902 = vshll.u32 %v3147, 16
    %v3904 = vrot.slane %v3902, 1
    %v3905 = vor.u32 %v3900, %v3904
    %v3963 = vunpack.c.l.b16 %v3837
    %v3964 = vunpack.c.h.b16 %v3837
    %v3965 = vunpack.c.l.b16 %v3838
    %v3966 = vunpack.c.l.b16 %v3839
    %v3967 = vunpack.c.h.b16 %v3839
    %v3968 = vunpack.c.l.b16 %v3840
    %v3969 = vunpack.c.l.b16 %v3841
    %v3970 = vunpack.c.h.b16 %v3841
    %v3971 = vunpack.c.l.b16 %v3842
    %v3972 = vunpack.c.l.b16 %v3843
    %v3973 = vunpack.c.h.b16 %v3843
    %v3974 = vunpack.c.l.b16 %v3844
    %v3975 = vunpack.c.l.b16 %v3845
    %v3976 = vunpack.c.h.b16 %v3845
    %v3977 = vunpack.c.l.b16 %v3846
    %v3978 = vunpack.c.l.b16 %v3847
    %v3979 = vunpack.c.h.b16 %v3847
    %v3980 = vunpack.c.l.b16 %v3848
    %v3981 = vunpack.c.l.b16 %v3849
    %v3982 = vunpack.c.h.b16 %v3849
    %v3983 = vunpack.c.l.b16 %v3850
    %v3984 = vunpack.c.l.b16 %v3851
    %v3985 = vunpack.c.h.b16 %v3851
    %v3986 = vunpack.c.l.b16 %v3852
    %v3987 = vunpack.c.l.b16 %v3853
    %v3988 = vunpack.c.h.b16 %v3853
    %v3989 = vunpack.c.l.b16 %v3854
    %v3990 = vunpack.c.l.b16 %v3855
    %v3991 = vunpack.c.h.b16 %v3855
    %v3992 = vunpack.c.l.b16 %v3856
    %v3993 = vunpack.c.l.b16 %v3857
    %v3994 = vunpack.c.h.b16 %v3857
    %v3995 = vunpack.c.l.b16 %v3858
    %v3996 = vunpack.c.l.b16 %v3859
    %v3997 = vunpack.c.h.b16 %v3859
    %v3998 = vunpack.c.l.b16 %v3860
    %v3999 = vunpack.c.l.b16 %v3861
    %v4000 = vunpack.c.h.b16 %v3861
    %v4001 = vunpack.c.l.b16 %v3862
    %v4002 = vunpack.c.l.b16 %v3863
    %v4003 = vunpack.c.h.b16 %v3863
    %v4004 = vunpack.c.l.b16 %v3864
    %v4005 = vunpack.c.l.b16 %v3865
    %v4006 = vunpack.c.h.b16 %v3865
    %v4007 = vunpack.c.l.b16 %v3866
    %v4008 = vunpack.c.l.b16 %v3867
    %v4009 = vunpack.c.h.b16 %v3867
    %v4010 = vunpack.c.l.b16 %v3868
    %v4011 = vunpack.c.l.b16 %v3869
    %v4012 = vunpack.c.h.b16 %v3869
    %v4013 = vunpack.c.l.b16 %v3870
    %v4014 = vunpack.c.l.b16 %v3871
    %v4015 = vunpack.c.h.b16 %v3871
    %v4016 = vunpack.c.l.b16 %v3872
    %v4017 = vunpack.c.l.b16 %v3873
    %v4018 = vunpack.c.h.b16 %v3873
    %v4019 = vunpack.c.l.b16 %v3874
    %v4020 = vunpack.c.l.b16 %v3875
    %v4021 = vunpack.c.h.b16 %v3875
    %v4022 = vunpack.c.l.b16 %v3876
    %v4023 = vunpack.c.l.b16 %v3877
    %v4024 = vunpack.c.h.b16 %v3877
    %v4025 = vunpack.c.l.b16 %v3878
    %v4026 = vunpack.c.l.b16 %v3879
    %v4027 = vunpack.c.h.b16 %v3879
    %v4028 = vunpack.c.l.b16 %v3880
    %v4029 = vunpack.c.l.b16 %v3881
    %v4030 = vunpack.c.h.b16 %v3881
    %v4031 = vunpack.c.l.b16 %v3882
    %v4032 = vunpack.c.l.b16 %v3883
    %v4033 = vunpack.c.h.b16 %v3883
    %v4034 = vunpack.c.l.b16 %v3884
    %v4035 = vunpack.c.l.b16 %v3885
    %v4036 = vunpack.c.h.b16 %v3885
    %v4037 = vunpack.c.l.b16 %v3886
    %v4038 = vunpack.c.l.b16 %v3887
    %v4039 = vunpack.c.h.b16 %v3887
    %v4040 = vunpack.c.l.b16 %v3888
    %v4041 = vunpack.c.l.b16 %v3889
    %v4042 = vunpack.c.h.b16 %v3889
    %v4043 = vunpack.c.l.b16 %v3890
    %v4044 = vunpack.c.l.b16 %v3891
    %v4045 = vunpack.c.h.b16 %v3891
    %v4046 = vunpack.c.l.b16 %v3892
    %v4047 = vpack.c.b16 %v3966, %v3963
    %v4048 = vpack.c.b16 %v3967, %v3964
    %v4049 = vpack.c.b16 %v3968, %v3965
    %v4050 = vpack.c.b16 %v3972, %v3969
    %v4051 = vpack.c.b16 %v3973, %v3970
    %v4052 = vpack.c.b16 %v3974, %v3971
    %v4053 = vpack.c.b16 %v3978, %v3975
    %v4054 = vpack.c.b16 %v3979, %v3976
    %v4055 = vpack.c.b16 %v3980, %v3977
    %v4056 = vpack.c.b16 %v3984, %v3981
    %v4057 = vpack.c.b16 %v3985, %v3982
    %v4058 = vpack.c.b16 %v3986, %v3983
    %v4059 = vpack.c.b16 %v3990, %v3987
    %v4060 = vpack.c.b16 %v3991, %v3988
    %v4061 = vpack.c.b16 %v3992, %v3989
    %v4062 = vpack.c.b16 %v3996, %v3993
    %v4063 = vpack.c.b16 %v3997, %v3994
    %v4064 = vpack.c.b16 %v3998, %v3995
    %v4065 = vpack.c.b16 %v4002, %v3999
    %v4066 = vpack.c.b16 %v4003, %v4000
    %v4067 = vpack.c.b16 %v4004, %v4001
    %v4068 = vpack.c.b16 %v4008, %v4005
    %v4069 = vpack.c.b16 %v4009, %v4006
    %v4070 = vpack.c.b16 %v4010, %v4007
    %v4071 = vpack.c.b16 %v4014, %v4011
    %v4072 = vpack.c.b16 %v4015, %v4012
    %v4073 = vpack.c.b16 %v4016, %v4013
    %v4074 = vpack.c.b16 %v4020, %v4017
    %v4075 = vpack.c.b16 %v4021, %v4018
    %v4076 = vpack.c.b16 %v4022, %v4019
    %v4077 = vpack.c.b16 %v4026, %v4023
    %v4078 = vpack.c.b16 %v4027, %v4024
    %v4079 = vpack.c.b16 %v4028, %v4025
    %v4080 = vpack.c.b16 %v4032, %v4029
    %v4081 = vpack.c.b16 %v4033, %v4030
    %v4082 = vpack.c.b16 %v4034, %v4031
    %v4083 = vpack.c.b16 %v4038, %v4035
    %v4084 = vpack.c.b16 %v4039, %v4036
    %v4085 = vpack.c.b16 %v4040, %v4037
    %v4086 = vpack.c.b16 %v4044, %v4041
    %v4087 = vpack.c.b16 %v4045, %v4042
    %v4088 = vpack.c.b16 %v4046, %v4043
    %v4132 = vsel %vm2993, %v3905, 0
    %4134 = vmatpush.bf16.msra.mxu0 %v4068
    %4135 = vmatpush.bf16.msra.mxu0 %v4065
    %4136 = vmatpush.bf16.msra.mxu0 %v4062
    %4137 = vmatpush.bf16.msra.mxu0 %v4059
    %4138 = vmatpush.bf16.msra.mxu0 %v4056
    %4139 = vmatpush.bf16.msra.mxu0 %v4053
    %4140 = vmatpush.bf16.msra.mxu0 %v4050
    %4141 = vmatpush.bf16.msra.mxu0 %v4047
    %4142 = vmatmul.bf16.gmra.mxu0 %v3899
    %v4143 = vpop.f32.mrf.mxu0
    %v4144 = vadd.f32 0.0, %v4143
    %v4145 = vpop.f32.mrf.mxu0
    %4146 = vdwg.mxu0
    %4147 = vmatpush.bf16.msra.mxu0 0
    %4148 = vmatpush.bf16.msra.mxu0 0
    %4149 = vmatpush.bf16.msra.mxu0 %v4086
    %4150 = vmatpush.bf16.msra.mxu0 %v4083
    %4151 = vmatpush.bf16.msra.mxu0 %v4080
    %4152 = vmatpush.bf16.msra.mxu0 %v4077
    %4153 = vmatpush.bf16.msra.mxu0 %v4074
    %4154 = vmatpush.bf16.msra.mxu0 %v4071
    %4155 = vmatmul.bf16.gmra.mxu0 %v4132
    %v4156 = vpop.f32.mrf.mxu0
    %v4157 = vadd.f32 %v4144, %v4156
    %v4158 = vpop.f32.mrf.mxu0
    %4159 = vdwg.mxu0
    %4160 = vmatpush.bf16.msra.mxu0 %v4069
    %4161 = vmatpush.bf16.msra.mxu0 %v4066
    %4162 = vmatpush.bf16.msra.mxu0 %v4063
    %4163 = vmatpush.bf16.msra.mxu0 %v4060
    %4164 = vmatpush.bf16.msra.mxu0 %v4057
    %4165 = vmatpush.bf16.msra.mxu0 %v4054
    %4166 = vmatpush.bf16.msra.mxu0 %v4051
    %4167 = vmatpush.bf16.msra.mxu0 %v4048
    %4168 = vmatmul.bf16.gmra.mxu0 %v3899
    %v4169 = vpop.f32.mrf.mxu0
    %v4170 = vadd.f32 0.0, %v4169
    %v4171 = vpop.f32.mrf.mxu0
    %4172 = vdwg.mxu0
    %4173 = vmatpush.bf16.msra.mxu0 0
    %4174 = vmatpush.bf16.msra.mxu0 0
    %4175 = vmatpush.bf16.msra.mxu0 %v4087
    %4176 = vmatpush.bf16.msra.mxu0 %v4084
    %4177 = vmatpush.bf16.msra.mxu0 %v4081
    %4178 = vmatpush.bf16.msra.mxu0 %v4078
    %4179 = vmatpush.bf16.msra.mxu0 %v4075
    %4180 = vmatpush.bf16.msra.mxu0 %v4072
    %4181 = vmatmul.bf16.gmra.mxu0 %v4132
    %v4182 = vpop.f32.mrf.mxu0
    %v4183 = vadd.f32 %v4170, %v4182
    %v4184 = vpop.f32.mrf.mxu0
    %4185 = vdwg.mxu0
    %4186 = vmatpush.bf16.msra.mxu0 %v4070
    %4187 = vmatpush.bf16.msra.mxu0 %v4067
    %4188 = vmatpush.bf16.msra.mxu0 %v4064
    %4189 = vmatpush.bf16.msra.mxu0 %v4061
    %4190 = vmatpush.bf16.msra.mxu0 %v4058
    %4191 = vmatpush.bf16.msra.mxu0 %v4055
    %4192 = vmatpush.bf16.msra.mxu0 %v4052
    %4193 = vmatpush.bf16.msra.mxu0 %v4049
    %4194 = vmatmul.bf16.gmra.mxu0 %v3899
    %v4195 = vpop.f32.mrf.mxu0
    %v4196 = vadd.f32 0.0, %v4195
    %v4197 = vpop.f32.mrf.mxu0
    %4198 = vdwg.mxu0
    %4199 = vmatpush.bf16.msra.mxu0 0
    %4200 = vmatpush.bf16.msra.mxu0 0
    %4201 = vmatpush.bf16.msra.mxu0 %v4088
    %4202 = vmatpush.bf16.msra.mxu0 %v4085
    %4203 = vmatpush.bf16.msra.mxu0 %v4082
    %4204 = vmatpush.bf16.msra.mxu0 %v4079
    %4205 = vmatpush.bf16.msra.mxu0 %v4076
    %4206 = vmatpush.bf16.msra.mxu0 %v4073
    %4207 = vmatmul.bf16.gmra.mxu0 %v4132
    %v4208 = vpop.f32.mrf.mxu0
    %v4209 = vadd.f32 %v4196, %v4208
    %v4210 = vpop.f32.mrf.mxu0
    %4211 = vdwg.mxu0
    %v4212 = vadd.f32 %v3833, %v4157
    %v4213 = vadd.f32 %v3834, %v4183
    %v4214 = vadd.f32 %v3835, %v4209
    %v4215 = vld [vmem:[#allocation2] sm:$0xee]
    %s4216 = scalar_lea.vmem %s3, 1344
    %v4217 = vld [vmem:[%s4216] sm:$0xff]
    %v4218 = vld [vmem:[%s4216 + $0x8] sm:$0xf]
    %v4219 = vld [vmem:[%s4216 + $0xc] sm:$0xff]
    %v4220 = vld [vmem:[%s4216 + $0x14] sm:$0xf]
    %v4221 = vld [vmem:[%s4216 + $0x18] sm:$0xff]
    %v4222 = vld [vmem:[%s4216 + $0x20] sm:$0xf]
    %v4223 = vld [vmem:[%s4216 + $0x24] sm:$0xff]
    %v4224 = vld [vmem:[%s4216 + $0x2c] sm:$0xf]
    %v4225 = vld [vmem:[%s4216 + $0x30] sm:$0xff]
    %v4226 = vld [vmem:[%s4216 + $0x38] sm:$0xf]
    %v4227 = vld [vmem:[%s4216 + $0x3c] sm:$0xff]
    %v4228 = vld [vmem:[%s4216 + $0x44] sm:$0xf]
    %v4229 = vld [vmem:[%s4216 + $0x48] sm:$0xff]
    %v4230 = vld [vmem:[%s4216 + $0x50] sm:$0xf]
    %v4231 = vld [vmem:[%s4216 + $0x54] sm:$0xff]
    %v4232 = vld [vmem:[%s4216 + $0x5c] sm:$0xf]
    %v4233 = vld [vmem:[%s4216 + $0x60] sm:$0xff]
    %v4234 = vld [vmem:[%s4216 + $0x68] sm:$0xf]
    %v4235 = vld [vmem:[%s4216 + $0x6c] sm:$0xff]
    %v4236 = vld [vmem:[%s4216 + $0x74] sm:$0xf]
    %v4237 = vld [vmem:[%s4216 + $0x78] sm:$0xff]
    %v4238 = vld [vmem:[%s4216 + $0x80] sm:$0xf]
    %v4239 = vld [vmem:[%s4216 + $0x84] sm:$0xff]
    %v4240 = vld [vmem:[%s4216 + $0x8c] sm:$0xf]
    %v4241 = vld [vmem:[%s4216 + $0x90] sm:$0xff]
    %v4242 = vld [vmem:[%s4216 + $0x98] sm:$0xf]
    %v4243 = vld [vmem:[%s4216 + $0x9c] sm:$0xff]
    %v4244 = vld [vmem:[%s4216 + $0xa4] sm:$0xf]
    %v4245 = vld [vmem:[%s4216 + $0xa8] sm:$0xff]
    %v4246 = vld [vmem:[%s4216 + $0xb0] sm:$0xf]
    %v4247 = vld [vmem:[%s4216 + $0xb4] sm:$0xff]
    %v4248 = vld [vmem:[%s4216 + $0xbc] sm:$0xf]
    %v4249 = vld [vmem:[%s4216 + $0xc0] sm:$0xff]
    %v4250 = vld [vmem:[%s4216 + $0xc8] sm:$0xf]
    %v4251 = vld [vmem:[%s4216 + $0xcc] sm:$0xff]
    %v4252 = vld [vmem:[%s4216 + $0xd4] sm:$0xf]
    %v4253 = vld [vmem:[%s4216 + $0xd8] sm:$0xff]
    %v4254 = vld [vmem:[%s4216 + $0xe0] sm:$0xf]
    %v4255 = vld [vmem:[%s4216 + $0xe4] sm:$0xff]
    %v4256 = vld [vmem:[%s4216 + $0xec] sm:$0xf]
    %v4257 = vld [vmem:[%s4216 + $0xf0] sm:$0xff]
    %v4258 = vld [vmem:[%s4216 + $0xf8] sm:$0xf]
    %v4259 = vld [vmem:[%s4216 + $0xfc] sm:$0xff]
    %v4260 = vld [vmem:[%s4216 + $0x104] sm:$0xf]
    %v4261 = vld [vmem:[%s4216 + $0x108] sm:$0xff]
    %v4262 = vld [vmem:[%s4216 + $0x110] sm:$0xf]
    %v4263 = vld [vmem:[%s4216 + $0x114] sm:$0xff]
    %v4264 = vld [vmem:[%s4216 + $0x11c] sm:$0xf]
    %v4265 = vld [vmem:[%s4216 + $0x120] sm:$0xff]
    %v4266 = vld [vmem:[%s4216 + $0x128] sm:$0xf]
    %v4267 = vld [vmem:[%s4216 + $0x12c] sm:$0xff]
    %v4268 = vld [vmem:[%s4216 + $0x134] sm:$0xf]
    %v4269 = vld [vmem:[%s4216 + $0x138] sm:$0xff]
    %v4270 = vld [vmem:[%s4216 + $0x140] sm:$0xf]
    %v4271 = vld [vmem:[%s4216 + $0x144] sm:$0xff]
    %v4272 = vld [vmem:[%s4216 + $0x14c] sm:$0xf]
    %v4274 = vunpack.c.l.b16 %v4215
    %v4275 = vunpack.c.h.b16 %v4215
    %v4276 = vpack.c.b16 %v4274, %v4274
    %v4277 = vpack.c.b16 %v4275, %v4275
    %v4278 = vrot.slane %v4276, 1
    %v4279 = vrot.slane %v4277, 1
    %v4337 = vunpack.c.l.b16 %v4217
    %v4338 = vunpack.c.h.b16 %v4217
    %v4339 = vunpack.c.l.b16 %v4218
    %v4340 = vunpack.c.l.b16 %v4219
    %v4341 = vunpack.c.h.b16 %v4219
    %v4342 = vunpack.c.l.b16 %v4220
    %v4343 = vunpack.c.l.b16 %v4221
    %v4344 = vunpack.c.h.b16 %v4221
    %v4345 = vunpack.c.l.b16 %v4222
    %v4346 = vunpack.c.l.b16 %v4223
    %v4347 = vunpack.c.h.b16 %v4223
    %v4348 = vunpack.c.l.b16 %v4224
    %v4349 = vunpack.c.l.b16 %v4225
    %v4350 = vunpack.c.h.b16 %v4225
    %v4351 = vunpack.c.l.b16 %v4226
    %v4352 = vunpack.c.l.b16 %v4227
    %v4353 = vunpack.c.h.b16 %v4227
    %v4354 = vunpack.c.l.b16 %v4228
    %v4355 = vunpack.c.l.b16 %v4229
    %v4356 = vunpack.c.h.b16 %v4229
    %v4357 = vunpack.c.l.b16 %v4230
    %v4358 = vunpack.c.l.b16 %v4231
    %v4359 = vunpack.c.h.b16 %v4231
    %v4360 = vunpack.c.l.b16 %v4232
    %v4361 = vunpack.c.l.b16 %v4233
    %v4362 = vunpack.c.h.b16 %v4233
    %v4363 = vunpack.c.l.b16 %v4234
    %v4364 = vunpack.c.l.b16 %v4235
    %v4365 = vunpack.c.h.b16 %v4235
    %v4366 = vunpack.c.l.b16 %v4236
    %v4367 = vunpack.c.l.b16 %v4237
    %v4368 = vunpack.c.h.b16 %v4237
    %v4369 = vunpack.c.l.b16 %v4238
    %v4370 = vunpack.c.l.b16 %v4239
    %v4371 = vunpack.c.h.b16 %v4239
    %v4372 = vunpack.c.l.b16 %v4240
    %v4373 = vunpack.c.l.b16 %v4241
    %v4374 = vunpack.c.h.b16 %v4241
    %v4375 = vunpack.c.l.b16 %v4242
    %v4376 = vunpack.c.l.b16 %v4243
    %v4377 = vunpack.c.h.b16 %v4243
    %v4378 = vunpack.c.l.b16 %v4244
    %v4379 = vunpack.c.l.b16 %v4245
    %v4380 = vunpack.c.h.b16 %v4245
    %v4381 = vunpack.c.l.b16 %v4246
    %v4382 = vunpack.c.l.b16 %v4247
    %v4383 = vunpack.c.h.b16 %v4247
    %v4384 = vunpack.c.l.b16 %v4248
    %v4385 = vunpack.c.l.b16 %v4249
    %v4386 = vunpack.c.h.b16 %v4249
    %v4387 = vunpack.c.l.b16 %v4250
    %v4388 = vunpack.c.l.b16 %v4251
    %v4389 = vunpack.c.h.b16 %v4251
    %v4390 = vunpack.c.l.b16 %v4252
    %v4391 = vunpack.c.l.b16 %v4253
    %v4392 = vunpack.c.h.b16 %v4253
    %v4393 = vunpack.c.l.b16 %v4254
    %v4394 = vunpack.c.l.b16 %v4255
    %v4395 = vunpack.c.h.b16 %v4255
    %v4396 = vunpack.c.l.b16 %v4256
    %v4397 = vunpack.c.l.b16 %v4257
    %v4398 = vunpack.c.h.b16 %v4257
    %v4399 = vunpack.c.l.b16 %v4258
    %v4400 = vunpack.c.l.b16 %v4259
    %v4401 = vunpack.c.h.b16 %v4259
    %v4402 = vunpack.c.l.b16 %v4260
    %v4403 = vunpack.c.l.b16 %v4261
    %v4404 = vunpack.c.h.b16 %v4261
    %v4405 = vunpack.c.l.b16 %v4262
    %v4406 = vunpack.c.l.b16 %v4263
    %v4407 = vunpack.c.h.b16 %v4263
    %v4408 = vunpack.c.l.b16 %v4264
    %v4409 = vunpack.c.l.b16 %v4265
    %v4410 = vunpack.c.h.b16 %v4265
    %v4411 = vunpack.c.l.b16 %v4266
    %v4412 = vunpack.c.l.b16 %v4267
    %v4413 = vunpack.c.h.b16 %v4267
    %v4414 = vunpack.c.l.b16 %v4268
    %v4415 = vunpack.c.l.b16 %v4269
    %v4416 = vunpack.c.h.b16 %v4269
    %v4417 = vunpack.c.l.b16 %v4270
    %v4418 = vunpack.c.l.b16 %v4271
    %v4419 = vunpack.c.h.b16 %v4271
    %v4420 = vunpack.c.l.b16 %v4272
    %v4421 = vpack.c.b16 %v4340, %v4337
    %v4422 = vpack.c.b16 %v4341, %v4338
    %v4423 = vpack.c.b16 %v4342, %v4339
    %v4424 = vpack.c.b16 %v4346, %v4343
    %v4425 = vpack.c.b16 %v4347, %v4344
    %v4426 = vpack.c.b16 %v4348, %v4345
    %v4427 = vpack.c.b16 %v4352, %v4349
    %v4428 = vpack.c.b16 %v4353, %v4350
    %v4429 = vpack.c.b16 %v4354, %v4351
    %v4430 = vpack.c.b16 %v4358, %v4355
    %v4431 = vpack.c.b16 %v4359, %v4356
    %v4432 = vpack.c.b16 %v4360, %v4357
    %v4433 = vpack.c.b16 %v4364, %v4361
    %v4434 = vpack.c.b16 %v4365, %v4362
    %v4435 = vpack.c.b16 %v4366, %v4363
    %v4436 = vpack.c.b16 %v4370, %v4367
    %v4437 = vpack.c.b16 %v4371, %v4368
    %v4438 = vpack.c.b16 %v4372, %v4369
    %v4439 = vpack.c.b16 %v4376, %v4373
    %v4440 = vpack.c.b16 %v4377, %v4374
    %v4441 = vpack.c.b16 %v4378, %v4375
    %v4442 = vpack.c.b16 %v4382, %v4379
    %v4443 = vpack.c.b16 %v4383, %v4380
    %v4444 = vpack.c.b16 %v4384, %v4381
    %v4445 = vpack.c.b16 %v4388, %v4385
    %v4446 = vpack.c.b16 %v4389, %v4386
    %v4447 = vpack.c.b16 %v4390, %v4387
    %v4448 = vpack.c.b16 %v4394, %v4391
    %v4449 = vpack.c.b16 %v4395, %v4392
    %v4450 = vpack.c.b16 %v4396, %v4393
    %v4451 = vpack.c.b16 %v4400, %v4397
    %v4452 = vpack.c.b16 %v4401, %v4398
    %v4453 = vpack.c.b16 %v4402, %v4399
    %v4454 = vpack.c.b16 %v4406, %v4403
    %v4455 = vpack.c.b16 %v4407, %v4404
    %v4456 = vpack.c.b16 %v4408, %v4405
    %v4457 = vpack.c.b16 %v4412, %v4409
    %v4458 = vpack.c.b16 %v4413, %v4410
    %v4459 = vpack.c.b16 %v4414, %v4411
    %v4460 = vpack.c.b16 %v4418, %v4415
    %v4461 = vpack.c.b16 %v4419, %v4416
    %v4462 = vpack.c.b16 %v4420, %v4417
    %v4506 = vsel %vm2993, %v4279, 0
    %4508 = vmatpush.bf16.msra.mxu0 %v4442
    %4509 = vmatpush.bf16.msra.mxu0 %v4439
    %4510 = vmatpush.bf16.msra.mxu0 %v4436
    %4511 = vmatpush.bf16.msra.mxu0 %v4433
    %4512 = vmatpush.bf16.msra.mxu0 %v4430
    %4513 = vmatpush.bf16.msra.mxu0 %v4427
    %4514 = vmatpush.bf16.msra.mxu0 %v4424
    %4515 = vmatpush.bf16.msra.mxu0 %v4421
    %4516 = vmatmul.bf16.gmra.mxu0 %v4278
    %v4517 = vpop.f32.mrf.mxu0
    %v4518 = vadd.f32 0.0, %v4517
    %v4519 = vpop.f32.mrf.mxu0
    %4520 = vdwg.mxu0
    %4521 = vmatpush.bf16.msra.mxu0 0
    %4522 = vmatpush.bf16.msra.mxu0 0
    %4523 = vmatpush.bf16.msra.mxu0 %v4460
    %4524 = vmatpush.bf16.msra.mxu0 %v4457
    %4525 = vmatpush.bf16.msra.mxu0 %v4454
    %4526 = vmatpush.bf16.msra.mxu0 %v4451
    %4527 = vmatpush.bf16.msra.mxu0 %v4448
    %4528 = vmatpush.bf16.msra.mxu0 %v4445
    %4529 = vmatmul.bf16.gmra.mxu0 %v4506
    %v4530 = vpop.f32.mrf.mxu0
    %v4531 = vadd.f32 %v4518, %v4530
    %v4532 = vpop.f32.mrf.mxu0
    %4533 = vdwg.mxu0
    %4534 = vmatpush.bf16.msra.mxu0 %v4443
    %4535 = vmatpush.bf16.msra.mxu0 %v4440
    %4536 = vmatpush.bf16.msra.mxu0 %v4437
    %4537 = vmatpush.bf16.msra.mxu0 %v4434
    %4538 = vmatpush.bf16.msra.mxu0 %v4431
    %4539 = vmatpush.bf16.msra.mxu0 %v4428
    %4540 = vmatpush.bf16.msra.mxu0 %v4425
    %4541 = vmatpush.bf16.msra.mxu0 %v4422
    %4542 = vmatmul.bf16.gmra.mxu0 %v4278
    %v4543 = vpop.f32.mrf.mxu0
    %v4544 = vadd.f32 0.0, %v4543
    %v4545 = vpop.f32.mrf.mxu0
    %4546 = vdwg.mxu0
    %4547 = vmatpush.bf16.msra.mxu0 0
    %4548 = vmatpush.bf16.msra.mxu0 0
    %4549 = vmatpush.bf16.msra.mxu0 %v4461
    %4550 = vmatpush.bf16.msra.mxu0 %v4458
    %4551 = vmatpush.bf16.msra.mxu0 %v4455
    %4552 = vmatpush.bf16.msra.mxu0 %v4452
    %4553 = vmatpush.bf16.msra.mxu0 %v4449
    %4554 = vmatpush.bf16.msra.mxu0 %v4446
    %4555 = vmatmul.bf16.gmra.mxu0 %v4506
    %v4556 = vpop.f32.mrf.mxu0
    %v4557 = vadd.f32 %v4544, %v4556
    %v4558 = vpop.f32.mrf.mxu0
    %4559 = vdwg.mxu0
    %4560 = vmatpush.bf16.msra.mxu0 %v4444
    %4561 = vmatpush.bf16.msra.mxu0 %v4441
    %4562 = vmatpush.bf16.msra.mxu0 %v4438
    %4563 = vmatpush.bf16.msra.mxu0 %v4435
    %4564 = vmatpush.bf16.msra.mxu0 %v4432
    %4565 = vmatpush.bf16.msra.mxu0 %v4429
    %4566 = vmatpush.bf16.msra.mxu0 %v4426
    %4567 = vmatpush.bf16.msra.mxu0 %v4423
    %4568 = vmatmul.bf16.gmra.mxu0 %v4278
    %v4569 = vpop.f32.mrf.mxu0
    %v4570 = vadd.f32 0.0, %v4569
    %v4571 = vpop.f32.mrf.mxu0
    %4572 = vdwg.mxu0
    %4573 = vmatpush.bf16.msra.mxu0 0
    %4574 = vmatpush.bf16.msra.mxu0 0
    %4575 = vmatpush.bf16.msra.mxu0 %v4462
    %4576 = vmatpush.bf16.msra.mxu0 %v4459
    %4577 = vmatpush.bf16.msra.mxu0 %v4456
    %4578 = vmatpush.bf16.msra.mxu0 %v4453
    %4579 = vmatpush.bf16.msra.mxu0 %v4450
    %4580 = vmatpush.bf16.msra.mxu0 %v4447
    %4581 = vmatmul.bf16.gmra.mxu0 %v4506
    %v4582 = vpop.f32.mrf.mxu0
    %v4583 = vadd.f32 %v4570, %v4582
    %v4584 = vpop.f32.mrf.mxu0
    %4585 = vdwg.mxu0
    %v4586 = vadd.f32 %v4212, %v4531
    %v4587 = vadd.f32 %v4213, %v4557
    %v4588 = vadd.f32 %v4214, %v4583
    %v4589 = vmax.f32 %v4586, 0.0
    %v4590 = vmax.f32 %v4587, 0.0
    %v4591 = vmax.f32 %v4588, 0.0
    %v4592 = vpack.c.bf16 %v4590, %v4589
    %v4593 = vpack.c.bf16 %v4591, %v4591
    %vm4594 = vcmask 1042432
    %vm4595 = vsmask.f32 2304
    %vm4596 = vmand %vm4594, %vm4595
    %vm4597 = vcmask 1046532
    %vm4598 = vsmask.f32 6400
    %vm4599 = vmand %vm4597, %vm4598
    %vm4600 = vmor %vm4599, %vm4596
    %v4601 = vld [vmem:[#allocation3] sm:$0x77]
    %v4602 = vsel %vm4600, %v4592, %v4601
    %4603 = vst [vmem:[#allocation3] sm:$0x77] %v4602
    %vm4604 = vcmask 518144
    %vm4605 = vmand %vm4604, %vm4595
    %v4606 = vld [vmem:[#allocation3 + $0x8] sm:$0x7]
    %v4607 = vsel %vm4605, %v4593, %v4606
    %4608 = vst [vmem:[#allocation3 + $0x8] sm:$0x7] %v4607
    %v4609 = vld [vmem:[%s6] sm:$0x7]
    %v4610 = vld [vmem:[%s2031] sm:$0x77]
    %v4611 = vld [vmem:[%s3] sm:$0xff]
    %v4612 = vld [vmem:[%s3 + $0x8] sm:$0xf]
    %v4613 = vld [vmem:[%s3 + $0xc] sm:$0xff]
    %v4614 = vld [vmem:[%s3 + $0x14] sm:$0xf]
    %v4615 = vld [vmem:[%s3 + $0x18] sm:$0xff]
    %v4616 = vld [vmem:[%s3 + $0x20] sm:$0xf]
    %v4617 = vld [vmem:[%s3 + $0x24] sm:$0xff]
    %v4618 = vld [vmem:[%s3 + $0x2c] sm:$0xf]
    %v4619 = vld [vmem:[%s3 + $0x30] sm:$0xff]
    %v4620 = vld [vmem:[%s3 + $0x38] sm:$0xf]
    %v4621 = vld [vmem:[%s3 + $0x3c] sm:$0xff]
    %v4622 = vld [vmem:[%s3 + $0x44] sm:$0xf]
    %v4623 = vld [vmem:[%s3 + $0x48] sm:$0xff]
    %v4624 = vld [vmem:[%s3 + $0x50] sm:$0xf]
    %v4625 = vld [vmem:[%s3 + $0x54] sm:$0xff]
    %v4626 = vld [vmem:[%s3 + $0x5c] sm:$0xf]
    %v4627 = vld [vmem:[%s3 + $0x60] sm:$0xff]
    %v4628 = vld [vmem:[%s3 + $0x68] sm:$0xf]
    %v4629 = vld [vmem:[%s3 + $0x6c] sm:$0xff]
    %v4630 = vld [vmem:[%s3 + $0x74] sm:$0xf]
    %v4631 = vld [vmem:[%s3 + $0x78] sm:$0xff]
    %v4632 = vld [vmem:[%s3 + $0x80] sm:$0xf]
    %v4633 = vld [vmem:[%s3 + $0x84] sm:$0xff]
    %v4634 = vld [vmem:[%s3 + $0x8c] sm:$0xf]
    %v4635 = vld [vmem:[%s3 + $0x90] sm:$0xff]
    %v4636 = vld [vmem:[%s3 + $0x98] sm:$0xf]
    %v4637 = vld [vmem:[%s3 + $0x9c] sm:$0xff]
    %v4638 = vld [vmem:[%s3 + $0xa4] sm:$0xf]
    %v4639 = vld [vmem:[%s3 + $0xa8] sm:$0xff]
    %v4640 = vld [vmem:[%s3 + $0xb0] sm:$0xf]
    %v4641 = vld [vmem:[%s3 + $0xb4] sm:$0xff]
    %v4642 = vld [vmem:[%s3 + $0xbc] sm:$0xf]
    %v4643 = vld [vmem:[%s3 + $0xc0] sm:$0xff]
    %v4644 = vld [vmem:[%s3 + $0xc8] sm:$0xf]
    %v4645 = vld [vmem:[%s3 + $0xcc] sm:$0xff]
    %v4646 = vld [vmem:[%s3 + $0xd4] sm:$0xf]
    %v4647 = vld [vmem:[%s3 + $0xd8] sm:$0xff]
    %v4648 = vld [vmem:[%s3 + $0xe0] sm:$0xf]
    %v4649 = vld [vmem:[%s3 + $0xe4] sm:$0xff]
    %v4650 = vld [vmem:[%s3 + $0xec] sm:$0xf]
    %v4651 = vld [vmem:[%s3 + $0xf0] sm:$0xff]
    %v4652 = vld [vmem:[%s3 + $0xf8] sm:$0xf]
    %v4653 = vld [vmem:[%s3 + $0xfc] sm:$0xff]
    %v4654 = vld [vmem:[%s3 + $0x104] sm:$0xf]
    %v4655 = vld [vmem:[%s3 + $0x108] sm:$0xff]
    %v4656 = vld [vmem:[%s3 + $0x110] sm:$0xf]
    %v4657 = vld [vmem:[%s3 + $0x114] sm:$0xff]
    %v4658 = vld [vmem:[%s3 + $0x11c] sm:$0xf]
    %v4659 = vld [vmem:[%s3 + $0x120] sm:$0xff]
    %v4660 = vld [vmem:[%s3 + $0x128] sm:$0xf]
    %v4661 = vld [vmem:[%s3 + $0x12c] sm:$0xff]
    %v4662 = vld [vmem:[%s3 + $0x134] sm:$0xf]
    %v4663 = vld [vmem:[%s3 + $0x138] sm:$0xff]
    %v4664 = vld [vmem:[%s3 + $0x140] sm:$0xf]
    %v4665 = vld [vmem:[%s3 + $0x144] sm:$0xff]
    %v4666 = vld [vmem:[%s3 + $0x14c] sm:$0xf]
    %v4668 = vunpack.c.l.b16 %v4610
    %v4669 = vunpack.c.h.b16 %v4610
    %v4670 = vpack.c.b16 %v4668, %v4668
    %v4671 = vpack.c.b16 %v4669, %v4669
    %v4729 = vunpack.c.l.b16 %v4611
    %v4730 = vunpack.c.h.b16 %v4611
    %v4731 = vunpack.c.l.b16 %v4612
    %v4732 = vunpack.c.l.b16 %v4613
    %v4733 = vunpack.c.h.b16 %v4613
    %v4734 = vunpack.c.l.b16 %v4614
    %v4735 = vunpack.c.l.b16 %v4615
    %v4736 = vunpack.c.h.b16 %v4615
    %v4737 = vunpack.c.l.b16 %v4616
    %v4738 = vunpack.c.l.b16 %v4617
    %v4739 = vunpack.c.h.b16 %v4617
    %v4740 = vunpack.c.l.b16 %v4618
    %v4741 = vunpack.c.l.b16 %v4619
    %v4742 = vunpack.c.h.b16 %v4619
    %v4743 = vunpack.c.l.b16 %v4620
    %v4744 = vunpack.c.l.b16 %v4621
    %v4745 = vunpack.c.h.b16 %v4621
    %v4746 = vunpack.c.l.b16 %v4622
    %v4747 = vunpack.c.l.b16 %v4623
    %v4748 = vunpack.c.h.b16 %v4623
    %v4749 = vunpack.c.l.b16 %v4624
    %v4750 = vunpack.c.l.b16 %v4625
    %v4751 = vunpack.c.h.b16 %v4625
    %v4752 = vunpack.c.l.b16 %v4626
    %v4753 = vunpack.c.l.b16 %v4627
    %v4754 = vunpack.c.h.b16 %v4627
    %v4755 = vunpack.c.l.b16 %v4628
    %v4756 = vunpack.c.l.b16 %v4629
    %v4757 = vunpack.c.h.b16 %v4629
    %v4758 = vunpack.c.l.b16 %v4630
    %v4759 = vunpack.c.l.b16 %v4631
    %v4760 = vunpack.c.h.b16 %v4631
    %v4761 = vunpack.c.l.b16 %v4632
    %v4762 = vunpack.c.l.b16 %v4633
    %v4763 = vunpack.c.h.b16 %v4633
    %v4764 = vunpack.c.l.b16 %v4634
    %v4765 = vunpack.c.l.b16 %v4635
    %v4766 = vunpack.c.h.b16 %v4635
    %v4767 = vunpack.c.l.b16 %v4636
    %v4768 = vunpack.c.l.b16 %v4637
    %v4769 = vunpack.c.h.b16 %v4637
    %v4770 = vunpack.c.l.b16 %v4638
    %v4771 = vunpack.c.l.b16 %v4639
    %v4772 = vunpack.c.h.b16 %v4639
    %v4773 = vunpack.c.l.b16 %v4640
    %v4774 = vunpack.c.l.b16 %v4641
    %v4775 = vunpack.c.h.b16 %v4641
    %v4776 = vunpack.c.l.b16 %v4642
    %v4777 = vunpack.c.l.b16 %v4643
    %v4778 = vunpack.c.h.b16 %v4643
    %v4779 = vunpack.c.l.b16 %v4644
    %v4780 = vunpack.c.l.b16 %v4645
    %v4781 = vunpack.c.h.b16 %v4645
    %v4782 = vunpack.c.l.b16 %v4646
    %v4783 = vunpack.c.l.b16 %v4647
    %v4784 = vunpack.c.h.b16 %v4647
    %v4785 = vunpack.c.l.b16 %v4648
    %v4786 = vunpack.c.l.b16 %v4649
    %v4787 = vunpack.c.h.b16 %v4649
    %v4788 = vunpack.c.l.b16 %v4650
    %v4789 = vunpack.c.l.b16 %v4651
    %v4790 = vunpack.c.h.b16 %v4651
    %v4791 = vunpack.c.l.b16 %v4652
    %v4792 = vunpack.c.l.b16 %v4653
    %v4793 = vunpack.c.h.b16 %v4653
    %v4794 = vunpack.c.l.b16 %v4654
    %v4795 = vunpack.c.l.b16 %v4655
    %v4796 = vunpack.c.h.b16 %v4655
    %v4797 = vunpack.c.l.b16 %v4656
    %v4798 = vunpack.c.l.b16 %v4657
    %v4799 = vunpack.c.h.b16 %v4657
    %v4800 = vunpack.c.l.b16 %v4658
    %v4801 = vunpack.c.l.b16 %v4659
    %v4802 = vunpack.c.h.b16 %v4659
    %v4803 = vunpack.c.l.b16 %v4660
    %v4804 = vunpack.c.l.b16 %v4661
    %v4805 = vunpack.c.h.b16 %v4661
    %v4806 = vunpack.c.l.b16 %v4662
    %v4807 = vunpack.c.l.b16 %v4663
    %v4808 = vunpack.c.h.b16 %v4663
    %v4809 = vunpack.c.l.b16 %v4664
    %v4810 = vunpack.c.l.b16 %v4665
    %v4811 = vunpack.c.h.b16 %v4665
    %v4812 = vunpack.c.l.b16 %v4666
    %v4813 = vpack.c.b16 %v4732, %v4729
    %v4814 = vpack.c.b16 %v4733, %v4730
    %v4815 = vpack.c.b16 %v4734, %v4731
    %v4816 = vpack.c.b16 %v4738, %v4735
    %v4817 = vpack.c.b16 %v4739, %v4736
    %v4818 = vpack.c.b16 %v4740, %v4737
    %v4819 = vpack.c.b16 %v4744, %v4741
    %v4820 = vpack.c.b16 %v4745, %v4742
    %v4821 = vpack.c.b16 %v4746, %v4743
    %v4822 = vpack.c.b16 %v4750, %v4747
    %v4823 = vpack.c.b16 %v4751, %v4748
    %v4824 = vpack.c.b16 %v4752, %v4749
    %v4825 = vpack.c.b16 %v4756, %v4753
    %v4826 = vpack.c.b16 %v4757, %v4754
    %v4827 = vpack.c.b16 %v4758, %v4755
    %v4828 = vpack.c.b16 %v4762, %v4759
    %v4829 = vpack.c.b16 %v4763, %v4760
    %v4830 = vpack.c.b16 %v4764, %v4761
    %v4831 = vpack.c.b16 %v4768, %v4765
    %v4832 = vpack.c.b16 %v4769, %v4766
    %v4833 = vpack.c.b16 %v4770, %v4767
    %v4834 = vpack.c.b16 %v4774, %v4771
    %v4835 = vpack.c.b16 %v4775, %v4772
    %v4836 = vpack.c.b16 %v4776, %v4773
    %v4837 = vpack.c.b16 %v4780, %v4777
    %v4838 = vpack.c.b16 %v4781, %v4778
    %v4839 = vpack.c.b16 %v4782, %v4779
    %v4840 = vpack.c.b16 %v4786, %v4783
    %v4841 = vpack.c.b16 %v4787, %v4784
    %v4842 = vpack.c.b16 %v4788, %v4785
    %v4843 = vpack.c.b16 %v4792, %v4789
    %v4844 = vpack.c.b16 %v4793, %v4790
    %v4845 = vpack.c.b16 %v4794, %v4791
    %v4846 = vpack.c.b16 %v4798, %v4795
    %v4847 = vpack.c.b16 %v4799, %v4796
    %v4848 = vpack.c.b16 %v4800, %v4797
    %v4849 = vpack.c.b16 %v4804, %v4801
    %v4850 = vpack.c.b16 %v4805, %v4802
    %v4851 = vpack.c.b16 %v4806, %v4803
    %v4852 = vpack.c.b16 %v4810, %v4807
    %v4853 = vpack.c.b16 %v4811, %v4808
    %v4854 = vpack.c.b16 %v4812, %v4809
    %v4898 = vsel %vm2993, %v4671, 0
    %4900 = vmatpush.bf16.msra.mxu0 %v4834
    %4901 = vmatpush.bf16.msra.mxu0 %v4831
    %4902 = vmatpush.bf16.msra.mxu0 %v4828
    %4903 = vmatpush.bf16.msra.mxu0 %v4825
    %4904 = vmatpush.bf16.msra.mxu0 %v4822
    %4905 = vmatpush.bf16.msra.mxu0 %v4819
    %4906 = vmatpush.bf16.msra.mxu0 %v4816
    %4907 = vmatpush.bf16.msra.mxu0 %v4813
    %4908 = vmatmul.bf16.gmra.mxu0 %v4670
    %v4909 = vpop.f32.mrf.mxu0
    %v4910 = vadd.f32 0.0, %v4909
    %v4911 = vpop.f32.mrf.mxu0
    %4912 = vdwg.mxu0
    %4913 = vmatpush.bf16.msra.mxu0 0
    %4914 = vmatpush.bf16.msra.mxu0 0
    %4915 = vmatpush.bf16.msra.mxu0 %v4852
    %4916 = vmatpush.bf16.msra.mxu0 %v4849
    %4917 = vmatpush.bf16.msra.mxu0 %v4846
    %4918 = vmatpush.bf16.msra.mxu0 %v4843
    %4919 = vmatpush.bf16.msra.mxu0 %v4840
    %4920 = vmatpush.bf16.msra.mxu0 %v4837
    %4921 = vmatmul.bf16.gmra.mxu0 %v4898
    %v4922 = vpop.f32.mrf.mxu0
    %v4923 = vadd.f32 %v4910, %v4922
    %v4924 = vpop.f32.mrf.mxu0
    %4925 = vdwg.mxu0
    %4926 = vmatpush.bf16.msra.mxu0 %v4835
    %4927 = vmatpush.bf16.msra.mxu0 %v4832
    %4928 = vmatpush.bf16.msra.mxu0 %v4829
    %4929 = vmatpush.bf16.msra.mxu0 %v4826
    %4930 = vmatpush.bf16.msra.mxu0 %v4823
    %4931 = vmatpush.bf16.msra.mxu0 %v4820
    %4932 = vmatpush.bf16.msra.mxu0 %v4817
    %4933 = vmatpush.bf16.msra.mxu0 %v4814
    %4934 = vmatmul.bf16.gmra.mxu0 %v4670
    %v4935 = vpop.f32.mrf.mxu0
    %v4936 = vadd.f32 0.0, %v4935
    %v4937 = vpop.f32.mrf.mxu0
    %4938 = vdwg.mxu0
    %4939 = vmatpush.bf16.msra.mxu0 0
    %4940 = vmatpush.bf16.msra.mxu0 0
    %4941 = vmatpush.bf16.msra.mxu0 %v4853
    %4942 = vmatpush.bf16.msra.mxu0 %v4850
    %4943 = vmatpush.bf16.msra.mxu0 %v4847
    %4944 = vmatpush.bf16.msra.mxu0 %v4844
    %4945 = vmatpush.bf16.msra.mxu0 %v4841
    %4946 = vmatpush.bf16.msra.mxu0 %v4838
    %4947 = vmatmul.bf16.gmra.mxu0 %v4898
    %v4948 = vpop.f32.mrf.mxu0
    %v4949 = vadd.f32 %v4936, %v4948
    %v4950 = vpop.f32.mrf.mxu0
    %4951 = vdwg.mxu0
    %4952 = vmatpush.bf16.msra.mxu0 %v4836
    %4953 = vmatpush.bf16.msra.mxu0 %v4833
    %4954 = vmatpush.bf16.msra.mxu0 %v4830
    %4955 = vmatpush.bf16.msra.mxu0 %v4827
    %4956 = vmatpush.bf16.msra.mxu0 %v4824
    %4957 = vmatpush.bf16.msra.mxu0 %v4821
    %4958 = vmatpush.bf16.msra.mxu0 %v4818
    %4959 = vmatpush.bf16.msra.mxu0 %v4815
    %4960 = vmatmul.bf16.gmra.mxu0 %v4670
    %v4961 = vpop.f32.mrf.mxu0
    %v4962 = vadd.f32 0.0, %v4961
    %v4963 = vpop.f32.mrf.mxu0
    %4964 = vdwg.mxu0
    %4965 = vmatpush.bf16.msra.mxu0 0
    %4966 = vmatpush.bf16.msra.mxu0 0
    %4967 = vmatpush.bf16.msra.mxu0 %v4854
    %4968 = vmatpush.bf16.msra.mxu0 %v4851
    %4969 = vmatpush.bf16.msra.mxu0 %v4848
    %4970 = vmatpush.bf16.msra.mxu0 %v4845
    %4971 = vmatpush.bf16.msra.mxu0 %v4842
    %4972 = vmatpush.bf16.msra.mxu0 %v4839
    %4973 = vmatmul.bf16.gmra.mxu0 %v4898
    %v4974 = vpop.f32.mrf.mxu0
    %v4975 = vadd.f32 %v4962, %v4974
    %v4976 = vpop.f32.mrf.mxu0
    %4977 = vdwg.mxu0
    %v4979 = vperm.slane %v4609, 0
    %v4980 = vperm.slane %v4609, 1
    %v4981 = vperm.slane %v4609, 2
    %v4985 = vadd.f32 %v4979, %v4923
    %v4986 = vadd.f32 %v4980, %v4949
    %v4987 = vadd.f32 %v4981, %v4975
    %v4988 = vld [vmem:[%s2701] sm:$0x77]
    %v4989 = vld [vmem:[%s3086] sm:$0xff]
    %v4990 = vld [vmem:[%s3086 + $0x8] sm:$0xf]
    %v4991 = vld [vmem:[%s3086 + $0xc] sm:$0xff]
    %v4992 = vld [vmem:[%s3086 + $0x14] sm:$0xf]
    %v4993 = vld [vmem:[%s3086 + $0x18] sm:$0xff]
    %v4994 = vld [vmem:[%s3086 + $0x20] sm:$0xf]
    %v4995 = vld [vmem:[%s3086 + $0x24] sm:$0xff]
    %v4996 = vld [vmem:[%s3086 + $0x2c] sm:$0xf]
    %v4997 = vld [vmem:[%s3086 + $0x30] sm:$0xff]
    %v4998 = vld [vmem:[%s3086 + $0x38] sm:$0xf]
    %v4999 = vld [vmem:[%s3086 + $0x3c] sm:$0xff]
    %v5000 = vld [vmem:[%s3086 + $0x44] sm:$0xf]
    %v5001 = vld [vmem:[%s3086 + $0x48] sm:$0xff]
    %v5002 = vld [vmem:[%s3086 + $0x50] sm:$0xf]
    %v5003 = vld [vmem:[%s3086 + $0x54] sm:$0xff]
    %v5004 = vld [vmem:[%s3086 + $0x5c] sm:$0xf]
    %v5005 = vld [vmem:[%s3086 + $0x60] sm:$0xff]
    %v5006 = vld [vmem:[%s3086 + $0x68] sm:$0xf]
    %v5007 = vld [vmem:[%s3086 + $0x6c] sm:$0xff]
    %v5008 = vld [vmem:[%s3086 + $0x74] sm:$0xf]
    %v5009 = vld [vmem:[%s3086 + $0x78] sm:$0xff]
    %v5010 = vld [vmem:[%s3086 + $0x80] sm:$0xf]
    %v5011 = vld [vmem:[%s3086 + $0x84] sm:$0xff]
    %v5012 = vld [vmem:[%s3086 + $0x8c] sm:$0xf]
    %v5013 = vld [vmem:[%s3086 + $0x90] sm:$0xff]
    %v5014 = vld [vmem:[%s3086 + $0x98] sm:$0xf]
    %v5015 = vld [vmem:[%s3086 + $0x9c] sm:$0xff]
    %v5016 = vld [vmem:[%s3086 + $0xa4] sm:$0xf]
    %v5017 = vld [vmem:[%s3086 + $0xa8] sm:$0xff]
    %v5018 = vld [vmem:[%s3086 + $0xb0] sm:$0xf]
    %v5019 = vld [vmem:[%s3086 + $0xb4] sm:$0xff]
    %v5020 = vld [vmem:[%s3086 + $0xbc] sm:$0xf]
    %v5021 = vld [vmem:[%s3086 + $0xc0] sm:$0xff]
    %v5022 = vld [vmem:[%s3086 + $0xc8] sm:$0xf]
    %v5023 = vld [vmem:[%s3086 + $0xcc] sm:$0xff]
    %v5024 = vld [vmem:[%s3086 + $0xd4] sm:$0xf]
    %v5025 = vld [vmem:[%s3086 + $0xd8] sm:$0xff]
    %v5026 = vld [vmem:[%s3086 + $0xe0] sm:$0xf]
    %v5027 = vld [vmem:[%s3086 + $0xe4] sm:$0xff]
    %v5028 = vld [vmem:[%s3086 + $0xec] sm:$0xf]
    %v5029 = vld [vmem:[%s3086 + $0xf0] sm:$0xff]
    %v5030 = vld [vmem:[%s3086 + $0xf8] sm:$0xf]
    %v5031 = vld [vmem:[%s3086 + $0xfc] sm:$0xff]
    %v5032 = vld [vmem:[%s3086 + $0x104] sm:$0xf]
    %v5033 = vld [vmem:[%s3086 + $0x108] sm:$0xff]
    %v5034 = vld [vmem:[%s3086 + $0x110] sm:$0xf]
    %v5035 = vld [vmem:[%s3086 + $0x114] sm:$0xff]
    %v5036 = vld [vmem:[%s3086 + $0x11c] sm:$0xf]
    %v5037 = vld [vmem:[%s3086 + $0x120] sm:$0xff]
    %v5038 = vld [vmem:[%s3086 + $0x128] sm:$0xf]
    %v5039 = vld [vmem:[%s3086 + $0x12c] sm:$0xff]
    %v5040 = vld [vmem:[%s3086 + $0x134] sm:$0xf]
    %v5041 = vld [vmem:[%s3086 + $0x138] sm:$0xff]
    %v5042 = vld [vmem:[%s3086 + $0x140] sm:$0xf]
    %v5043 = vld [vmem:[%s3086 + $0x144] sm:$0xff]
    %v5044 = vld [vmem:[%s3086 + $0x14c] sm:$0xf]
    %v5046 = vunpack.c.l.b16 %v4988
    %v5047 = vunpack.c.h.b16 %v4988
    %v5048 = vpack.c.b16 %v5046, %v5046
    %v5049 = vpack.c.b16 %v5047, %v5047
    %v5107 = vunpack.c.l.b16 %v4989
    %v5108 = vunpack.c.h.b16 %v4989
    %v5109 = vunpack.c.l.b16 %v4990
    %v5110 = vunpack.c.l.b16 %v4991
    %v5111 = vunpack.c.h.b16 %v4991
    %v5112 = vunpack.c.l.b16 %v4992
    %v5113 = vunpack.c.l.b16 %v4993
    %v5114 = vunpack.c.h.b16 %v4993
    %v5115 = vunpack.c.l.b16 %v4994
    %v5116 = vunpack.c.l.b16 %v4995
    %v5117 = vunpack.c.h.b16 %v4995
    %v5118 = vunpack.c.l.b16 %v4996
    %v5119 = vunpack.c.l.b16 %v4997
    %v5120 = vunpack.c.h.b16 %v4997
    %v5121 = vunpack.c.l.b16 %v4998
    %v5122 = vunpack.c.l.b16 %v4999
    %v5123 = vunpack.c.h.b16 %v4999
    %v5124 = vunpack.c.l.b16 %v5000
    %v5125 = vunpack.c.l.b16 %v5001
    %v5126 = vunpack.c.h.b16 %v5001
    %v5127 = vunpack.c.l.b16 %v5002
    %v5128 = vunpack.c.l.b16 %v5003
    %v5129 = vunpack.c.h.b16 %v5003
    %v5130 = vunpack.c.l.b16 %v5004
    %v5131 = vunpack.c.l.b16 %v5005
    %v5132 = vunpack.c.h.b16 %v5005
    %v5133 = vunpack.c.l.b16 %v5006
    %v5134 = vunpack.c.l.b16 %v5007
    %v5135 = vunpack.c.h.b16 %v5007
    %v5136 = vunpack.c.l.b16 %v5008
    %v5137 = vunpack.c.l.b16 %v5009
    %v5138 = vunpack.c.h.b16 %v5009
    %v5139 = vunpack.c.l.b16 %v5010
    %v5140 = vunpack.c.l.b16 %v5011
    %v5141 = vunpack.c.h.b16 %v5011
    %v5142 = vunpack.c.l.b16 %v5012
    %v5143 = vunpack.c.l.b16 %v5013
    %v5144 = vunpack.c.h.b16 %v5013
    %v5145 = vunpack.c.l.b16 %v5014
    %v5146 = vunpack.c.l.b16 %v5015
    %v5147 = vunpack.c.h.b16 %v5015
    %v5148 = vunpack.c.l.b16 %v5016
    %v5149 = vunpack.c.l.b16 %v5017
    %v5150 = vunpack.c.h.b16 %v5017
    %v5151 = vunpack.c.l.b16 %v5018
    %v5152 = vunpack.c.l.b16 %v5019
    %v5153 = vunpack.c.h.b16 %v5019
    %v5154 = vunpack.c.l.b16 %v5020
    %v5155 = vunpack.c.l.b16 %v5021
    %v5156 = vunpack.c.h.b16 %v5021
    %v5157 = vunpack.c.l.b16 %v5022
    %v5158 = vunpack.c.l.b16 %v5023
    %v5159 = vunpack.c.h.b16 %v5023
    %v5160 = vunpack.c.l.b16 %v5024
    %v5161 = vunpack.c.l.b16 %v5025
    %v5162 = vunpack.c.h.b16 %v5025
    %v5163 = vunpack.c.l.b16 %v5026
    %v5164 = vunpack.c.l.b16 %v5027
    %v5165 = vunpack.c.h.b16 %v5027
    %v5166 = vunpack.c.l.b16 %v5028
    %v5167 = vunpack.c.l.b16 %v5029
    %v5168 = vunpack.c.h.b16 %v5029
    %v5169 = vunpack.c.l.b16 %v5030
    %v5170 = vunpack.c.l.b16 %v5031
    %v5171 = vunpack.c.h.b16 %v5031
    %v5172 = vunpack.c.l.b16 %v5032
    %v5173 = vunpack.c.l.b16 %v5033
    %v5174 = vunpack.c.h.b16 %v5033
    %v5175 = vunpack.c.l.b16 %v5034
    %v5176 = vunpack.c.l.b16 %v5035
    %v5177 = vunpack.c.h.b16 %v5035
    %v5178 = vunpack.c.l.b16 %v5036
    %v5179 = vunpack.c.l.b16 %v5037
    %v5180 = vunpack.c.h.b16 %v5037
    %v5181 = vunpack.c.l.b16 %v5038
    %v5182 = vunpack.c.l.b16 %v5039
    %v5183 = vunpack.c.h.b16 %v5039
    %v5184 = vunpack.c.l.b16 %v5040
    %v5185 = vunpack.c.l.b16 %v5041
    %v5186 = vunpack.c.h.b16 %v5041
    %v5187 = vunpack.c.l.b16 %v5042
    %v5188 = vunpack.c.l.b16 %v5043
    %v5189 = vunpack.c.h.b16 %v5043
    %v5190 = vunpack.c.l.b16 %v5044
    %v5191 = vpack.c.b16 %v5110, %v5107
    %v5192 = vpack.c.b16 %v5111, %v5108
    %v5193 = vpack.c.b16 %v5112, %v5109
    %v5194 = vpack.c.b16 %v5116, %v5113
    %v5195 = vpack.c.b16 %v5117, %v5114
    %v5196 = vpack.c.b16 %v5118, %v5115
    %v5197 = vpack.c.b16 %v5122, %v5119
    %v5198 = vpack.c.b16 %v5123, %v5120
    %v5199 = vpack.c.b16 %v5124, %v5121
    %v5200 = vpack.c.b16 %v5128, %v5125
    %v5201 = vpack.c.b16 %v5129, %v5126
    %v5202 = vpack.c.b16 %v5130, %v5127
    %v5203 = vpack.c.b16 %v5134, %v5131
    %v5204 = vpack.c.b16 %v5135, %v5132
    %v5205 = vpack.c.b16 %v5136, %v5133
    %v5206 = vpack.c.b16 %v5140, %v5137
    %v5207 = vpack.c.b16 %v5141, %v5138
    %v5208 = vpack.c.b16 %v5142, %v5139
    %v5209 = vpack.c.b16 %v5146, %v5143
    %v5210 = vpack.c.b16 %v5147, %v5144
    %v5211 = vpack.c.b16 %v5148, %v5145
    %v5212 = vpack.c.b16 %v5152, %v5149
    %v5213 = vpack.c.b16 %v5153, %v5150
    %v5214 = vpack.c.b16 %v5154, %v5151
    %v5215 = vpack.c.b16 %v5158, %v5155
    %v5216 = vpack.c.b16 %v5159, %v5156
    %v5217 = vpack.c.b16 %v5160, %v5157
    %v5218 = vpack.c.b16 %v5164, %v5161
    %v5219 = vpack.c.b16 %v5165, %v5162
    %v5220 = vpack.c.b16 %v5166, %v5163
    %v5221 = vpack.c.b16 %v5170, %v5167
    %v5222 = vpack.c.b16 %v5171, %v5168
    %v5223 = vpack.c.b16 %v5172, %v5169
    %v5224 = vpack.c.b16 %v5176, %v5173
    %v5225 = vpack.c.b16 %v5177, %v5174
    %v5226 = vpack.c.b16 %v5178, %v5175
    %v5227 = vpack.c.b16 %v5182, %v5179
    %v5228 = vpack.c.b16 %v5183, %v5180
    %v5229 = vpack.c.b16 %v5184, %v5181
    %v5230 = vpack.c.b16 %v5188, %v5185
    %v5231 = vpack.c.b16 %v5189, %v5186
    %v5232 = vpack.c.b16 %v5190, %v5187
    %v5276 = vsel %vm2993, %v5049, 0
    %5278 = vmatpush.bf16.msra.mxu0 %v5212
    %5279 = vmatpush.bf16.msra.mxu0 %v5209
    %5280 = vmatpush.bf16.msra.mxu0 %v5206
    %5281 = vmatpush.bf16.msra.mxu0 %v5203
    %5282 = vmatpush.bf16.msra.mxu0 %v5200
    %5283 = vmatpush.bf16.msra.mxu0 %v5197
    %5284 = vmatpush.bf16.msra.mxu0 %v5194
    %5285 = vmatpush.bf16.msra.mxu0 %v5191
    %5286 = vmatmul.bf16.gmra.mxu0 %v5048
    %v5287 = vpop.f32.mrf.mxu0
    %v5288 = vadd.f32 0.0, %v5287
    %v5289 = vpop.f32.mrf.mxu0
    %5290 = vdwg.mxu0
    %5291 = vmatpush.bf16.msra.mxu0 0
    %5292 = vmatpush.bf16.msra.mxu0 0
    %5293 = vmatpush.bf16.msra.mxu0 %v5230
    %5294 = vmatpush.bf16.msra.mxu0 %v5227
    %5295 = vmatpush.bf16.msra.mxu0 %v5224
    %5296 = vmatpush.bf16.msra.mxu0 %v5221
    %5297 = vmatpush.bf16.msra.mxu0 %v5218
    %5298 = vmatpush.bf16.msra.mxu0 %v5215
    %5299 = vmatmul.bf16.gmra.mxu0 %v5276
    %v5300 = vpop.f32.mrf.mxu0
    %v5301 = vadd.f32 %v5288, %v5300
    %v5302 = vpop.f32.mrf.mxu0
    %5303 = vdwg.mxu0
    %5304 = vmatpush.bf16.msra.mxu0 %v5213
    %5305 = vmatpush.bf16.msra.mxu0 %v5210
    %5306 = vmatpush.bf16.msra.mxu0 %v5207
    %5307 = vmatpush.bf16.msra.mxu0 %v5204
    %5308 = vmatpush.bf16.msra.mxu0 %v5201
    %5309 = vmatpush.bf16.msra.mxu0 %v5198
    %5310 = vmatpush.bf16.msra.mxu0 %v5195
    %5311 = vmatpush.bf16.msra.mxu0 %v5192
    %5312 = vmatmul.bf16.gmra.mxu0 %v5048
    %v5313 = vpop.f32.mrf.mxu0
    %v5314 = vadd.f32 0.0, %v5313
    %v5315 = vpop.f32.mrf.mxu0
    %5316 = vdwg.mxu0
    %5317 = vmatpush.bf16.msra.mxu0 0
    %5318 = vmatpush.bf16.msra.mxu0 0
    %5319 = vmatpush.bf16.msra.mxu0 %v5231
    %5320 = vmatpush.bf16.msra.mxu0 %v5228
    %5321 = vmatpush.bf16.msra.mxu0 %v5225
    %5322 = vmatpush.bf16.msra.mxu0 %v5222
    %5323 = vmatpush.bf16.msra.mxu0 %v5219
    %5324 = vmatpush.bf16.msra.mxu0 %v5216
    %5325 = vmatmul.bf16.gmra.mxu0 %v5276
    %v5326 = vpop.f32.mrf.mxu0
    %v5327 = vadd.f32 %v5314, %v5326
    %v5328 = vpop.f32.mrf.mxu0
    %5329 = vdwg.mxu0
    %5330 = vmatpush.bf16.msra.mxu0 %v5214
    %5331 = vmatpush.bf16.msra.mxu0 %v5211
    %5332 = vmatpush.bf16.msra.mxu0 %v5208
    %5333 = vmatpush.bf16.msra.mxu0 %v5205
    %5334 = vmatpush.bf16.msra.mxu0 %v5202
    %5335 = vmatpush.bf16.msra.mxu0 %v5199
    %5336 = vmatpush.bf16.msra.mxu0 %v5196
    %5337 = vmatpush.bf16.msra.mxu0 %v5193
    %5338 = vmatmul.bf16.gmra.mxu0 %v5048
    %v5339 = vpop.f32.mrf.mxu0
    %v5340 = vadd.f32 0.0, %v5339
    %v5341 = vpop.f32.mrf.mxu0
    %5342 = vdwg.mxu0
    %5343 = vmatpush.bf16.msra.mxu0 0
    %5344 = vmatpush.bf16.msra.mxu0 0
    %5345 = vmatpush.bf16.msra.mxu0 %v5232
    %5346 = vmatpush.bf16.msra.mxu0 %v5229
    %5347 = vmatpush.bf16.msra.mxu0 %v5226
    %5348 = vmatpush.bf16.msra.mxu0 %v5223
    %5349 = vmatpush.bf16.msra.mxu0 %v5220
    %5350 = vmatpush.bf16.msra.mxu0 %v5217
    %5351 = vmatmul.bf16.gmra.mxu0 %v5276
    %v5352 = vpop.f32.mrf.mxu0
    %v5353 = vadd.f32 %v5340, %v5352
    %v5354 = vpop.f32.mrf.mxu0
    %5355 = vdwg.mxu0
    %v5356 = vadd.f32 %v4985, %v5301
    %v5357 = vadd.f32 %v4986, %v5327
    %v5358 = vadd.f32 %v4987, %v5353
    %v5359 = vld [vmem:[%s3457] sm:$0xff]
    %v5360 = vld [vmem:[%s3457 + $0x8] sm:$0xf]
    %v5361 = vld [vmem:[%s3457 + $0xc] sm:$0xff]
    %v5362 = vld [vmem:[%s3457 + $0x14] sm:$0xf]
    %v5363 = vld [vmem:[%s3457 + $0x18] sm:$0xff]
    %v5364 = vld [vmem:[%s3457 + $0x20] sm:$0xf]
    %v5365 = vld [vmem:[%s3457 + $0x24] sm:$0xff]
    %v5366 = vld [vmem:[%s3457 + $0x2c] sm:$0xf]
    %v5367 = vld [vmem:[%s3457 + $0x30] sm:$0xff]
    %v5368 = vld [vmem:[%s3457 + $0x38] sm:$0xf]
    %v5369 = vld [vmem:[%s3457 + $0x3c] sm:$0xff]
    %v5370 = vld [vmem:[%s3457 + $0x44] sm:$0xf]
    %v5371 = vld [vmem:[%s3457 + $0x48] sm:$0xff]
    %v5372 = vld [vmem:[%s3457 + $0x50] sm:$0xf]
    %v5373 = vld [vmem:[%s3457 + $0x54] sm:$0xff]
    %v5374 = vld [vmem:[%s3457 + $0x5c] sm:$0xf]
    %v5375 = vld [vmem:[%s3457 + $0x60] sm:$0xff]
    %v5376 = vld [vmem:[%s3457 + $0x68] sm:$0xf]
    %v5377 = vld [vmem:[%s3457 + $0x6c] sm:$0xff]
    %v5378 = vld [vmem:[%s3457 + $0x74] sm:$0xf]
    %v5379 = vld [vmem:[%s3457 + $0x78] sm:$0xff]
    %v5380 = vld [vmem:[%s3457 + $0x80] sm:$0xf]
    %v5381 = vld [vmem:[%s3457 + $0x84] sm:$0xff]
    %v5382 = vld [vmem:[%s3457 + $0x8c] sm:$0xf]
    %v5383 = vld [vmem:[%s3457 + $0x90] sm:$0xff]
    %v5384 = vld [vmem:[%s3457 + $0x98] sm:$0xf]
    %v5385 = vld [vmem:[%s3457 + $0x9c] sm:$0xff]
    %v5386 = vld [vmem:[%s3457 + $0xa4] sm:$0xf]
    %v5387 = vld [vmem:[%s3457 + $0xa8] sm:$0xff]
    %v5388 = vld [vmem:[%s3457 + $0xb0] sm:$0xf]
    %v5389 = vld [vmem:[%s3457 + $0xb4] sm:$0xff]
    %v5390 = vld [vmem:[%s3457 + $0xbc] sm:$0xf]
    %v5391 = vld [vmem:[%s3457 + $0xc0] sm:$0xff]
    %v5392 = vld [vmem:[%s3457 + $0xc8] sm:$0xf]
    %v5393 = vld [vmem:[%s3457 + $0xcc] sm:$0xff]
    %v5394 = vld [vmem:[%s3457 + $0xd4] sm:$0xf]
    %v5395 = vld [vmem:[%s3457 + $0xd8] sm:$0xff]
    %v5396 = vld [vmem:[%s3457 + $0xe0] sm:$0xf]
    %v5397 = vld [vmem:[%s3457 + $0xe4] sm:$0xff]
    %v5398 = vld [vmem:[%s3457 + $0xec] sm:$0xf]
    %v5399 = vld [vmem:[%s3457 + $0xf0] sm:$0xff]
    %v5400 = vld [vmem:[%s3457 + $0xf8] sm:$0xf]
    %v5401 = vld [vmem:[%s3457 + $0xfc] sm:$0xff]
    %v5402 = vld [vmem:[%s3457 + $0x104] sm:$0xf]
    %v5403 = vld [vmem:[%s3457 + $0x108] sm:$0xff]
    %v5404 = vld [vmem:[%s3457 + $0x110] sm:$0xf]
    %v5405 = vld [vmem:[%s3457 + $0x114] sm:$0xff]
    %v5406 = vld [vmem:[%s3457 + $0x11c] sm:$0xf]
    %v5407 = vld [vmem:[%s3457 + $0x120] sm:$0xff]
    %v5408 = vld [vmem:[%s3457 + $0x128] sm:$0xf]
    %v5409 = vld [vmem:[%s3457 + $0x12c] sm:$0xff]
    %v5410 = vld [vmem:[%s3457 + $0x134] sm:$0xf]
    %v5411 = vld [vmem:[%s3457 + $0x138] sm:$0xff]
    %v5412 = vld [vmem:[%s3457 + $0x140] sm:$0xf]
    %v5413 = vld [vmem:[%s3457 + $0x144] sm:$0xff]
    %v5414 = vld [vmem:[%s3457 + $0x14c] sm:$0xf]
    %v5416 = vshrl.u32 %v4670, 16
    %v5418 = vshll.u32 %v4670, 16
    %v5420 = vrot.slane %v5418, 1
    %v5421 = vor.u32 %v5416, %v5420
    %v5422 = vshrl.u32 %v4671, 16
    %v5424 = vshll.u32 %v4671, 16
    %v5426 = vrot.slane %v5424, 1
    %v5427 = vor.u32 %v5422, %v5426
    %v5485 = vunpack.c.l.b16 %v5359
    %v5486 = vunpack.c.h.b16 %v5359
    %v5487 = vunpack.c.l.b16 %v5360
    %v5488 = vunpack.c.l.b16 %v5361
    %v5489 = vunpack.c.h.b16 %v5361
    %v5490 = vunpack.c.l.b16 %v5362
    %v5491 = vunpack.c.l.b16 %v5363
    %v5492 = vunpack.c.h.b16 %v5363
    %v5493 = vunpack.c.l.b16 %v5364
    %v5494 = vunpack.c.l.b16 %v5365
    %v5495 = vunpack.c.h.b16 %v5365
    %v5496 = vunpack.c.l.b16 %v5366
    %v5497 = vunpack.c.l.b16 %v5367
    %v5498 = vunpack.c.h.b16 %v5367
    %v5499 = vunpack.c.l.b16 %v5368
    %v5500 = vunpack.c.l.b16 %v5369
    %v5501 = vunpack.c.h.b16 %v5369
    %v5502 = vunpack.c.l.b16 %v5370
    %v5503 = vunpack.c.l.b16 %v5371
    %v5504 = vunpack.c.h.b16 %v5371
    %v5505 = vunpack.c.l.b16 %v5372
    %v5506 = vunpack.c.l.b16 %v5373
    %v5507 = vunpack.c.h.b16 %v5373
    %v5508 = vunpack.c.l.b16 %v5374
    %v5509 = vunpack.c.l.b16 %v5375
    %v5510 = vunpack.c.h.b16 %v5375
    %v5511 = vunpack.c.l.b16 %v5376
    %v5512 = vunpack.c.l.b16 %v5377
    %v5513 = vunpack.c.h.b16 %v5377
    %v5514 = vunpack.c.l.b16 %v5378
    %v5515 = vunpack.c.l.b16 %v5379
    %v5516 = vunpack.c.h.b16 %v5379
    %v5517 = vunpack.c.l.b16 %v5380
    %v5518 = vunpack.c.l.b16 %v5381
    %v5519 = vunpack.c.h.b16 %v5381
    %v5520 = vunpack.c.l.b16 %v5382
    %v5521 = vunpack.c.l.b16 %v5383
    %v5522 = vunpack.c.h.b16 %v5383
    %v5523 = vunpack.c.l.b16 %v5384
    %v5524 = vunpack.c.l.b16 %v5385
    %v5525 = vunpack.c.h.b16 %v5385
    %v5526 = vunpack.c.l.b16 %v5386
    %v5527 = vunpack.c.l.b16 %v5387
    %v5528 = vunpack.c.h.b16 %v5387
    %v5529 = vunpack.c.l.b16 %v5388
    %v5530 = vunpack.c.l.b16 %v5389
    %v5531 = vunpack.c.h.b16 %v5389
    %v5532 = vunpack.c.l.b16 %v5390
    %v5533 = vunpack.c.l.b16 %v5391
    %v5534 = vunpack.c.h.b16 %v5391
    %v5535 = vunpack.c.l.b16 %v5392
    %v5536 = vunpack.c.l.b16 %v5393
    %v5537 = vunpack.c.h.b16 %v5393
    %v5538 = vunpack.c.l.b16 %v5394
    %v5539 = vunpack.c.l.b16 %v5395
    %v5540 = vunpack.c.h.b16 %v5395
    %v5541 = vunpack.c.l.b16 %v5396
    %v5542 = vunpack.c.l.b16 %v5397
    %v5543 = vunpack.c.h.b16 %v5397
    %v5544 = vunpack.c.l.b16 %v5398
    %v5545 = vunpack.c.l.b16 %v5399
    %v5546 = vunpack.c.h.b16 %v5399
    %v5547 = vunpack.c.l.b16 %v5400
    %v5548 = vunpack.c.l.b16 %v5401
    %v5549 = vunpack.c.h.b16 %v5401
    %v5550 = vunpack.c.l.b16 %v5402
    %v5551 = vunpack.c.l.b16 %v5403
    %v5552 = vunpack.c.h.b16 %v5403
    %v5553 = vunpack.c.l.b16 %v5404
    %v5554 = vunpack.c.l.b16 %v5405
    %v5555 = vunpack.c.h.b16 %v5405
    %v5556 = vunpack.c.l.b16 %v5406
    %v5557 = vunpack.c.l.b16 %v5407
    %v5558 = vunpack.c.h.b16 %v5407
    %v5559 = vunpack.c.l.b16 %v5408
    %v5560 = vunpack.c.l.b16 %v5409
    %v5561 = vunpack.c.h.b16 %v5409
    %v5562 = vunpack.c.l.b16 %v5410
    %v5563 = vunpack.c.l.b16 %v5411
    %v5564 = vunpack.c.h.b16 %v5411
    %v5565 = vunpack.c.l.b16 %v5412
    %v5566 = vunpack.c.l.b16 %v5413
    %v5567 = vunpack.c.h.b16 %v5413
    %v5568 = vunpack.c.l.b16 %v5414
    %v5569 = vpack.c.b16 %v5488, %v5485
    %v5570 = vpack.c.b16 %v5489, %v5486
    %v5571 = vpack.c.b16 %v5490, %v5487
    %v5572 = vpack.c.b16 %v5494, %v5491
    %v5573 = vpack.c.b16 %v5495, %v5492
    %v5574 = vpack.c.b16 %v5496, %v5493
    %v5575 = vpack.c.b16 %v5500, %v5497
    %v5576 = vpack.c.b16 %v5501, %v5498
    %v5577 = vpack.c.b16 %v5502, %v5499
    %v5578 = vpack.c.b16 %v5506, %v5503
    %v5579 = vpack.c.b16 %v5507, %v5504
    %v5580 = vpack.c.b16 %v5508, %v5505
    %v5581 = vpack.c.b16 %v5512, %v5509
    %v5582 = vpack.c.b16 %v5513, %v5510
    %v5583 = vpack.c.b16 %v5514, %v5511
    %v5584 = vpack.c.b16 %v5518, %v5515
    %v5585 = vpack.c.b16 %v5519, %v5516
    %v5586 = vpack.c.b16 %v5520, %v5517
    %v5587 = vpack.c.b16 %v5524, %v5521
    %v5588 = vpack.c.b16 %v5525, %v5522
    %v5589 = vpack.c.b16 %v5526, %v5523
    %v5590 = vpack.c.b16 %v5530, %v5527
    %v5591 = vpack.c.b16 %v5531, %v5528
    %v5592 = vpack.c.b16 %v5532, %v5529
    %v5593 = vpack.c.b16 %v5536, %v5533
    %v5594 = vpack.c.b16 %v5537, %v5534
    %v5595 = vpack.c.b16 %v5538, %v5535
    %v5596 = vpack.c.b16 %v5542, %v5539
    %v5597 = vpack.c.b16 %v5543, %v5540
    %v5598 = vpack.c.b16 %v5544, %v5541
    %v5599 = vpack.c.b16 %v5548, %v5545
    %v5600 = vpack.c.b16 %v5549, %v5546
    %v5601 = vpack.c.b16 %v5550, %v5547
    %v5602 = vpack.c.b16 %v5554, %v5551
    %v5603 = vpack.c.b16 %v5555, %v5552
    %v5604 = vpack.c.b16 %v5556, %v5553
    %v5605 = vpack.c.b16 %v5560, %v5557
    %v5606 = vpack.c.b16 %v5561, %v5558
    %v5607 = vpack.c.b16 %v5562, %v5559
    %v5608 = vpack.c.b16 %v5566, %v5563
    %v5609 = vpack.c.b16 %v5567, %v5564
    %v5610 = vpack.c.b16 %v5568, %v5565
    %v5654 = vsel %vm2993, %v5427, 0
    %5656 = vmatpush.bf16.msra.mxu0 %v5590
    %5657 = vmatpush.bf16.msra.mxu0 %v5587
    %5658 = vmatpush.bf16.msra.mxu0 %v5584
    %5659 = vmatpush.bf16.msra.mxu0 %v5581
    %5660 = vmatpush.bf16.msra.mxu0 %v5578
    %5661 = vmatpush.bf16.msra.mxu0 %v5575
    %5662 = vmatpush.bf16.msra.mxu0 %v5572
    %5663 = vmatpush.bf16.msra.mxu0 %v5569
    %5664 = vmatmul.bf16.gmra.mxu0 %v5421
    %v5665 = vpop.f32.mrf.mxu0
    %v5666 = vadd.f32 0.0, %v5665
    %v5667 = vpop.f32.mrf.mxu0
    %5668 = vdwg.mxu0
    %5669 = vmatpush.bf16.msra.mxu0 0
    %5670 = vmatpush.bf16.msra.mxu0 0
    %5671 = vmatpush.bf16.msra.mxu0 %v5608
    %5672 = vmatpush.bf16.msra.mxu0 %v5605
    %5673 = vmatpush.bf16.msra.mxu0 %v5602
    %5674 = vmatpush.bf16.msra.mxu0 %v5599
    %5675 = vmatpush.bf16.msra.mxu0 %v5596
    %5676 = vmatpush.bf16.msra.mxu0 %v5593
    %5677 = vmatmul.bf16.gmra.mxu0 %v5654
    %v5678 = vpop.f32.mrf.mxu0
    %v5679 = vadd.f32 %v5666, %v5678
    %v5680 = vpop.f32.mrf.mxu0
    %5681 = vdwg.mxu0
    %5682 = vmatpush.bf16.msra.mxu0 %v5591
    %5683 = vmatpush.bf16.msra.mxu0 %v5588
    %5684 = vmatpush.bf16.msra.mxu0 %v5585
    %5685 = vmatpush.bf16.msra.mxu0 %v5582
    %5686 = vmatpush.bf16.msra.mxu0 %v5579
    %5687 = vmatpush.bf16.msra.mxu0 %v5576
    %5688 = vmatpush.bf16.msra.mxu0 %v5573
    %5689 = vmatpush.bf16.msra.mxu0 %v5570
    %5690 = vmatmul.bf16.gmra.mxu0 %v5421
    %v5691 = vpop.f32.mrf.mxu0
    %v5692 = vadd.f32 0.0, %v5691
    %v5693 = vpop.f32.mrf.mxu0
    %5694 = vdwg.mxu0
    %5695 = vmatpush.bf16.msra.mxu0 0
    %5696 = vmatpush.bf16.msra.mxu0 0
    %5697 = vmatpush.bf16.msra.mxu0 %v5609
    %5698 = vmatpush.bf16.msra.mxu0 %v5606
    %5699 = vmatpush.bf16.msra.mxu0 %v5603
    %5700 = vmatpush.bf16.msra.mxu0 %v5600
    %5701 = vmatpush.bf16.msra.mxu0 %v5597
    %5702 = vmatpush.bf16.msra.mxu0 %v5594
    %5703 = vmatmul.bf16.gmra.mxu0 %v5654
    %v5704 = vpop.f32.mrf.mxu0
    %v5705 = vadd.f32 %v5692, %v5704
    %v5706 = vpop.f32.mrf.mxu0
    %5707 = vdwg.mxu0
    %5708 = vmatpush.bf16.msra.mxu0 %v5592
    %5709 = vmatpush.bf16.msra.mxu0 %v5589
    %5710 = vmatpush.bf16.msra.mxu0 %v5586
    %5711 = vmatpush.bf16.msra.mxu0 %v5583
    %5712 = vmatpush.bf16.msra.mxu0 %v5580
    %5713 = vmatpush.bf16.msra.mxu0 %v5577
    %5714 = vmatpush.bf16.msra.mxu0 %v5574
    %5715 = vmatpush.bf16.msra.mxu0 %v5571
    %5716 = vmatmul.bf16.gmra.mxu0 %v5421
    %v5717 = vpop.f32.mrf.mxu0
    %v5718 = vadd.f32 0.0, %v5717
    %v5719 = vpop.f32.mrf.mxu0
    %5720 = vdwg.mxu0
    %5721 = vmatpush.bf16.msra.mxu0 0
    %5722 = vmatpush.bf16.msra.mxu0 0
    %5723 = vmatpush.bf16.msra.mxu0 %v5610
    %5724 = vmatpush.bf16.msra.mxu0 %v5607
    %5725 = vmatpush.bf16.msra.mxu0 %v5604
    %5726 = vmatpush.bf16.msra.mxu0 %v5601
    %5727 = vmatpush.bf16.msra.mxu0 %v5598
    %5728 = vmatpush.bf16.msra.mxu0 %v5595
    %5729 = vmatmul.bf16.gmra.mxu0 %v5654
    %v5730 = vpop.f32.mrf.mxu0
    %v5731 = vadd.f32 %v5718, %v5730
    %v5732 = vpop.f32.mrf.mxu0
    %5733 = vdwg.mxu0
    %v5734 = vadd.f32 %v5356, %v5679
    %v5735 = vadd.f32 %v5357, %v5705
    %v5736 = vadd.f32 %v5358, %v5731
    %v5737 = vld [vmem:[%s3836] sm:$0xff]
    %v5738 = vld [vmem:[%s3836 + $0x8] sm:$0xf]
    %v5739 = vld [vmem:[%s3836 + $0xc] sm:$0xff]
    %v5740 = vld [vmem:[%s3836 + $0x14] sm:$0xf]
    %v5741 = vld [vmem:[%s3836 + $0x18] sm:$0xff]
    %v5742 = vld [vmem:[%s3836 + $0x20] sm:$0xf]
    %v5743 = vld [vmem:[%s3836 + $0x24] sm:$0xff]
    %v5744 = vld [vmem:[%s3836 + $0x2c] sm:$0xf]
    %v5745 = vld [vmem:[%s3836 + $0x30] sm:$0xff]
    %v5746 = vld [vmem:[%s3836 + $0x38] sm:$0xf]
    %v5747 = vld [vmem:[%s3836 + $0x3c] sm:$0xff]
    %v5748 = vld [vmem:[%s3836 + $0x44] sm:$0xf]
    %v5749 = vld [vmem:[%s3836 + $0x48] sm:$0xff]
    %v5750 = vld [vmem:[%s3836 + $0x50] sm:$0xf]
    %v5751 = vld [vmem:[%s3836 + $0x54] sm:$0xff]
    %v5752 = vld [vmem:[%s3836 + $0x5c] sm:$0xf]
    %v5753 = vld [vmem:[%s3836 + $0x60] sm:$0xff]
    %v5754 = vld [vmem:[%s3836 + $0x68] sm:$0xf]
    %v5755 = vld [vmem:[%s3836 + $0x6c] sm:$0xff]
    %v5756 = vld [vmem:[%s3836 + $0x74] sm:$0xf]
    %v5757 = vld [vmem:[%s3836 + $0x78] sm:$0xff]
    %v5758 = vld [vmem:[%s3836 + $0x80] sm:$0xf]
    %v5759 = vld [vmem:[%s3836 + $0x84] sm:$0xff]
    %v5760 = vld [vmem:[%s3836 + $0x8c] sm:$0xf]
    %v5761 = vld [vmem:[%s3836 + $0x90] sm:$0xff]
    %v5762 = vld [vmem:[%s3836 + $0x98] sm:$0xf]
    %v5763 = vld [vmem:[%s3836 + $0x9c] sm:$0xff]
    %v5764 = vld [vmem:[%s3836 + $0xa4] sm:$0xf]
    %v5765 = vld [vmem:[%s3836 + $0xa8] sm:$0xff]
    %v5766 = vld [vmem:[%s3836 + $0xb0] sm:$0xf]
    %v5767 = vld [vmem:[%s3836 + $0xb4] sm:$0xff]
    %v5768 = vld [vmem:[%s3836 + $0xbc] sm:$0xf]
    %v5769 = vld [vmem:[%s3836 + $0xc0] sm:$0xff]
    %v5770 = vld [vmem:[%s3836 + $0xc8] sm:$0xf]
    %v5771 = vld [vmem:[%s3836 + $0xcc] sm:$0xff]
    %v5772 = vld [vmem:[%s3836 + $0xd4] sm:$0xf]
    %v5773 = vld [vmem:[%s3836 + $0xd8] sm:$0xff]
    %v5774 = vld [vmem:[%s3836 + $0xe0] sm:$0xf]
    %v5775 = vld [vmem:[%s3836 + $0xe4] sm:$0xff]
    %v5776 = vld [vmem:[%s3836 + $0xec] sm:$0xf]
    %v5777 = vld [vmem:[%s3836 + $0xf0] sm:$0xff]
    %v5778 = vld [vmem:[%s3836 + $0xf8] sm:$0xf]
    %v5779 = vld [vmem:[%s3836 + $0xfc] sm:$0xff]
    %v5780 = vld [vmem:[%s3836 + $0x104] sm:$0xf]
    %v5781 = vld [vmem:[%s3836 + $0x108] sm:$0xff]
    %v5782 = vld [vmem:[%s3836 + $0x110] sm:$0xf]
    %v5783 = vld [vmem:[%s3836 + $0x114] sm:$0xff]
    %v5784 = vld [vmem:[%s3836 + $0x11c] sm:$0xf]
    %v5785 = vld [vmem:[%s3836 + $0x120] sm:$0xff]
    %v5786 = vld [vmem:[%s3836 + $0x128] sm:$0xf]
    %v5787 = vld [vmem:[%s3836 + $0x12c] sm:$0xff]
    %v5788 = vld [vmem:[%s3836 + $0x134] sm:$0xf]
    %v5789 = vld [vmem:[%s3836 + $0x138] sm:$0xff]
    %v5790 = vld [vmem:[%s3836 + $0x140] sm:$0xf]
    %v5791 = vld [vmem:[%s3836 + $0x144] sm:$0xff]
    %v5792 = vld [vmem:[%s3836 + $0x14c] sm:$0xf]
    %v5794 = vshrl.u32 %v5048, 16
    %v5796 = vshll.u32 %v5048, 16
    %v5798 = vrot.slane %v5796, 1
    %v5799 = vor.u32 %v5794, %v5798
    %v5800 = vshrl.u32 %v5049, 16
    %v5802 = vshll.u32 %v5049, 16
    %v5804 = vrot.slane %v5802, 1
    %v5805 = vor.u32 %v5800, %v5804
    %v5863 = vunpack.c.l.b16 %v5737
    %v5864 = vunpack.c.h.b16 %v5737
    %v5865 = vunpack.c.l.b16 %v5738
    %v5866 = vunpack.c.l.b16 %v5739
    %v5867 = vunpack.c.h.b16 %v5739
    %v5868 = vunpack.c.l.b16 %v5740
    %v5869 = vunpack.c.l.b16 %v5741
    %v5870 = vunpack.c.h.b16 %v5741
    %v5871 = vunpack.c.l.b16 %v5742
    %v5872 = vunpack.c.l.b16 %v5743
    %v5873 = vunpack.c.h.b16 %v5743
    %v5874 = vunpack.c.l.b16 %v5744
    %v5875 = vunpack.c.l.b16 %v5745
    %v5876 = vunpack.c.h.b16 %v5745
    %v5877 = vunpack.c.l.b16 %v5746
    %v5878 = vunpack.c.l.b16 %v5747
    %v5879 = vunpack.c.h.b16 %v5747
    %v5880 = vunpack.c.l.b16 %v5748
    %v5881 = vunpack.c.l.b16 %v5749
    %v5882 = vunpack.c.h.b16 %v5749
    %v5883 = vunpack.c.l.b16 %v5750
    %v5884 = vunpack.c.l.b16 %v5751
    %v5885 = vunpack.c.h.b16 %v5751
    %v5886 = vunpack.c.l.b16 %v5752
    %v5887 = vunpack.c.l.b16 %v5753
    %v5888 = vunpack.c.h.b16 %v5753
    %v5889 = vunpack.c.l.b16 %v5754
    %v5890 = vunpack.c.l.b16 %v5755
    %v5891 = vunpack.c.h.b16 %v5755
    %v5892 = vunpack.c.l.b16 %v5756
    %v5893 = vunpack.c.l.b16 %v5757
    %v5894 = vunpack.c.h.b16 %v5757
    %v5895 = vunpack.c.l.b16 %v5758
    %v5896 = vunpack.c.l.b16 %v5759
    %v5897 = vunpack.c.h.b16 %v5759
    %v5898 = vunpack.c.l.b16 %v5760
    %v5899 = vunpack.c.l.b16 %v5761
    %v5900 = vunpack.c.h.b16 %v5761
    %v5901 = vunpack.c.l.b16 %v5762
    %v5902 = vunpack.c.l.b16 %v5763
    %v5903 = vunpack.c.h.b16 %v5763
    %v5904 = vunpack.c.l.b16 %v5764
    %v5905 = vunpack.c.l.b16 %v5765
    %v5906 = vunpack.c.h.b16 %v5765
    %v5907 = vunpack.c.l.b16 %v5766
    %v5908 = vunpack.c.l.b16 %v5767
    %v5909 = vunpack.c.h.b16 %v5767
    %v5910 = vunpack.c.l.b16 %v5768
    %v5911 = vunpack.c.l.b16 %v5769
    %v5912 = vunpack.c.h.b16 %v5769
    %v5913 = vunpack.c.l.b16 %v5770
    %v5914 = vunpack.c.l.b16 %v5771
    %v5915 = vunpack.c.h.b16 %v5771
    %v5916 = vunpack.c.l.b16 %v5772
    %v5917 = vunpack.c.l.b16 %v5773
    %v5918 = vunpack.c.h.b16 %v5773
    %v5919 = vunpack.c.l.b16 %v5774
    %v5920 = vunpack.c.l.b16 %v5775
    %v5921 = vunpack.c.h.b16 %v5775
    %v5922 = vunpack.c.l.b16 %v5776
    %v5923 = vunpack.c.l.b16 %v5777
    %v5924 = vunpack.c.h.b16 %v5777
    %v5925 = vunpack.c.l.b16 %v5778
    %v5926 = vunpack.c.l.b16 %v5779
    %v5927 = vunpack.c.h.b16 %v5779
    %v5928 = vunpack.c.l.b16 %v5780
    %v5929 = vunpack.c.l.b16 %v5781
    %v5930 = vunpack.c.h.b16 %v5781
    %v5931 = vunpack.c.l.b16 %v5782
    %v5932 = vunpack.c.l.b16 %v5783
    %v5933 = vunpack.c.h.b16 %v5783
    %v5934 = vunpack.c.l.b16 %v5784
    %v5935 = vunpack.c.l.b16 %v5785
    %v5936 = vunpack.c.h.b16 %v5785
    %v5937 = vunpack.c.l.b16 %v5786
    %v5938 = vunpack.c.l.b16 %v5787
    %v5939 = vunpack.c.h.b16 %v5787
    %v5940 = vunpack.c.l.b16 %v5788
    %v5941 = vunpack.c.l.b16 %v5789
    %v5942 = vunpack.c.h.b16 %v5789
    %v5943 = vunpack.c.l.b16 %v5790
    %v5944 = vunpack.c.l.b16 %v5791
    %v5945 = vunpack.c.h.b16 %v5791
    %v5946 = vunpack.c.l.b16 %v5792
    %v5947 = vpack.c.b16 %v5866, %v5863
    %v5948 = vpack.c.b16 %v5867, %v5864
    %v5949 = vpack.c.b16 %v5868, %v5865
    %v5950 = vpack.c.b16 %v5872, %v5869
    %v5951 = vpack.c.b16 %v5873, %v5870
    %v5952 = vpack.c.b16 %v5874, %v5871
    %v5953 = vpack.c.b16 %v5878, %v5875
    %v5954 = vpack.c.b16 %v5879, %v5876
    %v5955 = vpack.c.b16 %v5880, %v5877
    %v5956 = vpack.c.b16 %v5884, %v5881
    %v5957 = vpack.c.b16 %v5885, %v5882
    %v5958 = vpack.c.b16 %v5886, %v5883
    %v5959 = vpack.c.b16 %v5890, %v5887
    %v5960 = vpack.c.b16 %v5891, %v5888
    %v5961 = vpack.c.b16 %v5892, %v5889
    %v5962 = vpack.c.b16 %v5896, %v5893
    %v5963 = vpack.c.b16 %v5897, %v5894
    %v5964 = vpack.c.b16 %v5898, %v5895
    %v5965 = vpack.c.b16 %v5902, %v5899
    %v5966 = vpack.c.b16 %v5903, %v5900
    %v5967 = vpack.c.b16 %v5904, %v5901
    %v5968 = vpack.c.b16 %v5908, %v5905
    %v5969 = vpack.c.b16 %v5909, %v5906
    %v5970 = vpack.c.b16 %v5910, %v5907
    %v5971 = vpack.c.b16 %v5914, %v5911
    %v5972 = vpack.c.b16 %v5915, %v5912
    %v5973 = vpack.c.b16 %v5916, %v5913
    %v5974 = vpack.c.b16 %v5920, %v5917
    %v5975 = vpack.c.b16 %v5921, %v5918
    %v5976 = vpack.c.b16 %v5922, %v5919
    %v5977 = vpack.c.b16 %v5926, %v5923
    %v5978 = vpack.c.b16 %v5927, %v5924
    %v5979 = vpack.c.b16 %v5928, %v5925
    %v5980 = vpack.c.b16 %v5932, %v5929
    %v5981 = vpack.c.b16 %v5933, %v5930
    %v5982 = vpack.c.b16 %v5934, %v5931
    %v5983 = vpack.c.b16 %v5938, %v5935
    %v5984 = vpack.c.b16 %v5939, %v5936
    %v5985 = vpack.c.b16 %v5940, %v5937
    %v5986 = vpack.c.b16 %v5944, %v5941
    %v5987 = vpack.c.b16 %v5945, %v5942
    %v5988 = vpack.c.b16 %v5946, %v5943
    %v6032 = vsel %vm2993, %v5805, 0
    %6034 = vmatpush.bf16.msra.mxu0 %v5968
    %6035 = vmatpush.bf16.msra.mxu0 %v5965
    %6036 = vmatpush.bf16.msra.mxu0 %v5962
    %6037 = vmatpush.bf16.msra.mxu0 %v5959
    %6038 = vmatpush.bf16.msra.mxu0 %v5956
    %6039 = vmatpush.bf16.msra.mxu0 %v5953
    %6040 = vmatpush.bf16.msra.mxu0 %v5950
    %6041 = vmatpush.bf16.msra.mxu0 %v5947
    %6042 = vmatmul.bf16.gmra.mxu0 %v5799
    %v6043 = vpop.f32.mrf.mxu0
    %v6044 = vadd.f32 0.0, %v6043
    %v6045 = vpop.f32.mrf.mxu0
    %6046 = vdwg.mxu0
    %6047 = vmatpush.bf16.msra.mxu0 0
    %6048 = vmatpush.bf16.msra.mxu0 0
    %6049 = vmatpush.bf16.msra.mxu0 %v5986
    %6050 = vmatpush.bf16.msra.mxu0 %v5983
    %6051 = vmatpush.bf16.msra.mxu0 %v5980
    %6052 = vmatpush.bf16.msra.mxu0 %v5977
    %6053 = vmatpush.bf16.msra.mxu0 %v5974
    %6054 = vmatpush.bf16.msra.mxu0 %v5971
    %6055 = vmatmul.bf16.gmra.mxu0 %v6032
    %v6056 = vpop.f32.mrf.mxu0
    %v6057 = vadd.f32 %v6044, %v6056
    %v6058 = vpop.f32.mrf.mxu0
    %6059 = vdwg.mxu0
    %6060 = vmatpush.bf16.msra.mxu0 %v5969
    %6061 = vmatpush.bf16.msra.mxu0 %v5966
    %6062 = vmatpush.bf16.msra.mxu0 %v5963
    %6063 = vmatpush.bf16.msra.mxu0 %v5960
    %6064 = vmatpush.bf16.msra.mxu0 %v5957
    %6065 = vmatpush.bf16.msra.mxu0 %v5954
    %6066 = vmatpush.bf16.msra.mxu0 %v5951
    %6067 = vmatpush.bf16.msra.mxu0 %v5948
    %6068 = vmatmul.bf16.gmra.mxu0 %v5799
    %v6069 = vpop.f32.mrf.mxu0
    %v6070 = vadd.f32 0.0, %v6069
    %v6071 = vpop.f32.mrf.mxu0
    %6072 = vdwg.mxu0
    %6073 = vmatpush.bf16.msra.mxu0 0
    %6074 = vmatpush.bf16.msra.mxu0 0
    %6075 = vmatpush.bf16.msra.mxu0 %v5987
    %6076 = vmatpush.bf16.msra.mxu0 %v5984
    %6077 = vmatpush.bf16.msra.mxu0 %v5981
    %6078 = vmatpush.bf16.msra.mxu0 %v5978
    %6079 = vmatpush.bf16.msra.mxu0 %v5975
    %6080 = vmatpush.bf16.msra.mxu0 %v5972
    %6081 = vmatmul.bf16.gmra.mxu0 %v6032
    %v6082 = vpop.f32.mrf.mxu0
    %v6083 = vadd.f32 %v6070, %v6082
    %v6084 = vpop.f32.mrf.mxu0
    %6085 = vdwg.mxu0
    %6086 = vmatpush.bf16.msra.mxu0 %v5970
    %6087 = vmatpush.bf16.msra.mxu0 %v5967
    %6088 = vmatpush.bf16.msra.mxu0 %v5964
    %6089 = vmatpush.bf16.msra.mxu0 %v5961
    %6090 = vmatpush.bf16.msra.mxu0 %v5958
    %6091 = vmatpush.bf16.msra.mxu0 %v5955
    %6092 = vmatpush.bf16.msra.mxu0 %v5952
    %6093 = vmatpush.bf16.msra.mxu0 %v5949
    %6094 = vmatmul.bf16.gmra.mxu0 %v5799
    %v6095 = vpop.f32.mrf.mxu0
    %v6096 = vadd.f32 0.0, %v6095
    %v6097 = vpop.f32.mrf.mxu0
    %6098 = vdwg.mxu0
    %6099 = vmatpush.bf16.msra.mxu0 0
    %6100 = vmatpush.bf16.msra.mxu0 0
    %6101 = vmatpush.bf16.msra.mxu0 %v5988
    %6102 = vmatpush.bf16.msra.mxu0 %v5985
    %6103 = vmatpush.bf16.msra.mxu0 %v5982
    %6104 = vmatpush.bf16.msra.mxu0 %v5979
    %6105 = vmatpush.bf16.msra.mxu0 %v5976
    %6106 = vmatpush.bf16.msra.mxu0 %v5973
    %6107 = vmatmul.bf16.gmra.mxu0 %v6032
    %v6108 = vpop.f32.mrf.mxu0
    %v6109 = vadd.f32 %v6096, %v6108
    %v6110 = vpop.f32.mrf.mxu0
    %6111 = vdwg.mxu0
    %v6112 = vadd.f32 %v5734, %v6057
    %v6113 = vadd.f32 %v5735, %v6083
    %v6114 = vadd.f32 %v5736, %v6109
    %v6115 = vld [vmem:[%s2031] sm:$0xee]
    %v6116 = vld [vmem:[%s4216] sm:$0xff]
    %v6117 = vld [vmem:[%s4216 + $0x8] sm:$0xf]
    %v6118 = vld [vmem:[%s4216 + $0xc] sm:$0xff]
    %v6119 = vld [vmem:[%s4216 + $0x14] sm:$0xf]
    %v6120 = vld [vmem:[%s4216 + $0x18] sm:$0xff]
    %v6121 = vld [vmem:[%s4216 + $0x20] sm:$0xf]
    %v6122 = vld [vmem:[%s4216 + $0x24] sm:$0xff]
    %v6123 = vld [vmem:[%s4216 + $0x2c] sm:$0xf]
    %v6124 = vld [vmem:[%s4216 + $0x30] sm:$0xff]
    %v6125 = vld [vmem:[%s4216 + $0x38] sm:$0xf]
    %v6126 = vld [vmem:[%s4216 + $0x3c] sm:$0xff]
    %v6127 = vld [vmem:[%s4216 + $0x44] sm:$0xf]
    %v6128 = vld [vmem:[%s4216 + $0x48] sm:$0xff]
    %v6129 = vld [vmem:[%s4216 + $0x50] sm:$0xf]
    %v6130 = vld [vmem:[%s4216 + $0x54] sm:$0xff]
    %v6131 = vld [vmem:[%s4216 + $0x5c] sm:$0xf]
    %v6132 = vld [vmem:[%s4216 + $0x60] sm:$0xff]
    %v6133 = vld [vmem:[%s4216 + $0x68] sm:$0xf]
    %v6134 = vld [vmem:[%s4216 + $0x6c] sm:$0xff]
    %v6135 = vld [vmem:[%s4216 + $0x74] sm:$0xf]
    %v6136 = vld [vmem:[%s4216 + $0x78] sm:$0xff]
    %v6137 = vld [vmem:[%s4216 + $0x80] sm:$0xf]
    %v6138 = vld [vmem:[%s4216 + $0x84] sm:$0xff]
    %v6139 = vld [vmem:[%s4216 + $0x8c] sm:$0xf]
    %v6140 = vld [vmem:[%s4216 + $0x90] sm:$0xff]
    %v6141 = vld [vmem:[%s4216 + $0x98] sm:$0xf]
    %v6142 = vld [vmem:[%s4216 + $0x9c] sm:$0xff]
    %v6143 = vld [vmem:[%s4216 + $0xa4] sm:$0xf]
    %v6144 = vld [vmem:[%s4216 + $0xa8] sm:$0xff]
    %v6145 = vld [vmem:[%s4216 + $0xb0] sm:$0xf]
    %v6146 = vld [vmem:[%s4216 + $0xb4] sm:$0xff]
    %v6147 = vld [vmem:[%s4216 + $0xbc] sm:$0xf]
    %v6148 = vld [vmem:[%s4216 + $0xc0] sm:$0xff]
    %v6149 = vld [vmem:[%s4216 + $0xc8] sm:$0xf]
    %v6150 = vld [vmem:[%s4216 + $0xcc] sm:$0xff]
    %v6151 = vld [vmem:[%s4216 + $0xd4] sm:$0xf]
    %v6152 = vld [vmem:[%s4216 + $0xd8] sm:$0xff]
    %v6153 = vld [vmem:[%s4216 + $0xe0] sm:$0xf]
    %v6154 = vld [vmem:[%s4216 + $0xe4] sm:$0xff]
    %v6155 = vld [vmem:[%s4216 + $0xec] sm:$0xf]
    %v6156 = vld [vmem:[%s4216 + $0xf0] sm:$0xff]
    %v6157 = vld [vmem:[%s4216 + $0xf8] sm:$0xf]
    %v6158 = vld [vmem:[%s4216 + $0xfc] sm:$0xff]
    %v6159 = vld [vmem:[%s4216 + $0x104] sm:$0xf]
    %v6160 = vld [vmem:[%s4216 + $0x108] sm:$0xff]
    %v6161 = vld [vmem:[%s4216 + $0x110] sm:$0xf]
    %v6162 = vld [vmem:[%s4216 + $0x114] sm:$0xff]
    %v6163 = vld [vmem:[%s4216 + $0x11c] sm:$0xf]
    %v6164 = vld [vmem:[%s4216 + $0x120] sm:$0xff]
    %v6165 = vld [vmem:[%s4216 + $0x128] sm:$0xf]
    %v6166 = vld [vmem:[%s4216 + $0x12c] sm:$0xff]
    %v6167 = vld [vmem:[%s4216 + $0x134] sm:$0xf]
    %v6168 = vld [vmem:[%s4216 + $0x138] sm:$0xff]
    %v6169 = vld [vmem:[%s4216 + $0x140] sm:$0xf]
    %v6170 = vld [vmem:[%s4216 + $0x144] sm:$0xff]
    %v6171 = vld [vmem:[%s4216 + $0x14c] sm:$0xf]
    %v6173 = vunpack.c.l.b16 %v6115
    %v6174 = vunpack.c.h.b16 %v6115
    %v6175 = vpack.c.b16 %v6173, %v6173
    %v6176 = vpack.c.b16 %v6174, %v6174
    %v6177 = vrot.slane %v6175, 1
    %v6178 = vrot.slane %v6176, 1
    %v6236 = vunpack.c.l.b16 %v6116
    %v6237 = vunpack.c.h.b16 %v6116
    %v6238 = vunpack.c.l.b16 %v6117
    %v6239 = vunpack.c.l.b16 %v6118
    %v6240 = vunpack.c.h.b16 %v6118
    %v6241 = vunpack.c.l.b16 %v6119
    %v6242 = vunpack.c.l.b16 %v6120
    %v6243 = vunpack.c.h.b16 %v6120
    %v6244 = vunpack.c.l.b16 %v6121
    %v6245 = vunpack.c.l.b16 %v6122
    %v6246 = vunpack.c.h.b16 %v6122
    %v6247 = vunpack.c.l.b16 %v6123
    %v6248 = vunpack.c.l.b16 %v6124
    %v6249 = vunpack.c.h.b16 %v6124
    %v6250 = vunpack.c.l.b16 %v6125
    %v6251 = vunpack.c.l.b16 %v6126
    %v6252 = vunpack.c.h.b16 %v6126
    %v6253 = vunpack.c.l.b16 %v6127
    %v6254 = vunpack.c.l.b16 %v6128
    %v6255 = vunpack.c.h.b16 %v6128
    %v6256 = vunpack.c.l.b16 %v6129
    %v6257 = vunpack.c.l.b16 %v6130
    %v6258 = vunpack.c.h.b16 %v6130
    %v6259 = vunpack.c.l.b16 %v6131
    %v6260 = vunpack.c.l.b16 %v6132
    %v6261 = vunpack.c.h.b16 %v6132
    %v6262 = vunpack.c.l.b16 %v6133
    %v6263 = vunpack.c.l.b16 %v6134
    %v6264 = vunpack.c.h.b16 %v6134
    %v6265 = vunpack.c.l.b16 %v6135
    %v6266 = vunpack.c.l.b16 %v6136
    %v6267 = vunpack.c.h.b16 %v6136
    %v6268 = vunpack.c.l.b16 %v6137
    %v6269 = vunpack.c.l.b16 %v6138
    %v6270 = vunpack.c.h.b16 %v6138
    %v6271 = vunpack.c.l.b16 %v6139
    %v6272 = vunpack.c.l.b16 %v6140
    %v6273 = vunpack.c.h.b16 %v6140
    %v6274 = vunpack.c.l.b16 %v6141
    %v6275 = vunpack.c.l.b16 %v6142
    %v6276 = vunpack.c.h.b16 %v6142
    %v6277 = vunpack.c.l.b16 %v6143
    %v6278 = vunpack.c.l.b16 %v6144
    %v6279 = vunpack.c.h.b16 %v6144
    %v6280 = vunpack.c.l.b16 %v6145
    %v6281 = vunpack.c.l.b16 %v6146
    %v6282 = vunpack.c.h.b16 %v6146
    %v6283 = vunpack.c.l.b16 %v6147
    %v6284 = vunpack.c.l.b16 %v6148
    %v6285 = vunpack.c.h.b16 %v6148
    %v6286 = vunpack.c.l.b16 %v6149
    %v6287 = vunpack.c.l.b16 %v6150
    %v6288 = vunpack.c.h.b16 %v6150
    %v6289 = vunpack.c.l.b16 %v6151
    %v6290 = vunpack.c.l.b16 %v6152
    %v6291 = vunpack.c.h.b16 %v6152
    %v6292 = vunpack.c.l.b16 %v6153
    %v6293 = vunpack.c.l.b16 %v6154
    %v6294 = vunpack.c.h.b16 %v6154
    %v6295 = vunpack.c.l.b16 %v6155
    %v6296 = vunpack.c.l.b16 %v6156
    %v6297 = vunpack.c.h.b16 %v6156
    %v6298 = vunpack.c.l.b16 %v6157
    %v6299 = vunpack.c.l.b16 %v6158
    %v6300 = vunpack.c.h.b16 %v6158
    %v6301 = vunpack.c.l.b16 %v6159
    %v6302 = vunpack.c.l.b16 %v6160
    %v6303 = vunpack.c.h.b16 %v6160
    %v6304 = vunpack.c.l.b16 %v6161
    %v6305 = vunpack.c.l.b16 %v6162
    %v6306 = vunpack.c.h.b16 %v6162
    %v6307 = vunpack.c.l.b16 %v6163
    %v6308 = vunpack.c.l.b16 %v6164
    %v6309 = vunpack.c.h.b16 %v6164
    %v6310 = vunpack.c.l.b16 %v6165
    %v6311 = vunpack.c.l.b16 %v6166
    %v6312 = vunpack.c.h.b16 %v6166
    %v6313 = vunpack.c.l.b16 %v6167
    %v6314 = vunpack.c.l.b16 %v6168
    %v6315 = vunpack.c.h.b16 %v6168
    %v6316 = vunpack.c.l.b16 %v6169
    %v6317 = vunpack.c.l.b16 %v6170
    %v6318 = vunpack.c.h.b16 %v6170
    %v6319 = vunpack.c.l.b16 %v6171
    %v6320 = vpack.c.b16 %v6239, %v6236
    %v6321 = vpack.c.b16 %v6240, %v6237
    %v6322 = vpack.c.b16 %v6241, %v6238
    %v6323 = vpack.c.b16 %v6245, %v6242
    %v6324 = vpack.c.b16 %v6246, %v6243
    %v6325 = vpack.c.b16 %v6247, %v6244
    %v6326 = vpack.c.b16 %v6251, %v6248
    %v6327 = vpack.c.b16 %v6252, %v6249
    %v6328 = vpack.c.b16 %v6253, %v6250
    %v6329 = vpack.c.b16 %v6257, %v6254
    %v6330 = vpack.c.b16 %v6258, %v6255
    %v6331 = vpack.c.b16 %v6259, %v6256
    %v6332 = vpack.c.b16 %v6263, %v6260
    %v6333 = vpack.c.b16 %v6264, %v6261
    %v6334 = vpack.c.b16 %v6265, %v6262
    %v6335 = vpack.c.b16 %v6269, %v6266
    %v6336 = vpack.c.b16 %v6270, %v6267
    %v6337 = vpack.c.b16 %v6271, %v6268
    %v6338 = vpack.c.b16 %v6275, %v6272
    %v6339 = vpack.c.b16 %v6276, %v6273
    %v6340 = vpack.c.b16 %v6277, %v6274
    %v6341 = vpack.c.b16 %v6281, %v6278
    %v6342 = vpack.c.b16 %v6282, %v6279
    %v6343 = vpack.c.b16 %v6283, %v6280
    %v6344 = vpack.c.b16 %v6287, %v6284
    %v6345 = vpack.c.b16 %v6288, %v6285
    %v6346 = vpack.c.b16 %v6289, %v6286
    %v6347 = vpack.c.b16 %v6293, %v6290
    %v6348 = vpack.c.b16 %v6294, %v6291
    %v6349 = vpack.c.b16 %v6295, %v6292
    %v6350 = vpack.c.b16 %v6299, %v6296
    %v6351 = vpack.c.b16 %v6300, %v6297
    %v6352 = vpack.c.b16 %v6301, %v6298
    %v6353 = vpack.c.b16 %v6305, %v6302
    %v6354 = vpack.c.b16 %v6306, %v6303
    %v6355 = vpack.c.b16 %v6307, %v6304
    %v6356 = vpack.c.b16 %v6311, %v6308
    %v6357 = vpack.c.b16 %v6312, %v6309
    %v6358 = vpack.c.b16 %v6313, %v6310
    %v6359 = vpack.c.b16 %v6317, %v6314
    %v6360 = vpack.c.b16 %v6318, %v6315
    %v6361 = vpack.c.b16 %v6319, %v6316
    %v6405 = vsel %vm2993, %v6178, 0
    %6407 = vmatpush.bf16.msra.mxu0 %v6341
    %6408 = vmatpush.bf16.msra.mxu0 %v6338
    %6409 = vmatpush.bf16.msra.mxu0 %v6335
    %6410 = vmatpush.bf16.msra.mxu0 %v6332
    %6411 = vmatpush.bf16.msra.mxu0 %v6329
    %6412 = vmatpush.bf16.msra.mxu0 %v6326
    %6413 = vmatpush.bf16.msra.mxu0 %v6323
    %6414 = vmatpush.bf16.msra.mxu0 %v6320
    %6415 = vmatmul.bf16.gmra.mxu0 %v6177
    %v6416 = vpop.f32.mrf.mxu0
    %v6417 = vadd.f32 0.0, %v6416
    %v6418 = vpop.f32.mrf.mxu0
    %6419 = vdwg.mxu0
    %6420 = vmatpush.bf16.msra.mxu0 0
    %6421 = vmatpush.bf16.msra.mxu0 0
    %6422 = vmatpush.bf16.msra.mxu0 %v6359
    %6423 = vmatpush.bf16.msra.mxu0 %v6356
    %6424 = vmatpush.bf16.msra.mxu0 %v6353
    %6425 = vmatpush.bf16.msra.mxu0 %v6350
    %6426 = vmatpush.bf16.msra.mxu0 %v6347
    %6427 = vmatpush.bf16.msra.mxu0 %v6344
    %6428 = vmatmul.bf16.gmra.mxu0 %v6405
    %v6429 = vpop.f32.mrf.mxu0
    %v6430 = vadd.f32 %v6417, %v6429
    %v6431 = vpop.f32.mrf.mxu0
    %6432 = vdwg.mxu0
    %6433 = vmatpush.bf16.msra.mxu0 %v6342
    %6434 = vmatpush.bf16.msra.mxu0 %v6339
    %6435 = vmatpush.bf16.msra.mxu0 %v6336
    %6436 = vmatpush.bf16.msra.mxu0 %v6333
    %6437 = vmatpush.bf16.msra.mxu0 %v6330
    %6438 = vmatpush.bf16.msra.mxu0 %v6327
    %6439 = vmatpush.bf16.msra.mxu0 %v6324
    %6440 = vmatpush.bf16.msra.mxu0 %v6321
    %6441 = vmatmul.bf16.gmra.mxu0 %v6177
    %v6442 = vpop.f32.mrf.mxu0
    %v6443 = vadd.f32 0.0, %v6442
    %v6444 = vpop.f32.mrf.mxu0
    %6445 = vdwg.mxu0
    %6446 = vmatpush.bf16.msra.mxu0 0
    %6447 = vmatpush.bf16.msra.mxu0 0
    %6448 = vmatpush.bf16.msra.mxu0 %v6360
    %6449 = vmatpush.bf16.msra.mxu0 %v6357
    %6450 = vmatpush.bf16.msra.mxu0 %v6354
    %6451 = vmatpush.bf16.msra.mxu0 %v6351
    %6452 = vmatpush.bf16.msra.mxu0 %v6348
    %6453 = vmatpush.bf16.msra.mxu0 %v6345
    %6454 = vmatmul.bf16.gmra.mxu0 %v6405
    %v6455 = vpop.f32.mrf.mxu0
    %v6456 = vadd.f32 %v6443, %v6455
    %v6457 = vpop.f32.mrf.mxu0
    %6458 = vdwg.mxu0
    %6459 = vmatpush.bf16.msra.mxu0 %v6343
    %6460 = vmatpush.bf16.msra.mxu0 %v6340
    %6461 = vmatpush.bf16.msra.mxu0 %v6337
    %6462 = vmatpush.bf16.msra.mxu0 %v6334
    %6463 = vmatpush.bf16.msra.mxu0 %v6331
    %6464 = vmatpush.bf16.msra.mxu0 %v6328
    %6465 = vmatpush.bf16.msra.mxu0 %v6325
    %6466 = vmatpush.bf16.msra.mxu0 %v6322
    %6467 = vmatmul.bf16.gmra.mxu0 %v6177
    %v6468 = vpop.f32.mrf.mxu0
    %v6469 = vadd.f32 0.0, %v6468
    %v6470 = vpop.f32.mrf.mxu0
    %6471 = vdwg.mxu0
    %6472 = vmatpush.bf16.msra.mxu0 0
    %6473 = vmatpush.bf16.msra.mxu0 0
    %6474 = vmatpush.bf16.msra.mxu0 %v6361
    %6475 = vmatpush.bf16.msra.mxu0 %v6358
    %6476 = vmatpush.bf16.msra.mxu0 %v6355
    %6477 = vmatpush.bf16.msra.mxu0 %v6352
    %6478 = vmatpush.bf16.msra.mxu0 %v6349
    %6479 = vmatpush.bf16.msra.mxu0 %v6346
    %6480 = vmatmul.bf16.gmra.mxu0 %v6405
    %v6481 = vpop.f32.mrf.mxu0
    %v6482 = vadd.f32 %v6469, %v6481
    %v6483 = vpop.f32.mrf.mxu0
    %6484 = vdwg.mxu0
    %v6485 = vadd.f32 %v6112, %v6430
    %v6486 = vadd.f32 %v6113, %v6456
    %v6487 = vadd.f32 %v6114, %v6482
    %v6488 = vmax.f32 %v6485, 0.0
    %v6489 = vmax.f32 %v6486, 0.0
    %v6490 = vmax.f32 %v6487, 0.0
    %v6491 = vpack.c.bf16 %v6489, %v6488
    %v6492 = vpack.c.bf16 %v6490, %v6490
    %s6493 = scalar_lea.vmem [#allocation3], 12
    %v6494 = vld [vmem:[%s6493] sm:$0x77]
    %v6495 = vsel %vm4600, %v6491, %v6494
    %6496 = vst [vmem:[%s6493] sm:$0x77] %v6495
    %v6497 = vld [vmem:[%s6493 + $0x8] sm:$0x7]
    %v6498 = vsel %vm4605, %v6492, %v6497
    %6499 = vst [vmem:[%s6493 + $0x8] sm:$0x7] %v6498
    %v6500 = vld [vmem:[%s7] sm:$0x3]
    %v6501 = vld [vmem:[#allocation3] sm:$0x11]
    %v6502 = vld [vmem:[#allocation3 + $0x8] sm:$0x1]
    %v6503 = vld [vmem:[#allocation3 + $0xc] sm:$0x11]
    %v6504 = vld [vmem:[#allocation3 + $0x14] sm:$0x1]
    %v6505 = vld [vmem:[%s4] sm:$0xff]
    %v6506 = vld [vmem:[%s4 + $0x8] sm:$0xff]
    %v6507 = vld [vmem:[%s4 + $0x10] sm:$0xff]
    %v6508 = vld [vmem:[%s4 + $0x18] sm:$0xff]
    %v6509 = vld [vmem:[%s4 + $0x20] sm:$0xff]
    %v6510 = vld [vmem:[%s4 + $0x28] sm:$0xff]
    %v6511 = vld [vmem:[%s4 + $0x30] sm:$0xff]
    %v6512 = vld [vmem:[%s4 + $0x38] sm:$0xff]
    %v6513 = vld [vmem:[%s4 + $0x40] sm:$0xff]
    %v6514 = vld [vmem:[%s4 + $0x48] sm:$0xff]
    %v6515 = vld [vmem:[%s4 + $0x50] sm:$0xff]
    %v6516 = vld [vmem:[%s4 + $0x58] sm:$0xff]
    %v6517 = vld [vmem:[%s4 + $0x60] sm:$0xff]
    %v6518 = vld [vmem:[%s4 + $0x68] sm:$0xff]
    %v6519 = vld [vmem:[%s4 + $0x70] sm:$0xff]
    %v6520 = vld [vmem:[%s4 + $0x78] sm:$0xff]
    %v6521 = vld [vmem:[%s4 + $0x80] sm:$0xff]
    %v6522 = vld [vmem:[%s4 + $0x88] sm:$0xff]
    %v6523 = vld [vmem:[%s4 + $0x90] sm:$0xff]
    %v6524 = vld [vmem:[%s4 + $0x98] sm:$0xff]
    %v6525 = vld [vmem:[%s4 + $0xa0] sm:$0xff]
    %v6526 = vld [vmem:[%s4 + $0xa8] sm:$0xff]
    %v6527 = vld [vmem:[%s4 + $0xb0] sm:$0xff]
    %v6528 = vld [vmem:[%s4 + $0xb8] sm:$0xff]
    %v6529 = vld [vmem:[%s4 + $0xc0] sm:$0xff]
    %v6530 = vld [vmem:[%s4 + $0xc8] sm:$0xff]
    %v6531 = vld [vmem:[%s4 + $0xd0] sm:$0xff]
    %v6532 = vld [vmem:[%s4 + $0xd8] sm:$0xff]
    %v6533 = vld [vmem:[%s4 + $0xe0] sm:$0xff]
    %v6534 = vld [vmem:[%s4 + $0xe8] sm:$0xff]
    %v6535 = vld [vmem:[%s4 + $0xf0] sm:$0xff]
    %v6536 = vld [vmem:[%s4 + $0xf8] sm:$0xff]
    %v6537 = vld [vmem:[%s4 + $0x100] sm:$0xff]
    %v6538 = vld [vmem:[%s4 + $0x108] sm:$0xff]
    %v6539 = vld [vmem:[%s4 + $0x110] sm:$0xff]
    %v6540 = vld [vmem:[%s4 + $0x118] sm:$0xff]
    %v6541 = vld [vmem:[%s4 + $0x120] sm:$0xff]
    %v6542 = vld [vmem:[%s4 + $0x128] sm:$0xff]
    %v6543 = vld [vmem:[%s4 + $0x130] sm:$0xff]
    %v6544 = vld [vmem:[%s4 + $0x138] sm:$0xff]
    %v6549 = vunpack.c.l.b16 %v6501
    %v6550 = vunpack.c.h.b16 %v6501
    %v6551 = vunpack.c.l.b16 %v6502
    %v6552 = vunpack.c.l.b16 %v6503
    %v6553 = vunpack.c.h.b16 %v6503
    %v6554 = vunpack.c.l.b16 %v6504
    %v6555 = vpack.c.b16 %v6549, %v6549
    %v6556 = vpack.c.b16 %v6550, %v6550
    %v6557 = vpack.c.b16 %v6551, %v6551
    %v6558 = vpack.c.b16 %v6552, %v6552
    %v6559 = vpack.c.b16 %v6553, %v6553
    %v6560 = vpack.c.b16 %v6554, %v6554
    %v6561 = vunpack.c.l.b16 %v6555
    %v6562 = vunpack.c.l.b16 %v6556
    %v6563 = vunpack.c.l.b16 %v6557
    %v6564 = vunpack.c.l.b16 %v6558
    %v6565 = vunpack.c.l.b16 %v6559
    %v6566 = vunpack.c.l.b16 %v6560
    %v6567 = vrot.slane %v6564, 7
    %vm6568 = vcmask 1041409
    %v6569 = vsel %vm6568, %v6567, %v6561
    %v6570 = vrot.slane %v6565, 7
    %v6571 = vsel %vm6568, %v6570, %v6562
    %v6572 = vrot.slane %v6566, 7
    %v6573 = vsel %vm6568, %v6572, %v6563
    %v6574 = vpack.c.b16 %v6569, %v6569
    %v6575 = vpack.c.b16 %v6571, %v6571
    %v6576 = vpack.c.b16 %v6573, %v6573
    %v6619 = vunpack.c.l.b16 %v6505
    %v6620 = vunpack.c.h.b16 %v6505
    %v6621 = vunpack.c.l.b16 %v6506
    %v6622 = vunpack.c.h.b16 %v6506
    %v6623 = vunpack.c.l.b16 %v6507
    %v6624 = vunpack.c.h.b16 %v6507
    %v6625 = vunpack.c.l.b16 %v6508
    %v6626 = vunpack.c.h.b16 %v6508
    %v6627 = vunpack.c.l.b16 %v6509
    %v6628 = vunpack.c.h.b16 %v6509
    %v6629 = vunpack.c.l.b16 %v6510
    %v6630 = vunpack.c.h.b16 %v6510
    %v6631 = vunpack.c.l.b16 %v6511
    %v6632 = vunpack.c.h.b16 %v6511
    %v6633 = vunpack.c.l.b16 %v6512
    %v6634 = vunpack.c.h.b16 %v6512
    %v6635 = vunpack.c.l.b16 %v6513
    %v6636 = vunpack.c.h.b16 %v6513
    %v6637 = vunpack.c.l.b16 %v6514
    %v6638 = vunpack.c.h.b16 %v6514
    %v6639 = vunpack.c.l.b16 %v6515
    %v6640 = vunpack.c.h.b16 %v6515
    %v6641 = vunpack.c.l.b16 %v6516
    %v6642 = vunpack.c.h.b16 %v6516
    %v6643 = vunpack.c.l.b16 %v6517
    %v6644 = vunpack.c.h.b16 %v6517
    %v6645 = vunpack.c.l.b16 %v6518
    %v6646 = vunpack.c.h.b16 %v6518
    %v6647 = vunpack.c.l.b16 %v6519
    %v6648 = vunpack.c.h.b16 %v6519
    %v6649 = vunpack.c.l.b16 %v6520
    %v6650 = vunpack.c.h.b16 %v6520
    %v6651 = vunpack.c.l.b16 %v6521
    %v6652 = vunpack.c.h.b16 %v6521
    %v6653 = vunpack.c.l.b16 %v6522
    %v6654 = vunpack.c.h.b16 %v6522
    %v6655 = vunpack.c.l.b16 %v6523
    %v6656 = vunpack.c.h.b16 %v6523
    %v6657 = vunpack.c.l.b16 %v6524
    %v6658 = vunpack.c.h.b16 %v6524
    %v6659 = vunpack.c.l.b16 %v6525
    %v6660 = vunpack.c.h.b16 %v6525
    %v6661 = vunpack.c.l.b16 %v6526
    %v6662 = vunpack.c.h.b16 %v6526
    %v6663 = vunpack.c.l.b16 %v6527
    %v6664 = vunpack.c.h.b16 %v6527
    %v6665 = vunpack.c.l.b16 %v6528
    %v6666 = vunpack.c.h.b16 %v6528
    %v6667 = vunpack.c.l.b16 %v6529
    %v6668 = vunpack.c.h.b16 %v6529
    %v6669 = vunpack.c.l.b16 %v6530
    %v6670 = vunpack.c.h.b16 %v6530
    %v6671 = vunpack.c.l.b16 %v6531
    %v6672 = vunpack.c.h.b16 %v6531
    %v6673 = vunpack.c.l.b16 %v6532
    %v6674 = vunpack.c.h.b16 %v6532
    %v6675 = vunpack.c.l.b16 %v6533
    %v6676 = vunpack.c.h.b16 %v6533
    %v6677 = vunpack.c.l.b16 %v6534
    %v6678 = vunpack.c.h.b16 %v6534
    %v6679 = vunpack.c.l.b16 %v6535
    %v6680 = vunpack.c.h.b16 %v6535
    %v6681 = vunpack.c.l.b16 %v6536
    %v6682 = vunpack.c.h.b16 %v6536
    %v6683 = vunpack.c.l.b16 %v6537
    %v6684 = vunpack.c.h.b16 %v6537
    %v6685 = vunpack.c.l.b16 %v6538
    %v6686 = vunpack.c.h.b16 %v6538
    %v6687 = vunpack.c.l.b16 %v6539
    %v6688 = vunpack.c.h.b16 %v6539
    %v6689 = vunpack.c.l.b16 %v6540
    %v6690 = vunpack.c.h.b16 %v6540
    %v6691 = vunpack.c.l.b16 %v6541
    %v6692 = vunpack.c.h.b16 %v6541
    %v6693 = vunpack.c.l.b16 %v6542
    %v6694 = vunpack.c.h.b16 %v6542
    %v6695 = vunpack.c.l.b16 %v6543
    %v6696 = vunpack.c.h.b16 %v6543
    %v6697 = vunpack.c.l.b16 %v6544
    %v6698 = vunpack.c.h.b16 %v6544
    %v6699 = vpack.c.b16 %v6621, %v6619
    %v6700 = vpack.c.b16 %v6622, %v6620
    %v6701 = vpack.c.b16 %v6625, %v6623
    %v6702 = vpack.c.b16 %v6626, %v6624
    %v6703 = vpack.c.b16 %v6629, %v6627
    %v6704 = vpack.c.b16 %v6630, %v6628
    %v6705 = vpack.c.b16 %v6633, %v6631
    %v6706 = vpack.c.b16 %v6634, %v6632
    %v6707 = vpack.c.b16 %v6637, %v6635
    %v6708 = vpack.c.b16 %v6638, %v6636
    %v6709 = vpack.c.b16 %v6641, %v6639
    %v6710 = vpack.c.b16 %v6642, %v6640
    %v6711 = vpack.c.b16 %v6645, %v6643
    %v6712 = vpack.c.b16 %v6646, %v6644
    %v6713 = vpack.c.b16 %v6649, %v6647
    %v6714 = vpack.c.b16 %v6650, %v6648
    %v6715 = vpack.c.b16 %v6653, %v6651
    %v6716 = vpack.c.b16 %v6654, %v6652
    %v6717 = vpack.c.b16 %v6657, %v6655
    %v6718 = vpack.c.b16 %v6658, %v6656
    %v6719 = vpack.c.b16 %v6661, %v6659
    %v6720 = vpack.c.b16 %v6662, %v6660
    %v6721 = vpack.c.b16 %v6665, %v6663
    %v6722 = vpack.c.b16 %v6666, %v6664
    %v6723 = vpack.c.b16 %v6669, %v6667
    %v6724 = vpack.c.b16 %v6670, %v6668
    %v6725 = vpack.c.b16 %v6673, %v6671
    %v6726 = vpack.c.b16 %v6674, %v6672
    %v6727 = vpack.c.b16 %v6677, %v6675
    %v6728 = vpack.c.b16 %v6678, %v6676
    %v6729 = vpack.c.b16 %v6681, %v6679
    %v6730 = vpack.c.b16 %v6682, %v6680
    %v6731 = vpack.c.b16 %v6685, %v6683
    %v6732 = vpack.c.b16 %v6686, %v6684
    %v6733 = vpack.c.b16 %v6689, %v6687
    %v6734 = vpack.c.b16 %v6690, %v6688
    %v6735 = vpack.c.b16 %v6693, %v6691
    %v6736 = vpack.c.b16 %v6694, %v6692
    %v6737 = vpack.c.b16 %v6697, %v6695
    %v6738 = vpack.c.b16 %v6698, %v6696
    %vm6779 = vcmask 523264
    %v6781 = vsel %vm6779, %v6576, 0
    %6783 = vmatpush.bf16.msra.mxu0 %v6713
    %6784 = vmatpush.bf16.msra.mxu0 %v6711
    %6785 = vmatpush.bf16.msra.mxu0 %v6709
    %6786 = vmatpush.bf16.msra.mxu0 %v6707
    %6787 = vmatpush.bf16.msra.mxu0 %v6705
    %6788 = vmatpush.bf16.msra.mxu0 %v6703
    %6789 = vmatpush.bf16.msra.mxu0 %v6701
    %6790 = vmatpush.bf16.msra.mxu0 %v6699
    %6791 = vmatmul.bf16.gmra.mxu0 %v6574
    %v6792 = vpop.f32.mrf.mxu0
    %v6793 = vadd.f32 0.0, %v6792
    %v6794 = vpop.f32.mrf.mxu0
    %6795 = vdwg.mxu0
    %6796 = vmatpush.bf16.msra.mxu0 %v6729
    %6797 = vmatpush.bf16.msra.mxu0 %v6727
    %6798 = vmatpush.bf16.msra.mxu0 %v6725
    %6799 = vmatpush.bf16.msra.mxu0 %v6723
    %6800 = vmatpush.bf16.msra.mxu0 %v6721
    %6801 = vmatpush.bf16.msra.mxu0 %v6719
    %6802 = vmatpush.bf16.msra.mxu0 %v6717
    %6803 = vmatpush.bf16.msra.mxu0 %v6715
    %6804 = vmatmul.bf16.gmra.mxu0 %v6575
    %v6805 = vpop.f32.mrf.mxu0
    %v6806 = vadd.f32 %v6793, %v6805
    %v6807 = vpop.f32.mrf.mxu0
    %6808 = vdwg.mxu0
    %6809 = vmatpush.bf16.msra.mxu0 0
    %6810 = vmatpush.bf16.msra.mxu0 0
    %6811 = vmatpush.bf16.msra.mxu0 0
    %6812 = vmatpush.bf16.msra.mxu0 0
    %6813 = vmatpush.bf16.msra.mxu0 %v6737
    %6814 = vmatpush.bf16.msra.mxu0 %v6735
    %6815 = vmatpush.bf16.msra.mxu0 %v6733
    %6816 = vmatpush.bf16.msra.mxu0 %v6731
    %6817 = vmatmul.bf16.gmra.mxu0 %v6781
    %v6818 = vpop.f32.mrf.mxu0
    %v6819 = vadd.f32 %v6806, %v6818
    %v6820 = vpop.f32.mrf.mxu0
    %6821 = vdwg.mxu0
    %6822 = vmatpush.bf16.msra.mxu0 %v6714
    %6823 = vmatpush.bf16.msra.mxu0 %v6712
    %6824 = vmatpush.bf16.msra.mxu0 %v6710
    %6825 = vmatpush.bf16.msra.mxu0 %v6708
    %6826 = vmatpush.bf16.msra.mxu0 %v6706
    %6827 = vmatpush.bf16.msra.mxu0 %v6704
    %6828 = vmatpush.bf16.msra.mxu0 %v6702
    %6829 = vmatpush.bf16.msra.mxu0 %v6700
    %6830 = vmatmul.bf16.gmra.mxu0 %v6574
    %v6831 = vpop.f32.mrf.mxu0
    %v6832 = vadd.f32 0.0, %v6831
    %v6833 = vpop.f32.mrf.mxu0
    %6834 = vdwg.mxu0
    %6835 = vmatpush.bf16.msra.mxu0 %v6730
    %6836 = vmatpush.bf16.msra.mxu0 %v6728
    %6837 = vmatpush.bf16.msra.mxu0 %v6726
    %6838 = vmatpush.bf16.msra.mxu0 %v6724
    %6839 = vmatpush.bf16.msra.mxu0 %v6722
    %6840 = vmatpush.bf16.msra.mxu0 %v6720
    %6841 = vmatpush.bf16.msra.mxu0 %v6718
    %6842 = vmatpush.bf16.msra.mxu0 %v6716
    %6843 = vmatmul.bf16.gmra.mxu0 %v6575
    %v6844 = vpop.f32.mrf.mxu0
    %v6845 = vadd.f32 %v6832, %v6844
    %v6846 = vpop.f32.mrf.mxu0
    %6847 = vdwg.mxu0
    %6848 = vmatpush.bf16.msra.mxu0 0
    %6849 = vmatpush.bf16.msra.mxu0 0
    %6850 = vmatpush.bf16.msra.mxu0 0
    %6851 = vmatpush.bf16.msra.mxu0 0
    %6852 = vmatpush.bf16.msra.mxu0 %v6738
    %6853 = vmatpush.bf16.msra.mxu0 %v6736
    %6854 = vmatpush.bf16.msra.mxu0 %v6734
    %6855 = vmatpush.bf16.msra.mxu0 %v6732
    %6856 = vmatmul.bf16.gmra.mxu0 %v6781
    %v6857 = vpop.f32.mrf.mxu0
    %v6858 = vadd.f32 %v6845, %v6857
    %v6859 = vpop.f32.mrf.mxu0
    %6860 = vdwg.mxu0
    %v6862 = vperm.slane %v6500, 0
    %v6863 = vperm.slane %v6500, 1
    %v6866 = vadd.f32 %v6862, %v6819
    %v6867 = vadd.f32 %v6863, %v6858
    %s6868 = scalar_lea.vmem %s4, 320
    %v6869 = vld [vmem:[%s6868] sm:$0xff]
    %v6870 = vld [vmem:[%s6868 + $0x8] sm:$0xff]
    %v6871 = vld [vmem:[%s6868 + $0x10] sm:$0xff]
    %v6872 = vld [vmem:[%s6868 + $0x18] sm:$0xff]
    %v6873 = vld [vmem:[%s6868 + $0x20] sm:$0xff]
    %v6874 = vld [vmem:[%s6868 + $0x28] sm:$0xff]
    %v6875 = vld [vmem:[%s6868 + $0x30] sm:$0xff]
    %v6876 = vld [vmem:[%s6868 + $0x38] sm:$0xff]
    %v6877 = vld [vmem:[%s6868 + $0x40] sm:$0xff]
    %v6878 = vld [vmem:[%s6868 + $0x48] sm:$0xff]
    %v6879 = vld [vmem:[%s6868 + $0x50] sm:$0xff]
    %v6880 = vld [vmem:[%s6868 + $0x58] sm:$0xff]
    %v6881 = vld [vmem:[%s6868 + $0x60] sm:$0xff]
    %v6882 = vld [vmem:[%s6868 + $0x68] sm:$0xff]
    %v6883 = vld [vmem:[%s6868 + $0x70] sm:$0xff]
    %v6884 = vld [vmem:[%s6868 + $0x78] sm:$0xff]
    %v6885 = vld [vmem:[%s6868 + $0x80] sm:$0xff]
    %v6886 = vld [vmem:[%s6868 + $0x88] sm:$0xff]
    %v6887 = vld [vmem:[%s6868 + $0x90] sm:$0xff]
    %v6888 = vld [vmem:[%s6868 + $0x98] sm:$0xff]
    %v6889 = vld [vmem:[%s6868 + $0xa0] sm:$0xff]
    %v6890 = vld [vmem:[%s6868 + $0xa8] sm:$0xff]
    %v6891 = vld [vmem:[%s6868 + $0xb0] sm:$0xff]
    %v6892 = vld [vmem:[%s6868 + $0xb8] sm:$0xff]
    %v6893 = vld [vmem:[%s6868 + $0xc0] sm:$0xff]
    %v6894 = vld [vmem:[%s6868 + $0xc8] sm:$0xff]
    %v6895 = vld [vmem:[%s6868 + $0xd0] sm:$0xff]
    %v6896 = vld [vmem:[%s6868 + $0xd8] sm:$0xff]
    %v6897 = vld [vmem:[%s6868 + $0xe0] sm:$0xff]
    %v6898 = vld [vmem:[%s6868 + $0xe8] sm:$0xff]
    %v6899 = vld [vmem:[%s6868 + $0xf0] sm:$0xff]
    %v6900 = vld [vmem:[%s6868 + $0xf8] sm:$0xff]
    %v6901 = vld [vmem:[%s6868 + $0x100] sm:$0xff]
    %v6902 = vld [vmem:[%s6868 + $0x108] sm:$0xff]
    %v6903 = vld [vmem:[%s6868 + $0x110] sm:$0xff]
    %v6904 = vld [vmem:[%s6868 + $0x118] sm:$0xff]
    %v6905 = vld [vmem:[%s6868 + $0x120] sm:$0xff]
    %v6906 = vld [vmem:[%s6868 + $0x128] sm:$0xff]
    %v6907 = vld [vmem:[%s6868 + $0x130] sm:$0xff]
    %v6908 = vld [vmem:[%s6868 + $0x138] sm:$0xff]
    %v6909 = vrot.slane %v6561, 1
    %v6910 = vsel %vm6568, %v6564, %v6909
    %v6911 = vrot.slane %v6562, 1
    %v6912 = vsel %vm6568, %v6565, %v6911
    %v6913 = vrot.slane %v6563, 1
    %v6914 = vsel %vm6568, %v6566, %v6913
    %v6915 = vpack.c.b16 %v6910, %v6910
    %v6916 = vpack.c.b16 %v6912, %v6912
    %v6917 = vpack.c.b16 %v6914, %v6914
    %v6960 = vunpack.c.l.b16 %v6869
    %v6961 = vunpack.c.h.b16 %v6869
    %v6962 = vunpack.c.l.b16 %v6870
    %v6963 = vunpack.c.h.b16 %v6870
    %v6964 = vunpack.c.l.b16 %v6871
    %v6965 = vunpack.c.h.b16 %v6871
    %v6966 = vunpack.c.l.b16 %v6872
    %v6967 = vunpack.c.h.b16 %v6872
    %v6968 = vunpack.c.l.b16 %v6873
    %v6969 = vunpack.c.h.b16 %v6873
    %v6970 = vunpack.c.l.b16 %v6874
    %v6971 = vunpack.c.h.b16 %v6874
    %v6972 = vunpack.c.l.b16 %v6875
    %v6973 = vunpack.c.h.b16 %v6875
    %v6974 = vunpack.c.l.b16 %v6876
    %v6975 = vunpack.c.h.b16 %v6876
    %v6976 = vunpack.c.l.b16 %v6877
    %v6977 = vunpack.c.h.b16 %v6877
    %v6978 = vunpack.c.l.b16 %v6878
    %v6979 = vunpack.c.h.b16 %v6878
    %v6980 = vunpack.c.l.b16 %v6879
    %v6981 = vunpack.c.h.b16 %v6879
    %v6982 = vunpack.c.l.b16 %v6880
    %v6983 = vunpack.c.h.b16 %v6880
    %v6984 = vunpack.c.l.b16 %v6881
    %v6985 = vunpack.c.h.b16 %v6881
    %v6986 = vunpack.c.l.b16 %v6882
    %v6987 = vunpack.c.h.b16 %v6882
    %v6988 = vunpack.c.l.b16 %v6883
    %v6989 = vunpack.c.h.b16 %v6883
    %v6990 = vunpack.c.l.b16 %v6884
    %v6991 = vunpack.c.h.b16 %v6884
    %v6992 = vunpack.c.l.b16 %v6885
    %v6993 = vunpack.c.h.b16 %v6885
    %v6994 = vunpack.c.l.b16 %v6886
    %v6995 = vunpack.c.h.b16 %v6886
    %v6996 = vunpack.c.l.b16 %v6887
    %v6997 = vunpack.c.h.b16 %v6887
    %v6998 = vunpack.c.l.b16 %v6888
    %v6999 = vunpack.c.h.b16 %v6888
    %v7000 = vunpack.c.l.b16 %v6889
    %v7001 = vunpack.c.h.b16 %v6889
    %v7002 = vunpack.c.l.b16 %v6890
    %v7003 = vunpack.c.h.b16 %v6890
    %v7004 = vunpack.c.l.b16 %v6891
    %v7005 = vunpack.c.h.b16 %v6891
    %v7006 = vunpack.c.l.b16 %v6892
    %v7007 = vunpack.c.h.b16 %v6892
    %v7008 = vunpack.c.l.b16 %v6893
    %v7009 = vunpack.c.h.b16 %v6893
    %v7010 = vunpack.c.l.b16 %v6894
    %v7011 = vunpack.c.h.b16 %v6894
    %v7012 = vunpack.c.l.b16 %v6895
    %v7013 = vunpack.c.h.b16 %v6895
    %v7014 = vunpack.c.l.b16 %v6896
    %v7015 = vunpack.c.h.b16 %v6896
    %v7016 = vunpack.c.l.b16 %v6897
    %v7017 = vunpack.c.h.b16 %v6897
    %v7018 = vunpack.c.l.b16 %v6898
    %v7019 = vunpack.c.h.b16 %v6898
    %v7020 = vunpack.c.l.b16 %v6899
    %v7021 = vunpack.c.h.b16 %v6899
    %v7022 = vunpack.c.l.b16 %v6900
    %v7023 = vunpack.c.h.b16 %v6900
    %v7024 = vunpack.c.l.b16 %v6901
    %v7025 = vunpack.c.h.b16 %v6901
    %v7026 = vunpack.c.l.b16 %v6902
    %v7027 = vunpack.c.h.b16 %v6902
    %v7028 = vunpack.c.l.b16 %v6903
    %v7029 = vunpack.c.h.b16 %v6903
    %v7030 = vunpack.c.l.b16 %v6904
    %v7031 = vunpack.c.h.b16 %v6904
    %v7032 = vunpack.c.l.b16 %v6905
    %v7033 = vunpack.c.h.b16 %v6905
    %v7034 = vunpack.c.l.b16 %v6906
    %v7035 = vunpack.c.h.b16 %v6906
    %v7036 = vunpack.c.l.b16 %v6907
    %v7037 = vunpack.c.h.b16 %v6907
    %v7038 = vunpack.c.l.b16 %v6908
    %v7039 = vunpack.c.h.b16 %v6908
    %v7040 = vpack.c.b16 %v6962, %v6960
    %v7041 = vpack.c.b16 %v6963, %v6961
    %v7042 = vpack.c.b16 %v6966, %v6964
    %v7043 = vpack.c.b16 %v6967, %v6965
    %v7044 = vpack.c.b16 %v6970, %v6968
    %v7045 = vpack.c.b16 %v6971, %v6969
    %v7046 = vpack.c.b16 %v6974, %v6972
    %v7047 = vpack.c.b16 %v6975, %v6973
    %v7048 = vpack.c.b16 %v6978, %v6976
    %v7049 = vpack.c.b16 %v6979, %v6977
    %v7050 = vpack.c.b16 %v6982, %v6980
    %v7051 = vpack.c.b16 %v6983, %v6981
    %v7052 = vpack.c.b16 %v6986, %v6984
    %v7053 = vpack.c.b16 %v6987, %v6985
    %v7054 = vpack.c.b16 %v6990, %v6988
    %v7055 = vpack.c.b16 %v6991, %v6989
    %v7056 = vpack.c.b16 %v6994, %v6992
    %v7057 = vpack.c.b16 %v6995, %v6993
    %v7058 = vpack.c.b16 %v6998, %v6996
    %v7059 = vpack.c.b16 %v6999, %v6997
    %v7060 = vpack.c.b16 %v7002, %v7000
    %v7061 = vpack.c.b16 %v7003, %v7001
    %v7062 = vpack.c.b16 %v7006, %v7004
    %v7063 = vpack.c.b16 %v7007, %v7005
    %v7064 = vpack.c.b16 %v7010, %v7008
    %v7065 = vpack.c.b16 %v7011, %v7009
    %v7066 = vpack.c.b16 %v7014, %v7012
    %v7067 = vpack.c.b16 %v7015, %v7013
    %v7068 = vpack.c.b16 %v7018, %v7016
    %v7069 = vpack.c.b16 %v7019, %v7017
    %v7070 = vpack.c.b16 %v7022, %v7020
    %v7071 = vpack.c.b16 %v7023, %v7021
    %v7072 = vpack.c.b16 %v7026, %v7024
    %v7073 = vpack.c.b16 %v7027, %v7025
    %v7074 = vpack.c.b16 %v7030, %v7028
    %v7075 = vpack.c.b16 %v7031, %v7029
    %v7076 = vpack.c.b16 %v7034, %v7032
    %v7077 = vpack.c.b16 %v7035, %v7033
    %v7078 = vpack.c.b16 %v7038, %v7036
    %v7079 = vpack.c.b16 %v7039, %v7037
    %v7121 = vsel %vm6779, %v6917, 0
    %7123 = vmatpush.bf16.msra.mxu0 %v7054
    %7124 = vmatpush.bf16.msra.mxu0 %v7052
    %7125 = vmatpush.bf16.msra.mxu0 %v7050
    %7126 = vmatpush.bf16.msra.mxu0 %v7048
    %7127 = vmatpush.bf16.msra.mxu0 %v7046
    %7128 = vmatpush.bf16.msra.mxu0 %v7044
    %7129 = vmatpush.bf16.msra.mxu0 %v7042
    %7130 = vmatpush.bf16.msra.mxu0 %v7040
    %7131 = vmatmul.bf16.gmra.mxu0 %v6915
    %v7132 = vpop.f32.mrf.mxu0
    %v7133 = vadd.f32 0.0, %v7132
    %v7134 = vpop.f32.mrf.mxu0
    %7135 = vdwg.mxu0
    %7136 = vmatpush.bf16.msra.mxu0 %v7070
    %7137 = vmatpush.bf16.msra.mxu0 %v7068
    %7138 = vmatpush.bf16.msra.mxu0 %v7066
    %7139 = vmatpush.bf16.msra.mxu0 %v7064
    %7140 = vmatpush.bf16.msra.mxu0 %v7062
    %7141 = vmatpush.bf16.msra.mxu0 %v7060
    %7142 = vmatpush.bf16.msra.mxu0 %v7058
    %7143 = vmatpush.bf16.msra.mxu0 %v7056
    %7144 = vmatmul.bf16.gmra.mxu0 %v6916
    %v7145 = vpop.f32.mrf.mxu0
    %v7146 = vadd.f32 %v7133, %v7145
    %v7147 = vpop.f32.mrf.mxu0
    %7148 = vdwg.mxu0
    %7149 = vmatpush.bf16.msra.mxu0 0
    %7150 = vmatpush.bf16.msra.mxu0 0
    %7151 = vmatpush.bf16.msra.mxu0 0
    %7152 = vmatpush.bf16.msra.mxu0 0
    %7153 = vmatpush.bf16.msra.mxu0 %v7078
    %7154 = vmatpush.bf16.msra.mxu0 %v7076
    %7155 = vmatpush.bf16.msra.mxu0 %v7074
    %7156 = vmatpush.bf16.msra.mxu0 %v7072
    %7157 = vmatmul.bf16.gmra.mxu0 %v7121
    %v7158 = vpop.f32.mrf.mxu0
    %v7159 = vadd.f32 %v7146, %v7158
    %v7160 = vpop.f32.mrf.mxu0
    %7161 = vdwg.mxu0
    %7162 = vmatpush.bf16.msra.mxu0 %v7055
    %7163 = vmatpush.bf16.msra.mxu0 %v7053
    %7164 = vmatpush.bf16.msra.mxu0 %v7051
    %7165 = vmatpush.bf16.msra.mxu0 %v7049
    %7166 = vmatpush.bf16.msra.mxu0 %v7047
    %7167 = vmatpush.bf16.msra.mxu0 %v7045
    %7168 = vmatpush.bf16.msra.mxu0 %v7043
    %7169 = vmatpush.bf16.msra.mxu0 %v7041
    %7170 = vmatmul.bf16.gmra.mxu0 %v6915
    %v7171 = vpop.f32.mrf.mxu0
    %v7172 = vadd.f32 0.0, %v7171
    %v7173 = vpop.f32.mrf.mxu0
    %7174 = vdwg.mxu0
    %7175 = vmatpush.bf16.msra.mxu0 %v7071
    %7176 = vmatpush.bf16.msra.mxu0 %v7069
    %7177 = vmatpush.bf16.msra.mxu0 %v7067
    %7178 = vmatpush.bf16.msra.mxu0 %v7065
    %7179 = vmatpush.bf16.msra.mxu0 %v7063
    %7180 = vmatpush.bf16.msra.mxu0 %v7061
    %7181 = vmatpush.bf16.msra.mxu0 %v7059
    %7182 = vmatpush.bf16.msra.mxu0 %v7057
    %7183 = vmatmul.bf16.gmra.mxu0 %v6916
    %v7184 = vpop.f32.mrf.mxu0
    %v7185 = vadd.f32 %v7172, %v7184
    %v7186 = vpop.f32.mrf.mxu0
    %7187 = vdwg.mxu0
    %7188 = vmatpush.bf16.msra.mxu0 0
    %7189 = vmatpush.bf16.msra.mxu0 0
    %7190 = vmatpush.bf16.msra.mxu0 0
    %7191 = vmatpush.bf16.msra.mxu0 0
    %7192 = vmatpush.bf16.msra.mxu0 %v7079
    %7193 = vmatpush.bf16.msra.mxu0 %v7077
    %7194 = vmatpush.bf16.msra.mxu0 %v7075
    %7195 = vmatpush.bf16.msra.mxu0 %v7073
    %7196 = vmatmul.bf16.gmra.mxu0 %v7121
    %v7197 = vpop.f32.mrf.mxu0
    %v7198 = vadd.f32 %v7185, %v7197
    %v7199 = vpop.f32.mrf.mxu0
    %7200 = vdwg.mxu0
    %v7201 = vadd.f32 %v6866, %v7159
    %v7202 = vadd.f32 %v6867, %v7198
    %v7203 = vld [vmem:[#allocation3] sm:$0x22]
    %v7204 = vld [vmem:[#allocation3 + $0x8] sm:$0x2]
    %v7205 = vld [vmem:[#allocation3 + $0xc] sm:$0x22]
    %v7206 = vld [vmem:[#allocation3 + $0x14] sm:$0x2]
    %s7207 = scalar_lea.vmem %s4, 640
    %v7208 = vld [vmem:[%s7207] sm:$0xff]
    %v7209 = vld [vmem:[%s7207 + $0x8] sm:$0xff]
    %v7210 = vld [vmem:[%s7207 + $0x10] sm:$0xff]
    %v7211 = vld [vmem:[%s7207 + $0x18] sm:$0xff]
    %v7212 = vld [vmem:[%s7207 + $0x20] sm:$0xff]
    %v7213 = vld [vmem:[%s7207 + $0x28] sm:$0xff]
    %v7214 = vld [vmem:[%s7207 + $0x30] sm:$0xff]
    %v7215 = vld [vmem:[%s7207 + $0x38] sm:$0xff]
    %v7216 = vld [vmem:[%s7207 + $0x40] sm:$0xff]
    %v7217 = vld [vmem:[%s7207 + $0x48] sm:$0xff]
    %v7218 = vld [vmem:[%s7207 + $0x50] sm:$0xff]
    %v7219 = vld [vmem:[%s7207 + $0x58] sm:$0xff]
    %v7220 = vld [vmem:[%s7207 + $0x60] sm:$0xff]
    %v7221 = vld [vmem:[%s7207 + $0x68] sm:$0xff]
    %v7222 = vld [vmem:[%s7207 + $0x70] sm:$0xff]
    %v7223 = vld [vmem:[%s7207 + $0x78] sm:$0xff]
    %v7224 = vld [vmem:[%s7207 + $0x80] sm:$0xff]
    %v7225 = vld [vmem:[%s7207 + $0x88] sm:$0xff]
    %v7226 = vld [vmem:[%s7207 + $0x90] sm:$0xff]
    %v7227 = vld [vmem:[%s7207 + $0x98] sm:$0xff]
    %v7228 = vld [vmem:[%s7207 + $0xa0] sm:$0xff]
    %v7229 = vld [vmem:[%s7207 + $0xa8] sm:$0xff]
    %v7230 = vld [vmem:[%s7207 + $0xb0] sm:$0xff]
    %v7231 = vld [vmem:[%s7207 + $0xb8] sm:$0xff]
    %v7232 = vld [vmem:[%s7207 + $0xc0] sm:$0xff]
    %v7233 = vld [vmem:[%s7207 + $0xc8] sm:$0xff]
    %v7234 = vld [vmem:[%s7207 + $0xd0] sm:$0xff]
    %v7235 = vld [vmem:[%s7207 + $0xd8] sm:$0xff]
    %v7236 = vld [vmem:[%s7207 + $0xe0] sm:$0xff]
    %v7237 = vld [vmem:[%s7207 + $0xe8] sm:$0xff]
    %v7238 = vld [vmem:[%s7207 + $0xf0] sm:$0xff]
    %v7239 = vld [vmem:[%s7207 + $0xf8] sm:$0xff]
    %v7240 = vld [vmem:[%s7207 + $0x100] sm:$0xff]
    %v7241 = vld [vmem:[%s7207 + $0x108] sm:$0xff]
    %v7242 = vld [vmem:[%s7207 + $0x110] sm:$0xff]
    %v7243 = vld [vmem:[%s7207 + $0x118] sm:$0xff]
    %v7244 = vld [vmem:[%s7207 + $0x120] sm:$0xff]
    %v7245 = vld [vmem:[%s7207 + $0x128] sm:$0xff]
    %v7246 = vld [vmem:[%s7207 + $0x130] sm:$0xff]
    %v7247 = vld [vmem:[%s7207 + $0x138] sm:$0xff]
    %v7252 = vunpack.c.l.b16 %v7203
    %v7253 = vunpack.c.h.b16 %v7203
    %v7254 = vunpack.c.l.b16 %v7204
    %v7255 = vunpack.c.l.b16 %v7205
    %v7256 = vunpack.c.h.b16 %v7205
    %v7257 = vunpack.c.l.b16 %v7206
    %v7258 = vpack.c.b16 %v7252, %v7252
    %v7259 = vpack.c.b16 %v7253, %v7253
    %v7260 = vpack.c.b16 %v7254, %v7254
    %v7261 = vpack.c.b16 %v7255, %v7255
    %v7262 = vpack.c.b16 %v7256, %v7256
    %v7263 = vpack.c.b16 %v7257, %v7257
    %v7264 = vunpack.c.l.b16 %v7258
    %v7265 = vunpack.c.l.b16 %v7259
    %v7266 = vunpack.c.l.b16 %v7260
    %v7267 = vunpack.c.l.b16 %v7261
    %v7268 = vunpack.c.l.b16 %v7262
    %v7269 = vunpack.c.l.b16 %v7263
    %v7270 = vrot.slane %v7264, 2
    %v7271 = vrot.slane %v7267, 1
    %v7272 = vsel %vm6568, %v7271, %v7270
    %v7273 = vrot.slane %v7265, 2
    %v7274 = vrot.slane %v7268, 1
    %v7275 = vsel %vm6568, %v7274, %v7273
    %v7276 = vrot.slane %v7266, 2
    %v7277 = vrot.slane %v7269, 1
    %v7278 = vsel %vm6568, %v7277, %v7276
    %v7279 = vpack.c.b16 %v7272, %v7272
    %v7280 = vpack.c.b16 %v7275, %v7275
    %v7281 = vpack.c.b16 %v7278, %v7278
    %v7324 = vunpack.c.l.b16 %v7208
    %v7325 = vunpack.c.h.b16 %v7208
    %v7326 = vunpack.c.l.b16 %v7209
    %v7327 = vunpack.c.h.b16 %v7209
    %v7328 = vunpack.c.l.b16 %v7210
    %v7329 = vunpack.c.h.b16 %v7210
    %v7330 = vunpack.c.l.b16 %v7211
    %v7331 = vunpack.c.h.b16 %v7211
    %v7332 = vunpack.c.l.b16 %v7212
    %v7333 = vunpack.c.h.b16 %v7212
    %v7334 = vunpack.c.l.b16 %v7213
    %v7335 = vunpack.c.h.b16 %v7213
    %v7336 = vunpack.c.l.b16 %v7214
    %v7337 = vunpack.c.h.b16 %v7214
    %v7338 = vunpack.c.l.b16 %v7215
    %v7339 = vunpack.c.h.b16 %v7215
    %v7340 = vunpack.c.l.b16 %v7216
    %v7341 = vunpack.c.h.b16 %v7216
    %v7342 = vunpack.c.l.b16 %v7217
    %v7343 = vunpack.c.h.b16 %v7217
    %v7344 = vunpack.c.l.b16 %v7218
    %v7345 = vunpack.c.h.b16 %v7218
    %v7346 = vunpack.c.l.b16 %v7219
    %v7347 = vunpack.c.h.b16 %v7219
    %v7348 = vunpack.c.l.b16 %v7220
    %v7349 = vunpack.c.h.b16 %v7220
    %v7350 = vunpack.c.l.b16 %v7221
    %v7351 = vunpack.c.h.b16 %v7221
    %v7352 = vunpack.c.l.b16 %v7222
    %v7353 = vunpack.c.h.b16 %v7222
    %v7354 = vunpack.c.l.b16 %v7223
    %v7355 = vunpack.c.h.b16 %v7223
    %v7356 = vunpack.c.l.b16 %v7224
    %v7357 = vunpack.c.h.b16 %v7224
    %v7358 = vunpack.c.l.b16 %v7225
    %v7359 = vunpack.c.h.b16 %v7225
    %v7360 = vunpack.c.l.b16 %v7226
    %v7361 = vunpack.c.h.b16 %v7226
    %v7362 = vunpack.c.l.b16 %v7227
    %v7363 = vunpack.c.h.b16 %v7227
    %v7364 = vunpack.c.l.b16 %v7228
    %v7365 = vunpack.c.h.b16 %v7228
    %v7366 = vunpack.c.l.b16 %v7229
    %v7367 = vunpack.c.h.b16 %v7229
    %v7368 = vunpack.c.l.b16 %v7230
    %v7369 = vunpack.c.h.b16 %v7230
    %v7370 = vunpack.c.l.b16 %v7231
    %v7371 = vunpack.c.h.b16 %v7231
    %v7372 = vunpack.c.l.b16 %v7232
    %v7373 = vunpack.c.h.b16 %v7232
    %v7374 = vunpack.c.l.b16 %v7233
    %v7375 = vunpack.c.h.b16 %v7233
    %v7376 = vunpack.c.l.b16 %v7234
    %v7377 = vunpack.c.h.b16 %v7234
    %v7378 = vunpack.c.l.b16 %v7235
    %v7379 = vunpack.c.h.b16 %v7235
    %v7380 = vunpack.c.l.b16 %v7236
    %v7381 = vunpack.c.h.b16 %v7236
    %v7382 = vunpack.c.l.b16 %v7237
    %v7383 = vunpack.c.h.b16 %v7237
    %v7384 = vunpack.c.l.b16 %v7238
    %v7385 = vunpack.c.h.b16 %v7238
    %v7386 = vunpack.c.l.b16 %v7239
    %v7387 = vunpack.c.h.b16 %v7239
    %v7388 = vunpack.c.l.b16 %v7240
    %v7389 = vunpack.c.h.b16 %v7240
    %v7390 = vunpack.c.l.b16 %v7241
    %v7391 = vunpack.c.h.b16 %v7241
    %v7392 = vunpack.c.l.b16 %v7242
    %v7393 = vunpack.c.h.b16 %v7242
    %v7394 = vunpack.c.l.b16 %v7243
    %v7395 = vunpack.c.h.b16 %v7243
    %v7396 = vunpack.c.l.b16 %v7244
    %v7397 = vunpack.c.h.b16 %v7244
    %v7398 = vunpack.c.l.b16 %v7245
    %v7399 = vunpack.c.h.b16 %v7245
    %v7400 = vunpack.c.l.b16 %v7246
    %v7401 = vunpack.c.h.b16 %v7246
    %v7402 = vunpack.c.l.b16 %v7247
    %v7403 = vunpack.c.h.b16 %v7247
    %v7404 = vpack.c.b16 %v7326, %v7324
    %v7405 = vpack.c.b16 %v7327, %v7325
    %v7406 = vpack.c.b16 %v7330, %v7328
    %v7407 = vpack.c.b16 %v7331, %v7329
    %v7408 = vpack.c.b16 %v7334, %v7332
    %v7409 = vpack.c.b16 %v7335, %v7333
    %v7410 = vpack.c.b16 %v7338, %v7336
    %v7411 = vpack.c.b16 %v7339, %v7337
    %v7412 = vpack.c.b16 %v7342, %v7340
    %v7413 = vpack.c.b16 %v7343, %v7341
    %v7414 = vpack.c.b16 %v7346, %v7344
    %v7415 = vpack.c.b16 %v7347, %v7345
    %v7416 = vpack.c.b16 %v7350, %v7348
    %v7417 = vpack.c.b16 %v7351, %v7349
    %v7418 = vpack.c.b16 %v7354, %v7352
    %v7419 = vpack.c.b16 %v7355, %v7353
    %v7420 = vpack.c.b16 %v7358, %v7356
    %v7421 = vpack.c.b16 %v7359, %v7357
    %v7422 = vpack.c.b16 %v7362, %v7360
    %v7423 = vpack.c.b16 %v7363, %v7361
    %v7424 = vpack.c.b16 %v7366, %v7364
    %v7425 = vpack.c.b16 %v7367, %v7365
    %v7426 = vpack.c.b16 %v7370, %v7368
    %v7427 = vpack.c.b16 %v7371, %v7369
    %v7428 = vpack.c.b16 %v7374, %v7372
    %v7429 = vpack.c.b16 %v7375, %v7373
    %v7430 = vpack.c.b16 %v7378, %v7376
    %v7431 = vpack.c.b16 %v7379, %v7377
    %v7432 = vpack.c.b16 %v7382, %v7380
    %v7433 = vpack.c.b16 %v7383, %v7381
    %v7434 = vpack.c.b16 %v7386, %v7384
    %v7435 = vpack.c.b16 %v7387, %v7385
    %v7436 = vpack.c.b16 %v7390, %v7388
    %v7437 = vpack.c.b16 %v7391, %v7389
    %v7438 = vpack.c.b16 %v7394, %v7392
    %v7439 = vpack.c.b16 %v7395, %v7393
    %v7440 = vpack.c.b16 %v7398, %v7396
    %v7441 = vpack.c.b16 %v7399, %v7397
    %v7442 = vpack.c.b16 %v7402, %v7400
    %v7443 = vpack.c.b16 %v7403, %v7401
    %v7485 = vsel %vm6779, %v7281, 0
    %7487 = vmatpush.bf16.msra.mxu0 %v7418
    %7488 = vmatpush.bf16.msra.mxu0 %v7416
    %7489 = vmatpush.bf16.msra.mxu0 %v7414
    %7490 = vmatpush.bf16.msra.mxu0 %v7412
    %7491 = vmatpush.bf16.msra.mxu0 %v7410
    %7492 = vmatpush.bf16.msra.mxu0 %v7408
    %7493 = vmatpush.bf16.msra.mxu0 %v7406
    %7494 = vmatpush.bf16.msra.mxu0 %v7404
    %7495 = vmatmul.bf16.gmra.mxu0 %v7279
    %v7496 = vpop.f32.mrf.mxu0
    %v7497 = vadd.f32 0.0, %v7496
    %v7498 = vpop.f32.mrf.mxu0
    %7499 = vdwg.mxu0
    %7500 = vmatpush.bf16.msra.mxu0 %v7434
    %7501 = vmatpush.bf16.msra.mxu0 %v7432
    %7502 = vmatpush.bf16.msra.mxu0 %v7430
    %7503 = vmatpush.bf16.msra.mxu0 %v7428
    %7504 = vmatpush.bf16.msra.mxu0 %v7426
    %7505 = vmatpush.bf16.msra.mxu0 %v7424
    %7506 = vmatpush.bf16.msra.mxu0 %v7422
    %7507 = vmatpush.bf16.msra.mxu0 %v7420
    %7508 = vmatmul.bf16.gmra.mxu0 %v7280
    %v7509 = vpop.f32.mrf.mxu0
    %v7510 = vadd.f32 %v7497, %v7509
    %v7511 = vpop.f32.mrf.mxu0
    %7512 = vdwg.mxu0
    %7513 = vmatpush.bf16.msra.mxu0 0
    %7514 = vmatpush.bf16.msra.mxu0 0
    %7515 = vmatpush.bf16.msra.mxu0 0
    %7516 = vmatpush.bf16.msra.mxu0 0
    %7517 = vmatpush.bf16.msra.mxu0 %v7442
    %7518 = vmatpush.bf16.msra.mxu0 %v7440
    %7519 = vmatpush.bf16.msra.mxu0 %v7438
    %7520 = vmatpush.bf16.msra.mxu0 %v7436
    %7521 = vmatmul.bf16.gmra.mxu0 %v7485
    %v7522 = vpop.f32.mrf.mxu0
    %v7523 = vadd.f32 %v7510, %v7522
    %v7524 = vpop.f32.mrf.mxu0
    %7525 = vdwg.mxu0
    %7526 = vmatpush.bf16.msra.mxu0 %v7419
    %7527 = vmatpush.bf16.msra.mxu0 %v7417
    %7528 = vmatpush.bf16.msra.mxu0 %v7415
    %7529 = vmatpush.bf16.msra.mxu0 %v7413
    %7530 = vmatpush.bf16.msra.mxu0 %v7411
    %7531 = vmatpush.bf16.msra.mxu0 %v7409
    %7532 = vmatpush.bf16.msra.mxu0 %v7407
    %7533 = vmatpush.bf16.msra.mxu0 %v7405
    %7534 = vmatmul.bf16.gmra.mxu0 %v7279
    %v7535 = vpop.f32.mrf.mxu0
    %v7536 = vadd.f32 0.0, %v7535
    %v7537 = vpop.f32.mrf.mxu0
    %7538 = vdwg.mxu0
    %7539 = vmatpush.bf16.msra.mxu0 %v7435
    %7540 = vmatpush.bf16.msra.mxu0 %v7433
    %7541 = vmatpush.bf16.msra.mxu0 %v7431
    %7542 = vmatpush.bf16.msra.mxu0 %v7429
    %7543 = vmatpush.bf16.msra.mxu0 %v7427
    %7544 = vmatpush.bf16.msra.mxu0 %v7425
    %7545 = vmatpush.bf16.msra.mxu0 %v7423
    %7546 = vmatpush.bf16.msra.mxu0 %v7421
    %7547 = vmatmul.bf16.gmra.mxu0 %v7280
    %v7548 = vpop.f32.mrf.mxu0
    %v7549 = vadd.f32 %v7536, %v7548
    %v7550 = vpop.f32.mrf.mxu0
    %7551 = vdwg.mxu0
    %7552 = vmatpush.bf16.msra.mxu0 0
    %7553 = vmatpush.bf16.msra.mxu0 0
    %7554 = vmatpush.bf16.msra.mxu0 0
    %7555 = vmatpush.bf16.msra.mxu0 0
    %7556 = vmatpush.bf16.msra.mxu0 %v7443
    %7557 = vmatpush.bf16.msra.mxu0 %v7441
    %7558 = vmatpush.bf16.msra.mxu0 %v7439
    %7559 = vmatpush.bf16.msra.mxu0 %v7437
    %7560 = vmatmul.bf16.gmra.mxu0 %v7485
    %v7561 = vpop.f32.mrf.mxu0
    %v7562 = vadd.f32 %v7549, %v7561
    %v7563 = vpop.f32.mrf.mxu0
    %7564 = vdwg.mxu0
    %v7565 = vadd.f32 %v7201, %v7523
    %v7566 = vadd.f32 %v7202, %v7562
    %s7567 = scalar_lea.vmem %s4, 960
    %v7568 = vld [vmem:[%s7567] sm:$0xff]
    %v7569 = vld [vmem:[%s7567 + $0x8] sm:$0xff]
    %v7570 = vld [vmem:[%s7567 + $0x10] sm:$0xff]
    %v7571 = vld [vmem:[%s7567 + $0x18] sm:$0xff]
    %v7572 = vld [vmem:[%s7567 + $0x20] sm:$0xff]
    %v7573 = vld [vmem:[%s7567 + $0x28] sm:$0xff]
    %v7574 = vld [vmem:[%s7567 + $0x30] sm:$0xff]
    %v7575 = vld [vmem:[%s7567 + $0x38] sm:$0xff]
    %v7576 = vld [vmem:[%s7567 + $0x40] sm:$0xff]
    %v7577 = vld [vmem:[%s7567 + $0x48] sm:$0xff]
    %v7578 = vld [vmem:[%s7567 + $0x50] sm:$0xff]
    %v7579 = vld [vmem:[%s7567 + $0x58] sm:$0xff]
    %v7580 = vld [vmem:[%s7567 + $0x60] sm:$0xff]
    %v7581 = vld [vmem:[%s7567 + $0x68] sm:$0xff]
    %v7582 = vld [vmem:[%s7567 + $0x70] sm:$0xff]
    %v7583 = vld [vmem:[%s7567 + $0x78] sm:$0xff]
    %v7584 = vld [vmem:[%s7567 + $0x80] sm:$0xff]
    %v7585 = vld [vmem:[%s7567 + $0x88] sm:$0xff]
    %v7586 = vld [vmem:[%s7567 + $0x90] sm:$0xff]
    %v7587 = vld [vmem:[%s7567 + $0x98] sm:$0xff]
    %v7588 = vld [vmem:[%s7567 + $0xa0] sm:$0xff]
    %v7589 = vld [vmem:[%s7567 + $0xa8] sm:$0xff]
    %v7590 = vld [vmem:[%s7567 + $0xb0] sm:$0xff]
    %v7591 = vld [vmem:[%s7567 + $0xb8] sm:$0xff]
    %v7592 = vld [vmem:[%s7567 + $0xc0] sm:$0xff]
    %v7593 = vld [vmem:[%s7567 + $0xc8] sm:$0xff]
    %v7594 = vld [vmem:[%s7567 + $0xd0] sm:$0xff]
    %v7595 = vld [vmem:[%s7567 + $0xd8] sm:$0xff]
    %v7596 = vld [vmem:[%s7567 + $0xe0] sm:$0xff]
    %v7597 = vld [vmem:[%s7567 + $0xe8] sm:$0xff]
    %v7598 = vld [vmem:[%s7567 + $0xf0] sm:$0xff]
    %v7599 = vld [vmem:[%s7567 + $0xf8] sm:$0xff]
    %v7600 = vld [vmem:[%s7567 + $0x100] sm:$0xff]
    %v7601 = vld [vmem:[%s7567 + $0x108] sm:$0xff]
    %v7602 = vld [vmem:[%s7567 + $0x110] sm:$0xff]
    %v7603 = vld [vmem:[%s7567 + $0x118] sm:$0xff]
    %v7604 = vld [vmem:[%s7567 + $0x120] sm:$0xff]
    %v7605 = vld [vmem:[%s7567 + $0x128] sm:$0xff]
    %v7606 = vld [vmem:[%s7567 + $0x130] sm:$0xff]
    %v7607 = vld [vmem:[%s7567 + $0x138] sm:$0xff]
    %v7608 = vrot.slane %v7264, 3
    %v7609 = vrot.slane %v7267, 2
    %v7610 = vsel %vm6568, %v7609, %v7608
    %v7611 = vrot.slane %v7265, 3
    %v7612 = vrot.slane %v7268, 2
    %v7613 = vsel %vm6568, %v7612, %v7611
    %v7614 = vrot.slane %v7266, 3
    %v7615 = vrot.slane %v7269, 2
    %v7616 = vsel %vm6568, %v7615, %v7614
    %v7617 = vpack.c.b16 %v7610, %v7610
    %v7618 = vpack.c.b16 %v7613, %v7613
    %v7619 = vpack.c.b16 %v7616, %v7616
    %v7662 = vunpack.c.l.b16 %v7568
    %v7663 = vunpack.c.h.b16 %v7568
    %v7664 = vunpack.c.l.b16 %v7569
    %v7665 = vunpack.c.h.b16 %v7569
    %v7666 = vunpack.c.l.b16 %v7570
    %v7667 = vunpack.c.h.b16 %v7570
    %v7668 = vunpack.c.l.b16 %v7571
    %v7669 = vunpack.c.h.b16 %v7571
    %v7670 = vunpack.c.l.b16 %v7572
    %v7671 = vunpack.c.h.b16 %v7572
    %v7672 = vunpack.c.l.b16 %v7573
    %v7673 = vunpack.c.h.b16 %v7573
    %v7674 = vunpack.c.l.b16 %v7574
    %v7675 = vunpack.c.h.b16 %v7574
    %v7676 = vunpack.c.l.b16 %v7575
    %v7677 = vunpack.c.h.b16 %v7575
    %v7678 = vunpack.c.l.b16 %v7576
    %v7679 = vunpack.c.h.b16 %v7576
    %v7680 = vunpack.c.l.b16 %v7577
    %v7681 = vunpack.c.h.b16 %v7577
    %v7682 = vunpack.c.l.b16 %v7578
    %v7683 = vunpack.c.h.b16 %v7578
    %v7684 = vunpack.c.l.b16 %v7579
    %v7685 = vunpack.c.h.b16 %v7579
    %v7686 = vunpack.c.l.b16 %v7580
    %v7687 = vunpack.c.h.b16 %v7580
    %v7688 = vunpack.c.l.b16 %v7581
    %v7689 = vunpack.c.h.b16 %v7581
    %v7690 = vunpack.c.l.b16 %v7582
    %v7691 = vunpack.c.h.b16 %v7582
    %v7692 = vunpack.c.l.b16 %v7583
    %v7693 = vunpack.c.h.b16 %v7583
    %v7694 = vunpack.c.l.b16 %v7584
    %v7695 = vunpack.c.h.b16 %v7584
    %v7696 = vunpack.c.l.b16 %v7585
    %v7697 = vunpack.c.h.b16 %v7585
    %v7698 = vunpack.c.l.b16 %v7586
    %v7699 = vunpack.c.h.b16 %v7586
    %v7700 = vunpack.c.l.b16 %v7587
    %v7701 = vunpack.c.h.b16 %v7587
    %v7702 = vunpack.c.l.b16 %v7588
    %v7703 = vunpack.c.h.b16 %v7588
    %v7704 = vunpack.c.l.b16 %v7589
    %v7705 = vunpack.c.h.b16 %v7589
    %v7706 = vunpack.c.l.b16 %v7590
    %v7707 = vunpack.c.h.b16 %v7590
    %v7708 = vunpack.c.l.b16 %v7591
    %v7709 = vunpack.c.h.b16 %v7591
    %v7710 = vunpack.c.l.b16 %v7592
    %v7711 = vunpack.c.h.b16 %v7592
    %v7712 = vunpack.c.l.b16 %v7593
    %v7713 = vunpack.c.h.b16 %v7593
    %v7714 = vunpack.c.l.b16 %v7594
    %v7715 = vunpack.c.h.b16 %v7594
    %v7716 = vunpack.c.l.b16 %v7595
    %v7717 = vunpack.c.h.b16 %v7595
    %v7718 = vunpack.c.l.b16 %v7596
    %v7719 = vunpack.c.h.b16 %v7596
    %v7720 = vunpack.c.l.b16 %v7597
    %v7721 = vunpack.c.h.b16 %v7597
    %v7722 = vunpack.c.l.b16 %v7598
    %v7723 = vunpack.c.h.b16 %v7598
    %v7724 = vunpack.c.l.b16 %v7599
    %v7725 = vunpack.c.h.b16 %v7599
    %v7726 = vunpack.c.l.b16 %v7600
    %v7727 = vunpack.c.h.b16 %v7600
    %v7728 = vunpack.c.l.b16 %v7601
    %v7729 = vunpack.c.h.b16 %v7601
    %v7730 = vunpack.c.l.b16 %v7602
    %v7731 = vunpack.c.h.b16 %v7602
    %v7732 = vunpack.c.l.b16 %v7603
    %v7733 = vunpack.c.h.b16 %v7603
    %v7734 = vunpack.c.l.b16 %v7604
    %v7735 = vunpack.c.h.b16 %v7604
    %v7736 = vunpack.c.l.b16 %v7605
    %v7737 = vunpack.c.h.b16 %v7605
    %v7738 = vunpack.c.l.b16 %v7606
    %v7739 = vunpack.c.h.b16 %v7606
    %v7740 = vunpack.c.l.b16 %v7607
    %v7741 = vunpack.c.h.b16 %v7607
    %v7742 = vpack.c.b16 %v7664, %v7662
    %v7743 = vpack.c.b16 %v7665, %v7663
    %v7744 = vpack.c.b16 %v7668, %v7666
    %v7745 = vpack.c.b16 %v7669, %v7667
    %v7746 = vpack.c.b16 %v7672, %v7670
    %v7747 = vpack.c.b16 %v7673, %v7671
    %v7748 = vpack.c.b16 %v7676, %v7674
    %v7749 = vpack.c.b16 %v7677, %v7675
    %v7750 = vpack.c.b16 %v7680, %v7678
    %v7751 = vpack.c.b16 %v7681, %v7679
    %v7752 = vpack.c.b16 %v7684, %v7682
    %v7753 = vpack.c.b16 %v7685, %v7683
    %v7754 = vpack.c.b16 %v7688, %v7686
    %v7755 = vpack.c.b16 %v7689, %v7687
    %v7756 = vpack.c.b16 %v7692, %v7690
    %v7757 = vpack.c.b16 %v7693, %v7691
    %v7758 = vpack.c.b16 %v7696, %v7694
    %v7759 = vpack.c.b16 %v7697, %v7695
    %v7760 = vpack.c.b16 %v7700, %v7698
    %v7761 = vpack.c.b16 %v7701, %v7699
    %v7762 = vpack.c.b16 %v7704, %v7702
    %v7763 = vpack.c.b16 %v7705, %v7703
    %v7764 = vpack.c.b16 %v7708, %v7706
    %v7765 = vpack.c.b16 %v7709, %v7707
    %v7766 = vpack.c.b16 %v7712, %v7710
    %v7767 = vpack.c.b16 %v7713, %v7711
    %v7768 = vpack.c.b16 %v7716, %v7714
    %v7769 = vpack.c.b16 %v7717, %v7715
    %v7770 = vpack.c.b16 %v7720, %v7718
    %v7771 = vpack.c.b16 %v7721, %v7719
    %v7772 = vpack.c.b16 %v7724, %v7722
    %v7773 = vpack.c.b16 %v7725, %v7723
    %v7774 = vpack.c.b16 %v7728, %v7726
    %v7775 = vpack.c.b16 %v7729, %v7727
    %v7776 = vpack.c.b16 %v7732, %v7730
    %v7777 = vpack.c.b16 %v7733, %v7731
    %v7778 = vpack.c.b16 %v7736, %v7734
    %v7779 = vpack.c.b16 %v7737, %v7735
    %v7780 = vpack.c.b16 %v7740, %v7738
    %v7781 = vpack.c.b16 %v7741, %v7739
    %v7823 = vsel %vm6779, %v7619, 0
    %7825 = vmatpush.bf16.msra.mxu0 %v7756
    %7826 = vmatpush.bf16.msra.mxu0 %v7754
    %7827 = vmatpush.bf16.msra.mxu0 %v7752
    %7828 = vmatpush.bf16.msra.mxu0 %v7750
    %7829 = vmatpush.bf16.msra.mxu0 %v7748
    %7830 = vmatpush.bf16.msra.mxu0 %v7746
    %7831 = vmatpush.bf16.msra.mxu0 %v7744
    %7832 = vmatpush.bf16.msra.mxu0 %v7742
    %7833 = vmatmul.bf16.gmra.mxu0 %v7617
    %v7834 = vpop.f32.mrf.mxu0
    %v7835 = vadd.f32 0.0, %v7834
    %v7836 = vpop.f32.mrf.mxu0
    %7837 = vdwg.mxu0
    %7838 = vmatpush.bf16.msra.mxu0 %v7772
    %7839 = vmatpush.bf16.msra.mxu0 %v7770
    %7840 = vmatpush.bf16.msra.mxu0 %v7768
    %7841 = vmatpush.bf16.msra.mxu0 %v7766
    %7842 = vmatpush.bf16.msra.mxu0 %v7764
    %7843 = vmatpush.bf16.msra.mxu0 %v7762
    %7844 = vmatpush.bf16.msra.mxu0 %v7760
    %7845 = vmatpush.bf16.msra.mxu0 %v7758
    %7846 = vmatmul.bf16.gmra.mxu0 %v7618
    %v7847 = vpop.f32.mrf.mxu0
    %v7848 = vadd.f32 %v7835, %v7847
    %v7849 = vpop.f32.mrf.mxu0
    %7850 = vdwg.mxu0
    %7851 = vmatpush.bf16.msra.mxu0 0
    %7852 = vmatpush.bf16.msra.mxu0 0
    %7853 = vmatpush.bf16.msra.mxu0 0
    %7854 = vmatpush.bf16.msra.mxu0 0
    %7855 = vmatpush.bf16.msra.mxu0 %v7780
    %7856 = vmatpush.bf16.msra.mxu0 %v7778
    %7857 = vmatpush.bf16.msra.mxu0 %v7776
    %7858 = vmatpush.bf16.msra.mxu0 %v7774
    %7859 = vmatmul.bf16.gmra.mxu0 %v7823
    %v7860 = vpop.f32.mrf.mxu0
    %v7861 = vadd.f32 %v7848, %v7860
    %v7862 = vpop.f32.mrf.mxu0
    %7863 = vdwg.mxu0
    %7864 = vmatpush.bf16.msra.mxu0 %v7757
    %7865 = vmatpush.bf16.msra.mxu0 %v7755
    %7866 = vmatpush.bf16.msra.mxu0 %v7753
    %7867 = vmatpush.bf16.msra.mxu0 %v7751
    %7868 = vmatpush.bf16.msra.mxu0 %v7749
    %7869 = vmatpush.bf16.msra.mxu0 %v7747
    %7870 = vmatpush.bf16.msra.mxu0 %v7745
    %7871 = vmatpush.bf16.msra.mxu0 %v7743
    %7872 = vmatmul.bf16.gmra.mxu0 %v7617
    %v7873 = vpop.f32.mrf.mxu0
    %v7874 = vadd.f32 0.0, %v7873
    %v7875 = vpop.f32.mrf.mxu0
    %7876 = vdwg.mxu0
    %7877 = vmatpush.bf16.msra.mxu0 %v7773
    %7878 = vmatpush.bf16.msra.mxu0 %v7771
    %7879 = vmatpush.bf16.msra.mxu0 %v7769
    %7880 = vmatpush.bf16.msra.mxu0 %v7767
    %7881 = vmatpush.bf16.msra.mxu0 %v7765
    %7882 = vmatpush.bf16.msra.mxu0 %v7763
    %7883 = vmatpush.bf16.msra.mxu0 %v7761
    %7884 = vmatpush.bf16.msra.mxu0 %v7759
    %7885 = vmatmul.bf16.gmra.mxu0 %v7618
    %v7886 = vpop.f32.mrf.mxu0
    %v7887 = vadd.f32 %v7874, %v7886
    %v7888 = vpop.f32.mrf.mxu0
    %7889 = vdwg.mxu0
    %7890 = vmatpush.bf16.msra.mxu0 0
    %7891 = vmatpush.bf16.msra.mxu0 0
    %7892 = vmatpush.bf16.msra.mxu0 0
    %7893 = vmatpush.bf16.msra.mxu0 0
    %7894 = vmatpush.bf16.msra.mxu0 %v7781
    %7895 = vmatpush.bf16.msra.mxu0 %v7779
    %7896 = vmatpush.bf16.msra.mxu0 %v7777
    %7897 = vmatpush.bf16.msra.mxu0 %v7775
    %7898 = vmatmul.bf16.gmra.mxu0 %v7823
    %v7899 = vpop.f32.mrf.mxu0
    %v7900 = vadd.f32 %v7887, %v7899
    %v7901 = vpop.f32.mrf.mxu0
    %7902 = vdwg.mxu0
    %v7903 = vadd.f32 %v7565, %v7861
    %v7904 = vadd.f32 %v7566, %v7900
    %v7905 = vld [vmem:[#allocation3] sm:$0x44]
    %v7906 = vld [vmem:[#allocation3 + $0x8] sm:$0x4]
    %v7907 = vld [vmem:[#allocation3 + $0xc] sm:$0x44]
    %v7908 = vld [vmem:[#allocation3 + $0x14] sm:$0x4]
    %s7909 = scalar_lea.vmem %s4, 1280
    %v7910 = vld [vmem:[%s7909] sm:$0xff]
    %v7911 = vld [vmem:[%s7909 + $0x8] sm:$0xff]
    %v7912 = vld [vmem:[%s7909 + $0x10] sm:$0xff]
    %v7913 = vld [vmem:[%s7909 + $0x18] sm:$0xff]
    %v7914 = vld [vmem:[%s7909 + $0x20] sm:$0xff]
    %v7915 = vld [vmem:[%s7909 + $0x28] sm:$0xff]
    %v7916 = vld [vmem:[%s7909 + $0x30] sm:$0xff]
    %v7917 = vld [vmem:[%s7909 + $0x38] sm:$0xff]
    %v7918 = vld [vmem:[%s7909 + $0x40] sm:$0xff]
    %v7919 = vld [vmem:[%s7909 + $0x48] sm:$0xff]
    %v7920 = vld [vmem:[%s7909 + $0x50] sm:$0xff]
    %v7921 = vld [vmem:[%s7909 + $0x58] sm:$0xff]
    %v7922 = vld [vmem:[%s7909 + $0x60] sm:$0xff]
    %v7923 = vld [vmem:[%s7909 + $0x68] sm:$0xff]
    %v7924 = vld [vmem:[%s7909 + $0x70] sm:$0xff]
    %v7925 = vld [vmem:[%s7909 + $0x78] sm:$0xff]
    %v7926 = vld [vmem:[%s7909 + $0x80] sm:$0xff]
    %v7927 = vld [vmem:[%s7909 + $0x88] sm:$0xff]
    %v7928 = vld [vmem:[%s7909 + $0x90] sm:$0xff]
    %v7929 = vld [vmem:[%s7909 + $0x98] sm:$0xff]
    %v7930 = vld [vmem:[%s7909 + $0xa0] sm:$0xff]
    %v7931 = vld [vmem:[%s7909 + $0xa8] sm:$0xff]
    %v7932 = vld [vmem:[%s7909 + $0xb0] sm:$0xff]
    %v7933 = vld [vmem:[%s7909 + $0xb8] sm:$0xff]
    %v7934 = vld [vmem:[%s7909 + $0xc0] sm:$0xff]
    %v7935 = vld [vmem:[%s7909 + $0xc8] sm:$0xff]
    %v7936 = vld [vmem:[%s7909 + $0xd0] sm:$0xff]
    %v7937 = vld [vmem:[%s7909 + $0xd8] sm:$0xff]
    %v7938 = vld [vmem:[%s7909 + $0xe0] sm:$0xff]
    %v7939 = vld [vmem:[%s7909 + $0xe8] sm:$0xff]
    %v7940 = vld [vmem:[%s7909 + $0xf0] sm:$0xff]
    %v7941 = vld [vmem:[%s7909 + $0xf8] sm:$0xff]
    %v7942 = vld [vmem:[%s7909 + $0x100] sm:$0xff]
    %v7943 = vld [vmem:[%s7909 + $0x108] sm:$0xff]
    %v7944 = vld [vmem:[%s7909 + $0x110] sm:$0xff]
    %v7945 = vld [vmem:[%s7909 + $0x118] sm:$0xff]
    %v7946 = vld [vmem:[%s7909 + $0x120] sm:$0xff]
    %v7947 = vld [vmem:[%s7909 + $0x128] sm:$0xff]
    %v7948 = vld [vmem:[%s7909 + $0x130] sm:$0xff]
    %v7949 = vld [vmem:[%s7909 + $0x138] sm:$0xff]
    %v7954 = vunpack.c.l.b16 %v7905
    %v7955 = vunpack.c.h.b16 %v7905
    %v7956 = vunpack.c.l.b16 %v7906
    %v7957 = vunpack.c.l.b16 %v7907
    %v7958 = vunpack.c.h.b16 %v7907
    %v7959 = vunpack.c.l.b16 %v7908
    %v7960 = vpack.c.b16 %v7954, %v7954
    %v7961 = vpack.c.b16 %v7955, %v7955
    %v7962 = vpack.c.b16 %v7956, %v7956
    %v7963 = vpack.c.b16 %v7957, %v7957
    %v7964 = vpack.c.b16 %v7958, %v7958
    %v7965 = vpack.c.b16 %v7959, %v7959
    %v7966 = vunpack.c.l.b16 %v7960
    %v7967 = vunpack.c.l.b16 %v7961
    %v7968 = vunpack.c.l.b16 %v7962
    %v7969 = vunpack.c.l.b16 %v7963
    %v7970 = vunpack.c.l.b16 %v7964
    %v7971 = vunpack.c.l.b16 %v7965
    %v7972 = vrot.slane %v7966, 4
    %v7973 = vrot.slane %v7969, 3
    %v7974 = vsel %vm6568, %v7973, %v7972
    %v7975 = vrot.slane %v7967, 4
    %v7976 = vrot.slane %v7970, 3
    %v7977 = vsel %vm6568, %v7976, %v7975
    %v7978 = vrot.slane %v7968, 4
    %v7979 = vrot.slane %v7971, 3
    %v7980 = vsel %vm6568, %v7979, %v7978
    %v7981 = vpack.c.b16 %v7974, %v7974
    %v7982 = vpack.c.b16 %v7977, %v7977
    %v7983 = vpack.c.b16 %v7980, %v7980
    %v8026 = vunpack.c.l.b16 %v7910
    %v8027 = vunpack.c.h.b16 %v7910
    %v8028 = vunpack.c.l.b16 %v7911
    %v8029 = vunpack.c.h.b16 %v7911
    %v8030 = vunpack.c.l.b16 %v7912
    %v8031 = vunpack.c.h.b16 %v7912
    %v8032 = vunpack.c.l.b16 %v7913
    %v8033 = vunpack.c.h.b16 %v7913
    %v8034 = vunpack.c.l.b16 %v7914
    %v8035 = vunpack.c.h.b16 %v7914
    %v8036 = vunpack.c.l.b16 %v7915
    %v8037 = vunpack.c.h.b16 %v7915
    %v8038 = vunpack.c.l.b16 %v7916
    %v8039 = vunpack.c.h.b16 %v7916
    %v8040 = vunpack.c.l.b16 %v7917
    %v8041 = vunpack.c.h.b16 %v7917
    %v8042 = vunpack.c.l.b16 %v7918
    %v8043 = vunpack.c.h.b16 %v7918
    %v8044 = vunpack.c.l.b16 %v7919
    %v8045 = vunpack.c.h.b16 %v7919
    %v8046 = vunpack.c.l.b16 %v7920
    %v8047 = vunpack.c.h.b16 %v7920
    %v8048 = vunpack.c.l.b16 %v7921
    %v8049 = vunpack.c.h.b16 %v7921
    %v8050 = vunpack.c.l.b16 %v7922
    %v8051 = vunpack.c.h.b16 %v7922
    %v8052 = vunpack.c.l.b16 %v7923
    %v8053 = vunpack.c.h.b16 %v7923
    %v8054 = vunpack.c.l.b16 %v7924
    %v8055 = vunpack.c.h.b16 %v7924
    %v8056 = vunpack.c.l.b16 %v7925
    %v8057 = vunpack.c.h.b16 %v7925
    %v8058 = vunpack.c.l.b16 %v7926
    %v8059 = vunpack.c.h.b16 %v7926
    %v8060 = vunpack.c.l.b16 %v7927
    %v8061 = vunpack.c.h.b16 %v7927
    %v8062 = vunpack.c.l.b16 %v7928
    %v8063 = vunpack.c.h.b16 %v7928
    %v8064 = vunpack.c.l.b16 %v7929
    %v8065 = vunpack.c.h.b16 %v7929
    %v8066 = vunpack.c.l.b16 %v7930
    %v8067 = vunpack.c.h.b16 %v7930
    %v8068 = vunpack.c.l.b16 %v7931
    %v8069 = vunpack.c.h.b16 %v7931
    %v8070 = vunpack.c.l.b16 %v7932
    %v8071 = vunpack.c.h.b16 %v7932
    %v8072 = vunpack.c.l.b16 %v7933
    %v8073 = vunpack.c.h.b16 %v7933
    %v8074 = vunpack.c.l.b16 %v7934
    %v8075 = vunpack.c.h.b16 %v7934
    %v8076 = vunpack.c.l.b16 %v7935
    %v8077 = vunpack.c.h.b16 %v7935
    %v8078 = vunpack.c.l.b16 %v7936
    %v8079 = vunpack.c.h.b16 %v7936
    %v8080 = vunpack.c.l.b16 %v7937
    %v8081 = vunpack.c.h.b16 %v7937
    %v8082 = vunpack.c.l.b16 %v7938
    %v8083 = vunpack.c.h.b16 %v7938
    %v8084 = vunpack.c.l.b16 %v7939
    %v8085 = vunpack.c.h.b16 %v7939
    %v8086 = vunpack.c.l.b16 %v7940
    %v8087 = vunpack.c.h.b16 %v7940
    %v8088 = vunpack.c.l.b16 %v7941
    %v8089 = vunpack.c.h.b16 %v7941
    %v8090 = vunpack.c.l.b16 %v7942
    %v8091 = vunpack.c.h.b16 %v7942
    %v8092 = vunpack.c.l.b16 %v7943
    %v8093 = vunpack.c.h.b16 %v7943
    %v8094 = vunpack.c.l.b16 %v7944
    %v8095 = vunpack.c.h.b16 %v7944
    %v8096 = vunpack.c.l.b16 %v7945
    %v8097 = vunpack.c.h.b16 %v7945
    %v8098 = vunpack.c.l.b16 %v7946
    %v8099 = vunpack.c.h.b16 %v7946
    %v8100 = vunpack.c.l.b16 %v7947
    %v8101 = vunpack.c.h.b16 %v7947
    %v8102 = vunpack.c.l.b16 %v7948
    %v8103 = vunpack.c.h.b16 %v7948
    %v8104 = vunpack.c.l.b16 %v7949
    %v8105 = vunpack.c.h.b16 %v7949
    %v8106 = vpack.c.b16 %v8028, %v8026
    %v8107 = vpack.c.b16 %v8029, %v8027
    %v8108 = vpack.c.b16 %v8032, %v8030
    %v8109 = vpack.c.b16 %v8033, %v8031
    %v8110 = vpack.c.b16 %v8036, %v8034
    %v8111 = vpack.c.b16 %v8037, %v8035
    %v8112 = vpack.c.b16 %v8040, %v8038
    %v8113 = vpack.c.b16 %v8041, %v8039
    %v8114 = vpack.c.b16 %v8044, %v8042
    %v8115 = vpack.c.b16 %v8045, %v8043
    %v8116 = vpack.c.b16 %v8048, %v8046
    %v8117 = vpack.c.b16 %v8049, %v8047
    %v8118 = vpack.c.b16 %v8052, %v8050
    %v8119 = vpack.c.b16 %v8053, %v8051
    %v8120 = vpack.c.b16 %v8056, %v8054
    %v8121 = vpack.c.b16 %v8057, %v8055
    %v8122 = vpack.c.b16 %v8060, %v8058
    %v8123 = vpack.c.b16 %v8061, %v8059
    %v8124 = vpack.c.b16 %v8064, %v8062
    %v8125 = vpack.c.b16 %v8065, %v8063
    %v8126 = vpack.c.b16 %v8068, %v8066
    %v8127 = vpack.c.b16 %v8069, %v8067
    %v8128 = vpack.c.b16 %v8072, %v8070
    %v8129 = vpack.c.b16 %v8073, %v8071
    %v8130 = vpack.c.b16 %v8076, %v8074
    %v8131 = vpack.c.b16 %v8077, %v8075
    %v8132 = vpack.c.b16 %v8080, %v8078
    %v8133 = vpack.c.b16 %v8081, %v8079
    %v8134 = vpack.c.b16 %v8084, %v8082
    %v8135 = vpack.c.b16 %v8085, %v8083
    %v8136 = vpack.c.b16 %v8088, %v8086
    %v8137 = vpack.c.b16 %v8089, %v8087
    %v8138 = vpack.c.b16 %v8092, %v8090
    %v8139 = vpack.c.b16 %v8093, %v8091
    %v8140 = vpack.c.b16 %v8096, %v8094
    %v8141 = vpack.c.b16 %v8097, %v8095
    %v8142 = vpack.c.b16 %v8100, %v8098
    %v8143 = vpack.c.b16 %v8101, %v8099
    %v8144 = vpack.c.b16 %v8104, %v8102
    %v8145 = vpack.c.b16 %v8105, %v8103
    %v8187 = vsel %vm6779, %v7983, 0
    %8189 = vmatpush.bf16.msra.mxu0 %v8120
    %8190 = vmatpush.bf16.msra.mxu0 %v8118
    %8191 = vmatpush.bf16.msra.mxu0 %v8116
    %8192 = vmatpush.bf16.msra.mxu0 %v8114
    %8193 = vmatpush.bf16.msra.mxu0 %v8112
    %8194 = vmatpush.bf16.msra.mxu0 %v8110
    %8195 = vmatpush.bf16.msra.mxu0 %v8108
    %8196 = vmatpush.bf16.msra.mxu0 %v8106
    %8197 = vmatmul.bf16.gmra.mxu0 %v7981
    %v8198 = vpop.f32.mrf.mxu0
    %v8199 = vadd.f32 0.0, %v8198
    %v8200 = vpop.f32.mrf.mxu0
    %8201 = vdwg.mxu0
    %8202 = vmatpush.bf16.msra.mxu0 %v8136
    %8203 = vmatpush.bf16.msra.mxu0 %v8134
    %8204 = vmatpush.bf16.msra.mxu0 %v8132
    %8205 = vmatpush.bf16.msra.mxu0 %v8130
    %8206 = vmatpush.bf16.msra.mxu0 %v8128
    %8207 = vmatpush.bf16.msra.mxu0 %v8126
    %8208 = vmatpush.bf16.msra.mxu0 %v8124
    %8209 = vmatpush.bf16.msra.mxu0 %v8122
    %8210 = vmatmul.bf16.gmra.mxu0 %v7982
    %v8211 = vpop.f32.mrf.mxu0
    %v8212 = vadd.f32 %v8199, %v8211
    %v8213 = vpop.f32.mrf.mxu0
    %8214 = vdwg.mxu0
    %8215 = vmatpush.bf16.msra.mxu0 0
    %8216 = vmatpush.bf16.msra.mxu0 0
    %8217 = vmatpush.bf16.msra.mxu0 0
    %8218 = vmatpush.bf16.msra.mxu0 0
    %8219 = vmatpush.bf16.msra.mxu0 %v8144
    %8220 = vmatpush.bf16.msra.mxu0 %v8142
    %8221 = vmatpush.bf16.msra.mxu0 %v8140
    %8222 = vmatpush.bf16.msra.mxu0 %v8138
    %8223 = vmatmul.bf16.gmra.mxu0 %v8187
    %v8224 = vpop.f32.mrf.mxu0
    %v8225 = vadd.f32 %v8212, %v8224
    %v8226 = vpop.f32.mrf.mxu0
    %8227 = vdwg.mxu0
    %8228 = vmatpush.bf16.msra.mxu0 %v8121
    %8229 = vmatpush.bf16.msra.mxu0 %v8119
    %8230 = vmatpush.bf16.msra.mxu0 %v8117
    %8231 = vmatpush.bf16.msra.mxu0 %v8115
    %8232 = vmatpush.bf16.msra.mxu0 %v8113
    %8233 = vmatpush.bf16.msra.mxu0 %v8111
    %8234 = vmatpush.bf16.msra.mxu0 %v8109
    %8235 = vmatpush.bf16.msra.mxu0 %v8107
    %8236 = vmatmul.bf16.gmra.mxu0 %v7981
    %v8237 = vpop.f32.mrf.mxu0
    %v8238 = vadd.f32 0.0, %v8237
    %v8239 = vpop.f32.mrf.mxu0
    %8240 = vdwg.mxu0
    %8241 = vmatpush.bf16.msra.mxu0 %v8137
    %8242 = vmatpush.bf16.msra.mxu0 %v8135
    %8243 = vmatpush.bf16.msra.mxu0 %v8133
    %8244 = vmatpush.bf16.msra.mxu0 %v8131
    %8245 = vmatpush.bf16.msra.mxu0 %v8129
    %8246 = vmatpush.bf16.msra.mxu0 %v8127
    %8247 = vmatpush.bf16.msra.mxu0 %v8125
    %8248 = vmatpush.bf16.msra.mxu0 %v8123
    %8249 = vmatmul.bf16.gmra.mxu0 %v7982
    %v8250 = vpop.f32.mrf.mxu0
    %v8251 = vadd.f32 %v8238, %v8250
    %v8252 = vpop.f32.mrf.mxu0
    %8253 = vdwg.mxu0
    %8254 = vmatpush.bf16.msra.mxu0 0
    %8255 = vmatpush.bf16.msra.mxu0 0
    %8256 = vmatpush.bf16.msra.mxu0 0
    %8257 = vmatpush.bf16.msra.mxu0 0
    %8258 = vmatpush.bf16.msra.mxu0 %v8145
    %8259 = vmatpush.bf16.msra.mxu0 %v8143
    %8260 = vmatpush.bf16.msra.mxu0 %v8141
    %8261 = vmatpush.bf16.msra.mxu0 %v8139
    %8262 = vmatmul.bf16.gmra.mxu0 %v8187
    %v8263 = vpop.f32.mrf.mxu0
    %v8264 = vadd.f32 %v8251, %v8263
    %v8265 = vpop.f32.mrf.mxu0
    %8266 = vdwg.mxu0
    %v8267 = vadd.f32 %v7903, %v8225
    %v8268 = vadd.f32 %v7904, %v8264
    %v8269 = vmax.f32 %v8267, 0.0
    %v8270 = vmax.f32 %v8268, 0.0
    %v8271 = vpack.c.bf16 %v8269, %v8269
    %v8272 = vpack.c.bf16 %v8270, %v8270
    %v8273 = vld [vmem:[%s8] sm:$0xf]
    %v8274 = vld [vmem:[%s8 + $0x4] sm:$0xf]
    %v8275 = vld [vmem:[%s8 + $0x8] sm:$0xf]
    %v8276 = vld [vmem:[%s8 + $0xc] sm:$0xf]
    %v8277 = vld [vmem:[%s8 + $0x10] sm:$0xf]
    %v8278 = vld [vmem:[%s8 + $0x14] sm:$0xf]
    %v8279 = vld [vmem:[%s8 + $0x18] sm:$0xf]
    %v8280 = vld [vmem:[%s8 + $0x1c] sm:$0xf]
    %v8281 = vld [vmem:[%s8 + $0x20] sm:$0xf]
    %v8282 = vld [vmem:[%s8 + $0x24] sm:$0xf]
    %v8283 = vld [vmem:[%s8 + $0x28] sm:$0xf]
    %v8284 = vld [vmem:[%s8 + $0x2c] sm:$0xf]
    %v8285 = vld [vmem:[%s8 + $0x30] sm:$0xf]
    %v8286 = vld [vmem:[%s8 + $0x34] sm:$0xf]
    %v8287 = vld [vmem:[%s8 + $0x38] sm:$0xf]
    %v8288 = vld [vmem:[%s8 + $0x3c] sm:$0xf]
    %v8289 = vld [vmem:[%s8 + $0x40] sm:$0xf]
    %v8290 = vld [vmem:[%s8 + $0x44] sm:$0xf]
    %v8291 = vld [vmem:[%s8 + $0x48] sm:$0xf]
    %v8292 = vld [vmem:[%s8 + $0x4c] sm:$0xf]
    %v8293 = vld [vmem:[%s8 + $0x50] sm:$0xf]
    %v8294 = vld [vmem:[%s8 + $0x54] sm:$0xf]
    %v8295 = vld [vmem:[%s8 + $0x58] sm:$0xf]
    %v8296 = vld [vmem:[%s8 + $0x5c] sm:$0xf]
    %v8297 = vld [vmem:[%s8 + $0x60] sm:$0xf]
    %v8298 = vld [vmem:[%s8 + $0x64] sm:$0xf]
    %v8299 = vld [vmem:[%s8 + $0x68] sm:$0xf]
    %v8300 = vld [vmem:[%s8 + $0x6c] sm:$0xf]
    %v8301 = vld [vmem:[%s8 + $0x70] sm:$0xf]
    %v8302 = vld [vmem:[%s8 + $0x74] sm:$0xf]
    %v8303 = vld [vmem:[%s8 + $0x78] sm:$0xf]
    %v8304 = vld [vmem:[%s8 + $0x7c] sm:$0xf]
    %v8305 = vld [vmem:[%s1] sm:$0x1]
    %v8306 = vld [vmem:[%s9] sm:$0xf]
    %vm8307 = vcmask 64512
    %v8309 = vsel %vm8307, %v8305, 0
    %vm8311 = vcmask 1043456
    %v8313 = vsel %vm8311, %v8306, 0
    %8315 = vmatpush.bf16.msra.mxu0 0
    %8316 = vmatpush.bf16.msra.mxu0 0
    %8317 = vmatpush.bf16.msra.mxu0 0
    %8318 = vmatpush.bf16.msra.mxu0 0
    %8319 = vmatpush.bf16.msra.mxu0 0
    %8320 = vmatpush.bf16.msra.mxu0 0
    %8321 = vmatpush.bf16.msra.mxu0 0
    %8322 = vmatpush.bf16.msra.mxu0 %v8313
    %8323 = vmatmul.bf16.gmra.mxu0 %v8309
    %v8324 = vpop.f32.mrf.mxu0
    %v8325 = vadd.f32 0.0, %v8324
    %v8326 = vpop.f32.mrf.mxu0
    %8327 = vdwg.mxu0
    %v8360 = vunpack.c.l.b16 %v8273
    %v8361 = vunpack.c.l.b16 %v8274
    %v8362 = vunpack.c.l.b16 %v8275
    %v8363 = vunpack.c.l.b16 %v8276
    %v8364 = vunpack.c.l.b16 %v8277
    %v8365 = vunpack.c.l.b16 %v8278
    %v8366 = vunpack.c.l.b16 %v8279
    %v8367 = vunpack.c.l.b16 %v8280
    %v8368 = vunpack.c.l.b16 %v8281
    %v8369 = vunpack.c.l.b16 %v8282
    %v8370 = vunpack.c.l.b16 %v8283
    %v8371 = vunpack.c.l.b16 %v8284
    %v8372 = vunpack.c.l.b16 %v8285
    %v8373 = vunpack.c.l.b16 %v8286
    %v8374 = vunpack.c.l.b16 %v8287
    %v8375 = vunpack.c.l.b16 %v8288
    %v8376 = vunpack.c.l.b16 %v8289
    %v8377 = vunpack.c.l.b16 %v8290
    %v8378 = vunpack.c.l.b16 %v8291
    %v8379 = vunpack.c.l.b16 %v8292
    %v8380 = vunpack.c.l.b16 %v8293
    %v8381 = vunpack.c.l.b16 %v8294
    %v8382 = vunpack.c.l.b16 %v8295
    %v8383 = vunpack.c.l.b16 %v8296
    %v8384 = vunpack.c.l.b16 %v8297
    %v8385 = vunpack.c.l.b16 %v8298
    %v8386 = vunpack.c.l.b16 %v8299
    %v8387 = vunpack.c.l.b16 %v8300
    %v8388 = vunpack.c.l.b16 %v8301
    %v8389 = vunpack.c.l.b16 %v8302
    %v8390 = vunpack.c.l.b16 %v8303
    %v8391 = vunpack.c.l.b16 %v8304
    %v8392 = vpack.c.b16 %v8361, %v8360
    %v8393 = vpack.c.b16 %v8363, %v8362
    %v8394 = vpack.c.b16 %v8365, %v8364
    %v8395 = vpack.c.b16 %v8367, %v8366
    %v8396 = vpack.c.b16 %v8369, %v8368
    %v8397 = vpack.c.b16 %v8371, %v8370
    %v8398 = vpack.c.b16 %v8373, %v8372
    %v8399 = vpack.c.b16 %v8375, %v8374
    %v8400 = vpack.c.b16 %v8377, %v8376
    %v8401 = vpack.c.b16 %v8379, %v8378
    %v8402 = vpack.c.b16 %v8381, %v8380
    %v8403 = vpack.c.b16 %v8383, %v8382
    %v8404 = vpack.c.b16 %v8385, %v8384
    %v8405 = vpack.c.b16 %v8387, %v8386
    %v8406 = vpack.c.b16 %v8389, %v8388
    %v8407 = vpack.c.b16 %v8391, %v8390
    %8424 = vmatpush.bf16.msra.mxu0 %v8399
    %8425 = vmatpush.bf16.msra.mxu0 %v8398
    %8426 = vmatpush.bf16.msra.mxu0 %v8397
    %8427 = vmatpush.bf16.msra.mxu0 %v8396
    %8428 = vmatpush.bf16.msra.mxu0 %v8395
    %8429 = vmatpush.bf16.msra.mxu0 %v8394
    %8430 = vmatpush.bf16.msra.mxu0 %v8393
    %8431 = vmatpush.bf16.msra.mxu0 %v8392
    %8432 = vmatmul.bf16.gmra.mxu0 %v8271
    %v8433 = vpop.f32.mrf.mxu0
    %v8434 = vadd.f32 %v8325, %v8433
    %v8435 = vpop.f32.mrf.mxu0
    %8436 = vdwg.mxu0
    %8437 = vmatpush.bf16.msra.mxu0 %v8407
    %8438 = vmatpush.bf16.msra.mxu0 %v8406
    %8439 = vmatpush.bf16.msra.mxu0 %v8405
    %8440 = vmatpush.bf16.msra.mxu0 %v8404
    %8441 = vmatpush.bf16.msra.mxu0 %v8403
    %8442 = vmatpush.bf16.msra.mxu0 %v8402
    %8443 = vmatpush.bf16.msra.mxu0 %v8401
    %8444 = vmatpush.bf16.msra.mxu0 %v8400
    %8445 = vmatmul.bf16.gmra.mxu0 %v8272
    %v8446 = vpop.f32.mrf.mxu0
    %v8447 = vadd.f32 %v8434, %v8446
    %v8448 = vpop.f32.mrf.mxu0
    %8449 = vdwg.mxu0
    %v8450 = vld [vmem:[%s10] sm:$0x1]
    %v8452 = vperm.slane %v8450, 0
    %v8454 = vadd.f32 %v8447, %v8452
    %v8455 = vmax.f32 %v8454, 0.0
    %v8456 = vpack.c.bf16 %v8455, %v8455
    %v8457 = vld [vmem:[%s11] sm:$0xf]
    %v8458 = vld [vmem:[%s11 + $0x4] sm:$0xf]
    %v8459 = vld [vmem:[%s11 + $0x8] sm:$0xf]
    %v8460 = vld [vmem:[%s11 + $0xc] sm:$0xf]
    %v8461 = vld [vmem:[%s11 + $0x10] sm:$0xf]
    %v8462 = vld [vmem:[%s11 + $0x14] sm:$0xf]
    %v8463 = vld [vmem:[%s11 + $0x18] sm:$0xf]
    %v8464 = vld [vmem:[%s11 + $0x1c] sm:$0xf]
    %v8465 = vld [vmem:[%s11 + $0x20] sm:$0xf]
    %v8466 = vld [vmem:[%s11 + $0x24] sm:$0xf]
    %v8467 = vld [vmem:[%s11 + $0x28] sm:$0xf]
    %v8468 = vld [vmem:[%s11 + $0x2c] sm:$0xf]
    %v8469 = vld [vmem:[%s11 + $0x30] sm:$0xf]
    %v8470 = vld [vmem:[%s11 + $0x34] sm:$0xf]
    %v8471 = vld [vmem:[%s11 + $0x38] sm:$0xf]
    %v8472 = vld [vmem:[%s11 + $0x3c] sm:$0xf]
    %v8473 = vld [vmem:[%s12] sm:$0x1]
    %v8475 = vperm.slane %v8473, 0
    %v8493 = vunpack.c.l.b16 %v8457
    %v8494 = vunpack.c.l.b16 %v8458
    %v8495 = vunpack.c.l.b16 %v8459
    %v8496 = vunpack.c.l.b16 %v8460
    %v8497 = vunpack.c.l.b16 %v8461
    %v8498 = vunpack.c.l.b16 %v8462
    %v8499 = vunpack.c.l.b16 %v8463
    %v8500 = vunpack.c.l.b16 %v8464
    %v8501 = vunpack.c.l.b16 %v8465
    %v8502 = vunpack.c.l.b16 %v8466
    %v8503 = vunpack.c.l.b16 %v8467
    %v8504 = vunpack.c.l.b16 %v8468
    %v8505 = vunpack.c.l.b16 %v8469
    %v8506 = vunpack.c.l.b16 %v8470
    %v8507 = vunpack.c.l.b16 %v8471
    %v8508 = vunpack.c.l.b16 %v8472
    %v8509 = vpack.c.b16 %v8494, %v8493
    %v8510 = vpack.c.b16 %v8496, %v8495
    %v8511 = vpack.c.b16 %v8498, %v8497
    %v8512 = vpack.c.b16 %v8500, %v8499
    %v8513 = vpack.c.b16 %v8502, %v8501
    %v8514 = vpack.c.b16 %v8504, %v8503
    %v8515 = vpack.c.b16 %v8506, %v8505
    %v8516 = vpack.c.b16 %v8508, %v8507
    %8525 = vmatpush.bf16.msra.mxu0 %v8516
    %8526 = vmatpush.bf16.msra.mxu0 %v8515
    %8527 = vmatpush.bf16.msra.mxu0 %v8514
    %8528 = vmatpush.bf16.msra.mxu0 %v8513
    %8529 = vmatpush.bf16.msra.mxu0 %v8512
    %8530 = vmatpush.bf16.msra.mxu0 %v8511
    %8531 = vmatpush.bf16.msra.mxu0 %v8510
    %8532 = vmatpush.bf16.msra.mxu0 %v8509
    %8533 = vmatmul.bf16.gmra.mxu0 %v8456
    %v8534 = vpop.f32.mrf.mxu0
    %v8535 = vadd.f32 %v8475, %v8534
    %v8536 = vpop.f32.mrf.mxu0
    %8537 = vdwg.mxu0
    %v8538 = vmax.f32 %v8535, 0.0
    %v8539 = vpack.c.bf16 %v8538, %v8538
    %v8540 = vld [vmem:[%s13] sm:$0xf]
    %v8541 = vld [vmem:[%s13 + $0x4] sm:$0xf]
    %v8542 = vld [vmem:[%s13 + $0x8] sm:$0xf]
    %v8543 = vld [vmem:[%s13 + $0xc] sm:$0xf]
    %v8544 = vld [vmem:[%s14] sm:$0x1]
    %v8546 = vperm.slane %v8544, 0
    %v8552 = vunpack.c.l.b16 %v8540
    %v8553 = vunpack.c.l.b16 %v8541
    %v8554 = vunpack.c.l.b16 %v8542
    %v8555 = vunpack.c.l.b16 %v8543
    %v8556 = vpack.c.b16 %v8553, %v8552
    %v8557 = vpack.c.b16 %v8555, %v8554
    %vm8560 = vcmask 261120
    %v8562 = vsel %vm8560, %v8539, 0
    %8564 = vmatpush.bf16.msra.mxu0 0
    %8565 = vmatpush.bf16.msra.mxu0 0
    %8566 = vmatpush.bf16.msra.mxu0 0
    %8567 = vmatpush.bf16.msra.mxu0 0
    %8568 = vmatpush.bf16.msra.mxu0 0
    %8569 = vmatpush.bf16.msra.mxu0 0
    %8570 = vmatpush.bf16.msra.mxu0 %v8557
    %8571 = vmatpush.bf16.msra.mxu0 %v8556
    %8572 = vmatmul.bf16.gmra.mxu0 %v8562
    %v8573 = vpop.f32.mrf.mxu0
    %v8574 = vadd.f32 %v8546, %v8573
    %v8575 = vpop.f32.mrf.mxu0
    %8576 = vdwg.mxu0
    %v8577 = vtanh.pop %v8574
    %v8578 = vadd.f32 %v8577, 0.0
    %vm8579 = vcmask 41984
    %8580 = vst.msk [vmem:[#allocation4] sm:$0x3] %vm8579, %v8578
    // Predicated region
    $region62: #{deterministic_policy_forward.1} parent=1 // pred_check
      _
    $region63: #{deterministic_policy_forward.1} parent=1 // pred_check_branch
      %8582 = sbr.rel (0) target = $region65
    $region64: #{deterministic_policy_forward.1} parent=1 // pred_region
      %8584 = vsyncadd [#allocation5], 0
      %s8586 = sshll.u32 [#allocation4], 4
      %s8587 = int_to_ptr.vmem [resolvable:$true] %s8586
      %s8588 = sshll.u32 %s15, 4
      %s8589 = int_to_ptr.hbm [resolvable:$true] %s8588
      %8591 = dma.vmem_to_hbm [thread:$0]  %s8587, 32, %s8589, [#allocation5]
    $region65: #{deterministic_policy_forward.1} parent=1 // pred_fallthru
      _
    // Predicated region
    $region66: #{deterministic_policy_forward.1} parent=1 // pred_check
      _
    $region67: #{deterministic_policy_forward.1} parent=1 // pred_check_branch
      %8593 = sbr.rel (0) target = $region69
    $region68: #{deterministic_policy_forward.1} parent=1 // pred_region
      %8595 = dma.done [#allocation5], 32
    $region69: #{deterministic_policy_forward.1} parent=1 // pred_fallthru
      _
    %8596 = vsyncpa [#allocation5], 1

</llo_original>
